<compile_context>
chip_gen: v5e
topology: v5e:2x2
jax: 0.10.0
libtpu: 0.0.40
codegen_flags: <defaults>
</compile_context>

<pallas_src>
import functools

import jax
import jax.numpy as jnp
import numpy as np
from jax.experimental import pallas as pl
from jax.experimental.pallas import tpu as pltpu


# -----------------------------------------------------------------------------
# Helpers
# -----------------------------------------------------------------------------
def _sigmoid1eup(x):
    # sigma(x) = 0.5 * (1 + tanh(x/2)): a single EUP transcendental per call.
    return 0.5 * jnp.tanh(0.5 * x) + 0.5


# -----------------------------------------------------------------------------
# Fused 6-layer GRU-stack kernel (single invocation, no grid).
# -----------------------------------------------------------------------------
def _gru_stack_kernel(meta, T, B, xh_ref, p_ref, o_ref, act_ref):
    """meta: tuple of (din, hsz, act, (row offsets...)) per layer (static).

    xh_ref : (T*B, 2*dim)   time-major cat([x, h], -1)
    p_ref  : (R, 128)       packed f32 parameter slab (see prepare_params)
    o_ref  : (T*B, dim)     time-major output of the last layer
    act_ref: (T*B, Hmax)    VMEM scratch collecting per-step layer outputs
    """
    TB = T * B
    cur = xh_ref[...]                                   # (TB, Din0) f32

    for (din, hsz, act, offs) in meta:
        o_ir, o_iz, o_in, o_hr, o_hz, o_hn, o_b = offs
        # Per-layer weight loads (inside the layer loop -> bounded live range).
        wir = p_ref[o_ir:o_ir + din, 0:hsz]
        wiz = p_ref[o_iz:o_iz + din, 0:hsz]
        win = p_ref[o_in:o_in + din, 0:hsz]
        whr = p_ref[o_hr:o_hr + hsz, 0:hsz]
        whz = p_ref[o_hz:o_hz + hsz, 0:hsz]
        whn = p_ref[o_hn:o_hn + hsz, 0:hsz]
        b_r = p_ref[o_b + 0:o_b + 1, 0:hsz]             # b_ir + b_hr
        b_z = p_ref[o_b + 1:o_b + 2, 0:hsz]             # b_iz + b_hz
        b_in = p_ref[o_b + 2:o_b + 3, 0:hsz]
        b_hn = p_ref[o_b + 3:o_b + 4, 0:hsz]

        # ---- batched input-side projections: OFF the recurrent chain -------
        gxr = jnp.dot(cur, wir, preferred_element_type=jnp.float32) + b_r
        gxz = jnp.dot(cur, wiz, preferred_element_type=jnp.float32) + b_z
        gxn = jnp.dot(cur, win, preferred_element_type=jnp.float32) + b_in
        b_hn_b = jnp.broadcast_to(b_hn, (B, hsz))       # hoisted broadcast

        # ---- recurrent loop: only the hidden-side matmuls are serialized ---
        h = jnp.zeros((B, hsz), jnp.float32)
        for t in range(T):
            r0 = t * B
            ghr = jnp.dot(h, whr, preferred_element_type=jnp.float32)
            ghz = jnp.dot(h, whz, preferred_element_type=jnp.float32)
            ghn = jnp.dot(h, whn, preferred_element_type=jnp.float32)
            r = _sigmoid1eup(gxr[r0:r0 + B, :] + ghr)
            z = _sigmoid1eup(gxz[r0:r0 + B, :] + ghz)
            n = jnp.tanh(gxn[r0:r0 + B, :] + r * (ghn + b_hn_b))
            h = (1.0 - z) * n + z * h
            act_ref[r0:r0 + B, 0:hsz] = h               # small VMEM store

        y = act_ref[0:TB, 0:hsz]                        # (TB, hsz)
        if act == "relu":
            cur = jnp.maximum(y, 0.0)
        elif act == "sigmoid":
            cur = _sigmoid1eup(y)
        else:
            cur = y                                     # no act inside a stack

    # Single dense store; HBM writeback happens once after the kernel ends.
    o_ref[...] = cur.astype(o_ref.dtype)


# -----------------------------------------------------------------------------
# Host-side parameter packing: one (R, 128) slab + static metadata.
# -----------------------------------------------------------------------------
def prepare_params(raw_params, lane=128, dtype=jnp.float32):
    """raw_params: list of (layers, act); each layer is
       (wir, wiz, win, whr, whz, whn, b_r, b_z, b_in, b_hn) with input-side
       weights stored (Din, H).  Returns (slab (R,128), meta tuple)."""
    blocks, meta = [], []
    row = [0]

    def add(arr):
        a = np.asarray(arr, dtype=np.float32)
        r, c = a.shape
        rp = -(-r // 8) * 8                            # sublane-aligned block
        buf = np.zeros((rp, lane), np.float32)
        buf[:r, :c] = a
        blocks.append(buf)
        off = row[0]
        row[0] += rp
        return off

    for layers, act in raw_params:
        n = len(layers)
        for li, lp in enumerate(layers):
            wir, wiz, win, whr, whz, whn, b_r, b_z, b_in, b_hn = lp
            din, hsz = wir.shape
            bias_blk = np.concatenate([np.asarray(b_r), np.asarray(b_z),
                                       np.asarray(b_in), np.asarray(b_hn)], 0)
            offs = (add(wir), add(wiz), add(win),
                    add(whr), add(whz), add(whn), add(bias_blk))
            meta.append((int(din), int(hsz),
                         act if li == n - 1 else None, offs))
    slab = jnp.asarray(np.concatenate(blocks, axis=0), dtype=dtype)
    return slab, tuple(meta)


def discriminator_forward_pallas(x, h, slab, meta):
    """x, h: (B, T, dim) float32;  slab/meta from prepare_params."""
    B, T, dim = x.shape
    out_dim = meta[-1][1]
    h_max = max(m[1] for m in meta)

    # Wrapper-side layout plumbing only: time-major flatten of cat([x, h]).
    xh_tm = jnp.transpose(jnp.concatenate([x, h], axis=-1),
                          (1, 0, 2)).reshape(T * B, 2 * dim)

    kernel = functools.partial(_gru_stack_kernel, meta, T, B)
    out_tm = pl.pallas_call(
        kernel,
        out_shape=jax.ShapeDtypeStruct((T * B, out_dim), jnp.float32),
        in_specs=[pl.BlockSpec(memory_space=pltpu.MemorySpace.VMEM),
                  pl.BlockSpec(memory_space=pltpu.MemorySpace.VMEM)],
        out_specs=pl.BlockSpec(memory_space=pltpu.MemorySpace.VMEM),
        scratch_shapes=[pltpu.VMEM((T * B, h_max), jnp.float32)],
    )(xh_tm, slab)
    return jnp.transpose(out_tm.reshape(T, B, out_dim), (1, 0, 2))


# -----------------------------------------------------------------------------
# Pure-JAX reference (lax.scan over raw, unfused per-gate weights).
# -----------------------------------------------------------------------------
def gru_layer_ref(x_tm, wir, wiz, win, whr, whz, whn, br, bz, bi_n, bh_n,
                  activation="none"):
    B = x_tm.shape[1]
    H = wir.shape[1]

    def step(h_prev, x_t):
        r = jax.nn.sigmoid(x_t @ wir + h_prev @ whr + br)
        z = jax.nn.sigmoid(x_t @ wiz + h_prev @ whz + bz)
        n = jnp.tanh(x_t @ win + bi_n + r * (h_prev @ whn + bh_n))
        h_new = (1.0 - z) * n + z * h_prev
        return h_new, h_new

    _, ys = jax.lax.scan(step, jnp.zeros((B, H), jnp.float32), x_tm)
    if activation == "relu":
        ys = jnp.maximum(ys, 0.0)
    elif activation == "sigmoid":
        ys = jax.nn.sigmoid(ys)
    return ys


def discriminator_forward_ref(x, h, raw_params):
    inputs = jnp.concatenate([x, h], axis=-1)           # (B, T, 2*dim)
    out = jnp.transpose(inputs, (1, 0, 2))               # time-major (T, B, D)
    for layers, act in raw_params:
        for li, lp in enumerate(layers):
            a = act if li == len(layers) - 1 else "none"
            out = gru_layer_ref(out, *lp, activation=a)
    return jnp.transpose(out, (1, 0, 2))                  # back to (B, T, dim)


# -----------------------------------------------------------------------------
# Parameter construction (deterministic, PyTorch-style uniform init).
# -----------------------------------------------------------------------------
def make_gru_params(key, input_size, hidden_size, num_layers=2):
    """Per-layer raw tuples:
       (wir, wiz, win, whr, whz, whn, b_r, b_z, b_in, b_hn);
       input-side weights stored (Din, H) (transposed vs. PyTorch)."""
    layers = []
    k = 1.0 / np.sqrt(hidden_size)
    for li in range(num_layers):
        din = input_size if li == 0 else hidden_size
        key, *ks = jax.random.split(key, 11)
        wir = jax.random.uniform(ks[0], (din, hidden_size), jnp.float32, -k, k)
        wiz = jax.random.uniform(ks[1], (din, hidden_size), jnp.float32, -k, k)
        win = jax.random.uniform(ks[2], (din, hidden_size), jnp.float32, -k, k)
        whr = jax.random.uniform(ks[3], (hidden_size, hidden_size), jnp.float32, -k, k)
        whz = jax.random.uniform(ks[4], (hidden_size, hidden_size), jnp.float32, -k, k)
        whn = jax.random.uniform(ks[5], (hidden_size, hidden_size), jnp.float32, -k, k)
        b_ir = jax.random.uniform(ks[6], (1, hidden_size), jnp.float32, -k, k)
        b_hr = jax.random.uniform(ks[7], (1, hidden_size), jnp.float32, -k, k)
        b_iz = jax.random.uniform(ks[8], (1, hidden_size), jnp.float32, -k, k)
        b_hz = jax.random.uniform(ks[9], (1, hidden_size), jnp.float32, -k, k)
        key, k1, k2 = jax.random.split(key, 3)
        b_in = jax.random.uniform(k1, (1, hidden_size), jnp.float32, -k, k)
        b_hn = jax.random.uniform(k2, (1, hidden_size), jnp.float32, -k, k)
        layers.append((wir, wiz, win, whr, whz, whn,
                       b_ir + b_hr, b_iz + b_hz, b_in, b_hn))
    return key, layers


if __name__ == "__main__":
    # Small shapes consistent with the module.
    B, T = 2, 8
    dim, h_dim = 8, 16

    key = jax.random.PRNGKey(0)
    key, kx, kh = jax.random.split(key, 3)
    x = jax.random.normal(kx, (B, T, dim), jnp.float32)
    h = jax.random.normal(kh, (B, T, dim), jnp.float32)

    # gru1: 2*dim -> 2*h_dim, gru2: 2*h_dim -> h_dim, gru3: h_dim -> dim
    key, gru1 = make_gru_params(key, 2 * dim, 2 * h_dim, num_layers=2)
    key, gru2 = make_gru_params(key, 2 * h_dim, h_dim, num_layers=2)
    key, gru3 = make_gru_params(key, h_dim, dim, num_layers=2)
    raw_params = [(gru1, "relu"), (gru2, "relu"), (gru3, "sigmoid")]

    # One-time parameter packing into a single VMEM slab (f32; bf16 optional
    # on v6e/v7x).
    slab, meta = prepare_params(raw_params, dtype=jnp.float32)

    d_prob = discriminator_forward_pallas(x, h, slab, meta)
    d_prob = jax.block_until_ready(d_prob)

    # Pure-JAX reference check.
    d_prob_ref = discriminator_forward_ref(x, h, raw_params)
    np.testing.assert_allclose(np.asarray(d_prob), np.asarray(d_prob_ref),
                               rtol=5e-4, atol=1e-4)
    assert d_prob.shape == (B, T, dim)

    print("KERNEL_OK")
</pallas_src>

<mosaic_0001>
module attributes {stable_mosaic.version = 11 : i64} {
  func.func @_gru_stack_kernel(%arg0: memref<16x16xf32, #tpu.memory_space<vmem>>, %arg1: memref<744x128xf32, #tpu.memory_space<vmem>>, %arg2: memref<16x8xf32, #tpu.memory_space<vmem>>, %arg3: memref<16x32xf32, #tpu.memory_space<vmem>>) attributes {dimension_semantics = [], scalar_prefetch = 0 : i64, scratch_operands = 1 : i64, tpu.core_type = #tpu.core_type<tc>} {
    %c0 = arith.constant 0 : index
    %c0_0 = arith.constant 0 : index
    %0 = vector.load %arg0[%c0, %c0_0] : memref<16x16xf32, #tpu.memory_space<vmem>>, vector<16x16xf32>
    %c0_1 = arith.constant 0 : index
    %c0_2 = arith.constant 0 : index
    %1 = vector.load %arg1[%c0_1, %c0_2] : memref<744x128xf32, #tpu.memory_space<vmem>>, vector<16x32xf32>
    %c16 = arith.constant 16 : index
    %c0_3 = arith.constant 0 : index
    %2 = vector.load %arg1[%c16, %c0_3] : memref<744x128xf32, #tpu.memory_space<vmem>>, vector<16x32xf32>
    %c32 = arith.constant 32 : index
    %c0_4 = arith.constant 0 : index
    %3 = vector.load %arg1[%c32, %c0_4] : memref<744x128xf32, #tpu.memory_space<vmem>>, vector<16x32xf32>
    %c48 = arith.constant 48 : index
    %c0_5 = arith.constant 0 : index
    %4 = vector.load %arg1[%c48, %c0_5] : memref<744x128xf32, #tpu.memory_space<vmem>>, vector<32x32xf32>
    %c80 = arith.constant 80 : index
    %c0_6 = arith.constant 0 : index
    %5 = vector.load %arg1[%c80, %c0_6] : memref<744x128xf32, #tpu.memory_space<vmem>>, vector<32x32xf32>
    %c112 = arith.constant 112 : index
    %c0_7 = arith.constant 0 : index
    %6 = vector.load %arg1[%c112, %c0_7] : memref<744x128xf32, #tpu.memory_space<vmem>>, vector<32x32xf32>
    %c144 = arith.constant 144 : index
    %c0_8 = arith.constant 0 : index
    %7 = vector.load %arg1[%c144, %c0_8] : memref<744x128xf32, #tpu.memory_space<vmem>>, vector<1x32xf32>
    %c145 = arith.constant 145 : index
    %c0_9 = arith.constant 0 : index
    %8 = vector.load %arg1[%c145, %c0_9] : memref<744x128xf32, #tpu.memory_space<vmem>>, vector<1x32xf32>
    %c146 = arith.constant 146 : index
    %c0_10 = arith.constant 0 : index
    %9 = vector.load %arg1[%c146, %c0_10] : memref<744x128xf32, #tpu.memory_space<vmem>>, vector<1x32xf32>
    %c147 = arith.constant 147 : index
    %c0_11 = arith.constant 0 : index
    %10 = vector.load %arg1[%c147, %c0_11] : memref<744x128xf32, #tpu.memory_space<vmem>>, vector<1x32xf32>
    %cst = arith.constant dense<0.000000e+00> : vector<16x32xf32>
    %11 = tpu.matmul %0, %1, %cst {dimension_numbers = #tpu.dot_dimension_numbers<[1], [0], [0], [1], [0, 0, 1, 1], [], []>} : vector<16x16xf32>, vector<16x32xf32>, vector<16x32xf32> -> vector<16x32xf32>
    %12 = vector.broadcast %7 : vector<1x32xf32> to vector<16x32xf32>
    %13 = arith.addf %11, %12 : vector<16x32xf32>
    %cst_12 = arith.constant dense<0.000000e+00> : vector<16x32xf32>
    %14 = tpu.matmul %0, %2, %cst_12 {dimension_numbers = #tpu.dot_dimension_numbers<[1], [0], [0], [1], [0, 0, 1, 1], [], []>} : vector<16x16xf32>, vector<16x32xf32>, vector<16x32xf32> -> vector<16x32xf32>
    %15 = vector.broadcast %8 : vector<1x32xf32> to vector<16x32xf32>
    %16 = arith.addf %14, %15 : vector<16x32xf32>
    %cst_13 = arith.constant dense<0.000000e+00> : vector<16x32xf32>
    %17 = tpu.matmul %0, %3, %cst_13 {dimension_numbers = #tpu.dot_dimension_numbers<[1], [0], [0], [1], [0, 0, 1, 1], [], []>} : vector<16x16xf32>, vector<16x32xf32>, vector<16x32xf32> -> vector<16x32xf32>
    %18 = vector.broadcast %9 : vector<1x32xf32> to vector<16x32xf32>
    %19 = arith.addf %17, %18 : vector<16x32xf32>
    %20 = vector.shape_cast %10 : vector<1x32xf32> to vector<1x32xf32>
    %21 = vector.broadcast %20 : vector<1x32xf32> to vector<2x32xf32>
    %cst_14 = arith.constant 0.000000e+00 : f32
    %22 = vector.broadcast %cst_14 : f32 to vector<2x32xf32>
    %cst_15 = arith.constant dense<0.000000e+00> : vector<2x32xf32>
    %23 = tpu.matmul %22, %4, %cst_15 {dimension_numbers = #tpu.dot_dimension_numbers<[1], [0], [0], [1], [0, 0, 1, 1], [], []>} : vector<2x32xf32>, vector<32x32xf32>, vector<2x32xf32> -> vector<2x32xf32>
    %cst_16 = arith.constant dense<0.000000e+00> : vector<2x32xf32>
    %24 = tpu.matmul %22, %5, %cst_16 {dimension_numbers = #tpu.dot_dimension_numbers<[1], [0], [0], [1], [0, 0, 1, 1], [], []>} : vector<2x32xf32>, vector<32x32xf32>, vector<2x32xf32> -> vector<2x32xf32>
    %cst_17 = arith.constant dense<0.000000e+00> : vector<2x32xf32>
    %25 = tpu.matmul %22, %6, %cst_17 {dimension_numbers = #tpu.dot_dimension_numbers<[1], [0], [0], [1], [0, 0, 1, 1], [], []>} : vector<2x32xf32>, vector<32x32xf32>, vector<2x32xf32> -> vector<2x32xf32>
    %26 = vector.extract_strided_slice %13 {offsets = [0, 0], sizes = [2, 32], strides = [1, 1]} : vector<16x32xf32> to vector<2x32xf32>
    %27 = arith.addf %26, %23 : vector<2x32xf32>
    %cst_18 = arith.constant 5.000000e-01 : f32
    %28 = vector.broadcast %cst_18 : f32 to vector<2x32xf32>
    %29 = arith.mulf %28, %27 : vector<2x32xf32>
    %30 = math.tanh %29 : vector<2x32xf32>
    %cst_19 = arith.constant 5.000000e-01 : f32
    %31 = vector.broadcast %cst_19 : f32 to vector<2x32xf32>
    %32 = arith.mulf %31, %30 : vector<2x32xf32>
    %cst_20 = arith.constant 5.000000e-01 : f32
    %33 = vector.broadcast %cst_20 : f32 to vector<2x32xf32>
    %34 = arith.addf %32, %33 : vector<2x32xf32>
    %35 = vector.extract_strided_slice %16 {offsets = [0, 0], sizes = [2, 32], strides = [1, 1]} : vector<16x32xf32> to vector<2x32xf32>
    %36 = arith.addf %35, %24 : vector<2x32xf32>
    %cst_21 = arith.constant 5.000000e-01 : f32
    %37 = vector.broadcast %cst_21 : f32 to vector<2x32xf32>
    %38 = arith.mulf %37, %36 : vector<2x32xf32>
    %39 = math.tanh %38 : vector<2x32xf32>
    %cst_22 = arith.constant 5.000000e-01 : f32
    %40 = vector.broadcast %cst_22 : f32 to vector<2x32xf32>
    %41 = arith.mulf %40, %39 : vector<2x32xf32>
    %cst_23 = arith.constant 5.000000e-01 : f32
    %42 = vector.broadcast %cst_23 : f32 to vector<2x32xf32>
    %43 = arith.addf %41, %42 : vector<2x32xf32>
    %44 = vector.extract_strided_slice %19 {offsets = [0, 0], sizes = [2, 32], strides = [1, 1]} : vector<16x32xf32> to vector<2x32xf32>
    %45 = arith.addf %25, %21 : vector<2x32xf32>
    %46 = arith.mulf %34, %45 : vector<2x32xf32>
    %47 = arith.addf %44, %46 : vector<2x32xf32>
    %48 = math.tanh %47 : vector<2x32xf32>
    %cst_24 = arith.constant 1.000000e+00 : f32
    %49 = vector.broadcast %cst_24 : f32 to vector<2x32xf32>
    %50 = arith.subf %49, %43 : vector<2x32xf32>
    %51 = arith.mulf %50, %48 : vector<2x32xf32>
    %52 = arith.mulf %43, %22 : vector<2x32xf32>
    %53 = arith.addf %51, %52 : vector<2x32xf32>
    %c0_25 = arith.constant 0 : index
    %c0_26 = arith.constant 0 : index
    %54 = vector.load %arg3[%c0_25, %c0_26] : memref<16x32xf32, #tpu.memory_space<vmem>>, vector<2x32xf32>
    tpu.vector_store %arg3[%c0_25, %c0_26], %53 {strides = array<i32>} : memref<16x32xf32, #tpu.memory_space<vmem>>, vector<2x32xf32>,
    %cst_27 = arith.constant dense<0.000000e+00> : vector<2x32xf32>
    %55 = tpu.matmul %53, %4, %cst_27 {dimension_numbers = #tpu.dot_dimension_numbers<[1], [0], [0], [1], [0, 0, 1, 1], [], []>} : vector<2x32xf32>, vector<32x32xf32>, vector<2x32xf32> -> vector<2x32xf32>
    %cst_28 = arith.constant dense<0.000000e+00> : vector<2x32xf32>
    %56 = tpu.matmul %53, %5, %cst_28 {dimension_numbers = #tpu.dot_dimension_numbers<[1], [0], [0], [1], [0, 0, 1, 1], [], []>} : vector<2x32xf32>, vector<32x32xf32>, vector<2x32xf32> -> vector<2x32xf32>
    %cst_29 = arith.constant dense<0.000000e+00> : vector<2x32xf32>
    %57 = tpu.matmul %53, %6, %cst_29 {dimension_numbers = #tpu.dot_dimension_numbers<[1], [0], [0], [1], [0, 0, 1, 1], [], []>} : vector<2x32xf32>, vector<32x32xf32>, vector<2x32xf32> -> vector<2x32xf32>
    %58 = vector.extract_strided_slice %13 {offsets = [2, 0], sizes = [2, 32], strides = [1, 1]} : vector<16x32xf32> to vector<2x32xf32>
    %59 = arith.addf %58, %55 : vector<2x32xf32>
    %cst_30 = arith.constant 5.000000e-01 : f32
    %60 = vector.broadcast %cst_30 : f32 to vector<2x32xf32>
    %61 = arith.mulf %60, %59 : vector<2x32xf32>
    %62 = math.tanh %61 : vector<2x32xf32>
    %cst_31 = arith.constant 5.000000e-01 : f32
    %63 = vector.broadcast %cst_31 : f32 to vector<2x32xf32>
    %64 = arith.mulf %63, %62 : vector<2x32xf32>
    %cst_32 = arith.constant 5.000000e-01 : f32
    %65 = vector.broadcast %cst_32 : f32 to vector<2x32xf32>
    %66 = arith.addf %64, %65 : vector<2x32xf32>
    %67 = vector.extract_strided_slice %16 {offsets = [2, 0], sizes = [2, 32], strides = [1, 1]} : vector<16x32xf32> to vector<2x32xf32>
    %68 = arith.addf %67, %56 : vector<2x32xf32>
    %cst_33 = arith.constant 5.000000e-01 : f32
    %69 = vector.broadcast %cst_33 : f32 to vector<2x32xf32>
    %70 = arith.mulf %69, %68 : vector<2x32xf32>
    %71 = math.tanh %70 : vector<2x32xf32>
    %cst_34 = arith.constant 5.000000e-01 : f32
    %72 = vector.broadcast %cst_34 : f32 to vector<2x32xf32>
    %73 = arith.mulf %72, %71 : vector<2x32xf32>
    %cst_35 = arith.constant 5.000000e-01 : f32
    %74 = vector.broadcast %cst_35 : f32 to vector<2x32xf32>
    %75 = arith.addf %73, %74 : vector<2x32xf32>
    %76 = vector.extract_strided_slice %19 {offsets = [2, 0], sizes = [2, 32], strides = [1, 1]} : vector<16x32xf32> to vector<2x32xf32>
    %77 = arith.addf %57, %21 : vector<2x32xf32>
    %78 = arith.mulf %66, %77 : vector<2x32xf32>
    %79 = arith.addf %76, %78 : vector<2x32xf32>
    %80 = math.tanh %79 : vector<2x32xf32>
    %cst_36 = arith.constant 1.000000e+00 : f32
    %81 = vector.broadcast %cst_36 : f32 to vector<2x32xf32>
    %82 = arith.subf %81, %75 : vector<2x32xf32>
    %83 = arith.mulf %82, %80 : vector<2x32xf32>
    %84 = arith.mulf %75, %53 : vector<2x32xf32>
    %85 = arith.addf %83, %84 : vector<2x32xf32>
    %c2 = arith.constant 2 : index
    %c0_37 = arith.constant 0 : index
    %86 = vector.load %arg3[%c2, %c0_37] : memref<16x32xf32, #tpu.memory_space<vmem>>, vector<2x32xf32>
    tpu.vector_store %arg3[%c2, %c0_37], %85 {strides = array<i32>} : memref<16x32xf32, #tpu.memory_space<vmem>>, vector<2x32xf32>,
    %cst_38 = arith.constant dense<0.000000e+00> : vector<2x32xf32>
    %87 = tpu.matmul %85, %4, %cst_38 {dimension_numbers = #tpu.dot_dimension_numbers<[1], [0], [0], [1], [0, 0, 1, 1], [], []>} : vector<2x32xf32>, vector<32x32xf32>, vector<2x32xf32> -> vector<2x32xf32>
    %cst_39 = arith.constant dense<0.000000e+00> : vector<2x32xf32>
    %88 = tpu.matmul %85, %5, %cst_39 {dimension_numbers = #tpu.dot_dimension_numbers<[1], [0], [0], [1], [0, 0, 1, 1], [], []>} : vector<2x32xf32>, vector<32x32xf32>, vector<2x32xf32> -> vector<2x32xf32>
    %cst_40 = arith.constant dense<0.000000e+00> : vector<2x32xf32>
    %89 = tpu.matmul %85, %6, %cst_40 {dimension_numbers = #tpu.dot_dimension_numbers<[1], [0], [0], [1], [0, 0, 1, 1], [], []>} : vector<2x32xf32>, vector<32x32xf32>, vector<2x32xf32> -> vector<2x32xf32>
    %90 = vector.extract_strided_slice %13 {offsets = [4, 0], sizes = [2, 32], strides = [1, 1]} : vector<16x32xf32> to vector<2x32xf32>
    %91 = arith.addf %90, %87 : vector<2x32xf32>
    %cst_41 = arith.constant 5.000000e-01 : f32
    %92 = vector.broadcast %cst_41 : f32 to vector<2x32xf32>
    %93 = arith.mulf %92, %91 : vector<2x32xf32>
    %94 = math.tanh %93 : vector<2x32xf32>
    %cst_42 = arith.constant 5.000000e-01 : f32
    %95 = vector.broadcast %cst_42 : f32 to vector<2x32xf32>
    %96 = arith.mulf %95, %94 : vector<2x32xf32>
    %cst_43 = arith.constant 5.000000e-01 : f32
    %97 = vector.broadcast %cst_43 : f32 to vector<2x32xf32>
    %98 = arith.addf %96, %97 : vector<2x32xf32>
    %99 = vector.extract_strided_slice %16 {offsets = [4, 0], sizes = [2, 32], strides = [1, 1]} : vector<16x32xf32> to vector<2x32xf32>
    %100 = arith.addf %99, %88 : vector<2x32xf32>
    %cst_44 = arith.constant 5.000000e-01 : f32
    %101 = vector.broadcast %cst_44 : f32 to vector<2x32xf32>
    %102 = arith.mulf %101, %100 : vector<2x32xf32>
    %103 = math.tanh %102 : vector<2x32xf32>
    %cst_45 = arith.constant 5.000000e-01 : f32
    %104 = vector.broadcast %cst_45 : f32 to vector<2x32xf32>
    %105 = arith.mulf %104, %103 : vector<2x32xf32>
    %cst_46 = arith.constant 5.000000e-01 : f32
    %106 = vector.broadcast %cst_46 : f32 to vector<2x32xf32>
    %107 = arith.addf %105, %106 : vector<2x32xf32>
    %108 = vector.extract_strided_slice %19 {offsets = [4, 0], sizes = [2, 32], strides = [1, 1]} : vector<16x32xf32> to vector<2x32xf32>
    %109 = arith.addf %89, %21 : vector<2x32xf32>
    %110 = arith.mulf %98, %109 : vector<2x32xf32>
    %111 = arith.addf %108, %110 : vector<2x32xf32>
    %112 = math.tanh %111 : vector<2x32xf32>
    %cst_47 = arith.constant 1.000000e+00 : f32
    %113 = vector.broadcast %cst_47 : f32 to vector<2x32xf32>
    %114 = arith.subf %113, %107 : vector<2x32xf32>
    %115 = arith.mulf %114, %112 : vector<2x32xf32>
    %116 = arith.mulf %107, %85 : vector<2x32xf32>
    %117 = arith.addf %115, %116 : vector<2x32xf32>
    %c4 = arith.constant 4 : index
    %c0_48 = arith.constant 0 : index
    %118 = vector.load %arg3[%c4, %c0_48] : memref<16x32xf32, #tpu.memory_space<vmem>>, vector<2x32xf32>
    tpu.vector_store %arg3[%c4, %c0_48], %117 {strides = array<i32>} : memref<16x32xf32, #tpu.memory_space<vmem>>, vector<2x32xf32>,
    %cst_49 = arith.constant dense<0.000000e+00> : vector<2x32xf32>
    %119 = tpu.matmul %117, %4, %cst_49 {dimension_numbers = #tpu.dot_dimension_numbers<[1], [0], [0], [1], [0, 0, 1, 1], [], []>} : vector<2x32xf32>, vector<32x32xf32>, vector<2x32xf32> -> vector<2x32xf32>
    %cst_50 = arith.constant dense<0.000000e+00> : vector<2x32xf32>
    %120 = tpu.matmul %117, %5, %cst_50 {dimension_numbers = #tpu.dot_dimension_numbers<[1], [0], [0], [1], [0, 0, 1, 1], [], []>} : vector<2x32xf32>, vector<32x32xf32>, vector<2x32xf32> -> vector<2x32xf32>
    %cst_51 = arith.constant dense<0.000000e+00> : vector<2x32xf32>
    %121 = tpu.matmul %117, %6, %cst_51 {dimension_numbers = #tpu.dot_dimension_numbers<[1], [0], [0], [1], [0, 0, 1, 1], [], []>} : vector<2x32xf32>, vector<32x32xf32>, vector<2x32xf32> -> vector<2x32xf32>
    %122 = vector.extract_strided_slice %13 {offsets = [6, 0], sizes = [2, 32], strides = [1, 1]} : vector<16x32xf32> to vector<2x32xf32>
    %123 = arith.addf %122, %119 : vector<2x32xf32>
    %cst_52 = arith.constant 5.000000e-01 : f32
    %124 = vector.broadcast %cst_52 : f32 to vector<2x32xf32>
    %125 = arith.mulf %124, %123 : vector<2x32xf32>
    %126 = math.tanh %125 : vector<2x32xf32>
    %cst_53 = arith.constant 5.000000e-01 : f32
    %127 = vector.broadcast %cst_53 : f32 to vector<2x32xf32>
    %128 = arith.mulf %127, %126 : vector<2x32xf32>
    %cst_54 = arith.constant 5.000000e-01 : f32
    %129 = vector.broadcast %cst_54 : f32 to vector<2x32xf32>
    %130 = arith.addf %128, %129 : vector<2x32xf32>
    %131 = vector.extract_strided_slice %16 {offsets = [6, 0], sizes = [2, 32], strides = [1, 1]} : vector<16x32xf32> to vector<2x32xf32>
    %132 = arith.addf %131, %120 : vector<2x32xf32>
    %cst_55 = arith.constant 5.000000e-01 : f32
    %133 = vector.broadcast %cst_55 : f32 to vector<2x32xf32>
    %134 = arith.mulf %133, %132 : vector<2x32xf32>
    %135 = math.tanh %134 : vector<2x32xf32>
    %cst_56 = arith.constant 5.000000e-01 : f32
    %136 = vector.broadcast %cst_56 : f32 to vector<2x32xf32>
    %137 = arith.mulf %136, %135 : vector<2x32xf32>
    %cst_57 = arith.constant 5.000000e-01 : f32
    %138 = vector.broadcast %cst_57 : f32 to vector<2x32xf32>
    %139 = arith.addf %137, %138 : vector<2x32xf32>
    %140 = vector.extract_strided_slice %19 {offsets = [6, 0], sizes = [2, 32], strides = [1, 1]} : vector<16x32xf32> to vector<2x32xf32>
    %141 = arith.addf %121, %21 : vector<2x32xf32>
    %142 = arith.mulf %130, %141 : vector<2x32xf32>
    %143 = arith.addf %140, %142 : vector<2x32xf32>
    %144 = math.tanh %143 : vector<2x32xf32>
    %cst_58 = arith.constant 1.000000e+00 : f32
    %145 = vector.broadcast %cst_58 : f32 to vector<2x32xf32>
    %146 = arith.subf %145, %139 : vector<2x32xf32>
    %147 = arith.mulf %146, %144 : vector<2x32xf32>
    %148 = arith.mulf %139, %117 : vector<2x32xf32>
    %149 = arith.addf %147, %148 : vector<2x32xf32>
    %c6 = arith.constant 6 : index
    %c0_59 = arith.constant 0 : index
    %150 = vector.load %arg3[%c6, %c0_59] : memref<16x32xf32, #tpu.memory_space<vmem>>, vector<2x32xf32>
    tpu.vector_store %arg3[%c6, %c0_59], %149 {strides = array<i32>} : memref<16x32xf32, #tpu.memory_space<vmem>>, vector<2x32xf32>,
    %cst_60 = arith.constant dense<0.000000e+00> : vector<2x32xf32>
    %151 = tpu.matmul %149, %4, %cst_60 {dimension_numbers = #tpu.dot_dimension_numbers<[1], [0], [0], [1], [0, 0, 1, 1], [], []>} : vector<2x32xf32>, vector<32x32xf32>, vector<2x32xf32> -> vector<2x32xf32>
    %cst_61 = arith.constant dense<0.000000e+00> : vector<2x32xf32>
    %152 = tpu.matmul %149, %5, %cst_61 {dimension_numbers = #tpu.dot_dimension_numbers<[1], [0], [0], [1], [0, 0, 1, 1], [], []>} : vector<2x32xf32>, vector<32x32xf32>, vector<2x32xf32> -> vector<2x32xf32>
    %cst_62 = arith.constant dense<0.000000e+00> : vector<2x32xf32>
    %153 = tpu.matmul %149, %6, %cst_62 {dimension_numbers = #tpu.dot_dimension_numbers<[1], [0], [0], [1], [0, 0, 1, 1], [], []>} : vector<2x32xf32>, vector<32x32xf32>, vector<2x32xf32> -> vector<2x32xf32>
    %154 = vector.extract_strided_slice %13 {offsets = [8, 0], sizes = [2, 32], strides = [1, 1]} : vector<16x32xf32> to vector<2x32xf32>
    %155 = arith.addf %154, %151 : vector<2x32xf32>
    %cst_63 = arith.constant 5.000000e-01 : f32
    %156 = vector.broadcast %cst_63 : f32 to vector<2x32xf32>
    %157 = arith.mulf %156, %155 : vector<2x32xf32>
    %158 = math.tanh %157 : vector<2x32xf32>
    %cst_64 = arith.constant 5.000000e-01 : f32
    %159 = vector.broadcast %cst_64 : f32 to vector<2x32xf32>
    %160 = arith.mulf %159, %158 : vector<2x32xf32>
    %cst_65 = arith.constant 5.000000e-01 : f32
    %161 = vector.broadcast %cst_65 : f32 to vector<2x32xf32>
    %162 = arith.addf %160, %161 : vector<2x32xf32>
    %163 = vector.extract_strided_slice %16 {offsets = [8, 0], sizes = [2, 32], strides = [1, 1]} : vector<16x32xf32> to vector<2x32xf32>
    %164 = arith.addf %163, %152 : vector<2x32xf32>
    %cst_66 = arith.constant 5.000000e-01 : f32
    %165 = vector.broadcast %cst_66 : f32 to vector<2x32xf32>
    %166 = arith.mulf %165, %164 : vector<2x32xf32>
    %167 = math.tanh %166 : vector<2x32xf32>
    %cst_67 = arith.constant 5.000000e-01 : f32
    %168 = vector.broadcast %cst_67 : f32 to vector<2x32xf32>
    %169 = arith.mulf %168, %167 : vector<2x32xf32>
    %cst_68 = arith.constant 5.000000e-01 : f32
    %170 = vector.broadcast %cst_68 : f32 to vector<2x32xf32>
    %171 = arith.addf %169, %170 : vector<2x32xf32>
    %172 = vector.extract_strided_slice %19 {offsets = [8, 0], sizes = [2, 32], strides = [1, 1]} : vector<16x32xf32> to vector<2x32xf32>
    %173 = arith.addf %153, %21 : vector<2x32xf32>
    %174 = arith.mulf %162, %173 : vector<2x32xf32>
    %175 = arith.addf %172, %174 : vector<2x32xf32>
    %176 = math.tanh %175 : vector<2x32xf32>
    %cst_69 = arith.constant 1.000000e+00 : f32
    %177 = vector.broadcast %cst_69 : f32 to vector<2x32xf32>
    %178 = arith.subf %177, %171 : vector<2x32xf32>
    %179 = arith.mulf %178, %176 : vector<2x32xf32>
    %180 = arith.mulf %171, %149 : vector<2x32xf32>
    %181 = arith.addf %179, %180 : vector<2x32xf32>
    %c8 = arith.constant 8 : index
    %c0_70 = arith.constant 0 : index
    %182 = vector.load %arg3[%c8, %c0_70] : memref<16x32xf32, #tpu.memory_space<vmem>>, vector<2x32xf32>
    tpu.vector_store %arg3[%c8, %c0_70], %181 {strides = array<i32>} : memref<16x32xf32, #tpu.memory_space<vmem>>, vector<2x32xf32>,
    %cst_71 = arith.constant dense<0.000000e+00> : vector<2x32xf32>
    %183 = tpu.matmul %181, %4, %cst_71 {dimension_numbers = #tpu.dot_dimension_numbers<[1], [0], [0], [1], [0, 0, 1, 1], [], []>} : vector<2x32xf32>, vector<32x32xf32>, vector<2x32xf32> -> vector<2x32xf32>
    %cst_72 = arith.constant dense<0.000000e+00> : vector<2x32xf32>
    %184 = tpu.matmul %181, %5, %cst_72 {dimension_numbers = #tpu.dot_dimension_numbers<[1], [0], [0], [1], [0, 0, 1, 1], [], []>} : vector<2x32xf32>, vector<32x32xf32>, vector<2x32xf32> -> vector<2x32xf32>
    %cst_73 = arith.constant dense<0.000000e+00> : vector<2x32xf32>
    %185 = tpu.matmul %181, %6, %cst_73 {dimension_numbers = #tpu.dot_dimension_numbers<[1], [0], [0], [1], [0, 0, 1, 1], [], []>} : vector<2x32xf32>, vector<32x32xf32>, vector<2x32xf32> -> vector<2x32xf32>
    %186 = vector.extract_strided_slice %13 {offsets = [10, 0], sizes = [2, 32], strides = [1, 1]} : vector<16x32xf32> to vector<2x32xf32>
    %187 = arith.addf %186, %183 : vector<2x32xf32>
    %cst_74 = arith.constant 5.000000e-01 : f32
    %188 = vector.broadcast %cst_74 : f32 to vector<2x32xf32>
    %189 = arith.mulf %188, %187 : vector<2x32xf32>
    %190 = math.tanh %189 : vector<2x32xf32>
    %cst_75 = arith.constant 5.000000e-01 : f32
    %191 = vector.broadcast %cst_75 : f32 to vector<2x32xf32>
    %192 = arith.mulf %191, %190 : vector<2x32xf32>
    %cst_76 = arith.constant 5.000000e-01 : f32
    %193 = vector.broadcast %cst_76 : f32 to vector<2x32xf32>
    %194 = arith.addf %192, %193 : vector<2x32xf32>
    %195 = vector.extract_strided_slice %16 {offsets = [10, 0], sizes = [2, 32], strides = [1, 1]} : vector<16x32xf32> to vector<2x32xf32>
    %196 = arith.addf %195, %184 : vector<2x32xf32>
    %cst_77 = arith.constant 5.000000e-01 : f32
    %197 = vector.broadcast %cst_77 : f32 to vector<2x32xf32>
    %198 = arith.mulf %197, %196 : vector<2x32xf32>
    %199 = math.tanh %198 : vector<2x32xf32>
    %cst_78 = arith.constant 5.000000e-01 : f32
    %200 = vector.broadcast %cst_78 : f32 to vector<2x32xf32>
    %201 = arith.mulf %200, %199 : vector<2x32xf32>
    %cst_79 = arith.constant 5.000000e-01 : f32
    %202 = vector.broadcast %cst_79 : f32 to vector<2x32xf32>
    %203 = arith.addf %201, %202 : vector<2x32xf32>
    %204 = vector.extract_strided_slice %19 {offsets = [10, 0], sizes = [2, 32], strides = [1, 1]} : vector<16x32xf32> to vector<2x32xf32>
    %205 = arith.addf %185, %21 : vector<2x32xf32>
    %206 = arith.mulf %194, %205 : vector<2x32xf32>
    %207 = arith.addf %204, %206 : vector<2x32xf32>
    %208 = math.tanh %207 : vector<2x32xf32>
    %cst_80 = arith.constant 1.000000e+00 : f32
    %209 = vector.broadcast %cst_80 : f32 to vector<2x32xf32>
    %210 = arith.subf %209, %203 : vector<2x32xf32>
    %211 = arith.mulf %210, %208 : vector<2x32xf32>
    %212 = arith.mulf %203, %181 : vector<2x32xf32>
    %213 = arith.addf %211, %212 : vector<2x32xf32>
    %c10 = arith.constant 10 : index
    %c0_81 = arith.constant 0 : index
    %214 = vector.load %arg3[%c10, %c0_81] : memref<16x32xf32, #tpu.memory_space<vmem>>, vector<2x32xf32>
    tpu.vector_store %arg3[%c10, %c0_81], %213 {strides = array<i32>} : memref<16x32xf32, #tpu.memory_space<vmem>>, vector<2x32xf32>,
    %cst_82 = arith.constant dense<0.000000e+00> : vector<2x32xf32>
    %215 = tpu.matmul %213, %4, %cst_82 {dimension_numbers = #tpu.dot_dimension_numbers<[1], [0], [0], [1], [0, 0, 1, 1], [], []>} : vector<2x32xf32>, vector<32x32xf32>, vector<2x32xf32> -> vector<2x32xf32>
    %cst_83 = arith.constant dense<0.000000e+00> : vector<2x32xf32>
    %216 = tpu.matmul %213, %5, %cst_83 {dimension_numbers = #tpu.dot_dimension_numbers<[1], [0], [0], [1], [0, 0, 1, 1], [], []>} : vector<2x32xf32>, vector<32x32xf32>, vector<2x32xf32> -> vector<2x32xf32>
    %cst_84 = arith.constant dense<0.000000e+00> : vector<2x32xf32>
    %217 = tpu.matmul %213, %6, %cst_84 {dimension_numbers = #tpu.dot_dimension_numbers<[1], [0], [0], [1], [0, 0, 1, 1], [], []>} : vector<2x32xf32>, vector<32x32xf32>, vector<2x32xf32> -> vector<2x32xf32>
    %218 = vector.extract_strided_slice %13 {offsets = [12, 0], sizes = [2, 32], strides = [1, 1]} : vector<16x32xf32> to vector<2x32xf32>
    %219 = arith.addf %218, %215 : vector<2x32xf32>
    %cst_85 = arith.constant 5.000000e-01 : f32
    %220 = vector.broadcast %cst_85 : f32 to vector<2x32xf32>
    %221 = arith.mulf %220, %219 : vector<2x32xf32>
    %222 = math.tanh %221 : vector<2x32xf32>
    %cst_86 = arith.constant 5.000000e-01 : f32
    %223 = vector.broadcast %cst_86 : f32 to vector<2x32xf32>
    %224 = arith.mulf %223, %222 : vector<2x32xf32>
    %cst_87 = arith.constant 5.000000e-01 : f32
    %225 = vector.broadcast %cst_87 : f32 to vector<2x32xf32>
    %226 = arith.addf %224, %225 : vector<2x32xf32>
    %227 = vector.extract_strided_slice %16 {offsets = [12, 0], sizes = [2, 32], strides = [1, 1]} : vector<16x32xf32> to vector<2x32xf32>
    %228 = arith.addf %227, %216 : vector<2x32xf32>
    %cst_88 = arith.constant 5.000000e-01 : f32
    %229 = vector.broadcast %cst_88 : f32 to vector<2x32xf32>
    %230 = arith.mulf %229, %228 : vector<2x32xf32>
    %231 = math.tanh %230 : vector<2x32xf32>
    %cst_89 = arith.constant 5.000000e-01 : f32
    %232 = vector.broadcast %cst_89 : f32 to vector<2x32xf32>
    %233 = arith.mulf %232, %231 : vector<2x32xf32>
    %cst_90 = arith.constant 5.000000e-01 : f32
    %234 = vector.broadcast %cst_90 : f32 to vector<2x32xf32>
    %235 = arith.addf %233, %234 : vector<2x32xf32>
    %236 = vector.extract_strided_slice %19 {offsets = [12, 0], sizes = [2, 32], strides = [1, 1]} : vector<16x32xf32> to vector<2x32xf32>
    %237 = arith.addf %217, %21 : vector<2x32xf32>
    %238 = arith.mulf %226, %237 : vector<2x32xf32>
    %239 = arith.addf %236, %238 : vector<2x32xf32>
    %240 = math.tanh %239 : vector<2x32xf32>
    %cst_91 = arith.constant 1.000000e+00 : f32
    %241 = vector.broadcast %cst_91 : f32 to vector<2x32xf32>
    %242 = arith.subf %241, %235 : vector<2x32xf32>
    %243 = arith.mulf %242, %240 : vector<2x32xf32>
    %244 = arith.mulf %235, %213 : vector<2x32xf32>
    %245 = arith.addf %243, %244 : vector<2x32xf32>
    %c12 = arith.constant 12 : index
    %c0_92 = arith.constant 0 : index
    %246 = vector.load %arg3[%c12, %c0_92] : memref<16x32xf32, #tpu.memory_space<vmem>>, vector<2x32xf32>
    tpu.vector_store %arg3[%c12, %c0_92], %245 {strides = array<i32>} : memref<16x32xf32, #tpu.memory_space<vmem>>, vector<2x32xf32>,
    %cst_93 = arith.constant dense<0.000000e+00> : vector<2x32xf32>
    %247 = tpu.matmul %245, %4, %cst_93 {dimension_numbers = #tpu.dot_dimension_numbers<[1], [0], [0], [1], [0, 0, 1, 1], [], []>} : vector<2x32xf32>, vector<32x32xf32>, vector<2x32xf32> -> vector<2x32xf32>
    %cst_94 = arith.constant dense<0.000000e+00> : vector<2x32xf32>
    %248 = tpu.matmul %245, %5, %cst_94 {dimension_numbers = #tpu.dot_dimension_numbers<[1], [0], [0], [1], [0, 0, 1, 1], [], []>} : vector<2x32xf32>, vector<32x32xf32>, vector<2x32xf32> -> vector<2x32xf32>
    %cst_95 = arith.constant dense<0.000000e+00> : vector<2x32xf32>
    %249 = tpu.matmul %245, %6, %cst_95 {dimension_numbers = #tpu.dot_dimension_numbers<[1], [0], [0], [1], [0, 0, 1, 1], [], []>} : vector<2x32xf32>, vector<32x32xf32>, vector<2x32xf32> -> vector<2x32xf32>
    %250 = vector.extract_strided_slice %13 {offsets = [14, 0], sizes = [2, 32], strides = [1, 1]} : vector<16x32xf32> to vector<2x32xf32>
    %251 = arith.addf %250, %247 : vector<2x32xf32>
    %cst_96 = arith.constant 5.000000e-01 : f32
    %252 = vector.broadcast %cst_96 : f32 to vector<2x32xf32>
    %253 = arith.mulf %252, %251 : vector<2x32xf32>
    %254 = math.tanh %253 : vector<2x32xf32>
    %cst_97 = arith.constant 5.000000e-01 : f32
    %255 = vector.broadcast %cst_97 : f32 to vector<2x32xf32>
    %256 = arith.mulf %255, %254 : vector<2x32xf32>
    %cst_98 = arith.constant 5.000000e-01 : f32
    %257 = vector.broadcast %cst_98 : f32 to vector<2x32xf32>
    %258 = arith.addf %256, %257 : vector<2x32xf32>
    %259 = vector.extract_strided_slice %16 {offsets = [14, 0], sizes = [2, 32], strides = [1, 1]} : vector<16x32xf32> to vector<2x32xf32>
    %260 = arith.addf %259, %248 : vector<2x32xf32>
    %cst_99 = arith.constant 5.000000e-01 : f32
    %261 = vector.broadcast %cst_99 : f32 to vector<2x32xf32>
    %262 = arith.mulf %261, %260 : vector<2x32xf32>
    %263 = math.tanh %262 : vector<2x32xf32>
    %cst_100 = arith.constant 5.000000e-01 : f32
    %264 = vector.broadcast %cst_100 : f32 to vector<2x32xf32>
    %265 = arith.mulf %264, %263 : vector<2x32xf32>
    %cst_101 = arith.constant 5.000000e-01 : f32
    %266 = vector.broadcast %cst_101 : f32 to vector<2x32xf32>
    %267 = arith.addf %265, %266 : vector<2x32xf32>
    %268 = vector.extract_strided_slice %19 {offsets = [14, 0], sizes = [2, 32], strides = [1, 1]} : vector<16x32xf32> to vector<2x32xf32>
    %269 = arith.addf %249, %21 : vector<2x32xf32>
    %270 = arith.mulf %258, %269 : vector<2x32xf32>
    %271 = arith.addf %268, %270 : vector<2x32xf32>
    %272 = math.tanh %271 : vector<2x32xf32>
    %cst_102 = arith.constant 1.000000e+00 : f32
    %273 = vector.broadcast %cst_102 : f32 to vector<2x32xf32>
    %274 = arith.subf %273, %267 : vector<2x32xf32>
    %275 = arith.mulf %274, %272 : vector<2x32xf32>
    %276 = arith.mulf %267, %245 : vector<2x32xf32>
    %277 = arith.addf %275, %276 : vector<2x32xf32>
    %c14 = arith.constant 14 : index
    %c0_103 = arith.constant 0 : index
    %278 = vector.load %arg3[%c14, %c0_103] : memref<16x32xf32, #tpu.memory_space<vmem>>, vector<2x32xf32>
    tpu.vector_store %arg3[%c14, %c0_103], %277 {strides = array<i32>} : memref<16x32xf32, #tpu.memory_space<vmem>>, vector<2x32xf32>,
    %c0_104 = arith.constant 0 : index
    %c0_105 = arith.constant 0 : index
    %279 = vector.load %arg3[%c0_104, %c0_105] : memref<16x32xf32, #tpu.memory_space<vmem>>, vector<16x32xf32>
    %c152 = arith.constant 152 : index
    %c0_106 = arith.constant 0 : index
    %280 = vector.load %arg1[%c152, %c0_106] : memref<744x128xf32, #tpu.memory_space<vmem>>, vector<32x32xf32>
    %c184 = arith.constant 184 : index
    %c0_107 = arith.constant 0 : index
    %281 = vector.load %arg1[%c184, %c0_107] : memref<744x128xf32, #tpu.memory_space<vmem>>, vector<32x32xf32>
    %c216 = arith.constant 216 : index
    %c0_108 = arith.constant 0 : index
    %282 = vector.load %arg1[%c216, %c0_108] : memref<744x128xf32, #tpu.memory_space<vmem>>, vector<32x32xf32>
    %c248 = arith.constant 248 : index
    %c0_109 = arith.constant 0 : index
    %283 = vector.load %arg1[%c248, %c0_109] : memref<744x128xf32, #tpu.memory_space<vmem>>, vector<32x32xf32>
    %c280 = arith.constant 280 : index
    %c0_110 = arith.constant 0 : index
    %284 = vector.load %arg1[%c280, %c0_110] : memref<744x128xf32, #tpu.memory_space<vmem>>, vector<32x32xf32>
    %c312 = arith.constant 312 : index
    %c0_111 = arith.constant 0 : index
    %285 = vector.load %arg1[%c312, %c0_111] : memref<744x128xf32, #tpu.memory_space<vmem>>, vector<32x32xf32>
    %c344 = arith.constant 344 : index
    %c0_112 = arith.constant 0 : index
    %286 = vector.load %arg1[%c344, %c0_112] : memref<744x128xf32, #tpu.memory_space<vmem>>, vector<1x32xf32>
    %c345 = arith.constant 345 : index
    %c0_113 = arith.constant 0 : index
    %287 = vector.load %arg1[%c345, %c0_113] : memref<744x128xf32, #tpu.memory_space<vmem>>, vector<1x32xf32>
    %c346 = arith.constant 346 : index
    %c0_114 = arith.constant 0 : index
    %288 = vector.load %arg1[%c346, %c0_114] : memref<744x128xf32, #tpu.memory_space<vmem>>, vector<1x32xf32>
    %c347 = arith.constant 347 : index
    %c0_115 = arith.constant 0 : index
    %289 = vector.load %arg1[%c347, %c0_115] : memref<744x128xf32, #tpu.memory_space<vmem>>, vector<1x32xf32>
    %cst_116 = arith.constant dense<0.000000e+00> : vector<16x32xf32>
    %290 = tpu.matmul %279, %280, %cst_116 {dimension_numbers = #tpu.dot_dimension_numbers<[1], [0], [0], [1], [0, 0, 1, 1], [], []>} : vector<16x32xf32>, vector<32x32xf32>, vector<16x32xf32> -> vector<16x32xf32>
    %291 = vector.broadcast %286 : vector<1x32xf32> to vector<16x32xf32>
    %292 = arith.addf %290, %291 : vector<16x32xf32>
    %cst_117 = arith.constant dense<0.000000e+00> : vector<16x32xf32>
    %293 = tpu.matmul %279, %281, %cst_117 {dimension_numbers = #tpu.dot_dimension_numbers<[1], [0], [0], [1], [0, 0, 1, 1], [], []>} : vector<16x32xf32>, vector<32x32xf32>, vector<16x32xf32> -> vector<16x32xf32>
    %294 = vector.broadcast %287 : vector<1x32xf32> to vector<16x32xf32>
    %295 = arith.addf %293, %294 : vector<16x32xf32>
    %cst_118 = arith.constant dense<0.000000e+00> : vector<16x32xf32>
    %296 = tpu.matmul %279, %282, %cst_118 {dimension_numbers = #tpu.dot_dimension_numbers<[1], [0], [0], [1], [0, 0, 1, 1], [], []>} : vector<16x32xf32>, vector<32x32xf32>, vector<16x32xf32> -> vector<16x32xf32>
    %297 = vector.broadcast %288 : vector<1x32xf32> to vector<16x32xf32>
    %298 = arith.addf %296, %297 : vector<16x32xf32>
    %299 = vector.shape_cast %289 : vector<1x32xf32> to vector<1x32xf32>
    %300 = vector.broadcast %299 : vector<1x32xf32> to vector<2x32xf32>
    %cst_119 = arith.constant 0.000000e+00 : f32
    %301 = vector.broadcast %cst_119 : f32 to vector<2x32xf32>
    %cst_120 = arith.constant dense<0.000000e+00> : vector<2x32xf32>
    %302 = tpu.matmul %301, %283, %cst_120 {dimension_numbers = #tpu.dot_dimension_numbers<[1], [0], [0], [1], [0, 0, 1, 1], [], []>} : vector<2x32xf32>, vector<32x32xf32>, vector<2x32xf32> -> vector<2x32xf32>
    %cst_121 = arith.constant dense<0.000000e+00> : vector<2x32xf32>
    %303 = tpu.matmul %301, %284, %cst_121 {dimension_numbers = #tpu.dot_dimension_numbers<[1], [0], [0], [1], [0, 0, 1, 1], [], []>} : vector<2x32xf32>, vector<32x32xf32>, vector<2x32xf32> -> vector<2x32xf32>
    %cst_122 = arith.constant dense<0.000000e+00> : vector<2x32xf32>
    %304 = tpu.matmul %301, %285, %cst_122 {dimension_numbers = #tpu.dot_dimension_numbers<[1], [0], [0], [1], [0, 0, 1, 1], [], []>} : vector<2x32xf32>, vector<32x32xf32>, vector<2x32xf32> -> vector<2x32xf32>
    %305 = vector.extract_strided_slice %292 {offsets = [0, 0], sizes = [2, 32], strides = [1, 1]} : vector<16x32xf32> to vector<2x32xf32>
    %306 = arith.addf %305, %302 : vector<2x32xf32>
    %cst_123 = arith.constant 5.000000e-01 : f32
    %307 = vector.broadcast %cst_123 : f32 to vector<2x32xf32>
    %308 = arith.mulf %307, %306 : vector<2x32xf32>
    %309 = math.tanh %308 : vector<2x32xf32>
    %cst_124 = arith.constant 5.000000e-01 : f32
    %310 = vector.broadcast %cst_124 : f32 to vector<2x32xf32>
    %311 = arith.mulf %310, %309 : vector<2x32xf32>
    %cst_125 = arith.constant 5.000000e-01 : f32
    %312 = vector.broadcast %cst_125 : f32 to vector<2x32xf32>
    %313 = arith.addf %311, %312 : vector<2x32xf32>
    %314 = vector.extract_strided_slice %295 {offsets = [0, 0], sizes = [2, 32], strides = [1, 1]} : vector<16x32xf32> to vector<2x32xf32>
    %315 = arith.addf %314, %303 : vector<2x32xf32>
    %cst_126 = arith.constant 5.000000e-01 : f32
    %316 = vector.broadcast %cst_126 : f32 to vector<2x32xf32>
    %317 = arith.mulf %316, %315 : vector<2x32xf32>
    %318 = math.tanh %317 : vector<2x32xf32>
    %cst_127 = arith.constant 5.000000e-01 : f32
    %319 = vector.broadcast %cst_127 : f32 to vector<2x32xf32>
    %320 = arith.mulf %319, %318 : vector<2x32xf32>
    %cst_128 = arith.constant 5.000000e-01 : f32
    %321 = vector.broadcast %cst_128 : f32 to vector<2x32xf32>
    %322 = arith.addf %320, %321 : vector<2x32xf32>
    %323 = vector.extract_strided_slice %298 {offsets = [0, 0], sizes = [2, 32], strides = [1, 1]} : vector<16x32xf32> to vector<2x32xf32>
    %324 = arith.addf %304, %300 : vector<2x32xf32>
    %325 = arith.mulf %313, %324 : vector<2x32xf32>
    %326 = arith.addf %323, %325 : vector<2x32xf32>
    %327 = math.tanh %326 : vector<2x32xf32>
    %cst_129 = arith.constant 1.000000e+00 : f32
    %328 = vector.broadcast %cst_129 : f32 to vector<2x32xf32>
    %329 = arith.subf %328, %322 : vector<2x32xf32>
    %330 = arith.mulf %329, %327 : vector<2x32xf32>
    %331 = arith.mulf %322, %301 : vector<2x32xf32>
    %332 = arith.addf %330, %331 : vector<2x32xf32>
    %c0_130 = arith.constant 0 : index
    %c0_131 = arith.constant 0 : index
    %333 = vector.load %arg3[%c0_130, %c0_131] : memref<16x32xf32, #tpu.memory_space<vmem>>, vector<2x32xf32>
    tpu.vector_store %arg3[%c0_130, %c0_131], %332 {strides = array<i32>} : memref<16x32xf32, #tpu.memory_space<vmem>>, vector<2x32xf32>,
    %cst_132 = arith.constant dense<0.000000e+00> : vector<2x32xf32>
    %334 = tpu.matmul %332, %283, %cst_132 {dimension_numbers = #tpu.dot_dimension_numbers<[1], [0], [0], [1], [0, 0, 1, 1], [], []>} : vector<2x32xf32>, vector<32x32xf32>, vector<2x32xf32> -> vector<2x32xf32>
    %cst_133 = arith.constant dense<0.000000e+00> : vector<2x32xf32>
    %335 = tpu.matmul %332, %284, %cst_133 {dimension_numbers = #tpu.dot_dimension_numbers<[1], [0], [0], [1], [0, 0, 1, 1], [], []>} : vector<2x32xf32>, vector<32x32xf32>, vector<2x32xf32> -> vector<2x32xf32>
    %cst_134 = arith.constant dense<0.000000e+00> : vector<2x32xf32>
    %336 = tpu.matmul %332, %285, %cst_134 {dimension_numbers = #tpu.dot_dimension_numbers<[1], [0], [0], [1], [0, 0, 1, 1], [], []>} : vector<2x32xf32>, vector<32x32xf32>, vector<2x32xf32> -> vector<2x32xf32>
    %337 = vector.extract_strided_slice %292 {offsets = [2, 0], sizes = [2, 32], strides = [1, 1]} : vector<16x32xf32> to vector<2x32xf32>
    %338 = arith.addf %337, %334 : vector<2x32xf32>
    %cst_135 = arith.constant 5.000000e-01 : f32
    %339 = vector.broadcast %cst_135 : f32 to vector<2x32xf32>
    %340 = arith.mulf %339, %338 : vector<2x32xf32>
    %341 = math.tanh %340 : vector<2x32xf32>
    %cst_136 = arith.constant 5.000000e-01 : f32
    %342 = vector.broadcast %cst_136 : f32 to vector<2x32xf32>
    %343 = arith.mulf %342, %341 : vector<2x32xf32>
    %cst_137 = arith.constant 5.000000e-01 : f32
    %344 = vector.broadcast %cst_137 : f32 to vector<2x32xf32>
    %345 = arith.addf %343, %344 : vector<2x32xf32>
    %346 = vector.extract_strided_slice %295 {offsets = [2, 0], sizes = [2, 32], strides = [1, 1]} : vector<16x32xf32> to vector<2x32xf32>
    %347 = arith.addf %346, %335 : vector<2x32xf32>
    %cst_138 = arith.constant 5.000000e-01 : f32
    %348 = vector.broadcast %cst_138 : f32 to vector<2x32xf32>
    %349 = arith.mulf %348, %347 : vector<2x32xf32>
    %350 = math.tanh %349 : vector<2x32xf32>
    %cst_139 = arith.constant 5.000000e-01 : f32
    %351 = vector.broadcast %cst_139 : f32 to vector<2x32xf32>
    %352 = arith.mulf %351, %350 : vector<2x32xf32>
    %cst_140 = arith.constant 5.000000e-01 : f32
    %353 = vector.broadcast %cst_140 : f32 to vector<2x32xf32>
    %354 = arith.addf %352, %353 : vector<2x32xf32>
    %355 = vector.extract_strided_slice %298 {offsets = [2, 0], sizes = [2, 32], strides = [1, 1]} : vector<16x32xf32> to vector<2x32xf32>
    %356 = arith.addf %336, %300 : vector<2x32xf32>
    %357 = arith.mulf %345, %356 : vector<2x32xf32>
    %358 = arith.addf %355, %357 : vector<2x32xf32>
    %359 = math.tanh %358 : vector<2x32xf32>
    %cst_141 = arith.constant 1.000000e+00 : f32
    %360 = vector.broadcast %cst_141 : f32 to vector<2x32xf32>
    %361 = arith.subf %360, %354 : vector<2x32xf32>
    %362 = arith.mulf %361, %359 : vector<2x32xf32>
    %363 = arith.mulf %354, %332 : vector<2x32xf32>
    %364 = arith.addf %362, %363 : vector<2x32xf32>
    %c2_142 = arith.constant 2 : index
    %c0_143 = arith.constant 0 : index
    %365 = vector.load %arg3[%c2_142, %c0_143] : memref<16x32xf32, #tpu.memory_space<vmem>>, vector<2x32xf32>
    tpu.vector_store %arg3[%c2_142, %c0_143], %364 {strides = array<i32>} : memref<16x32xf32, #tpu.memory_space<vmem>>, vector<2x32xf32>,
    %cst_144 = arith.constant dense<0.000000e+00> : vector<2x32xf32>
    %366 = tpu.matmul %364, %283, %cst_144 {dimension_numbers = #tpu.dot_dimension_numbers<[1], [0], [0], [1], [0, 0, 1, 1], [], []>} : vector<2x32xf32>, vector<32x32xf32>, vector<2x32xf32> -> vector<2x32xf32>
    %cst_145 = arith.constant dense<0.000000e+00> : vector<2x32xf32>
    %367 = tpu.matmul %364, %284, %cst_145 {dimension_numbers = #tpu.dot_dimension_numbers<[1], [0], [0], [1], [0, 0, 1, 1], [], []>} : vector<2x32xf32>, vector<32x32xf32>, vector<2x32xf32> -> vector<2x32xf32>
    %cst_146 = arith.constant dense<0.000000e+00> : vector<2x32xf32>
    %368 = tpu.matmul %364, %285, %cst_146 {dimension_numbers = #tpu.dot_dimension_numbers<[1], [0], [0], [1], [0, 0, 1, 1], [], []>} : vector<2x32xf32>, vector<32x32xf32>, vector<2x32xf32> -> vector<2x32xf32>
    %369 = vector.extract_strided_slice %292 {offsets = [4, 0], sizes = [2, 32], strides = [1, 1]} : vector<16x32xf32> to vector<2x32xf32>
    %370 = arith.addf %369, %366 : vector<2x32xf32>
    %cst_147 = arith.constant 5.000000e-01 : f32
    %371 = vector.broadcast %cst_147 : f32 to vector<2x32xf32>
    %372 = arith.mulf %371, %370 : vector<2x32xf32>
    %373 = math.tanh %372 : vector<2x32xf32>
    %cst_148 = arith.constant 5.000000e-01 : f32
    %374 = vector.broadcast %cst_148 : f32 to vector<2x32xf32>
    %375 = arith.mulf %374, %373 : vector<2x32xf32>
    %cst_149 = arith.constant 5.000000e-01 : f32
    %376 = vector.broadcast %cst_149 : f32 to vector<2x32xf32>
    %377 = arith.addf %375, %376 : vector<2x32xf32>
    %378 = vector.extract_strided_slice %295 {offsets = [4, 0], sizes = [2, 32], strides = [1, 1]} : vector<16x32xf32> to vector<2x32xf32>
    %379 = arith.addf %378, %367 : vector<2x32xf32>
    %cst_150 = arith.constant 5.000000e-01 : f32
    %380 = vector.broadcast %cst_150 : f32 to vector<2x32xf32>
    %381 = arith.mulf %380, %379 : vector<2x32xf32>
    %382 = math.tanh %381 : vector<2x32xf32>
    %cst_151 = arith.constant 5.000000e-01 : f32
    %383 = vector.broadcast %cst_151 : f32 to vector<2x32xf32>
    %384 = arith.mulf %383, %382 : vector<2x32xf32>
    %cst_152 = arith.constant 5.000000e-01 : f32
    %385 = vector.broadcast %cst_152 : f32 to vector<2x32xf32>
    %386 = arith.addf %384, %385 : vector<2x32xf32>
    %387 = vector.extract_strided_slice %298 {offsets = [4, 0], sizes = [2, 32], strides = [1, 1]} : vector<16x32xf32> to vector<2x32xf32>
    %388 = arith.addf %368, %300 : vector<2x32xf32>
    %389 = arith.mulf %377, %388 : vector<2x32xf32>
    %390 = arith.addf %387, %389 : vector<2x32xf32>
    %391 = math.tanh %390 : vector<2x32xf32>
    %cst_153 = arith.constant 1.000000e+00 : f32
    %392 = vector.broadcast %cst_153 : f32 to vector<2x32xf32>
    %393 = arith.subf %392, %386 : vector<2x32xf32>
    %394 = arith.mulf %393, %391 : vector<2x32xf32>
    %395 = arith.mulf %386, %364 : vector<2x32xf32>
    %396 = arith.addf %394, %395 : vector<2x32xf32>
    %c4_154 = arith.constant 4 : index
    %c0_155 = arith.constant 0 : index
    %397 = vector.load %arg3[%c4_154, %c0_155] : memref<16x32xf32, #tpu.memory_space<vmem>>, vector<2x32xf32>
    tpu.vector_store %arg3[%c4_154, %c0_155], %396 {strides = array<i32>} : memref<16x32xf32, #tpu.memory_space<vmem>>, vector<2x32xf32>,
    %cst_156 = arith.constant dense<0.000000e+00> : vector<2x32xf32>
    %398 = tpu.matmul %396, %283, %cst_156 {dimension_numbers = #tpu.dot_dimension_numbers<[1], [0], [0], [1], [0, 0, 1, 1], [], []>} : vector<2x32xf32>, vector<32x32xf32>, vector<2x32xf32> -> vector<2x32xf32>
    %cst_157 = arith.constant dense<0.000000e+00> : vector<2x32xf32>
    %399 = tpu.matmul %396, %284, %cst_157 {dimension_numbers = #tpu.dot_dimension_numbers<[1], [0], [0], [1], [0, 0, 1, 1], [], []>} : vector<2x32xf32>, vector<32x32xf32>, vector<2x32xf32> -> vector<2x32xf32>
    %cst_158 = arith.constant dense<0.000000e+00> : vector<2x32xf32>
    %400 = tpu.matmul %396, %285, %cst_158 {dimension_numbers = #tpu.dot_dimension_numbers<[1], [0], [0], [1], [0, 0, 1, 1], [], []>} : vector<2x32xf32>, vector<32x32xf32>, vector<2x32xf32> -> vector<2x32xf32>
    %401 = vector.extract_strided_slice %292 {offsets = [6, 0], sizes = [2, 32], strides = [1, 1]} : vector<16x32xf32> to vector<2x32xf32>
    %402 = arith.addf %401, %398 : vector<2x32xf32>
    %cst_159 = arith.constant 5.000000e-01 : f32
    %403 = vector.broadcast %cst_159 : f32 to vector<2x32xf32>
    %404 = arith.mulf %403, %402 : vector<2x32xf32>
    %405 = math.tanh %404 : vector<2x32xf32>
    %cst_160 = arith.constant 5.000000e-01 : f32
    %406 = vector.broadcast %cst_160 : f32 to vector<2x32xf32>
    %407 = arith.mulf %406, %405 : vector<2x32xf32>
    %cst_161 = arith.constant 5.000000e-01 : f32
    %408 = vector.broadcast %cst_161 : f32 to vector<2x32xf32>
    %409 = arith.addf %407, %408 : vector<2x32xf32>
    %410 = vector.extract_strided_slice %295 {offsets = [6, 0], sizes = [2, 32], strides = [1, 1]} : vector<16x32xf32> to vector<2x32xf32>
    %411 = arith.addf %410, %399 : vector<2x32xf32>
    %cst_162 = arith.constant 5.000000e-01 : f32
    %412 = vector.broadcast %cst_162 : f32 to vector<2x32xf32>
    %413 = arith.mulf %412, %411 : vector<2x32xf32>
    %414 = math.tanh %413 : vector<2x32xf32>
    %cst_163 = arith.constant 5.000000e-01 : f32
    %415 = vector.broadcast %cst_163 : f32 to vector<2x32xf32>
    %416 = arith.mulf %415, %414 : vector<2x32xf32>
    %cst_164 = arith.constant 5.000000e-01 : f32
    %417 = vector.broadcast %cst_164 : f32 to vector<2x32xf32>
    %418 = arith.addf %416, %417 : vector<2x32xf32>
    %419 = vector.extract_strided_slice %298 {offsets = [6, 0], sizes = [2, 32], strides = [1, 1]} : vector<16x32xf32> to vector<2x32xf32>
    %420 = arith.addf %400, %300 : vector<2x32xf32>
    %421 = arith.mulf %409, %420 : vector<2x32xf32>
    %422 = arith.addf %419, %421 : vector<2x32xf32>
    %423 = math.tanh %422 : vector<2x32xf32>
    %cst_165 = arith.constant 1.000000e+00 : f32
    %424 = vector.broadcast %cst_165 : f32 to vector<2x32xf32>
    %425 = arith.subf %424, %418 : vector<2x32xf32>
    %426 = arith.mulf %425, %423 : vector<2x32xf32>
    %427 = arith.mulf %418, %396 : vector<2x32xf32>
    %428 = arith.addf %426, %427 : vector<2x32xf32>
    %c6_166 = arith.constant 6 : index
    %c0_167 = arith.constant 0 : index
    %429 = vector.load %arg3[%c6_166, %c0_167] : memref<16x32xf32, #tpu.memory_space<vmem>>, vector<2x32xf32>
    tpu.vector_store %arg3[%c6_166, %c0_167], %428 {strides = array<i32>} : memref<16x32xf32, #tpu.memory_space<vmem>>, vector<2x32xf32>,
    %cst_168 = arith.constant dense<0.000000e+00> : vector<2x32xf32>
    %430 = tpu.matmul %428, %283, %cst_168 {dimension_numbers = #tpu.dot_dimension_numbers<[1], [0], [0], [1], [0, 0, 1, 1], [], []>} : vector<2x32xf32>, vector<32x32xf32>, vector<2x32xf32> -> vector<2x32xf32>
    %cst_169 = arith.constant dense<0.000000e+00> : vector<2x32xf32>
    %431 = tpu.matmul %428, %284, %cst_169 {dimension_numbers = #tpu.dot_dimension_numbers<[1], [0], [0], [1], [0, 0, 1, 1], [], []>} : vector<2x32xf32>, vector<32x32xf32>, vector<2x32xf32> -> vector<2x32xf32>
    %cst_170 = arith.constant dense<0.000000e+00> : vector<2x32xf32>
    %432 = tpu.matmul %428, %285, %cst_170 {dimension_numbers = #tpu.dot_dimension_numbers<[1], [0], [0], [1], [0, 0, 1, 1], [], []>} : vector<2x32xf32>, vector<32x32xf32>, vector<2x32xf32> -> vector<2x32xf32>
    %433 = vector.extract_strided_slice %292 {offsets = [8, 0], sizes = [2, 32], strides = [1, 1]} : vector<16x32xf32> to vector<2x32xf32>
    %434 = arith.addf %433, %430 : vector<2x32xf32>
    %cst_171 = arith.constant 5.000000e-01 : f32
    %435 = vector.broadcast %cst_171 : f32 to vector<2x32xf32>
    %436 = arith.mulf %435, %434 : vector<2x32xf32>
    %437 = math.tanh %436 : vector<2x32xf32>
    %cst_172 = arith.constant 5.000000e-01 : f32
    %438 = vector.broadcast %cst_172 : f32 to vector<2x32xf32>
    %439 = arith.mulf %438, %437 : vector<2x32xf32>
    %cst_173 = arith.constant 5.000000e-01 : f32
    %440 = vector.broadcast %cst_173 : f32 to vector<2x32xf32>
    %441 = arith.addf %439, %440 : vector<2x32xf32>
    %442 = vector.extract_strided_slice %295 {offsets = [8, 0], sizes = [2, 32], strides = [1, 1]} : vector<16x32xf32> to vector<2x32xf32>
    %443 = arith.addf %442, %431 : vector<2x32xf32>
    %cst_174 = arith.constant 5.000000e-01 : f32
    %444 = vector.broadcast %cst_174 : f32 to vector<2x32xf32>
    %445 = arith.mulf %444, %443 : vector<2x32xf32>
    %446 = math.tanh %445 : vector<2x32xf32>
    %cst_175 = arith.constant 5.000000e-01 : f32
    %447 = vector.broadcast %cst_175 : f32 to vector<2x32xf32>
    %448 = arith.mulf %447, %446 : vector<2x32xf32>
    %cst_176 = arith.constant 5.000000e-01 : f32
    %449 = vector.broadcast %cst_176 : f32 to vector<2x32xf32>
    %450 = arith.addf %448, %449 : vector<2x32xf32>
    %451 = vector.extract_strided_slice %298 {offsets = [8, 0], sizes = [2, 32], strides = [1, 1]} : vector<16x32xf32> to vector<2x32xf32>
    %452 = arith.addf %432, %300 : vector<2x32xf32>
    %453 = arith.mulf %441, %452 : vector<2x32xf32>
    %454 = arith.addf %451, %453 : vector<2x32xf32>
    %455 = math.tanh %454 : vector<2x32xf32>
    %cst_177 = arith.constant 1.000000e+00 : f32
    %456 = vector.broadcast %cst_177 : f32 to vector<2x32xf32>
    %457 = arith.subf %456, %450 : vector<2x32xf32>
    %458 = arith.mulf %457, %455 : vector<2x32xf32>
    %459 = arith.mulf %450, %428 : vector<2x32xf32>
    %460 = arith.addf %458, %459 : vector<2x32xf32>
    %c8_178 = arith.constant 8 : index
    %c0_179 = arith.constant 0 : index
    %461 = vector.load %arg3[%c8_178, %c0_179] : memref<16x32xf32, #tpu.memory_space<vmem>>, vector<2x32xf32>
    tpu.vector_store %arg3[%c8_178, %c0_179], %460 {strides = array<i32>} : memref<16x32xf32, #tpu.memory_space<vmem>>, vector<2x32xf32>,
    %cst_180 = arith.constant dense<0.000000e+00> : vector<2x32xf32>
    %462 = tpu.matmul %460, %283, %cst_180 {dimension_numbers = #tpu.dot_dimension_numbers<[1], [0], [0], [1], [0, 0, 1, 1], [], []>} : vector<2x32xf32>, vector<32x32xf32>, vector<2x32xf32> -> vector<2x32xf32>
    %cst_181 = arith.constant dense<0.000000e+00> : vector<2x32xf32>
    %463 = tpu.matmul %460, %284, %cst_181 {dimension_numbers = #tpu.dot_dimension_numbers<[1], [0], [0], [1], [0, 0, 1, 1], [], []>} : vector<2x32xf32>, vector<32x32xf32>, vector<2x32xf32> -> vector<2x32xf32>
    %cst_182 = arith.constant dense<0.000000e+00> : vector<2x32xf32>
    %464 = tpu.matmul %460, %285, %cst_182 {dimension_numbers = #tpu.dot_dimension_numbers<[1], [0], [0], [1], [0, 0, 1, 1], [], []>} : vector<2x32xf32>, vector<32x32xf32>, vector<2x32xf32> -> vector<2x32xf32>
    %465 = vector.extract_strided_slice %292 {offsets = [10, 0], sizes = [2, 32], strides = [1, 1]} : vector<16x32xf32> to vector<2x32xf32>
    %466 = arith.addf %465, %462 : vector<2x32xf32>
    %cst_183 = arith.constant 5.000000e-01 : f32
    %467 = vector.broadcast %cst_183 : f32 to vector<2x32xf32>
    %468 = arith.mulf %467, %466 : vector<2x32xf32>
    %469 = math.tanh %468 : vector<2x32xf32>
    %cst_184 = arith.constant 5.000000e-01 : f32
    %470 = vector.broadcast %cst_184 : f32 to vector<2x32xf32>
    %471 = arith.mulf %470, %469 : vector<2x32xf32>
    %cst_185 = arith.constant 5.000000e-01 : f32
    %472 = vector.broadcast %cst_185 : f32 to vector<2x32xf32>
    %473 = arith.addf %471, %472 : vector<2x32xf32>
    %474 = vector.extract_strided_slice %295 {offsets = [10, 0], sizes = [2, 32], strides = [1, 1]} : vector<16x32xf32> to vector<2x32xf32>
    %475 = arith.addf %474, %463 : vector<2x32xf32>
    %cst_186 = arith.constant 5.000000e-01 : f32
    %476 = vector.broadcast %cst_186 : f32 to vector<2x32xf32>
    %477 = arith.mulf %476, %475 : vector<2x32xf32>
    %478 = math.tanh %477 : vector<2x32xf32>
    %cst_187 = arith.constant 5.000000e-01 : f32
    %479 = vector.broadcast %cst_187 : f32 to vector<2x32xf32>
    %480 = arith.mulf %479, %478 : vector<2x32xf32>
    %cst_188 = arith.constant 5.000000e-01 : f32
    %481 = vector.broadcast %cst_188 : f32 to vector<2x32xf32>
    %482 = arith.addf %480, %481 : vector<2x32xf32>
    %483 = vector.extract_strided_slice %298 {offsets = [10, 0], sizes = [2, 32], strides = [1, 1]} : vector<16x32xf32> to vector<2x32xf32>
    %484 = arith.addf %464, %300 : vector<2x32xf32>
    %485 = arith.mulf %473, %484 : vector<2x32xf32>
    %486 = arith.addf %483, %485 : vector<2x32xf32>
    %487 = math.tanh %486 : vector<2x32xf32>
    %cst_189 = arith.constant 1.000000e+00 : f32
    %488 = vector.broadcast %cst_189 : f32 to vector<2x32xf32>
    %489 = arith.subf %488, %482 : vector<2x32xf32>
    %490 = arith.mulf %489, %487 : vector<2x32xf32>
    %491 = arith.mulf %482, %460 : vector<2x32xf32>
    %492 = arith.addf %490, %491 : vector<2x32xf32>
    %c10_190 = arith.constant 10 : index
    %c0_191 = arith.constant 0 : index
    %493 = vector.load %arg3[%c10_190, %c0_191] : memref<16x32xf32, #tpu.memory_space<vmem>>, vector<2x32xf32>
    tpu.vector_store %arg3[%c10_190, %c0_191], %492 {strides = array<i32>} : memref<16x32xf32, #tpu.memory_space<vmem>>, vector<2x32xf32>,
    %cst_192 = arith.constant dense<0.000000e+00> : vector<2x32xf32>
    %494 = tpu.matmul %492, %283, %cst_192 {dimension_numbers = #tpu.dot_dimension_numbers<[1], [0], [0], [1], [0, 0, 1, 1], [], []>} : vector<2x32xf32>, vector<32x32xf32>, vector<2x32xf32> -> vector<2x32xf32>
    %cst_193 = arith.constant dense<0.000000e+00> : vector<2x32xf32>
    %495 = tpu.matmul %492, %284, %cst_193 {dimension_numbers = #tpu.dot_dimension_numbers<[1], [0], [0], [1], [0, 0, 1, 1], [], []>} : vector<2x32xf32>, vector<32x32xf32>, vector<2x32xf32> -> vector<2x32xf32>
    %cst_194 = arith.constant dense<0.000000e+00> : vector<2x32xf32>
    %496 = tpu.matmul %492, %285, %cst_194 {dimension_numbers = #tpu.dot_dimension_numbers<[1], [0], [0], [1], [0, 0, 1, 1], [], []>} : vector<2x32xf32>, vector<32x32xf32>, vector<2x32xf32> -> vector<2x32xf32>
    %497 = vector.extract_strided_slice %292 {offsets = [12, 0], sizes = [2, 32], strides = [1, 1]} : vector<16x32xf32> to vector<2x32xf32>
    %498 = arith.addf %497, %494 : vector<2x32xf32>
    %cst_195 = arith.constant 5.000000e-01 : f32
    %499 = vector.broadcast %cst_195 : f32 to vector<2x32xf32>
    %500 = arith.mulf %499, %498 : vector<2x32xf32>
    %501 = math.tanh %500 : vector<2x32xf32>
    %cst_196 = arith.constant 5.000000e-01 : f32
    %502 = vector.broadcast %cst_196 : f32 to vector<2x32xf32>
    %503 = arith.mulf %502, %501 : vector<2x32xf32>
    %cst_197 = arith.constant 5.000000e-01 : f32
    %504 = vector.broadcast %cst_197 : f32 to vector<2x32xf32>
    %505 = arith.addf %503, %504 : vector<2x32xf32>
    %506 = vector.extract_strided_slice %295 {offsets = [12, 0], sizes = [2, 32], strides = [1, 1]} : vector<16x32xf32> to vector<2x32xf32>
    %507 = arith.addf %506, %495 : vector<2x32xf32>
    %cst_198 = arith.constant 5.000000e-01 : f32
    %508 = vector.broadcast %cst_198 : f32 to vector<2x32xf32>
    %509 = arith.mulf %508, %507 : vector<2x32xf32>
    %510 = math.tanh %509 : vector<2x32xf32>
    %cst_199 = arith.constant 5.000000e-01 : f32
    %511 = vector.broadcast %cst_199 : f32 to vector<2x32xf32>
    %512 = arith.mulf %511, %510 : vector<2x32xf32>
    %cst_200 = arith.constant 5.000000e-01 : f32
    %513 = vector.broadcast %cst_200 : f32 to vector<2x32xf32>
    %514 = arith.addf %512, %513 : vector<2x32xf32>
    %515 = vector.extract_strided_slice %298 {offsets = [12, 0], sizes = [2, 32], strides = [1, 1]} : vector<16x32xf32> to vector<2x32xf32>
    %516 = arith.addf %496, %300 : vector<2x32xf32>
    %517 = arith.mulf %505, %516 : vector<2x32xf32>
    %518 = arith.addf %515, %517 : vector<2x32xf32>
    %519 = math.tanh %518 : vector<2x32xf32>
    %cst_201 = arith.constant 1.000000e+00 : f32
    %520 = vector.broadcast %cst_201 : f32 to vector<2x32xf32>
    %521 = arith.subf %520, %514 : vector<2x32xf32>
    %522 = arith.mulf %521, %519 : vector<2x32xf32>
    %523 = arith.mulf %514, %492 : vector<2x32xf32>
    %524 = arith.addf %522, %523 : vector<2x32xf32>
    %c12_202 = arith.constant 12 : index
    %c0_203 = arith.constant 0 : index
    %525 = vector.load %arg3[%c12_202, %c0_203] : memref<16x32xf32, #tpu.memory_space<vmem>>, vector<2x32xf32>
    tpu.vector_store %arg3[%c12_202, %c0_203], %524 {strides = array<i32>} : memref<16x32xf32, #tpu.memory_space<vmem>>, vector<2x32xf32>,
    %cst_204 = arith.constant dense<0.000000e+00> : vector<2x32xf32>
    %526 = tpu.matmul %524, %283, %cst_204 {dimension_numbers = #tpu.dot_dimension_numbers<[1], [0], [0], [1], [0, 0, 1, 1], [], []>} : vector<2x32xf32>, vector<32x32xf32>, vector<2x32xf32> -> vector<2x32xf32>
    %cst_205 = arith.constant dense<0.000000e+00> : vector<2x32xf32>
    %527 = tpu.matmul %524, %284, %cst_205 {dimension_numbers = #tpu.dot_dimension_numbers<[1], [0], [0], [1], [0, 0, 1, 1], [], []>} : vector<2x32xf32>, vector<32x32xf32>, vector<2x32xf32> -> vector<2x32xf32>
    %cst_206 = arith.constant dense<0.000000e+00> : vector<2x32xf32>
    %528 = tpu.matmul %524, %285, %cst_206 {dimension_numbers = #tpu.dot_dimension_numbers<[1], [0], [0], [1], [0, 0, 1, 1], [], []>} : vector<2x32xf32>, vector<32x32xf32>, vector<2x32xf32> -> vector<2x32xf32>
    %529 = vector.extract_strided_slice %292 {offsets = [14, 0], sizes = [2, 32], strides = [1, 1]} : vector<16x32xf32> to vector<2x32xf32>
    %530 = arith.addf %529, %526 : vector<2x32xf32>
    %cst_207 = arith.constant 5.000000e-01 : f32
    %531 = vector.broadcast %cst_207 : f32 to vector<2x32xf32>
    %532 = arith.mulf %531, %530 : vector<2x32xf32>
    %533 = math.tanh %532 : vector<2x32xf32>
    %cst_208 = arith.constant 5.000000e-01 : f32
    %534 = vector.broadcast %cst_208 : f32 to vector<2x32xf32>
    %535 = arith.mulf %534, %533 : vector<2x32xf32>
    %cst_209 = arith.constant 5.000000e-01 : f32
    %536 = vector.broadcast %cst_209 : f32 to vector<2x32xf32>
    %537 = arith.addf %535, %536 : vector<2x32xf32>
    %538 = vector.extract_strided_slice %295 {offsets = [14, 0], sizes = [2, 32], strides = [1, 1]} : vector<16x32xf32> to vector<2x32xf32>
    %539 = arith.addf %538, %527 : vector<2x32xf32>
    %cst_210 = arith.constant 5.000000e-01 : f32
    %540 = vector.broadcast %cst_210 : f32 to vector<2x32xf32>
    %541 = arith.mulf %540, %539 : vector<2x32xf32>
    %542 = math.tanh %541 : vector<2x32xf32>
    %cst_211 = arith.constant 5.000000e-01 : f32
    %543 = vector.broadcast %cst_211 : f32 to vector<2x32xf32>
    %544 = arith.mulf %543, %542 : vector<2x32xf32>
    %cst_212 = arith.constant 5.000000e-01 : f32
    %545 = vector.broadcast %cst_212 : f32 to vector<2x32xf32>
    %546 = arith.addf %544, %545 : vector<2x32xf32>
    %547 = vector.extract_strided_slice %298 {offsets = [14, 0], sizes = [2, 32], strides = [1, 1]} : vector<16x32xf32> to vector<2x32xf32>
    %548 = arith.addf %528, %300 : vector<2x32xf32>
    %549 = arith.mulf %537, %548 : vector<2x32xf32>
    %550 = arith.addf %547, %549 : vector<2x32xf32>
    %551 = math.tanh %550 : vector<2x32xf32>
    %cst_213 = arith.constant 1.000000e+00 : f32
    %552 = vector.broadcast %cst_213 : f32 to vector<2x32xf32>
    %553 = arith.subf %552, %546 : vector<2x32xf32>
    %554 = arith.mulf %553, %551 : vector<2x32xf32>
    %555 = arith.mulf %546, %524 : vector<2x32xf32>
    %556 = arith.addf %554, %555 : vector<2x32xf32>
    %c14_214 = arith.constant 14 : index
    %c0_215 = arith.constant 0 : index
    %557 = vector.load %arg3[%c14_214, %c0_215] : memref<16x32xf32, #tpu.memory_space<vmem>>, vector<2x32xf32>
    tpu.vector_store %arg3[%c14_214, %c0_215], %556 {strides = array<i32>} : memref<16x32xf32, #tpu.memory_space<vmem>>, vector<2x32xf32>,
    %c0_216 = arith.constant 0 : index
    %c0_217 = arith.constant 0 : index
    %558 = vector.load %arg3[%c0_216, %c0_217] : memref<16x32xf32, #tpu.memory_space<vmem>>, vector<16x32xf32>
    %cst_218 = arith.constant 0.000000e+00 : f32
    %559 = vector.broadcast %cst_218 : f32 to vector<16x32xf32>
    %560 = arith.maximumf %558, %559 : vector<16x32xf32>
    %c352 = arith.constant 352 : index
    %c0_219 = arith.constant 0 : index
    %561 = vector.load %arg1[%c352, %c0_219] : memref<744x128xf32, #tpu.memory_space<vmem>>, vector<32x16xf32>
    %c384 = arith.constant 384 : index
    %c0_220 = arith.constant 0 : index
    %562 = vector.load %arg1[%c384, %c0_220] : memref<744x128xf32, #tpu.memory_space<vmem>>, vector<32x16xf32>
    %c416 = arith.constant 416 : index
    %c0_221 = arith.constant 0 : index
    %563 = vector.load %arg1[%c416, %c0_221] : memref<744x128xf32, #tpu.memory_space<vmem>>, vector<32x16xf32>
    %c448 = arith.constant 448 : index
    %c0_222 = arith.constant 0 : index
    %564 = vector.load %arg1[%c448, %c0_222] : memref<744x128xf32, #tpu.memory_space<vmem>>, vector<16x16xf32>
    %c464 = arith.constant 464 : index
    %c0_223 = arith.constant 0 : index
    %565 = vector.load %arg1[%c464, %c0_223] : memref<744x128xf32, #tpu.memory_space<vmem>>, vector<16x16xf32>
    %c480 = arith.constant 480 : index
    %c0_224 = arith.constant 0 : index
    %566 = vector.load %arg1[%c480, %c0_224] : memref<744x128xf32, #tpu.memory_space<vmem>>, vector<16x16xf32>
    %c496 = arith.constant 496 : index
    %c0_225 = arith.constant 0 : index
    %567 = vector.load %arg1[%c496, %c0_225] : memref<744x128xf32, #tpu.memory_space<vmem>>, vector<1x16xf32>
    %c497 = arith.constant 497 : index
    %c0_226 = arith.constant 0 : index
    %568 = vector.load %arg1[%c497, %c0_226] : memref<744x128xf32, #tpu.memory_space<vmem>>, vector<1x16xf32>
    %c498 = arith.constant 498 : index
    %c0_227 = arith.constant 0 : index
    %569 = vector.load %arg1[%c498, %c0_227] : memref<744x128xf32, #tpu.memory_space<vmem>>, vector<1x16xf32>
    %c499 = arith.constant 499 : index
    %c0_228 = arith.constant 0 : index
    %570 = vector.load %arg1[%c499, %c0_228] : memref<744x128xf32, #tpu.memory_space<vmem>>, vector<1x16xf32>
    %cst_229 = arith.constant dense<0.000000e+00> : vector<16x16xf32>
    %571 = tpu.matmul %560, %561, %cst_229 {dimension_numbers = #tpu.dot_dimension_numbers<[1], [0], [0], [1], [0, 0, 1, 1], [], []>} : vector<16x32xf32>, vector<32x16xf32>, vector<16x16xf32> -> vector<16x16xf32>
    %572 = vector.broadcast %567 : vector<1x16xf32> to vector<16x16xf32>
    %573 = arith.addf %571, %572 : vector<16x16xf32>
    %cst_230 = arith.constant dense<0.000000e+00> : vector<16x16xf32>
    %574 = tpu.matmul %560, %562, %cst_230 {dimension_numbers = #tpu.dot_dimension_numbers<[1], [0], [0], [1], [0, 0, 1, 1], [], []>} : vector<16x32xf32>, vector<32x16xf32>, vector<16x16xf32> -> vector<16x16xf32>
    %575 = vector.broadcast %568 : vector<1x16xf32> to vector<16x16xf32>
    %576 = arith.addf %574, %575 : vector<16x16xf32>
    %cst_231 = arith.constant dense<0.000000e+00> : vector<16x16xf32>
    %577 = tpu.matmul %560, %563, %cst_231 {dimension_numbers = #tpu.dot_dimension_numbers<[1], [0], [0], [1], [0, 0, 1, 1], [], []>} : vector<16x32xf32>, vector<32x16xf32>, vector<16x16xf32> -> vector<16x16xf32>
    %578 = vector.broadcast %569 : vector<1x16xf32> to vector<16x16xf32>
    %579 = arith.addf %577, %578 : vector<16x16xf32>
    %580 = vector.shape_cast %570 : vector<1x16xf32> to vector<1x16xf32>
    %581 = vector.broadcast %580 : vector<1x16xf32> to vector<2x16xf32>
    %cst_232 = arith.constant 0.000000e+00 : f32
    %582 = vector.broadcast %cst_232 : f32 to vector<2x16xf32>
    %cst_233 = arith.constant dense<0.000000e+00> : vector<2x16xf32>
    %583 = tpu.matmul %582, %564, %cst_233 {dimension_numbers = #tpu.dot_dimension_numbers<[1], [0], [0], [1], [0, 0, 1, 1], [], []>} : vector<2x16xf32>, vector<16x16xf32>, vector<2x16xf32> -> vector<2x16xf32>
    %cst_234 = arith.constant dense<0.000000e+00> : vector<2x16xf32>
    %584 = tpu.matmul %582, %565, %cst_234 {dimension_numbers = #tpu.dot_dimension_numbers<[1], [0], [0], [1], [0, 0, 1, 1], [], []>} : vector<2x16xf32>, vector<16x16xf32>, vector<2x16xf32> -> vector<2x16xf32>
    %cst_235 = arith.constant dense<0.000000e+00> : vector<2x16xf32>
    %585 = tpu.matmul %582, %566, %cst_235 {dimension_numbers = #tpu.dot_dimension_numbers<[1], [0], [0], [1], [0, 0, 1, 1], [], []>} : vector<2x16xf32>, vector<16x16xf32>, vector<2x16xf32> -> vector<2x16xf32>
    %586 = vector.extract_strided_slice %573 {offsets = [0, 0], sizes = [2, 16], strides = [1, 1]} : vector<16x16xf32> to vector<2x16xf32>
    %587 = arith.addf %586, %583 : vector<2x16xf32>
    %cst_236 = arith.constant 5.000000e-01 : f32
    %588 = vector.broadcast %cst_236 : f32 to vector<2x16xf32>
    %589 = arith.mulf %588, %587 : vector<2x16xf32>
    %590 = math.tanh %589 : vector<2x16xf32>
    %cst_237 = arith.constant 5.000000e-01 : f32
    %591 = vector.broadcast %cst_237 : f32 to vector<2x16xf32>
    %592 = arith.mulf %591, %590 : vector<2x16xf32>
    %cst_238 = arith.constant 5.000000e-01 : f32
    %593 = vector.broadcast %cst_238 : f32 to vector<2x16xf32>
    %594 = arith.addf %592, %593 : vector<2x16xf32>
    %595 = vector.extract_strided_slice %576 {offsets = [0, 0], sizes = [2, 16], strides = [1, 1]} : vector<16x16xf32> to vector<2x16xf32>
    %596 = arith.addf %595, %584 : vector<2x16xf32>
    %cst_239 = arith.constant 5.000000e-01 : f32
    %597 = vector.broadcast %cst_239 : f32 to vector<2x16xf32>
    %598 = arith.mulf %597, %596 : vector<2x16xf32>
    %599 = math.tanh %598 : vector<2x16xf32>
    %cst_240 = arith.constant 5.000000e-01 : f32
    %600 = vector.broadcast %cst_240 : f32 to vector<2x16xf32>
    %601 = arith.mulf %600, %599 : vector<2x16xf32>
    %cst_241 = arith.constant 5.000000e-01 : f32
    %602 = vector.broadcast %cst_241 : f32 to vector<2x16xf32>
    %603 = arith.addf %601, %602 : vector<2x16xf32>
    %604 = vector.extract_strided_slice %579 {offsets = [0, 0], sizes = [2, 16], strides = [1, 1]} : vector<16x16xf32> to vector<2x16xf32>
    %605 = arith.addf %585, %581 : vector<2x16xf32>
    %606 = arith.mulf %594, %605 : vector<2x16xf32>
    %607 = arith.addf %604, %606 : vector<2x16xf32>
    %608 = math.tanh %607 : vector<2x16xf32>
    %cst_242 = arith.constant 1.000000e+00 : f32
    %609 = vector.broadcast %cst_242 : f32 to vector<2x16xf32>
    %610 = arith.subf %609, %603 : vector<2x16xf32>
    %611 = arith.mulf %610, %608 : vector<2x16xf32>
    %612 = arith.mulf %603, %582 : vector<2x16xf32>
    %613 = arith.addf %611, %612 : vector<2x16xf32>
    %c0_243 = arith.constant 0 : index
    %c0_244 = arith.constant 0 : index
    %614 = vector.load %arg3[%c0_243, %c0_244] : memref<16x32xf32, #tpu.memory_space<vmem>>, vector<2x16xf32>
    tpu.vector_store %arg3[%c0_243, %c0_244], %613 {strides = array<i32>} : memref<16x32xf32, #tpu.memory_space<vmem>>, vector<2x16xf32>,
    %cst_245 = arith.constant dense<0.000000e+00> : vector<2x16xf32>
    %615 = tpu.matmul %613, %564, %cst_245 {dimension_numbers = #tpu.dot_dimension_numbers<[1], [0], [0], [1], [0, 0, 1, 1], [], []>} : vector<2x16xf32>, vector<16x16xf32>, vector<2x16xf32> -> vector<2x16xf32>
    %cst_246 = arith.constant dense<0.000000e+00> : vector<2x16xf32>
    %616 = tpu.matmul %613, %565, %cst_246 {dimension_numbers = #tpu.dot_dimension_numbers<[1], [0], [0], [1], [0, 0, 1, 1], [], []>} : vector<2x16xf32>, vector<16x16xf32>, vector<2x16xf32> -> vector<2x16xf32>
    %cst_247 = arith.constant dense<0.000000e+00> : vector<2x16xf32>
    %617 = tpu.matmul %613, %566, %cst_247 {dimension_numbers = #tpu.dot_dimension_numbers<[1], [0], [0], [1], [0, 0, 1, 1], [], []>} : vector<2x16xf32>, vector<16x16xf32>, vector<2x16xf32> -> vector<2x16xf32>
    %618 = vector.extract_strided_slice %573 {offsets = [2, 0], sizes = [2, 16], strides = [1, 1]} : vector<16x16xf32> to vector<2x16xf32>
    %619 = arith.addf %618, %615 : vector<2x16xf32>
    %cst_248 = arith.constant 5.000000e-01 : f32
    %620 = vector.broadcast %cst_248 : f32 to vector<2x16xf32>
    %621 = arith.mulf %620, %619 : vector<2x16xf32>
    %622 = math.tanh %621 : vector<2x16xf32>
    %cst_249 = arith.constant 5.000000e-01 : f32
    %623 = vector.broadcast %cst_249 : f32 to vector<2x16xf32>
    %624 = arith.mulf %623, %622 : vector<2x16xf32>
    %cst_250 = arith.constant 5.000000e-01 : f32
    %625 = vector.broadcast %cst_250 : f32 to vector<2x16xf32>
    %626 = arith.addf %624, %625 : vector<2x16xf32>
    %627 = vector.extract_strided_slice %576 {offsets = [2, 0], sizes = [2, 16], strides = [1, 1]} : vector<16x16xf32> to vector<2x16xf32>
    %628 = arith.addf %627, %616 : vector<2x16xf32>
    %cst_251 = arith.constant 5.000000e-01 : f32
    %629 = vector.broadcast %cst_251 : f32 to vector<2x16xf32>
    %630 = arith.mulf %629, %628 : vector<2x16xf32>
    %631 = math.tanh %630 : vector<2x16xf32>
    %cst_252 = arith.constant 5.000000e-01 : f32
    %632 = vector.broadcast %cst_252 : f32 to vector<2x16xf32>
    %633 = arith.mulf %632, %631 : vector<2x16xf32>
    %cst_253 = arith.constant 5.000000e-01 : f32
    %634 = vector.broadcast %cst_253 : f32 to vector<2x16xf32>
    %635 = arith.addf %633, %634 : vector<2x16xf32>
    %636 = vector.extract_strided_slice %579 {offsets = [2, 0], sizes = [2, 16], strides = [1, 1]} : vector<16x16xf32> to vector<2x16xf32>
    %637 = arith.addf %617, %581 : vector<2x16xf32>
    %638 = arith.mulf %626, %637 : vector<2x16xf32>
    %639 = arith.addf %636, %638 : vector<2x16xf32>
    %640 = math.tanh %639 : vector<2x16xf32>
    %cst_254 = arith.constant 1.000000e+00 : f32
    %641 = vector.broadcast %cst_254 : f32 to vector<2x16xf32>
    %642 = arith.subf %641, %635 : vector<2x16xf32>
    %643 = arith.mulf %642, %640 : vector<2x16xf32>
    %644 = arith.mulf %635, %613 : vector<2x16xf32>
    %645 = arith.addf %643, %644 : vector<2x16xf32>
    %c2_255 = arith.constant 2 : index
    %c0_256 = arith.constant 0 : index
    %646 = vector.load %arg3[%c2_255, %c0_256] : memref<16x32xf32, #tpu.memory_space<vmem>>, vector<2x16xf32>
    tpu.vector_store %arg3[%c2_255, %c0_256], %645 {strides = array<i32>} : memref<16x32xf32, #tpu.memory_space<vmem>>, vector<2x16xf32>,
    %cst_257 = arith.constant dense<0.000000e+00> : vector<2x16xf32>
    %647 = tpu.matmul %645, %564, %cst_257 {dimension_numbers = #tpu.dot_dimension_numbers<[1], [0], [0], [1], [0, 0, 1, 1], [], []>} : vector<2x16xf32>, vector<16x16xf32>, vector<2x16xf32> -> vector<2x16xf32>
    %cst_258 = arith.constant dense<0.000000e+00> : vector<2x16xf32>
    %648 = tpu.matmul %645, %565, %cst_258 {dimension_numbers = #tpu.dot_dimension_numbers<[1], [0], [0], [1], [0, 0, 1, 1], [], []>} : vector<2x16xf32>, vector<16x16xf32>, vector<2x16xf32> -> vector<2x16xf32>
    %cst_259 = arith.constant dense<0.000000e+00> : vector<2x16xf32>
    %649 = tpu.matmul %645, %566, %cst_259 {dimension_numbers = #tpu.dot_dimension_numbers<[1], [0], [0], [1], [0, 0, 1, 1], [], []>} : vector<2x16xf32>, vector<16x16xf32>, vector<2x16xf32> -> vector<2x16xf32>
    %650 = vector.extract_strided_slice %573 {offsets = [4, 0], sizes = [2, 16], strides = [1, 1]} : vector<16x16xf32> to vector<2x16xf32>
    %651 = arith.addf %650, %647 : vector<2x16xf32>
    %cst_260 = arith.constant 5.000000e-01 : f32
    %652 = vector.broadcast %cst_260 : f32 to vector<2x16xf32>
    %653 = arith.mulf %652, %651 : vector<2x16xf32>
    %654 = math.tanh %653 : vector<2x16xf32>
    %cst_261 = arith.constant 5.000000e-01 : f32
    %655 = vector.broadcast %cst_261 : f32 to vector<2x16xf32>
    %656 = arith.mulf %655, %654 : vector<2x16xf32>
    %cst_262 = arith.constant 5.000000e-01 : f32
    %657 = vector.broadcast %cst_262 : f32 to vector<2x16xf32>
    %658 = arith.addf %656, %657 : vector<2x16xf32>
    %659 = vector.extract_strided_slice %576 {offsets = [4, 0], sizes = [2, 16], strides = [1, 1]} : vector<16x16xf32> to vector<2x16xf32>
    %660 = arith.addf %659, %648 : vector<2x16xf32>
    %cst_263 = arith.constant 5.000000e-01 : f32
    %661 = vector.broadcast %cst_263 : f32 to vector<2x16xf32>
    %662 = arith.mulf %661, %660 : vector<2x16xf32>
    %663 = math.tanh %662 : vector<2x16xf32>
    %cst_264 = arith.constant 5.000000e-01 : f32
    %664 = vector.broadcast %cst_264 : f32 to vector<2x16xf32>
    %665 = arith.mulf %664, %663 : vector<2x16xf32>
    %cst_265 = arith.constant 5.000000e-01 : f32
    %666 = vector.broadcast %cst_265 : f32 to vector<2x16xf32>
    %667 = arith.addf %665, %666 : vector<2x16xf32>
    %668 = vector.extract_strided_slice %579 {offsets = [4, 0], sizes = [2, 16], strides = [1, 1]} : vector<16x16xf32> to vector<2x16xf32>
    %669 = arith.addf %649, %581 : vector<2x16xf32>
    %670 = arith.mulf %658, %669 : vector<2x16xf32>
    %671 = arith.addf %668, %670 : vector<2x16xf32>
    %672 = math.tanh %671 : vector<2x16xf32>
    %cst_266 = arith.constant 1.000000e+00 : f32
    %673 = vector.broadcast %cst_266 : f32 to vector<2x16xf32>
    %674 = arith.subf %673, %667 : vector<2x16xf32>
    %675 = arith.mulf %674, %672 : vector<2x16xf32>
    %676 = arith.mulf %667, %645 : vector<2x16xf32>
    %677 = arith.addf %675, %676 : vector<2x16xf32>
    %c4_267 = arith.constant 4 : index
    %c0_268 = arith.constant 0 : index
    %678 = vector.load %arg3[%c4_267, %c0_268] : memref<16x32xf32, #tpu.memory_space<vmem>>, vector<2x16xf32>
    tpu.vector_store %arg3[%c4_267, %c0_268], %677 {strides = array<i32>} : memref<16x32xf32, #tpu.memory_space<vmem>>, vector<2x16xf32>,
    %cst_269 = arith.constant dense<0.000000e+00> : vector<2x16xf32>
    %679 = tpu.matmul %677, %564, %cst_269 {dimension_numbers = #tpu.dot_dimension_numbers<[1], [0], [0], [1], [0, 0, 1, 1], [], []>} : vector<2x16xf32>, vector<16x16xf32>, vector<2x16xf32> -> vector<2x16xf32>
    %cst_270 = arith.constant dense<0.000000e+00> : vector<2x16xf32>
    %680 = tpu.matmul %677, %565, %cst_270 {dimension_numbers = #tpu.dot_dimension_numbers<[1], [0], [0], [1], [0, 0, 1, 1], [], []>} : vector<2x16xf32>, vector<16x16xf32>, vector<2x16xf32> -> vector<2x16xf32>
    %cst_271 = arith.constant dense<0.000000e+00> : vector<2x16xf32>
    %681 = tpu.matmul %677, %566, %cst_271 {dimension_numbers = #tpu.dot_dimension_numbers<[1], [0], [0], [1], [0, 0, 1, 1], [], []>} : vector<2x16xf32>, vector<16x16xf32>, vector<2x16xf32> -> vector<2x16xf32>
    %682 = vector.extract_strided_slice %573 {offsets = [6, 0], sizes = [2, 16], strides = [1, 1]} : vector<16x16xf32> to vector<2x16xf32>
    %683 = arith.addf %682, %679 : vector<2x16xf32>
    %cst_272 = arith.constant 5.000000e-01 : f32
    %684 = vector.broadcast %cst_272 : f32 to vector<2x16xf32>
    %685 = arith.mulf %684, %683 : vector<2x16xf32>
    %686 = math.tanh %685 : vector<2x16xf32>
    %cst_273 = arith.constant 5.000000e-01 : f32
    %687 = vector.broadcast %cst_273 : f32 to vector<2x16xf32>
    %688 = arith.mulf %687, %686 : vector<2x16xf32>
    %cst_274 = arith.constant 5.000000e-01 : f32
    %689 = vector.broadcast %cst_274 : f32 to vector<2x16xf32>
    %690 = arith.addf %688, %689 : vector<2x16xf32>
    %691 = vector.extract_strided_slice %576 {offsets = [6, 0], sizes = [2, 16], strides = [1, 1]} : vector<16x16xf32> to vector<2x16xf32>
    %692 = arith.addf %691, %680 : vector<2x16xf32>
    %cst_275 = arith.constant 5.000000e-01 : f32
    %693 = vector.broadcast %cst_275 : f32 to vector<2x16xf32>
    %694 = arith.mulf %693, %692 : vector<2x16xf32>
    %695 = math.tanh %694 : vector<2x16xf32>
    %cst_276 = arith.constant 5.000000e-01 : f32
    %696 = vector.broadcast %cst_276 : f32 to vector<2x16xf32>
    %697 = arith.mulf %696, %695 : vector<2x16xf32>
    %cst_277 = arith.constant 5.000000e-01 : f32
    %698 = vector.broadcast %cst_277 : f32 to vector<2x16xf32>
    %699 = arith.addf %697, %698 : vector<2x16xf32>
    %700 = vector.extract_strided_slice %579 {offsets = [6, 0], sizes = [2, 16], strides = [1, 1]} : vector<16x16xf32> to vector<2x16xf32>
    %701 = arith.addf %681, %581 : vector<2x16xf32>
    %702 = arith.mulf %690, %701 : vector<2x16xf32>
    %703 = arith.addf %700, %702 : vector<2x16xf32>
    %704 = math.tanh %703 : vector<2x16xf32>
    %cst_278 = arith.constant 1.000000e+00 : f32
    %705 = vector.broadcast %cst_278 : f32 to vector<2x16xf32>
    %706 = arith.subf %705, %699 : vector<2x16xf32>
    %707 = arith.mulf %706, %704 : vector<2x16xf32>
    %708 = arith.mulf %699, %677 : vector<2x16xf32>
    %709 = arith.addf %707, %708 : vector<2x16xf32>
    %c6_279 = arith.constant 6 : index
    %c0_280 = arith.constant 0 : index
    %710 = vector.load %arg3[%c6_279, %c0_280] : memref<16x32xf32, #tpu.memory_space<vmem>>, vector<2x16xf32>
    tpu.vector_store %arg3[%c6_279, %c0_280], %709 {strides = array<i32>} : memref<16x32xf32, #tpu.memory_space<vmem>>, vector<2x16xf32>,
    %cst_281 = arith.constant dense<0.000000e+00> : vector<2x16xf32>
    %711 = tpu.matmul %709, %564, %cst_281 {dimension_numbers = #tpu.dot_dimension_numbers<[1], [0], [0], [1], [0, 0, 1, 1], [], []>} : vector<2x16xf32>, vector<16x16xf32>, vector<2x16xf32> -> vector<2x16xf32>
    %cst_282 = arith.constant dense<0.000000e+00> : vector<2x16xf32>
    %712 = tpu.matmul %709, %565, %cst_282 {dimension_numbers = #tpu.dot_dimension_numbers<[1], [0], [0], [1], [0, 0, 1, 1], [], []>} : vector<2x16xf32>, vector<16x16xf32>, vector<2x16xf32> -> vector<2x16xf32>
    %cst_283 = arith.constant dense<0.000000e+00> : vector<2x16xf32>
    %713 = tpu.matmul %709, %566, %cst_283 {dimension_numbers = #tpu.dot_dimension_numbers<[1], [0], [0], [1], [0, 0, 1, 1], [], []>} : vector<2x16xf32>, vector<16x16xf32>, vector<2x16xf32> -> vector<2x16xf32>
    %714 = vector.extract_strided_slice %573 {offsets = [8, 0], sizes = [2, 16], strides = [1, 1]} : vector<16x16xf32> to vector<2x16xf32>
    %715 = arith.addf %714, %711 : vector<2x16xf32>
    %cst_284 = arith.constant 5.000000e-01 : f32
    %716 = vector.broadcast %cst_284 : f32 to vector<2x16xf32>
    %717 = arith.mulf %716, %715 : vector<2x16xf32>
    %718 = math.tanh %717 : vector<2x16xf32>
    %cst_285 = arith.constant 5.000000e-01 : f32
    %719 = vector.broadcast %cst_285 : f32 to vector<2x16xf32>
    %720 = arith.mulf %719, %718 : vector<2x16xf32>
    %cst_286 = arith.constant 5.000000e-01 : f32
    %721 = vector.broadcast %cst_286 : f32 to vector<2x16xf32>
    %722 = arith.addf %720, %721 : vector<2x16xf32>
    %723 = vector.extract_strided_slice %576 {offsets = [8, 0], sizes = [2, 16], strides = [1, 1]} : vector<16x16xf32> to vector<2x16xf32>
    %724 = arith.addf %723, %712 : vector<2x16xf32>
    %cst_287 = arith.constant 5.000000e-01 : f32
    %725 = vector.broadcast %cst_287 : f32 to vector<2x16xf32>
    %726 = arith.mulf %725, %724 : vector<2x16xf32>
    %727 = math.tanh %726 : vector<2x16xf32>
    %cst_288 = arith.constant 5.000000e-01 : f32
    %728 = vector.broadcast %cst_288 : f32 to vector<2x16xf32>
    %729 = arith.mulf %728, %727 : vector<2x16xf32>
    %cst_289 = arith.constant 5.000000e-01 : f32
    %730 = vector.broadcast %cst_289 : f32 to vector<2x16xf32>
    %731 = arith.addf %729, %730 : vector<2x16xf32>
    %732 = vector.extract_strided_slice %579 {offsets = [8, 0], sizes = [2, 16], strides = [1, 1]} : vector<16x16xf32> to vector<2x16xf32>
    %733 = arith.addf %713, %581 : vector<2x16xf32>
    %734 = arith.mulf %722, %733 : vector<2x16xf32>
    %735 = arith.addf %732, %734 : vector<2x16xf32>
    %736 = math.tanh %735 : vector<2x16xf32>
    %cst_290 = arith.constant 1.000000e+00 : f32
    %737 = vector.broadcast %cst_290 : f32 to vector<2x16xf32>
    %738 = arith.subf %737, %731 : vector<2x16xf32>
    %739 = arith.mulf %738, %736 : vector<2x16xf32>
    %740 = arith.mulf %731, %709 : vector<2x16xf32>
    %741 = arith.addf %739, %740 : vector<2x16xf32>
    %c8_291 = arith.constant 8 : index
    %c0_292 = arith.constant 0 : index
    %742 = vector.load %arg3[%c8_291, %c0_292] : memref<16x32xf32, #tpu.memory_space<vmem>>, vector<2x16xf32>
    tpu.vector_store %arg3[%c8_291, %c0_292], %741 {strides = array<i32>} : memref<16x32xf32, #tpu.memory_space<vmem>>, vector<2x16xf32>,
    %cst_293 = arith.constant dense<0.000000e+00> : vector<2x16xf32>
    %743 = tpu.matmul %741, %564, %cst_293 {dimension_numbers = #tpu.dot_dimension_numbers<[1], [0], [0], [1], [0, 0, 1, 1], [], []>} : vector<2x16xf32>, vector<16x16xf32>, vector<2x16xf32> -> vector<2x16xf32>
    %cst_294 = arith.constant dense<0.000000e+00> : vector<2x16xf32>
    %744 = tpu.matmul %741, %565, %cst_294 {dimension_numbers = #tpu.dot_dimension_numbers<[1], [0], [0], [1], [0, 0, 1, 1], [], []>} : vector<2x16xf32>, vector<16x16xf32>, vector<2x16xf32> -> vector<2x16xf32>
    %cst_295 = arith.constant dense<0.000000e+00> : vector<2x16xf32>
    %745 = tpu.matmul %741, %566, %cst_295 {dimension_numbers = #tpu.dot_dimension_numbers<[1], [0], [0], [1], [0, 0, 1, 1], [], []>} : vector<2x16xf32>, vector<16x16xf32>, vector<2x16xf32> -> vector<2x16xf32>
    %746 = vector.extract_strided_slice %573 {offsets = [10, 0], sizes = [2, 16], strides = [1, 1]} : vector<16x16xf32> to vector<2x16xf32>
    %747 = arith.addf %746, %743 : vector<2x16xf32>
    %cst_296 = arith.constant 5.000000e-01 : f32
    %748 = vector.broadcast %cst_296 : f32 to vector<2x16xf32>
    %749 = arith.mulf %748, %747 : vector<2x16xf32>
    %750 = math.tanh %749 : vector<2x16xf32>
    %cst_297 = arith.constant 5.000000e-01 : f32
    %751 = vector.broadcast %cst_297 : f32 to vector<2x16xf32>
    %752 = arith.mulf %751, %750 : vector<2x16xf32>
    %cst_298 = arith.constant 5.000000e-01 : f32
    %753 = vector.broadcast %cst_298 : f32 to vector<2x16xf32>
    %754 = arith.addf %752, %753 : vector<2x16xf32>
    %755 = vector.extract_strided_slice %576 {offsets = [10, 0], sizes = [2, 16], strides = [1, 1]} : vector<16x16xf32> to vector<2x16xf32>
    %756 = arith.addf %755, %744 : vector<2x16xf32>
    %cst_299 = arith.constant 5.000000e-01 : f32
    %757 = vector.broadcast %cst_299 : f32 to vector<2x16xf32>
    %758 = arith.mulf %757, %756 : vector<2x16xf32>
    %759 = math.tanh %758 : vector<2x16xf32>
    %cst_300 = arith.constant 5.000000e-01 : f32
    %760 = vector.broadcast %cst_300 : f32 to vector<2x16xf32>
    %761 = arith.mulf %760, %759 : vector<2x16xf32>
    %cst_301 = arith.constant 5.000000e-01 : f32
    %762 = vector.broadcast %cst_301 : f32 to vector<2x16xf32>
    %763 = arith.addf %761, %762 : vector<2x16xf32>
    %764 = vector.extract_strided_slice %579 {offsets = [10, 0], sizes = [2, 16], strides = [1, 1]} : vector<16x16xf32> to vector<2x16xf32>
    %765 = arith.addf %745, %581 : vector<2x16xf32>
    %766 = arith.mulf %754, %765 : vector<2x16xf32>
    %767 = arith.addf %764, %766 : vector<2x16xf32>
    %768 = math.tanh %767 : vector<2x16xf32>
    %cst_302 = arith.constant 1.000000e+00 : f32
    %769 = vector.broadcast %cst_302 : f32 to vector<2x16xf32>
    %770 = arith.subf %769, %763 : vector<2x16xf32>
    %771 = arith.mulf %770, %768 : vector<2x16xf32>
    %772 = arith.mulf %763, %741 : vector<2x16xf32>
    %773 = arith.addf %771, %772 : vector<2x16xf32>
    %c10_303 = arith.constant 10 : index
    %c0_304 = arith.constant 0 : index
    %774 = vector.load %arg3[%c10_303, %c0_304] : memref<16x32xf32, #tpu.memory_space<vmem>>, vector<2x16xf32>
    tpu.vector_store %arg3[%c10_303, %c0_304], %773 {strides = array<i32>} : memref<16x32xf32, #tpu.memory_space<vmem>>, vector<2x16xf32>,
    %cst_305 = arith.constant dense<0.000000e+00> : vector<2x16xf32>
    %775 = tpu.matmul %773, %564, %cst_305 {dimension_numbers = #tpu.dot_dimension_numbers<[1], [0], [0], [1], [0, 0, 1, 1], [], []>} : vector<2x16xf32>, vector<16x16xf32>, vector<2x16xf32> -> vector<2x16xf32>
    %cst_306 = arith.constant dense<0.000000e+00> : vector<2x16xf32>
    %776 = tpu.matmul %773, %565, %cst_306 {dimension_numbers = #tpu.dot_dimension_numbers<[1], [0], [0], [1], [0, 0, 1, 1], [], []>} : vector<2x16xf32>, vector<16x16xf32>, vector<2x16xf32> -> vector<2x16xf32>
    %cst_307 = arith.constant dense<0.000000e+00> : vector<2x16xf32>
    %777 = tpu.matmul %773, %566, %cst_307 {dimension_numbers = #tpu.dot_dimension_numbers<[1], [0], [0], [1], [0, 0, 1, 1], [], []>} : vector<2x16xf32>, vector<16x16xf32>, vector<2x16xf32> -> vector<2x16xf32>
    %778 = vector.extract_strided_slice %573 {offsets = [12, 0], sizes = [2, 16], strides = [1, 1]} : vector<16x16xf32> to vector<2x16xf32>
    %779 = arith.addf %778, %775 : vector<2x16xf32>
    %cst_308 = arith.constant 5.000000e-01 : f32
    %780 = vector.broadcast %cst_308 : f32 to vector<2x16xf32>
    %781 = arith.mulf %780, %779 : vector<2x16xf32>
    %782 = math.tanh %781 : vector<2x16xf32>
    %cst_309 = arith.constant 5.000000e-01 : f32
    %783 = vector.broadcast %cst_309 : f32 to vector<2x16xf32>
    %784 = arith.mulf %783, %782 : vector<2x16xf32>
    %cst_310 = arith.constant 5.000000e-01 : f32
    %785 = vector.broadcast %cst_310 : f32 to vector<2x16xf32>
    %786 = arith.addf %784, %785 : vector<2x16xf32>
    %787 = vector.extract_strided_slice %576 {offsets = [12, 0], sizes = [2, 16], strides = [1, 1]} : vector<16x16xf32> to vector<2x16xf32>
    %788 = arith.addf %787, %776 : vector<2x16xf32>
    %cst_311 = arith.constant 5.000000e-01 : f32
    %789 = vector.broadcast %cst_311 : f32 to vector<2x16xf32>
    %790 = arith.mulf %789, %788 : vector<2x16xf32>
    %791 = math.tanh %790 : vector<2x16xf32>
    %cst_312 = arith.constant 5.000000e-01 : f32
    %792 = vector.broadcast %cst_312 : f32 to vector<2x16xf32>
    %793 = arith.mulf %792, %791 : vector<2x16xf32>
    %cst_313 = arith.constant 5.000000e-01 : f32
    %794 = vector.broadcast %cst_313 : f32 to vector<2x16xf32>
    %795 = arith.addf %793, %794 : vector<2x16xf32>
    %796 = vector.extract_strided_slice %579 {offsets = [12, 0], sizes = [2, 16], strides = [1, 1]} : vector<16x16xf32> to vector<2x16xf32>
    %797 = arith.addf %777, %581 : vector<2x16xf32>
    %798 = arith.mulf %786, %797 : vector<2x16xf32>
    %799 = arith.addf %796, %798 : vector<2x16xf32>
    %800 = math.tanh %799 : vector<2x16xf32>
    %cst_314 = arith.constant 1.000000e+00 : f32
    %801 = vector.broadcast %cst_314 : f32 to vector<2x16xf32>
    %802 = arith.subf %801, %795 : vector<2x16xf32>
    %803 = arith.mulf %802, %800 : vector<2x16xf32>
    %804 = arith.mulf %795, %773 : vector<2x16xf32>
    %805 = arith.addf %803, %804 : vector<2x16xf32>
    %c12_315 = arith.constant 12 : index
    %c0_316 = arith.constant 0 : index
    %806 = vector.load %arg3[%c12_315, %c0_316] : memref<16x32xf32, #tpu.memory_space<vmem>>, vector<2x16xf32>
    tpu.vector_store %arg3[%c12_315, %c0_316], %805 {strides = array<i32>} : memref<16x32xf32, #tpu.memory_space<vmem>>, vector<2x16xf32>,
    %cst_317 = arith.constant dense<0.000000e+00> : vector<2x16xf32>
    %807 = tpu.matmul %805, %564, %cst_317 {dimension_numbers = #tpu.dot_dimension_numbers<[1], [0], [0], [1], [0, 0, 1, 1], [], []>} : vector<2x16xf32>, vector<16x16xf32>, vector<2x16xf32> -> vector<2x16xf32>
    %cst_318 = arith.constant dense<0.000000e+00> : vector<2x16xf32>
    %808 = tpu.matmul %805, %565, %cst_318 {dimension_numbers = #tpu.dot_dimension_numbers<[1], [0], [0], [1], [0, 0, 1, 1], [], []>} : vector<2x16xf32>, vector<16x16xf32>, vector<2x16xf32> -> vector<2x16xf32>
    %cst_319 = arith.constant dense<0.000000e+00> : vector<2x16xf32>
    %809 = tpu.matmul %805, %566, %cst_319 {dimension_numbers = #tpu.dot_dimension_numbers<[1], [0], [0], [1], [0, 0, 1, 1], [], []>} : vector<2x16xf32>, vector<16x16xf32>, vector<2x16xf32> -> vector<2x16xf32>
    %810 = vector.extract_strided_slice %573 {offsets = [14, 0], sizes = [2, 16], strides = [1, 1]} : vector<16x16xf32> to vector<2x16xf32>
    %811 = arith.addf %810, %807 : vector<2x16xf32>
    %cst_320 = arith.constant 5.000000e-01 : f32
    %812 = vector.broadcast %cst_320 : f32 to vector<2x16xf32>
    %813 = arith.mulf %812, %811 : vector<2x16xf32>
    %814 = math.tanh %813 : vector<2x16xf32>
    %cst_321 = arith.constant 5.000000e-01 : f32
    %815 = vector.broadcast %cst_321 : f32 to vector<2x16xf32>
    %816 = arith.mulf %815, %814 : vector<2x16xf32>
    %cst_322 = arith.constant 5.000000e-01 : f32
    %817 = vector.broadcast %cst_322 : f32 to vector<2x16xf32>
    %818 = arith.addf %816, %817 : vector<2x16xf32>
    %819 = vector.extract_strided_slice %576 {offsets = [14, 0], sizes = [2, 16], strides = [1, 1]} : vector<16x16xf32> to vector<2x16xf32>
    %820 = arith.addf %819, %808 : vector<2x16xf32>
    %cst_323 = arith.constant 5.000000e-01 : f32
    %821 = vector.broadcast %cst_323 : f32 to vector<2x16xf32>
    %822 = arith.mulf %821, %820 : vector<2x16xf32>
    %823 = math.tanh %822 : vector<2x16xf32>
    %cst_324 = arith.constant 5.000000e-01 : f32
    %824 = vector.broadcast %cst_324 : f32 to vector<2x16xf32>
    %825 = arith.mulf %824, %823 : vector<2x16xf32>
    %cst_325 = arith.constant 5.000000e-01 : f32
    %826 = vector.broadcast %cst_325 : f32 to vector<2x16xf32>
    %827 = arith.addf %825, %826 : vector<2x16xf32>
    %828 = vector.extract_strided_slice %579 {offsets = [14, 0], sizes = [2, 16], strides = [1, 1]} : vector<16x16xf32> to vector<2x16xf32>
    %829 = arith.addf %809, %581 : vector<2x16xf32>
    %830 = arith.mulf %818, %829 : vector<2x16xf32>
    %831 = arith.addf %828, %830 : vector<2x16xf32>
    %832 = math.tanh %831 : vector<2x16xf32>
    %cst_326 = arith.constant 1.000000e+00 : f32
    %833 = vector.broadcast %cst_326 : f32 to vector<2x16xf32>
    %834 = arith.subf %833, %827 : vector<2x16xf32>
    %835 = arith.mulf %834, %832 : vector<2x16xf32>
    %836 = arith.mulf %827, %805 : vector<2x16xf32>
    %837 = arith.addf %835, %836 : vector<2x16xf32>
    %c14_327 = arith.constant 14 : index
    %c0_328 = arith.constant 0 : index
    %838 = vector.load %arg3[%c14_327, %c0_328] : memref<16x32xf32, #tpu.memory_space<vmem>>, vector<2x16xf32>
    tpu.vector_store %arg3[%c14_327, %c0_328], %837 {strides = array<i32>} : memref<16x32xf32, #tpu.memory_space<vmem>>, vector<2x16xf32>,
    %c0_329 = arith.constant 0 : index
    %c0_330 = arith.constant 0 : index
    %839 = vector.load %arg3[%c0_329, %c0_330] : memref<16x32xf32, #tpu.memory_space<vmem>>, vector<16x16xf32>
    %c504 = arith.constant 504 : index
    %c0_331 = arith.constant 0 : index
    %840 = vector.load %arg1[%c504, %c0_331] : memref<744x128xf32, #tpu.memory_space<vmem>>, vector<16x16xf32>
    %c520 = arith.constant 520 : index
    %c0_332 = arith.constant 0 : index
    %841 = vector.load %arg1[%c520, %c0_332] : memref<744x128xf32, #tpu.memory_space<vmem>>, vector<16x16xf32>
    %c536 = arith.constant 536 : index
    %c0_333 = arith.constant 0 : index
    %842 = vector.load %arg1[%c536, %c0_333] : memref<744x128xf32, #tpu.memory_space<vmem>>, vector<16x16xf32>
    %c552 = arith.constant 552 : index
    %c0_334 = arith.constant 0 : index
    %843 = vector.load %arg1[%c552, %c0_334] : memref<744x128xf32, #tpu.memory_space<vmem>>, vector<16x16xf32>
    %c568 = arith.constant 568 : index
    %c0_335 = arith.constant 0 : index
    %844 = vector.load %arg1[%c568, %c0_335] : memref<744x128xf32, #tpu.memory_space<vmem>>, vector<16x16xf32>
    %c584 = arith.constant 584 : index
    %c0_336 = arith.constant 0 : index
    %845 = vector.load %arg1[%c584, %c0_336] : memref<744x128xf32, #tpu.memory_space<vmem>>, vector<16x16xf32>
    %c600 = arith.constant 600 : index
    %c0_337 = arith.constant 0 : index
    %846 = vector.load %arg1[%c600, %c0_337] : memref<744x128xf32, #tpu.memory_space<vmem>>, vector<1x16xf32>
    %c601 = arith.constant 601 : index
    %c0_338 = arith.constant 0 : index
    %847 = vector.load %arg1[%c601, %c0_338] : memref<744x128xf32, #tpu.memory_space<vmem>>, vector<1x16xf32>
    %c602 = arith.constant 602 : index
    %c0_339 = arith.constant 0 : index
    %848 = vector.load %arg1[%c602, %c0_339] : memref<744x128xf32, #tpu.memory_space<vmem>>, vector<1x16xf32>
    %c603 = arith.constant 603 : index
    %c0_340 = arith.constant 0 : index
    %849 = vector.load %arg1[%c603, %c0_340] : memref<744x128xf32, #tpu.memory_space<vmem>>, vector<1x16xf32>
    %cst_341 = arith.constant dense<0.000000e+00> : vector<16x16xf32>
    %850 = tpu.matmul %839, %840, %cst_341 {dimension_numbers = #tpu.dot_dimension_numbers<[1], [0], [0], [1], [0, 0, 1, 1], [], []>} : vector<16x16xf32>, vector<16x16xf32>, vector<16x16xf32> -> vector<16x16xf32>
    %851 = vector.broadcast %846 : vector<1x16xf32> to vector<16x16xf32>
    %852 = arith.addf %850, %851 : vector<16x16xf32>
    %cst_342 = arith.constant dense<0.000000e+00> : vector<16x16xf32>
    %853 = tpu.matmul %839, %841, %cst_342 {dimension_numbers = #tpu.dot_dimension_numbers<[1], [0], [0], [1], [0, 0, 1, 1], [], []>} : vector<16x16xf32>, vector<16x16xf32>, vector<16x16xf32> -> vector<16x16xf32>
    %854 = vector.broadcast %847 : vector<1x16xf32> to vector<16x16xf32>
    %855 = arith.addf %853, %854 : vector<16x16xf32>
    %cst_343 = arith.constant dense<0.000000e+00> : vector<16x16xf32>
    %856 = tpu.matmul %839, %842, %cst_343 {dimension_numbers = #tpu.dot_dimension_numbers<[1], [0], [0], [1], [0, 0, 1, 1], [], []>} : vector<16x16xf32>, vector<16x16xf32>, vector<16x16xf32> -> vector<16x16xf32>
    %857 = vector.broadcast %848 : vector<1x16xf32> to vector<16x16xf32>
    %858 = arith.addf %856, %857 : vector<16x16xf32>
    %859 = vector.shape_cast %849 : vector<1x16xf32> to vector<1x16xf32>
    %860 = vector.broadcast %859 : vector<1x16xf32> to vector<2x16xf32>
    %cst_344 = arith.constant 0.000000e+00 : f32
    %861 = vector.broadcast %cst_344 : f32 to vector<2x16xf32>
    %cst_345 = arith.constant dense<0.000000e+00> : vector<2x16xf32>
    %862 = tpu.matmul %861, %843, %cst_345 {dimension_numbers = #tpu.dot_dimension_numbers<[1], [0], [0], [1], [0, 0, 1, 1], [], []>} : vector<2x16xf32>, vector<16x16xf32>, vector<2x16xf32> -> vector<2x16xf32>
    %cst_346 = arith.constant dense<0.000000e+00> : vector<2x16xf32>
    %863 = tpu.matmul %861, %844, %cst_346 {dimension_numbers = #tpu.dot_dimension_numbers<[1], [0], [0], [1], [0, 0, 1, 1], [], []>} : vector<2x16xf32>, vector<16x16xf32>, vector<2x16xf32> -> vector<2x16xf32>
    %cst_347 = arith.constant dense<0.000000e+00> : vector<2x16xf32>
    %864 = tpu.matmul %861, %845, %cst_347 {dimension_numbers = #tpu.dot_dimension_numbers<[1], [0], [0], [1], [0, 0, 1, 1], [], []>} : vector<2x16xf32>, vector<16x16xf32>, vector<2x16xf32> -> vector<2x16xf32>
    %865 = vector.extract_strided_slice %852 {offsets = [0, 0], sizes = [2, 16], strides = [1, 1]} : vector<16x16xf32> to vector<2x16xf32>
    %866 = arith.addf %865, %862 : vector<2x16xf32>
    %cst_348 = arith.constant 5.000000e-01 : f32
    %867 = vector.broadcast %cst_348 : f32 to vector<2x16xf32>
    %868 = arith.mulf %867, %866 : vector<2x16xf32>
    %869 = math.tanh %868 : vector<2x16xf32>
    %cst_349 = arith.constant 5.000000e-01 : f32
    %870 = vector.broadcast %cst_349 : f32 to vector<2x16xf32>
    %871 = arith.mulf %870, %869 : vector<2x16xf32>
    %cst_350 = arith.constant 5.000000e-01 : f32
    %872 = vector.broadcast %cst_350 : f32 to vector<2x16xf32>
    %873 = arith.addf %871, %872 : vector<2x16xf32>
    %874 = vector.extract_strided_slice %855 {offsets = [0, 0], sizes = [2, 16], strides = [1, 1]} : vector<16x16xf32> to vector<2x16xf32>
    %875 = arith.addf %874, %863 : vector<2x16xf32>
    %cst_351 = arith.constant 5.000000e-01 : f32
    %876 = vector.broadcast %cst_351 : f32 to vector<2x16xf32>
    %877 = arith.mulf %876, %875 : vector<2x16xf32>
    %878 = math.tanh %877 : vector<2x16xf32>
    %cst_352 = arith.constant 5.000000e-01 : f32
    %879 = vector.broadcast %cst_352 : f32 to vector<2x16xf32>
    %880 = arith.mulf %879, %878 : vector<2x16xf32>
    %cst_353 = arith.constant 5.000000e-01 : f32
    %881 = vector.broadcast %cst_353 : f32 to vector<2x16xf32>
    %882 = arith.addf %880, %881 : vector<2x16xf32>
    %883 = vector.extract_strided_slice %858 {offsets = [0, 0], sizes = [2, 16], strides = [1, 1]} : vector<16x16xf32> to vector<2x16xf32>
    %884 = arith.addf %864, %860 : vector<2x16xf32>
    %885 = arith.mulf %873, %884 : vector<2x16xf32>
    %886 = arith.addf %883, %885 : vector<2x16xf32>
    %887 = math.tanh %886 : vector<2x16xf32>
    %cst_354 = arith.constant 1.000000e+00 : f32
    %888 = vector.broadcast %cst_354 : f32 to vector<2x16xf32>
    %889 = arith.subf %888, %882 : vector<2x16xf32>
    %890 = arith.mulf %889, %887 : vector<2x16xf32>
    %891 = arith.mulf %882, %861 : vector<2x16xf32>
    %892 = arith.addf %890, %891 : vector<2x16xf32>
    %c0_355 = arith.constant 0 : index
    %c0_356 = arith.constant 0 : index
    %893 = vector.load %arg3[%c0_355, %c0_356] : memref<16x32xf32, #tpu.memory_space<vmem>>, vector<2x16xf32>
    tpu.vector_store %arg3[%c0_355, %c0_356], %892 {strides = array<i32>} : memref<16x32xf32, #tpu.memory_space<vmem>>, vector<2x16xf32>,
    %cst_357 = arith.constant dense<0.000000e+00> : vector<2x16xf32>
    %894 = tpu.matmul %892, %843, %cst_357 {dimension_numbers = #tpu.dot_dimension_numbers<[1], [0], [0], [1], [0, 0, 1, 1], [], []>} : vector<2x16xf32>, vector<16x16xf32>, vector<2x16xf32> -> vector<2x16xf32>
    %cst_358 = arith.constant dense<0.000000e+00> : vector<2x16xf32>
    %895 = tpu.matmul %892, %844, %cst_358 {dimension_numbers = #tpu.dot_dimension_numbers<[1], [0], [0], [1], [0, 0, 1, 1], [], []>} : vector<2x16xf32>, vector<16x16xf32>, vector<2x16xf32> -> vector<2x16xf32>
    %cst_359 = arith.constant dense<0.000000e+00> : vector<2x16xf32>
    %896 = tpu.matmul %892, %845, %cst_359 {dimension_numbers = #tpu.dot_dimension_numbers<[1], [0], [0], [1], [0, 0, 1, 1], [], []>} : vector<2x16xf32>, vector<16x16xf32>, vector<2x16xf32> -> vector<2x16xf32>
    %897 = vector.extract_strided_slice %852 {offsets = [2, 0], sizes = [2, 16], strides = [1, 1]} : vector<16x16xf32> to vector<2x16xf32>
    %898 = arith.addf %897, %894 : vector<2x16xf32>
    %cst_360 = arith.constant 5.000000e-01 : f32
    %899 = vector.broadcast %cst_360 : f32 to vector<2x16xf32>
    %900 = arith.mulf %899, %898 : vector<2x16xf32>
    %901 = math.tanh %900 : vector<2x16xf32>
    %cst_361 = arith.constant 5.000000e-01 : f32
    %902 = vector.broadcast %cst_361 : f32 to vector<2x16xf32>
    %903 = arith.mulf %902, %901 : vector<2x16xf32>
    %cst_362 = arith.constant 5.000000e-01 : f32
    %904 = vector.broadcast %cst_362 : f32 to vector<2x16xf32>
    %905 = arith.addf %903, %904 : vector<2x16xf32>
    %906 = vector.extract_strided_slice %855 {offsets = [2, 0], sizes = [2, 16], strides = [1, 1]} : vector<16x16xf32> to vector<2x16xf32>
    %907 = arith.addf %906, %895 : vector<2x16xf32>
    %cst_363 = arith.constant 5.000000e-01 : f32
    %908 = vector.broadcast %cst_363 : f32 to vector<2x16xf32>
    %909 = arith.mulf %908, %907 : vector<2x16xf32>
    %910 = math.tanh %909 : vector<2x16xf32>
    %cst_364 = arith.constant 5.000000e-01 : f32
    %911 = vector.broadcast %cst_364 : f32 to vector<2x16xf32>
    %912 = arith.mulf %911, %910 : vector<2x16xf32>
    %cst_365 = arith.constant 5.000000e-01 : f32
    %913 = vector.broadcast %cst_365 : f32 to vector<2x16xf32>
    %914 = arith.addf %912, %913 : vector<2x16xf32>
    %915 = vector.extract_strided_slice %858 {offsets = [2, 0], sizes = [2, 16], strides = [1, 1]} : vector<16x16xf32> to vector<2x16xf32>
    %916 = arith.addf %896, %860 : vector<2x16xf32>
    %917 = arith.mulf %905, %916 : vector<2x16xf32>
    %918 = arith.addf %915, %917 : vector<2x16xf32>
    %919 = math.tanh %918 : vector<2x16xf32>
    %cst_366 = arith.constant 1.000000e+00 : f32
    %920 = vector.broadcast %cst_366 : f32 to vector<2x16xf32>
    %921 = arith.subf %920, %914 : vector<2x16xf32>
    %922 = arith.mulf %921, %919 : vector<2x16xf32>
    %923 = arith.mulf %914, %892 : vector<2x16xf32>
    %924 = arith.addf %922, %923 : vector<2x16xf32>
    %c2_367 = arith.constant 2 : index
    %c0_368 = arith.constant 0 : index
    %925 = vector.load %arg3[%c2_367, %c0_368] : memref<16x32xf32, #tpu.memory_space<vmem>>, vector<2x16xf32>
    tpu.vector_store %arg3[%c2_367, %c0_368], %924 {strides = array<i32>} : memref<16x32xf32, #tpu.memory_space<vmem>>, vector<2x16xf32>,
    %cst_369 = arith.constant dense<0.000000e+00> : vector<2x16xf32>
    %926 = tpu.matmul %924, %843, %cst_369 {dimension_numbers = #tpu.dot_dimension_numbers<[1], [0], [0], [1], [0, 0, 1, 1], [], []>} : vector<2x16xf32>, vector<16x16xf32>, vector<2x16xf32> -> vector<2x16xf32>
    %cst_370 = arith.constant dense<0.000000e+00> : vector<2x16xf32>
    %927 = tpu.matmul %924, %844, %cst_370 {dimension_numbers = #tpu.dot_dimension_numbers<[1], [0], [0], [1], [0, 0, 1, 1], [], []>} : vector<2x16xf32>, vector<16x16xf32>, vector<2x16xf32> -> vector<2x16xf32>
    %cst_371 = arith.constant dense<0.000000e+00> : vector<2x16xf32>
    %928 = tpu.matmul %924, %845, %cst_371 {dimension_numbers = #tpu.dot_dimension_numbers<[1], [0], [0], [1], [0, 0, 1, 1], [], []>} : vector<2x16xf32>, vector<16x16xf32>, vector<2x16xf32> -> vector<2x16xf32>
    %929 = vector.extract_strided_slice %852 {offsets = [4, 0], sizes = [2, 16], strides = [1, 1]} : vector<16x16xf32> to vector<2x16xf32>
    %930 = arith.addf %929, %926 : vector<2x16xf32>
    %cst_372 = arith.constant 5.000000e-01 : f32
    %931 = vector.broadcast %cst_372 : f32 to vector<2x16xf32>
    %932 = arith.mulf %931, %930 : vector<2x16xf32>
    %933 = math.tanh %932 : vector<2x16xf32>
    %cst_373 = arith.constant 5.000000e-01 : f32
    %934 = vector.broadcast %cst_373 : f32 to vector<2x16xf32>
    %935 = arith.mulf %934, %933 : vector<2x16xf32>
    %cst_374 = arith.constant 5.000000e-01 : f32
    %936 = vector.broadcast %cst_374 : f32 to vector<2x16xf32>
    %937 = arith.addf %935, %936 : vector<2x16xf32>
    %938 = vector.extract_strided_slice %855 {offsets = [4, 0], sizes = [2, 16], strides = [1, 1]} : vector<16x16xf32> to vector<2x16xf32>
    %939 = arith.addf %938, %927 : vector<2x16xf32>
    %cst_375 = arith.constant 5.000000e-01 : f32
    %940 = vector.broadcast %cst_375 : f32 to vector<2x16xf32>
    %941 = arith.mulf %940, %939 : vector<2x16xf32>
    %942 = math.tanh %941 : vector<2x16xf32>
    %cst_376 = arith.constant 5.000000e-01 : f32
    %943 = vector.broadcast %cst_376 : f32 to vector<2x16xf32>
    %944 = arith.mulf %943, %942 : vector<2x16xf32>
    %cst_377 = arith.constant 5.000000e-01 : f32
    %945 = vector.broadcast %cst_377 : f32 to vector<2x16xf32>
    %946 = arith.addf %944, %945 : vector<2x16xf32>
    %947 = vector.extract_strided_slice %858 {offsets = [4, 0], sizes = [2, 16], strides = [1, 1]} : vector<16x16xf32> to vector<2x16xf32>
    %948 = arith.addf %928, %860 : vector<2x16xf32>
    %949 = arith.mulf %937, %948 : vector<2x16xf32>
    %950 = arith.addf %947, %949 : vector<2x16xf32>
    %951 = math.tanh %950 : vector<2x16xf32>
    %cst_378 = arith.constant 1.000000e+00 : f32
    %952 = vector.broadcast %cst_378 : f32 to vector<2x16xf32>
    %953 = arith.subf %952, %946 : vector<2x16xf32>
    %954 = arith.mulf %953, %951 : vector<2x16xf32>
    %955 = arith.mulf %946, %924 : vector<2x16xf32>
    %956 = arith.addf %954, %955 : vector<2x16xf32>
    %c4_379 = arith.constant 4 : index
    %c0_380 = arith.constant 0 : index
    %957 = vector.load %arg3[%c4_379, %c0_380] : memref<16x32xf32, #tpu.memory_space<vmem>>, vector<2x16xf32>
    tpu.vector_store %arg3[%c4_379, %c0_380], %956 {strides = array<i32>} : memref<16x32xf32, #tpu.memory_space<vmem>>, vector<2x16xf32>,
    %cst_381 = arith.constant dense<0.000000e+00> : vector<2x16xf32>
    %958 = tpu.matmul %956, %843, %cst_381 {dimension_numbers = #tpu.dot_dimension_numbers<[1], [0], [0], [1], [0, 0, 1, 1], [], []>} : vector<2x16xf32>, vector<16x16xf32>, vector<2x16xf32> -> vector<2x16xf32>
    %cst_382 = arith.constant dense<0.000000e+00> : vector<2x16xf32>
    %959 = tpu.matmul %956, %844, %cst_382 {dimension_numbers = #tpu.dot_dimension_numbers<[1], [0], [0], [1], [0, 0, 1, 1], [], []>} : vector<2x16xf32>, vector<16x16xf32>, vector<2x16xf32> -> vector<2x16xf32>
    %cst_383 = arith.constant dense<0.000000e+00> : vector<2x16xf32>
    %960 = tpu.matmul %956, %845, %cst_383 {dimension_numbers = #tpu.dot_dimension_numbers<[1], [0], [0], [1], [0, 0, 1, 1], [], []>} : vector<2x16xf32>, vector<16x16xf32>, vector<2x16xf32> -> vector<2x16xf32>
    %961 = vector.extract_strided_slice %852 {offsets = [6, 0], sizes = [2, 16], strides = [1, 1]} : vector<16x16xf32> to vector<2x16xf32>
    %962 = arith.addf %961, %958 : vector<2x16xf32>
    %cst_384 = arith.constant 5.000000e-01 : f32
    %963 = vector.broadcast %cst_384 : f32 to vector<2x16xf32>
    %964 = arith.mulf %963, %962 : vector<2x16xf32>
    %965 = math.tanh %964 : vector<2x16xf32>
    %cst_385 = arith.constant 5.000000e-01 : f32
    %966 = vector.broadcast %cst_385 : f32 to vector<2x16xf32>
    %967 = arith.mulf %966, %965 : vector<2x16xf32>
    %cst_386 = arith.constant 5.000000e-01 : f32
    %968 = vector.broadcast %cst_386 : f32 to vector<2x16xf32>
    %969 = arith.addf %967, %968 : vector<2x16xf32>
    %970 = vector.extract_strided_slice %855 {offsets = [6, 0], sizes = [2, 16], strides = [1, 1]} : vector<16x16xf32> to vector<2x16xf32>
    %971 = arith.addf %970, %959 : vector<2x16xf32>
    %cst_387 = arith.constant 5.000000e-01 : f32
    %972 = vector.broadcast %cst_387 : f32 to vector<2x16xf32>
    %973 = arith.mulf %972, %971 : vector<2x16xf32>
    %974 = math.tanh %973 : vector<2x16xf32>
    %cst_388 = arith.constant 5.000000e-01 : f32
    %975 = vector.broadcast %cst_388 : f32 to vector<2x16xf32>
    %976 = arith.mulf %975, %974 : vector<2x16xf32>
    %cst_389 = arith.constant 5.000000e-01 : f32
    %977 = vector.broadcast %cst_389 : f32 to vector<2x16xf32>
    %978 = arith.addf %976, %977 : vector<2x16xf32>
    %979 = vector.extract_strided_slice %858 {offsets = [6, 0], sizes = [2, 16], strides = [1, 1]} : vector<16x16xf32> to vector<2x16xf32>
    %980 = arith.addf %960, %860 : vector<2x16xf32>
    %981 = arith.mulf %969, %980 : vector<2x16xf32>
    %982 = arith.addf %979, %981 : vector<2x16xf32>
    %983 = math.tanh %982 : vector<2x16xf32>
    %cst_390 = arith.constant 1.000000e+00 : f32
    %984 = vector.broadcast %cst_390 : f32 to vector<2x16xf32>
    %985 = arith.subf %984, %978 : vector<2x16xf32>
    %986 = arith.mulf %985, %983 : vector<2x16xf32>
    %987 = arith.mulf %978, %956 : vector<2x16xf32>
    %988 = arith.addf %986, %987 : vector<2x16xf32>
    %c6_391 = arith.constant 6 : index
    %c0_392 = arith.constant 0 : index
    %989 = vector.load %arg3[%c6_391, %c0_392] : memref<16x32xf32, #tpu.memory_space<vmem>>, vector<2x16xf32>
    tpu.vector_store %arg3[%c6_391, %c0_392], %988 {strides = array<i32>} : memref<16x32xf32, #tpu.memory_space<vmem>>, vector<2x16xf32>,
    %cst_393 = arith.constant dense<0.000000e+00> : vector<2x16xf32>
    %990 = tpu.matmul %988, %843, %cst_393 {dimension_numbers = #tpu.dot_dimension_numbers<[1], [0], [0], [1], [0, 0, 1, 1], [], []>} : vector<2x16xf32>, vector<16x16xf32>, vector<2x16xf32> -> vector<2x16xf32>
    %cst_394 = arith.constant dense<0.000000e+00> : vector<2x16xf32>
    %991 = tpu.matmul %988, %844, %cst_394 {dimension_numbers = #tpu.dot_dimension_numbers<[1], [0], [0], [1], [0, 0, 1, 1], [], []>} : vector<2x16xf32>, vector<16x16xf32>, vector<2x16xf32> -> vector<2x16xf32>
    %cst_395 = arith.constant dense<0.000000e+00> : vector<2x16xf32>
    %992 = tpu.matmul %988, %845, %cst_395 {dimension_numbers = #tpu.dot_dimension_numbers<[1], [0], [0], [1], [0, 0, 1, 1], [], []>} : vector<2x16xf32>, vector<16x16xf32>, vector<2x16xf32> -> vector<2x16xf32>
    %993 = vector.extract_strided_slice %852 {offsets = [8, 0], sizes = [2, 16], strides = [1, 1]} : vector<16x16xf32> to vector<2x16xf32>
    %994 = arith.addf %993, %990 : vector<2x16xf32>
    %cst_396 = arith.constant 5.000000e-01 : f32
    %995 = vector.broadcast %cst_396 : f32 to vector<2x16xf32>
    %996 = arith.mulf %995, %994 : vector<2x16xf32>
    %997 = math.tanh %996 : vector<2x16xf32>
    %cst_397 = arith.constant 5.000000e-01 : f32
    %998 = vector.broadcast %cst_397 : f32 to vector<2x16xf32>
    %999 = arith.mulf %998, %997 : vector<2x16xf32>
    %cst_398 = arith.constant 5.000000e-01 : f32
    %1000 = vector.broadcast %cst_398 : f32 to vector<2x16xf32>
    %1001 = arith.addf %999, %1000 : vector<2x16xf32>
    %1002 = vector.extract_strided_slice %855 {offsets = [8, 0], sizes = [2, 16], strides = [1, 1]} : vector<16x16xf32> to vector<2x16xf32>
    %1003 = arith.addf %1002, %991 : vector<2x16xf32>
    %cst_399 = arith.constant 5.000000e-01 : f32
    %1004 = vector.broadcast %cst_399 : f32 to vector<2x16xf32>
    %1005 = arith.mulf %1004, %1003 : vector<2x16xf32>
    %1006 = math.tanh %1005 : vector<2x16xf32>
    %cst_400 = arith.constant 5.000000e-01 : f32
    %1007 = vector.broadcast %cst_400 : f32 to vector<2x16xf32>
    %1008 = arith.mulf %1007, %1006 : vector<2x16xf32>
    %cst_401 = arith.constant 5.000000e-01 : f32
    %1009 = vector.broadcast %cst_401 : f32 to vector<2x16xf32>
    %1010 = arith.addf %1008, %1009 : vector<2x16xf32>
    %1011 = vector.extract_strided_slice %858 {offsets = [8, 0], sizes = [2, 16], strides = [1, 1]} : vector<16x16xf32> to vector<2x16xf32>
    %1012 = arith.addf %992, %860 : vector<2x16xf32>
    %1013 = arith.mulf %1001, %1012 : vector<2x16xf32>
    %1014 = arith.addf %1011, %1013 : vector<2x16xf32>
    %1015 = math.tanh %1014 : vector<2x16xf32>
    %cst_402 = arith.constant 1.000000e+00 : f32
    %1016 = vector.broadcast %cst_402 : f32 to vector<2x16xf32>
    %1017 = arith.subf %1016, %1010 : vector<2x16xf32>
    %1018 = arith.mulf %1017, %1015 : vector<2x16xf32>
    %1019 = arith.mulf %1010, %988 : vector<2x16xf32>
    %1020 = arith.addf %1018, %1019 : vector<2x16xf32>
    %c8_403 = arith.constant 8 : index
    %c0_404 = arith.constant 0 : index
    %1021 = vector.load %arg3[%c8_403, %c0_404] : memref<16x32xf32, #tpu.memory_space<vmem>>, vector<2x16xf32>
    tpu.vector_store %arg3[%c8_403, %c0_404], %1020 {strides = array<i32>} : memref<16x32xf32, #tpu.memory_space<vmem>>, vector<2x16xf32>,
    %cst_405 = arith.constant dense<0.000000e+00> : vector<2x16xf32>
    %1022 = tpu.matmul %1020, %843, %cst_405 {dimension_numbers = #tpu.dot_dimension_numbers<[1], [0], [0], [1], [0, 0, 1, 1], [], []>} : vector<2x16xf32>, vector<16x16xf32>, vector<2x16xf32> -> vector<2x16xf32>
    %cst_406 = arith.constant dense<0.000000e+00> : vector<2x16xf32>
    %1023 = tpu.matmul %1020, %844, %cst_406 {dimension_numbers = #tpu.dot_dimension_numbers<[1], [0], [0], [1], [0, 0, 1, 1], [], []>} : vector<2x16xf32>, vector<16x16xf32>, vector<2x16xf32> -> vector<2x16xf32>
    %cst_407 = arith.constant dense<0.000000e+00> : vector<2x16xf32>
    %1024 = tpu.matmul %1020, %845, %cst_407 {dimension_numbers = #tpu.dot_dimension_numbers<[1], [0], [0], [1], [0, 0, 1, 1], [], []>} : vector<2x16xf32>, vector<16x16xf32>, vector<2x16xf32> -> vector<2x16xf32>
    %1025 = vector.extract_strided_slice %852 {offsets = [10, 0], sizes = [2, 16], strides = [1, 1]} : vector<16x16xf32> to vector<2x16xf32>
    %1026 = arith.addf %1025, %1022 : vector<2x16xf32>
    %cst_408 = arith.constant 5.000000e-01 : f32
    %1027 = vector.broadcast %cst_408 : f32 to vector<2x16xf32>
    %1028 = arith.mulf %1027, %1026 : vector<2x16xf32>
    %1029 = math.tanh %1028 : vector<2x16xf32>
    %cst_409 = arith.constant 5.000000e-01 : f32
    %1030 = vector.broadcast %cst_409 : f32 to vector<2x16xf32>
    %1031 = arith.mulf %1030, %1029 : vector<2x16xf32>
    %cst_410 = arith.constant 5.000000e-01 : f32
    %1032 = vector.broadcast %cst_410 : f32 to vector<2x16xf32>
    %1033 = arith.addf %1031, %1032 : vector<2x16xf32>
    %1034 = vector.extract_strided_slice %855 {offsets = [10, 0], sizes = [2, 16], strides = [1, 1]} : vector<16x16xf32> to vector<2x16xf32>
    %1035 = arith.addf %1034, %1023 : vector<2x16xf32>
    %cst_411 = arith.constant 5.000000e-01 : f32
    %1036 = vector.broadcast %cst_411 : f32 to vector<2x16xf32>
    %1037 = arith.mulf %1036, %1035 : vector<2x16xf32>
    %1038 = math.tanh %1037 : vector<2x16xf32>
    %cst_412 = arith.constant 5.000000e-01 : f32
    %1039 = vector.broadcast %cst_412 : f32 to vector<2x16xf32>
    %1040 = arith.mulf %1039, %1038 : vector<2x16xf32>
    %cst_413 = arith.constant 5.000000e-01 : f32
    %1041 = vector.broadcast %cst_413 : f32 to vector<2x16xf32>
    %1042 = arith.addf %1040, %1041 : vector<2x16xf32>
    %1043 = vector.extract_strided_slice %858 {offsets = [10, 0], sizes = [2, 16], strides = [1, 1]} : vector<16x16xf32> to vector<2x16xf32>
    %1044 = arith.addf %1024, %860 : vector<2x16xf32>
    %1045 = arith.mulf %1033, %1044 : vector<2x16xf32>
    %1046 = arith.addf %1043, %1045 : vector<2x16xf32>
    %1047 = math.tanh %1046 : vector<2x16xf32>
    %cst_414 = arith.constant 1.000000e+00 : f32
    %1048 = vector.broadcast %cst_414 : f32 to vector<2x16xf32>
    %1049 = arith.subf %1048, %1042 : vector<2x16xf32>
    %1050 = arith.mulf %1049, %1047 : vector<2x16xf32>
    %1051 = arith.mulf %1042, %1020 : vector<2x16xf32>
    %1052 = arith.addf %1050, %1051 : vector<2x16xf32>
    %c10_415 = arith.constant 10 : index
    %c0_416 = arith.constant 0 : index
    %1053 = vector.load %arg3[%c10_415, %c0_416] : memref<16x32xf32, #tpu.memory_space<vmem>>, vector<2x16xf32>
    tpu.vector_store %arg3[%c10_415, %c0_416], %1052 {strides = array<i32>} : memref<16x32xf32, #tpu.memory_space<vmem>>, vector<2x16xf32>,
    %cst_417 = arith.constant dense<0.000000e+00> : vector<2x16xf32>
    %1054 = tpu.matmul %1052, %843, %cst_417 {dimension_numbers = #tpu.dot_dimension_numbers<[1], [0], [0], [1], [0, 0, 1, 1], [], []>} : vector<2x16xf32>, vector<16x16xf32>, vector<2x16xf32> -> vector<2x16xf32>
    %cst_418 = arith.constant dense<0.000000e+00> : vector<2x16xf32>
    %1055 = tpu.matmul %1052, %844, %cst_418 {dimension_numbers = #tpu.dot_dimension_numbers<[1], [0], [0], [1], [0, 0, 1, 1], [], []>} : vector<2x16xf32>, vector<16x16xf32>, vector<2x16xf32> -> vector<2x16xf32>
    %cst_419 = arith.constant dense<0.000000e+00> : vector<2x16xf32>
    %1056 = tpu.matmul %1052, %845, %cst_419 {dimension_numbers = #tpu.dot_dimension_numbers<[1], [0], [0], [1], [0, 0, 1, 1], [], []>} : vector<2x16xf32>, vector<16x16xf32>, vector<2x16xf32> -> vector<2x16xf32>
    %1057 = vector.extract_strided_slice %852 {offsets = [12, 0], sizes = [2, 16], strides = [1, 1]} : vector<16x16xf32> to vector<2x16xf32>
    %1058 = arith.addf %1057, %1054 : vector<2x16xf32>
    %cst_420 = arith.constant 5.000000e-01 : f32
    %1059 = vector.broadcast %cst_420 : f32 to vector<2x16xf32>
    %1060 = arith.mulf %1059, %1058 : vector<2x16xf32>
    %1061 = math.tanh %1060 : vector<2x16xf32>
    %cst_421 = arith.constant 5.000000e-01 : f32
    %1062 = vector.broadcast %cst_421 : f32 to vector<2x16xf32>
    %1063 = arith.mulf %1062, %1061 : vector<2x16xf32>
    %cst_422 = arith.constant 5.000000e-01 : f32
    %1064 = vector.broadcast %cst_422 : f32 to vector<2x16xf32>
    %1065 = arith.addf %1063, %1064 : vector<2x16xf32>
    %1066 = vector.extract_strided_slice %855 {offsets = [12, 0], sizes = [2, 16], strides = [1, 1]} : vector<16x16xf32> to vector<2x16xf32>
    %1067 = arith.addf %1066, %1055 : vector<2x16xf32>
    %cst_423 = arith.constant 5.000000e-01 : f32
    %1068 = vector.broadcast %cst_423 : f32 to vector<2x16xf32>
    %1069 = arith.mulf %1068, %1067 : vector<2x16xf32>
    %1070 = math.tanh %1069 : vector<2x16xf32>
    %cst_424 = arith.constant 5.000000e-01 : f32
    %1071 = vector.broadcast %cst_424 : f32 to vector<2x16xf32>
    %1072 = arith.mulf %1071, %1070 : vector<2x16xf32>
    %cst_425 = arith.constant 5.000000e-01 : f32
    %1073 = vector.broadcast %cst_425 : f32 to vector<2x16xf32>
    %1074 = arith.addf %1072, %1073 : vector<2x16xf32>
    %1075 = vector.extract_strided_slice %858 {offsets = [12, 0], sizes = [2, 16], strides = [1, 1]} : vector<16x16xf32> to vector<2x16xf32>
    %1076 = arith.addf %1056, %860 : vector<2x16xf32>
    %1077 = arith.mulf %1065, %1076 : vector<2x16xf32>
    %1078 = arith.addf %1075, %1077 : vector<2x16xf32>
    %1079 = math.tanh %1078 : vector<2x16xf32>
    %cst_426 = arith.constant 1.000000e+00 : f32
    %1080 = vector.broadcast %cst_426 : f32 to vector<2x16xf32>
    %1081 = arith.subf %1080, %1074 : vector<2x16xf32>
    %1082 = arith.mulf %1081, %1079 : vector<2x16xf32>
    %1083 = arith.mulf %1074, %1052 : vector<2x16xf32>
    %1084 = arith.addf %1082, %1083 : vector<2x16xf32>
    %c12_427 = arith.constant 12 : index
    %c0_428 = arith.constant 0 : index
    %1085 = vector.load %arg3[%c12_427, %c0_428] : memref<16x32xf32, #tpu.memory_space<vmem>>, vector<2x16xf32>
    tpu.vector_store %arg3[%c12_427, %c0_428], %1084 {strides = array<i32>} : memref<16x32xf32, #tpu.memory_space<vmem>>, vector<2x16xf32>,
    %cst_429 = arith.constant dense<0.000000e+00> : vector<2x16xf32>
    %1086 = tpu.matmul %1084, %843, %cst_429 {dimension_numbers = #tpu.dot_dimension_numbers<[1], [0], [0], [1], [0, 0, 1, 1], [], []>} : vector<2x16xf32>, vector<16x16xf32>, vector<2x16xf32> -> vector<2x16xf32>
    %cst_430 = arith.constant dense<0.000000e+00> : vector<2x16xf32>
    %1087 = tpu.matmul %1084, %844, %cst_430 {dimension_numbers = #tpu.dot_dimension_numbers<[1], [0], [0], [1], [0, 0, 1, 1], [], []>} : vector<2x16xf32>, vector<16x16xf32>, vector<2x16xf32> -> vector<2x16xf32>
    %cst_431 = arith.constant dense<0.000000e+00> : vector<2x16xf32>
    %1088 = tpu.matmul %1084, %845, %cst_431 {dimension_numbers = #tpu.dot_dimension_numbers<[1], [0], [0], [1], [0, 0, 1, 1], [], []>} : vector<2x16xf32>, vector<16x16xf32>, vector<2x16xf32> -> vector<2x16xf32>
    %1089 = vector.extract_strided_slice %852 {offsets = [14, 0], sizes = [2, 16], strides = [1, 1]} : vector<16x16xf32> to vector<2x16xf32>
    %1090 = arith.addf %1089, %1086 : vector<2x16xf32>
    %cst_432 = arith.constant 5.000000e-01 : f32
    %1091 = vector.broadcast %cst_432 : f32 to vector<2x16xf32>
    %1092 = arith.mulf %1091, %1090 : vector<2x16xf32>
    %1093 = math.tanh %1092 : vector<2x16xf32>
    %cst_433 = arith.constant 5.000000e-01 : f32
    %1094 = vector.broadcast %cst_433 : f32 to vector<2x16xf32>
    %1095 = arith.mulf %1094, %1093 : vector<2x16xf32>
    %cst_434 = arith.constant 5.000000e-01 : f32
    %1096 = vector.broadcast %cst_434 : f32 to vector<2x16xf32>
    %1097 = arith.addf %1095, %1096 : vector<2x16xf32>
    %1098 = vector.extract_strided_slice %855 {offsets = [14, 0], sizes = [2, 16], strides = [1, 1]} : vector<16x16xf32> to vector<2x16xf32>
    %1099 = arith.addf %1098, %1087 : vector<2x16xf32>
    %cst_435 = arith.constant 5.000000e-01 : f32
    %1100 = vector.broadcast %cst_435 : f32 to vector<2x16xf32>
    %1101 = arith.mulf %1100, %1099 : vector<2x16xf32>
    %1102 = math.tanh %1101 : vector<2x16xf32>
    %cst_436 = arith.constant 5.000000e-01 : f32
    %1103 = vector.broadcast %cst_436 : f32 to vector<2x16xf32>
    %1104 = arith.mulf %1103, %1102 : vector<2x16xf32>
    %cst_437 = arith.constant 5.000000e-01 : f32
    %1105 = vector.broadcast %cst_437 : f32 to vector<2x16xf32>
    %1106 = arith.addf %1104, %1105 : vector<2x16xf32>
    %1107 = vector.extract_strided_slice %858 {offsets = [14, 0], sizes = [2, 16], strides = [1, 1]} : vector<16x16xf32> to vector<2x16xf32>
    %1108 = arith.addf %1088, %860 : vector<2x16xf32>
    %1109 = arith.mulf %1097, %1108 : vector<2x16xf32>
    %1110 = arith.addf %1107, %1109 : vector<2x16xf32>
    %1111 = math.tanh %1110 : vector<2x16xf32>
    %cst_438 = arith.constant 1.000000e+00 : f32
    %1112 = vector.broadcast %cst_438 : f32 to vector<2x16xf32>
    %1113 = arith.subf %1112, %1106 : vector<2x16xf32>
    %1114 = arith.mulf %1113, %1111 : vector<2x16xf32>
    %1115 = arith.mulf %1106, %1084 : vector<2x16xf32>
    %1116 = arith.addf %1114, %1115 : vector<2x16xf32>
    %c14_439 = arith.constant 14 : index
    %c0_440 = arith.constant 0 : index
    %1117 = vector.load %arg3[%c14_439, %c0_440] : memref<16x32xf32, #tpu.memory_space<vmem>>, vector<2x16xf32>
    tpu.vector_store %arg3[%c14_439, %c0_440], %1116 {strides = array<i32>} : memref<16x32xf32, #tpu.memory_space<vmem>>, vector<2x16xf32>,
    %c0_441 = arith.constant 0 : index
    %c0_442 = arith.constant 0 : index
    %1118 = vector.load %arg3[%c0_441, %c0_442] : memref<16x32xf32, #tpu.memory_space<vmem>>, vector<16x16xf32>
    %cst_443 = arith.constant 0.000000e+00 : f32
    %1119 = vector.broadcast %cst_443 : f32 to vector<16x16xf32>
    %1120 = arith.maximumf %1118, %1119 : vector<16x16xf32>
    %c608 = arith.constant 608 : index
    %c0_444 = arith.constant 0 : index
    %1121 = vector.load %arg1[%c608, %c0_444] : memref<744x128xf32, #tpu.memory_space<vmem>>, vector<16x8xf32>
    %c624 = arith.constant 624 : index
    %c0_445 = arith.constant 0 : index
    %1122 = vector.load %arg1[%c624, %c0_445] : memref<744x128xf32, #tpu.memory_space<vmem>>, vector<16x8xf32>
    %c640 = arith.constant 640 : index
    %c0_446 = arith.constant 0 : index
    %1123 = vector.load %arg1[%c640, %c0_446] : memref<744x128xf32, #tpu.memory_space<vmem>>, vector<16x8xf32>
    %c656 = arith.constant 656 : index
    %c0_447 = arith.constant 0 : index
    %1124 = vector.load %arg1[%c656, %c0_447] : memref<744x128xf32, #tpu.memory_space<vmem>>, vector<8x8xf32>
    %c664 = arith.constant 664 : index
    %c0_448 = arith.constant 0 : index
    %1125 = vector.load %arg1[%c664, %c0_448] : memref<744x128xf32, #tpu.memory_space<vmem>>, vector<8x8xf32>
    %c672 = arith.constant 672 : index
    %c0_449 = arith.constant 0 : index
    %1126 = vector.load %arg1[%c672, %c0_449] : memref<744x128xf32, #tpu.memory_space<vmem>>, vector<8x8xf32>
    %c680 = arith.constant 680 : index
    %c0_450 = arith.constant 0 : index
    %1127 = vector.load %arg1[%c680, %c0_450] : memref<744x128xf32, #tpu.memory_space<vmem>>, vector<1x8xf32>
    %c681 = arith.constant 681 : index
    %c0_451 = arith.constant 0 : index
    %1128 = vector.load %arg1[%c681, %c0_451] : memref<744x128xf32, #tpu.memory_space<vmem>>, vector<1x8xf32>
    %c682 = arith.constant 682 : index
    %c0_452 = arith.constant 0 : index
    %1129 = vector.load %arg1[%c682, %c0_452] : memref<744x128xf32, #tpu.memory_space<vmem>>, vector<1x8xf32>
    %c683 = arith.constant 683 : index
    %c0_453 = arith.constant 0 : index
    %1130 = vector.load %arg1[%c683, %c0_453] : memref<744x128xf32, #tpu.memory_space<vmem>>, vector<1x8xf32>
    %cst_454 = arith.constant dense<0.000000e+00> : vector<16x8xf32>
    %1131 = tpu.matmul %1120, %1121, %cst_454 {dimension_numbers = #tpu.dot_dimension_numbers<[1], [0], [0], [1], [0, 0, 1, 1], [], []>} : vector<16x16xf32>, vector<16x8xf32>, vector<16x8xf32> -> vector<16x8xf32>
    %1132 = vector.broadcast %1127 : vector<1x8xf32> to vector<16x8xf32>
    %1133 = arith.addf %1131, %1132 : vector<16x8xf32>
    %cst_455 = arith.constant dense<0.000000e+00> : vector<16x8xf32>
    %1134 = tpu.matmul %1120, %1122, %cst_455 {dimension_numbers = #tpu.dot_dimension_numbers<[1], [0], [0], [1], [0, 0, 1, 1], [], []>} : vector<16x16xf32>, vector<16x8xf32>, vector<16x8xf32> -> vector<16x8xf32>
    %1135 = vector.broadcast %1128 : vector<1x8xf32> to vector<16x8xf32>
    %1136 = arith.addf %1134, %1135 : vector<16x8xf32>
    %cst_456 = arith.constant dense<0.000000e+00> : vector<16x8xf32>
    %1137 = tpu.matmul %1120, %1123, %cst_456 {dimension_numbers = #tpu.dot_dimension_numbers<[1], [0], [0], [1], [0, 0, 1, 1], [], []>} : vector<16x16xf32>, vector<16x8xf32>, vector<16x8xf32> -> vector<16x8xf32>
    %1138 = vector.broadcast %1129 : vector<1x8xf32> to vector<16x8xf32>
    %1139 = arith.addf %1137, %1138 : vector<16x8xf32>
    %1140 = vector.shape_cast %1130 : vector<1x8xf32> to vector<1x8xf32>
    %1141 = vector.broadcast %1140 : vector<1x8xf32> to vector<2x8xf32>
    %cst_457 = arith.constant 0.000000e+00 : f32
    %1142 = vector.broadcast %cst_457 : f32 to vector<2x8xf32>
    %cst_458 = arith.constant dense<0.000000e+00> : vector<2x8xf32>
    %1143 = tpu.matmul %1142, %1124, %cst_458 {dimension_numbers = #tpu.dot_dimension_numbers<[1], [0], [0], [1], [0, 0, 1, 1], [], []>} : vector<2x8xf32>, vector<8x8xf32>, vector<2x8xf32> -> vector<2x8xf32>
    %cst_459 = arith.constant dense<0.000000e+00> : vector<2x8xf32>
    %1144 = tpu.matmul %1142, %1125, %cst_459 {dimension_numbers = #tpu.dot_dimension_numbers<[1], [0], [0], [1], [0, 0, 1, 1], [], []>} : vector<2x8xf32>, vector<8x8xf32>, vector<2x8xf32> -> vector<2x8xf32>
    %cst_460 = arith.constant dense<0.000000e+00> : vector<2x8xf32>
    %1145 = tpu.matmul %1142, %1126, %cst_460 {dimension_numbers = #tpu.dot_dimension_numbers<[1], [0], [0], [1], [0, 0, 1, 1], [], []>} : vector<2x8xf32>, vector<8x8xf32>, vector<2x8xf32> -> vector<2x8xf32>
    %1146 = vector.extract_strided_slice %1133 {offsets = [0, 0], sizes = [2, 8], strides = [1, 1]} : vector<16x8xf32> to vector<2x8xf32>
    %1147 = arith.addf %1146, %1143 : vector<2x8xf32>
    %cst_461 = arith.constant 5.000000e-01 : f32
    %1148 = vector.broadcast %cst_461 : f32 to vector<2x8xf32>
    %1149 = arith.mulf %1148, %1147 : vector<2x8xf32>
    %1150 = math.tanh %1149 : vector<2x8xf32>
    %cst_462 = arith.constant 5.000000e-01 : f32
    %1151 = vector.broadcast %cst_462 : f32 to vector<2x8xf32>
    %1152 = arith.mulf %1151, %1150 : vector<2x8xf32>
    %cst_463 = arith.constant 5.000000e-01 : f32
    %1153 = vector.broadcast %cst_463 : f32 to vector<2x8xf32>
    %1154 = arith.addf %1152, %1153 : vector<2x8xf32>
    %1155 = vector.extract_strided_slice %1136 {offsets = [0, 0], sizes = [2, 8], strides = [1, 1]} : vector<16x8xf32> to vector<2x8xf32>
    %1156 = arith.addf %1155, %1144 : vector<2x8xf32>
    %cst_464 = arith.constant 5.000000e-01 : f32
    %1157 = vector.broadcast %cst_464 : f32 to vector<2x8xf32>
    %1158 = arith.mulf %1157, %1156 : vector<2x8xf32>
    %1159 = math.tanh %1158 : vector<2x8xf32>
    %cst_465 = arith.constant 5.000000e-01 : f32
    %1160 = vector.broadcast %cst_465 : f32 to vector<2x8xf32>
    %1161 = arith.mulf %1160, %1159 : vector<2x8xf32>
    %cst_466 = arith.constant 5.000000e-01 : f32
    %1162 = vector.broadcast %cst_466 : f32 to vector<2x8xf32>
    %1163 = arith.addf %1161, %1162 : vector<2x8xf32>
    %1164 = vector.extract_strided_slice %1139 {offsets = [0, 0], sizes = [2, 8], strides = [1, 1]} : vector<16x8xf32> to vector<2x8xf32>
    %1165 = arith.addf %1145, %1141 : vector<2x8xf32>
    %1166 = arith.mulf %1154, %1165 : vector<2x8xf32>
    %1167 = arith.addf %1164, %1166 : vector<2x8xf32>
    %1168 = math.tanh %1167 : vector<2x8xf32>
    %cst_467 = arith.constant 1.000000e+00 : f32
    %1169 = vector.broadcast %cst_467 : f32 to vector<2x8xf32>
    %1170 = arith.subf %1169, %1163 : vector<2x8xf32>
    %1171 = arith.mulf %1170, %1168 : vector<2x8xf32>
    %1172 = arith.mulf %1163, %1142 : vector<2x8xf32>
    %1173 = arith.addf %1171, %1172 : vector<2x8xf32>
    %c0_468 = arith.constant 0 : index
    %c0_469 = arith.constant 0 : index
    %1174 = vector.load %arg3[%c0_468, %c0_469] : memref<16x32xf32, #tpu.memory_space<vmem>>, vector<2x8xf32>
    tpu.vector_store %arg3[%c0_468, %c0_469], %1173 {strides = array<i32>} : memref<16x32xf32, #tpu.memory_space<vmem>>, vector<2x8xf32>,
    %cst_470 = arith.constant dense<0.000000e+00> : vector<2x8xf32>
    %1175 = tpu.matmul %1173, %1124, %cst_470 {dimension_numbers = #tpu.dot_dimension_numbers<[1], [0], [0], [1], [0, 0, 1, 1], [], []>} : vector<2x8xf32>, vector<8x8xf32>, vector<2x8xf32> -> vector<2x8xf32>
    %cst_471 = arith.constant dense<0.000000e+00> : vector<2x8xf32>
    %1176 = tpu.matmul %1173, %1125, %cst_471 {dimension_numbers = #tpu.dot_dimension_numbers<[1], [0], [0], [1], [0, 0, 1, 1], [], []>} : vector<2x8xf32>, vector<8x8xf32>, vector<2x8xf32> -> vector<2x8xf32>
    %cst_472 = arith.constant dense<0.000000e+00> : vector<2x8xf32>
    %1177 = tpu.matmul %1173, %1126, %cst_472 {dimension_numbers = #tpu.dot_dimension_numbers<[1], [0], [0], [1], [0, 0, 1, 1], [], []>} : vector<2x8xf32>, vector<8x8xf32>, vector<2x8xf32> -> vector<2x8xf32>
    %1178 = vector.extract_strided_slice %1133 {offsets = [2, 0], sizes = [2, 8], strides = [1, 1]} : vector<16x8xf32> to vector<2x8xf32>
    %1179 = arith.addf %1178, %1175 : vector<2x8xf32>
    %cst_473 = arith.constant 5.000000e-01 : f32
    %1180 = vector.broadcast %cst_473 : f32 to vector<2x8xf32>
    %1181 = arith.mulf %1180, %1179 : vector<2x8xf32>
    %1182 = math.tanh %1181 : vector<2x8xf32>
    %cst_474 = arith.constant 5.000000e-01 : f32
    %1183 = vector.broadcast %cst_474 : f32 to vector<2x8xf32>
    %1184 = arith.mulf %1183, %1182 : vector<2x8xf32>
    %cst_475 = arith.constant 5.000000e-01 : f32
    %1185 = vector.broadcast %cst_475 : f32 to vector<2x8xf32>
    %1186 = arith.addf %1184, %1185 : vector<2x8xf32>
    %1187 = vector.extract_strided_slice %1136 {offsets = [2, 0], sizes = [2, 8], strides = [1, 1]} : vector<16x8xf32> to vector<2x8xf32>
    %1188 = arith.addf %1187, %1176 : vector<2x8xf32>
    %cst_476 = arith.constant 5.000000e-01 : f32
    %1189 = vector.broadcast %cst_476 : f32 to vector<2x8xf32>
    %1190 = arith.mulf %1189, %1188 : vector<2x8xf32>
    %1191 = math.tanh %1190 : vector<2x8xf32>
    %cst_477 = arith.constant 5.000000e-01 : f32
    %1192 = vector.broadcast %cst_477 : f32 to vector<2x8xf32>
    %1193 = arith.mulf %1192, %1191 : vector<2x8xf32>
    %cst_478 = arith.constant 5.000000e-01 : f32
    %1194 = vector.broadcast %cst_478 : f32 to vector<2x8xf32>
    %1195 = arith.addf %1193, %1194 : vector<2x8xf32>
    %1196 = vector.extract_strided_slice %1139 {offsets = [2, 0], sizes = [2, 8], strides = [1, 1]} : vector<16x8xf32> to vector<2x8xf32>
    %1197 = arith.addf %1177, %1141 : vector<2x8xf32>
    %1198 = arith.mulf %1186, %1197 : vector<2x8xf32>
    %1199 = arith.addf %1196, %1198 : vector<2x8xf32>
    %1200 = math.tanh %1199 : vector<2x8xf32>
    %cst_479 = arith.constant 1.000000e+00 : f32
    %1201 = vector.broadcast %cst_479 : f32 to vector<2x8xf32>
    %1202 = arith.subf %1201, %1195 : vector<2x8xf32>
    %1203 = arith.mulf %1202, %1200 : vector<2x8xf32>
    %1204 = arith.mulf %1195, %1173 : vector<2x8xf32>
    %1205 = arith.addf %1203, %1204 : vector<2x8xf32>
    %c2_480 = arith.constant 2 : index
    %c0_481 = arith.constant 0 : index
    %1206 = vector.load %arg3[%c2_480, %c0_481] : memref<16x32xf32, #tpu.memory_space<vmem>>, vector<2x8xf32>
    tpu.vector_store %arg3[%c2_480, %c0_481], %1205 {strides = array<i32>} : memref<16x32xf32, #tpu.memory_space<vmem>>, vector<2x8xf32>,
    %cst_482 = arith.constant dense<0.000000e+00> : vector<2x8xf32>
    %1207 = tpu.matmul %1205, %1124, %cst_482 {dimension_numbers = #tpu.dot_dimension_numbers<[1], [0], [0], [1], [0, 0, 1, 1], [], []>} : vector<2x8xf32>, vector<8x8xf32>, vector<2x8xf32> -> vector<2x8xf32>
    %cst_483 = arith.constant dense<0.000000e+00> : vector<2x8xf32>
    %1208 = tpu.matmul %1205, %1125, %cst_483 {dimension_numbers = #tpu.dot_dimension_numbers<[1], [0], [0], [1], [0, 0, 1, 1], [], []>} : vector<2x8xf32>, vector<8x8xf32>, vector<2x8xf32> -> vector<2x8xf32>
    %cst_484 = arith.constant dense<0.000000e+00> : vector<2x8xf32>
    %1209 = tpu.matmul %1205, %1126, %cst_484 {dimension_numbers = #tpu.dot_dimension_numbers<[1], [0], [0], [1], [0, 0, 1, 1], [], []>} : vector<2x8xf32>, vector<8x8xf32>, vector<2x8xf32> -> vector<2x8xf32>
    %1210 = vector.extract_strided_slice %1133 {offsets = [4, 0], sizes = [2, 8], strides = [1, 1]} : vector<16x8xf32> to vector<2x8xf32>
    %1211 = arith.addf %1210, %1207 : vector<2x8xf32>
    %cst_485 = arith.constant 5.000000e-01 : f32
    %1212 = vector.broadcast %cst_485 : f32 to vector<2x8xf32>
    %1213 = arith.mulf %1212, %1211 : vector<2x8xf32>
    %1214 = math.tanh %1213 : vector<2x8xf32>
    %cst_486 = arith.constant 5.000000e-01 : f32
    %1215 = vector.broadcast %cst_486 : f32 to vector<2x8xf32>
    %1216 = arith.mulf %1215, %1214 : vector<2x8xf32>
    %cst_487 = arith.constant 5.000000e-01 : f32
    %1217 = vector.broadcast %cst_487 : f32 to vector<2x8xf32>
    %1218 = arith.addf %1216, %1217 : vector<2x8xf32>
    %1219 = vector.extract_strided_slice %1136 {offsets = [4, 0], sizes = [2, 8], strides = [1, 1]} : vector<16x8xf32> to vector<2x8xf32>
    %1220 = arith.addf %1219, %1208 : vector<2x8xf32>
    %cst_488 = arith.constant 5.000000e-01 : f32
    %1221 = vector.broadcast %cst_488 : f32 to vector<2x8xf32>
    %1222 = arith.mulf %1221, %1220 : vector<2x8xf32>
    %1223 = math.tanh %1222 : vector<2x8xf32>
    %cst_489 = arith.constant 5.000000e-01 : f32
    %1224 = vector.broadcast %cst_489 : f32 to vector<2x8xf32>
    %1225 = arith.mulf %1224, %1223 : vector<2x8xf32>
    %cst_490 = arith.constant 5.000000e-01 : f32
    %1226 = vector.broadcast %cst_490 : f32 to vector<2x8xf32>
    %1227 = arith.addf %1225, %1226 : vector<2x8xf32>
    %1228 = vector.extract_strided_slice %1139 {offsets = [4, 0], sizes = [2, 8], strides = [1, 1]} : vector<16x8xf32> to vector<2x8xf32>
    %1229 = arith.addf %1209, %1141 : vector<2x8xf32>
    %1230 = arith.mulf %1218, %1229 : vector<2x8xf32>
    %1231 = arith.addf %1228, %1230 : vector<2x8xf32>
    %1232 = math.tanh %1231 : vector<2x8xf32>
    %cst_491 = arith.constant 1.000000e+00 : f32
    %1233 = vector.broadcast %cst_491 : f32 to vector<2x8xf32>
    %1234 = arith.subf %1233, %1227 : vector<2x8xf32>
    %1235 = arith.mulf %1234, %1232 : vector<2x8xf32>
    %1236 = arith.mulf %1227, %1205 : vector<2x8xf32>
    %1237 = arith.addf %1235, %1236 : vector<2x8xf32>
    %c4_492 = arith.constant 4 : index
    %c0_493 = arith.constant 0 : index
    %1238 = vector.load %arg3[%c4_492, %c0_493] : memref<16x32xf32, #tpu.memory_space<vmem>>, vector<2x8xf32>
    tpu.vector_store %arg3[%c4_492, %c0_493], %1237 {strides = array<i32>} : memref<16x32xf32, #tpu.memory_space<vmem>>, vector<2x8xf32>,
    %cst_494 = arith.constant dense<0.000000e+00> : vector<2x8xf32>
    %1239 = tpu.matmul %1237, %1124, %cst_494 {dimension_numbers = #tpu.dot_dimension_numbers<[1], [0], [0], [1], [0, 0, 1, 1], [], []>} : vector<2x8xf32>, vector<8x8xf32>, vector<2x8xf32> -> vector<2x8xf32>
    %cst_495 = arith.constant dense<0.000000e+00> : vector<2x8xf32>
    %1240 = tpu.matmul %1237, %1125, %cst_495 {dimension_numbers = #tpu.dot_dimension_numbers<[1], [0], [0], [1], [0, 0, 1, 1], [], []>} : vector<2x8xf32>, vector<8x8xf32>, vector<2x8xf32> -> vector<2x8xf32>
    %cst_496 = arith.constant dense<0.000000e+00> : vector<2x8xf32>
    %1241 = tpu.matmul %1237, %1126, %cst_496 {dimension_numbers = #tpu.dot_dimension_numbers<[1], [0], [0], [1], [0, 0, 1, 1], [], []>} : vector<2x8xf32>, vector<8x8xf32>, vector<2x8xf32> -> vector<2x8xf32>
    %1242 = vector.extract_strided_slice %1133 {offsets = [6, 0], sizes = [2, 8], strides = [1, 1]} : vector<16x8xf32> to vector<2x8xf32>
    %1243 = arith.addf %1242, %1239 : vector<2x8xf32>
    %cst_497 = arith.constant 5.000000e-01 : f32
    %1244 = vector.broadcast %cst_497 : f32 to vector<2x8xf32>
    %1245 = arith.mulf %1244, %1243 : vector<2x8xf32>
    %1246 = math.tanh %1245 : vector<2x8xf32>
    %cst_498 = arith.constant 5.000000e-01 : f32
    %1247 = vector.broadcast %cst_498 : f32 to vector<2x8xf32>
    %1248 = arith.mulf %1247, %1246 : vector<2x8xf32>
    %cst_499 = arith.constant 5.000000e-01 : f32
    %1249 = vector.broadcast %cst_499 : f32 to vector<2x8xf32>
    %1250 = arith.addf %1248, %1249 : vector<2x8xf32>
    %1251 = vector.extract_strided_slice %1136 {offsets = [6, 0], sizes = [2, 8], strides = [1, 1]} : vector<16x8xf32> to vector<2x8xf32>
    %1252 = arith.addf %1251, %1240 : vector<2x8xf32>
    %cst_500 = arith.constant 5.000000e-01 : f32
    %1253 = vector.broadcast %cst_500 : f32 to vector<2x8xf32>
    %1254 = arith.mulf %1253, %1252 : vector<2x8xf32>
    %1255 = math.tanh %1254 : vector<2x8xf32>
    %cst_501 = arith.constant 5.000000e-01 : f32
    %1256 = vector.broadcast %cst_501 : f32 to vector<2x8xf32>
    %1257 = arith.mulf %1256, %1255 : vector<2x8xf32>
    %cst_502 = arith.constant 5.000000e-01 : f32
    %1258 = vector.broadcast %cst_502 : f32 to vector<2x8xf32>
    %1259 = arith.addf %1257, %1258 : vector<2x8xf32>
    %1260 = vector.extract_strided_slice %1139 {offsets = [6, 0], sizes = [2, 8], strides = [1, 1]} : vector<16x8xf32> to vector<2x8xf32>
    %1261 = arith.addf %1241, %1141 : vector<2x8xf32>
    %1262 = arith.mulf %1250, %1261 : vector<2x8xf32>
    %1263 = arith.addf %1260, %1262 : vector<2x8xf32>
    %1264 = math.tanh %1263 : vector<2x8xf32>
    %cst_503 = arith.constant 1.000000e+00 : f32
    %1265 = vector.broadcast %cst_503 : f32 to vector<2x8xf32>
    %1266 = arith.subf %1265, %1259 : vector<2x8xf32>
    %1267 = arith.mulf %1266, %1264 : vector<2x8xf32>
    %1268 = arith.mulf %1259, %1237 : vector<2x8xf32>
    %1269 = arith.addf %1267, %1268 : vector<2x8xf32>
    %c6_504 = arith.constant 6 : index
    %c0_505 = arith.constant 0 : index
    %1270 = vector.load %arg3[%c6_504, %c0_505] : memref<16x32xf32, #tpu.memory_space<vmem>>, vector<2x8xf32>
    tpu.vector_store %arg3[%c6_504, %c0_505], %1269 {strides = array<i32>} : memref<16x32xf32, #tpu.memory_space<vmem>>, vector<2x8xf32>,
    %cst_506 = arith.constant dense<0.000000e+00> : vector<2x8xf32>
    %1271 = tpu.matmul %1269, %1124, %cst_506 {dimension_numbers = #tpu.dot_dimension_numbers<[1], [0], [0], [1], [0, 0, 1, 1], [], []>} : vector<2x8xf32>, vector<8x8xf32>, vector<2x8xf32> -> vector<2x8xf32>
    %cst_507 = arith.constant dense<0.000000e+00> : vector<2x8xf32>
    %1272 = tpu.matmul %1269, %1125, %cst_507 {dimension_numbers = #tpu.dot_dimension_numbers<[1], [0], [0], [1], [0, 0, 1, 1], [], []>} : vector<2x8xf32>, vector<8x8xf32>, vector<2x8xf32> -> vector<2x8xf32>
    %cst_508 = arith.constant dense<0.000000e+00> : vector<2x8xf32>
    %1273 = tpu.matmul %1269, %1126, %cst_508 {dimension_numbers = #tpu.dot_dimension_numbers<[1], [0], [0], [1], [0, 0, 1, 1], [], []>} : vector<2x8xf32>, vector<8x8xf32>, vector<2x8xf32> -> vector<2x8xf32>
    %1274 = vector.extract_strided_slice %1133 {offsets = [8, 0], sizes = [2, 8], strides = [1, 1]} : vector<16x8xf32> to vector<2x8xf32>
    %1275 = arith.addf %1274, %1271 : vector<2x8xf32>
    %cst_509 = arith.constant 5.000000e-01 : f32
    %1276 = vector.broadcast %cst_509 : f32 to vector<2x8xf32>
    %1277 = arith.mulf %1276, %1275 : vector<2x8xf32>
    %1278 = math.tanh %1277 : vector<2x8xf32>
    %cst_510 = arith.constant 5.000000e-01 : f32
    %1279 = vector.broadcast %cst_510 : f32 to vector<2x8xf32>
    %1280 = arith.mulf %1279, %1278 : vector<2x8xf32>
    %cst_511 = arith.constant 5.000000e-01 : f32
    %1281 = vector.broadcast %cst_511 : f32 to vector<2x8xf32>
    %1282 = arith.addf %1280, %1281 : vector<2x8xf32>
    %1283 = vector.extract_strided_slice %1136 {offsets = [8, 0], sizes = [2, 8], strides = [1, 1]} : vector<16x8xf32> to vector<2x8xf32>
    %1284 = arith.addf %1283, %1272 : vector<2x8xf32>
    %cst_512 = arith.constant 5.000000e-01 : f32
    %1285 = vector.broadcast %cst_512 : f32 to vector<2x8xf32>
    %1286 = arith.mulf %1285, %1284 : vector<2x8xf32>
    %1287 = math.tanh %1286 : vector<2x8xf32>
    %cst_513 = arith.constant 5.000000e-01 : f32
    %1288 = vector.broadcast %cst_513 : f32 to vector<2x8xf32>
    %1289 = arith.mulf %1288, %1287 : vector<2x8xf32>
    %cst_514 = arith.constant 5.000000e-01 : f32
    %1290 = vector.broadcast %cst_514 : f32 to vector<2x8xf32>
    %1291 = arith.addf %1289, %1290 : vector<2x8xf32>
    %1292 = vector.extract_strided_slice %1139 {offsets = [8, 0], sizes = [2, 8], strides = [1, 1]} : vector<16x8xf32> to vector<2x8xf32>
    %1293 = arith.addf %1273, %1141 : vector<2x8xf32>
    %1294 = arith.mulf %1282, %1293 : vector<2x8xf32>
    %1295 = arith.addf %1292, %1294 : vector<2x8xf32>
    %1296 = math.tanh %1295 : vector<2x8xf32>
    %cst_515 = arith.constant 1.000000e+00 : f32
    %1297 = vector.broadcast %cst_515 : f32 to vector<2x8xf32>
    %1298 = arith.subf %1297, %1291 : vector<2x8xf32>
    %1299 = arith.mulf %1298, %1296 : vector<2x8xf32>
    %1300 = arith.mulf %1291, %1269 : vector<2x8xf32>
    %1301 = arith.addf %1299, %1300 : vector<2x8xf32>
    %c8_516 = arith.constant 8 : index
    %c0_517 = arith.constant 0 : index
    %1302 = vector.load %arg3[%c8_516, %c0_517] : memref<16x32xf32, #tpu.memory_space<vmem>>, vector<2x8xf32>
    tpu.vector_store %arg3[%c8_516, %c0_517], %1301 {strides = array<i32>} : memref<16x32xf32, #tpu.memory_space<vmem>>, vector<2x8xf32>,
    %cst_518 = arith.constant dense<0.000000e+00> : vector<2x8xf32>
    %1303 = tpu.matmul %1301, %1124, %cst_518 {dimension_numbers = #tpu.dot_dimension_numbers<[1], [0], [0], [1], [0, 0, 1, 1], [], []>} : vector<2x8xf32>, vector<8x8xf32>, vector<2x8xf32> -> vector<2x8xf32>
    %cst_519 = arith.constant dense<0.000000e+00> : vector<2x8xf32>
    %1304 = tpu.matmul %1301, %1125, %cst_519 {dimension_numbers = #tpu.dot_dimension_numbers<[1], [0], [0], [1], [0, 0, 1, 1], [], []>} : vector<2x8xf32>, vector<8x8xf32>, vector<2x8xf32> -> vector<2x8xf32>
    %cst_520 = arith.constant dense<0.000000e+00> : vector<2x8xf32>
    %1305 = tpu.matmul %1301, %1126, %cst_520 {dimension_numbers = #tpu.dot_dimension_numbers<[1], [0], [0], [1], [0, 0, 1, 1], [], []>} : vector<2x8xf32>, vector<8x8xf32>, vector<2x8xf32> -> vector<2x8xf32>
    %1306 = vector.extract_strided_slice %1133 {offsets = [10, 0], sizes = [2, 8], strides = [1, 1]} : vector<16x8xf32> to vector<2x8xf32>
    %1307 = arith.addf %1306, %1303 : vector<2x8xf32>
    %cst_521 = arith.constant 5.000000e-01 : f32
    %1308 = vector.broadcast %cst_521 : f32 to vector<2x8xf32>
    %1309 = arith.mulf %1308, %1307 : vector<2x8xf32>
    %1310 = math.tanh %1309 : vector<2x8xf32>
    %cst_522 = arith.constant 5.000000e-01 : f32
    %1311 = vector.broadcast %cst_522 : f32 to vector<2x8xf32>
    %1312 = arith.mulf %1311, %1310 : vector<2x8xf32>
    %cst_523 = arith.constant 5.000000e-01 : f32
    %1313 = vector.broadcast %cst_523 : f32 to vector<2x8xf32>
    %1314 = arith.addf %1312, %1313 : vector<2x8xf32>
    %1315 = vector.extract_strided_slice %1136 {offsets = [10, 0], sizes = [2, 8], strides = [1, 1]} : vector<16x8xf32> to vector<2x8xf32>
    %1316 = arith.addf %1315, %1304 : vector<2x8xf32>
    %cst_524 = arith.constant 5.000000e-01 : f32
    %1317 = vector.broadcast %cst_524 : f32 to vector<2x8xf32>
    %1318 = arith.mulf %1317, %1316 : vector<2x8xf32>
    %1319 = math.tanh %1318 : vector<2x8xf32>
    %cst_525 = arith.constant 5.000000e-01 : f32
    %1320 = vector.broadcast %cst_525 : f32 to vector<2x8xf32>
    %1321 = arith.mulf %1320, %1319 : vector<2x8xf32>
    %cst_526 = arith.constant 5.000000e-01 : f32
    %1322 = vector.broadcast %cst_526 : f32 to vector<2x8xf32>
    %1323 = arith.addf %1321, %1322 : vector<2x8xf32>
    %1324 = vector.extract_strided_slice %1139 {offsets = [10, 0], sizes = [2, 8], strides = [1, 1]} : vector<16x8xf32> to vector<2x8xf32>
    %1325 = arith.addf %1305, %1141 : vector<2x8xf32>
    %1326 = arith.mulf %1314, %1325 : vector<2x8xf32>
    %1327 = arith.addf %1324, %1326 : vector<2x8xf32>
    %1328 = math.tanh %1327 : vector<2x8xf32>
    %cst_527 = arith.constant 1.000000e+00 : f32
    %1329 = vector.broadcast %cst_527 : f32 to vector<2x8xf32>
    %1330 = arith.subf %1329, %1323 : vector<2x8xf32>
    %1331 = arith.mulf %1330, %1328 : vector<2x8xf32>
    %1332 = arith.mulf %1323, %1301 : vector<2x8xf32>
    %1333 = arith.addf %1331, %1332 : vector<2x8xf32>
    %c10_528 = arith.constant 10 : index
    %c0_529 = arith.constant 0 : index
    %1334 = vector.load %arg3[%c10_528, %c0_529] : memref<16x32xf32, #tpu.memory_space<vmem>>, vector<2x8xf32>
    tpu.vector_store %arg3[%c10_528, %c0_529], %1333 {strides = array<i32>} : memref<16x32xf32, #tpu.memory_space<vmem>>, vector<2x8xf32>,
    %cst_530 = arith.constant dense<0.000000e+00> : vector<2x8xf32>
    %1335 = tpu.matmul %1333, %1124, %cst_530 {dimension_numbers = #tpu.dot_dimension_numbers<[1], [0], [0], [1], [0, 0, 1, 1], [], []>} : vector<2x8xf32>, vector<8x8xf32>, vector<2x8xf32> -> vector<2x8xf32>
    %cst_531 = arith.constant dense<0.000000e+00> : vector<2x8xf32>
    %1336 = tpu.matmul %1333, %1125, %cst_531 {dimension_numbers = #tpu.dot_dimension_numbers<[1], [0], [0], [1], [0, 0, 1, 1], [], []>} : vector<2x8xf32>, vector<8x8xf32>, vector<2x8xf32> -> vector<2x8xf32>
    %cst_532 = arith.constant dense<0.000000e+00> : vector<2x8xf32>
    %1337 = tpu.matmul %1333, %1126, %cst_532 {dimension_numbers = #tpu.dot_dimension_numbers<[1], [0], [0], [1], [0, 0, 1, 1], [], []>} : vector<2x8xf32>, vector<8x8xf32>, vector<2x8xf32> -> vector<2x8xf32>
    %1338 = vector.extract_strided_slice %1133 {offsets = [12, 0], sizes = [2, 8], strides = [1, 1]} : vector<16x8xf32> to vector<2x8xf32>
    %1339 = arith.addf %1338, %1335 : vector<2x8xf32>
    %cst_533 = arith.constant 5.000000e-01 : f32
    %1340 = vector.broadcast %cst_533 : f32 to vector<2x8xf32>
    %1341 = arith.mulf %1340, %1339 : vector<2x8xf32>
    %1342 = math.tanh %1341 : vector<2x8xf32>
    %cst_534 = arith.constant 5.000000e-01 : f32
    %1343 = vector.broadcast %cst_534 : f32 to vector<2x8xf32>
    %1344 = arith.mulf %1343, %1342 : vector<2x8xf32>
    %cst_535 = arith.constant 5.000000e-01 : f32
    %1345 = vector.broadcast %cst_535 : f32 to vector<2x8xf32>
    %1346 = arith.addf %1344, %1345 : vector<2x8xf32>
    %1347 = vector.extract_strided_slice %1136 {offsets = [12, 0], sizes = [2, 8], strides = [1, 1]} : vector<16x8xf32> to vector<2x8xf32>
    %1348 = arith.addf %1347, %1336 : vector<2x8xf32>
    %cst_536 = arith.constant 5.000000e-01 : f32
    %1349 = vector.broadcast %cst_536 : f32 to vector<2x8xf32>
    %1350 = arith.mulf %1349, %1348 : vector<2x8xf32>
    %1351 = math.tanh %1350 : vector<2x8xf32>
    %cst_537 = arith.constant 5.000000e-01 : f32
    %1352 = vector.broadcast %cst_537 : f32 to vector<2x8xf32>
    %1353 = arith.mulf %1352, %1351 : vector<2x8xf32>
    %cst_538 = arith.constant 5.000000e-01 : f32
    %1354 = vector.broadcast %cst_538 : f32 to vector<2x8xf32>
    %1355 = arith.addf %1353, %1354 : vector<2x8xf32>
    %1356 = vector.extract_strided_slice %1139 {offsets = [12, 0], sizes = [2, 8], strides = [1, 1]} : vector<16x8xf32> to vector<2x8xf32>
    %1357 = arith.addf %1337, %1141 : vector<2x8xf32>
    %1358 = arith.mulf %1346, %1357 : vector<2x8xf32>
    %1359 = arith.addf %1356, %1358 : vector<2x8xf32>
    %1360 = math.tanh %1359 : vector<2x8xf32>
    %cst_539 = arith.constant 1.000000e+00 : f32
    %1361 = vector.broadcast %cst_539 : f32 to vector<2x8xf32>
    %1362 = arith.subf %1361, %1355 : vector<2x8xf32>
    %1363 = arith.mulf %1362, %1360 : vector<2x8xf32>
    %1364 = arith.mulf %1355, %1333 : vector<2x8xf32>
    %1365 = arith.addf %1363, %1364 : vector<2x8xf32>
    %c12_540 = arith.constant 12 : index
    %c0_541 = arith.constant 0 : index
    %1366 = vector.load %arg3[%c12_540, %c0_541] : memref<16x32xf32, #tpu.memory_space<vmem>>, vector<2x8xf32>
    tpu.vector_store %arg3[%c12_540, %c0_541], %1365 {strides = array<i32>} : memref<16x32xf32, #tpu.memory_space<vmem>>, vector<2x8xf32>,
    %cst_542 = arith.constant dense<0.000000e+00> : vector<2x8xf32>
    %1367 = tpu.matmul %1365, %1124, %cst_542 {dimension_numbers = #tpu.dot_dimension_numbers<[1], [0], [0], [1], [0, 0, 1, 1], [], []>} : vector<2x8xf32>, vector<8x8xf32>, vector<2x8xf32> -> vector<2x8xf32>
    %cst_543 = arith.constant dense<0.000000e+00> : vector<2x8xf32>
    %1368 = tpu.matmul %1365, %1125, %cst_543 {dimension_numbers = #tpu.dot_dimension_numbers<[1], [0], [0], [1], [0, 0, 1, 1], [], []>} : vector<2x8xf32>, vector<8x8xf32>, vector<2x8xf32> -> vector<2x8xf32>
    %cst_544 = arith.constant dense<0.000000e+00> : vector<2x8xf32>
    %1369 = tpu.matmul %1365, %1126, %cst_544 {dimension_numbers = #tpu.dot_dimension_numbers<[1], [0], [0], [1], [0, 0, 1, 1], [], []>} : vector<2x8xf32>, vector<8x8xf32>, vector<2x8xf32> -> vector<2x8xf32>
    %1370 = vector.extract_strided_slice %1133 {offsets = [14, 0], sizes = [2, 8], strides = [1, 1]} : vector<16x8xf32> to vector<2x8xf32>
    %1371 = arith.addf %1370, %1367 : vector<2x8xf32>
    %cst_545 = arith.constant 5.000000e-01 : f32
    %1372 = vector.broadcast %cst_545 : f32 to vector<2x8xf32>
    %1373 = arith.mulf %1372, %1371 : vector<2x8xf32>
    %1374 = math.tanh %1373 : vector<2x8xf32>
    %cst_546 = arith.constant 5.000000e-01 : f32
    %1375 = vector.broadcast %cst_546 : f32 to vector<2x8xf32>
    %1376 = arith.mulf %1375, %1374 : vector<2x8xf32>
    %cst_547 = arith.constant 5.000000e-01 : f32
    %1377 = vector.broadcast %cst_547 : f32 to vector<2x8xf32>
    %1378 = arith.addf %1376, %1377 : vector<2x8xf32>
    %1379 = vector.extract_strided_slice %1136 {offsets = [14, 0], sizes = [2, 8], strides = [1, 1]} : vector<16x8xf32> to vector<2x8xf32>
    %1380 = arith.addf %1379, %1368 : vector<2x8xf32>
    %cst_548 = arith.constant 5.000000e-01 : f32
    %1381 = vector.broadcast %cst_548 : f32 to vector<2x8xf32>
    %1382 = arith.mulf %1381, %1380 : vector<2x8xf32>
    %1383 = math.tanh %1382 : vector<2x8xf32>
    %cst_549 = arith.constant 5.000000e-01 : f32
    %1384 = vector.broadcast %cst_549 : f32 to vector<2x8xf32>
    %1385 = arith.mulf %1384, %1383 : vector<2x8xf32>
    %cst_550 = arith.constant 5.000000e-01 : f32
    %1386 = vector.broadcast %cst_550 : f32 to vector<2x8xf32>
    %1387 = arith.addf %1385, %1386 : vector<2x8xf32>
    %1388 = vector.extract_strided_slice %1139 {offsets = [14, 0], sizes = [2, 8], strides = [1, 1]} : vector<16x8xf32> to vector<2x8xf32>
    %1389 = arith.addf %1369, %1141 : vector<2x8xf32>
    %1390 = arith.mulf %1378, %1389 : vector<2x8xf32>
    %1391 = arith.addf %1388, %1390 : vector<2x8xf32>
    %1392 = math.tanh %1391 : vector<2x8xf32>
    %cst_551 = arith.constant 1.000000e+00 : f32
    %1393 = vector.broadcast %cst_551 : f32 to vector<2x8xf32>
    %1394 = arith.subf %1393, %1387 : vector<2x8xf32>
    %1395 = arith.mulf %1394, %1392 : vector<2x8xf32>
    %1396 = arith.mulf %1387, %1365 : vector<2x8xf32>
    %1397 = arith.addf %1395, %1396 : vector<2x8xf32>
    %c14_552 = arith.constant 14 : index
    %c0_553 = arith.constant 0 : index
    %1398 = vector.load %arg3[%c14_552, %c0_553] : memref<16x32xf32, #tpu.memory_space<vmem>>, vector<2x8xf32>
    tpu.vector_store %arg3[%c14_552, %c0_553], %1397 {strides = array<i32>} : memref<16x32xf32, #tpu.memory_space<vmem>>, vector<2x8xf32>,
    %c0_554 = arith.constant 0 : index
    %c0_555 = arith.constant 0 : index
    %1399 = vector.load %arg3[%c0_554, %c0_555] : memref<16x32xf32, #tpu.memory_space<vmem>>, vector<16x8xf32>
    %c688 = arith.constant 688 : index
    %c0_556 = arith.constant 0 : index
    %1400 = vector.load %arg1[%c688, %c0_556] : memref<744x128xf32, #tpu.memory_space<vmem>>, vector<8x8xf32>
    %c696 = arith.constant 696 : index
    %c0_557 = arith.constant 0 : index
    %1401 = vector.load %arg1[%c696, %c0_557] : memref<744x128xf32, #tpu.memory_space<vmem>>, vector<8x8xf32>
    %c704 = arith.constant 704 : index
    %c0_558 = arith.constant 0 : index
    %1402 = vector.load %arg1[%c704, %c0_558] : memref<744x128xf32, #tpu.memory_space<vmem>>, vector<8x8xf32>
    %c712 = arith.constant 712 : index
    %c0_559 = arith.constant 0 : index
    %1403 = vector.load %arg1[%c712, %c0_559] : memref<744x128xf32, #tpu.memory_space<vmem>>, vector<8x8xf32>
    %c720 = arith.constant 720 : index
    %c0_560 = arith.constant 0 : index
    %1404 = vector.load %arg1[%c720, %c0_560] : memref<744x128xf32, #tpu.memory_space<vmem>>, vector<8x8xf32>
    %c728 = arith.constant 728 : index
    %c0_561 = arith.constant 0 : index
    %1405 = vector.load %arg1[%c728, %c0_561] : memref<744x128xf32, #tpu.memory_space<vmem>>, vector<8x8xf32>
    %c736 = arith.constant 736 : index
    %c0_562 = arith.constant 0 : index
    %1406 = vector.load %arg1[%c736, %c0_562] : memref<744x128xf32, #tpu.memory_space<vmem>>, vector<1x8xf32>
    %c737 = arith.constant 737 : index
    %c0_563 = arith.constant 0 : index
    %1407 = vector.load %arg1[%c737, %c0_563] : memref<744x128xf32, #tpu.memory_space<vmem>>, vector<1x8xf32>
    %c738 = arith.constant 738 : index
    %c0_564 = arith.constant 0 : index
    %1408 = vector.load %arg1[%c738, %c0_564] : memref<744x128xf32, #tpu.memory_space<vmem>>, vector<1x8xf32>
    %c739 = arith.constant 739 : index
    %c0_565 = arith.constant 0 : index
    %1409 = vector.load %arg1[%c739, %c0_565] : memref<744x128xf32, #tpu.memory_space<vmem>>, vector<1x8xf32>
    %cst_566 = arith.constant dense<0.000000e+00> : vector<16x8xf32>
    %1410 = tpu.matmul %1399, %1400, %cst_566 {dimension_numbers = #tpu.dot_dimension_numbers<[1], [0], [0], [1], [0, 0, 1, 1], [], []>} : vector<16x8xf32>, vector<8x8xf32>, vector<16x8xf32> -> vector<16x8xf32>
    %1411 = vector.broadcast %1406 : vector<1x8xf32> to vector<16x8xf32>
    %1412 = arith.addf %1410, %1411 : vector<16x8xf32>
    %cst_567 = arith.constant dense<0.000000e+00> : vector<16x8xf32>
    %1413 = tpu.matmul %1399, %1401, %cst_567 {dimension_numbers = #tpu.dot_dimension_numbers<[1], [0], [0], [1], [0, 0, 1, 1], [], []>} : vector<16x8xf32>, vector<8x8xf32>, vector<16x8xf32> -> vector<16x8xf32>
    %1414 = vector.broadcast %1407 : vector<1x8xf32> to vector<16x8xf32>
    %1415 = arith.addf %1413, %1414 : vector<16x8xf32>
    %cst_568 = arith.constant dense<0.000000e+00> : vector<16x8xf32>
    %1416 = tpu.matmul %1399, %1402, %cst_568 {dimension_numbers = #tpu.dot_dimension_numbers<[1], [0], [0], [1], [0, 0, 1, 1], [], []>} : vector<16x8xf32>, vector<8x8xf32>, vector<16x8xf32> -> vector<16x8xf32>
    %1417 = vector.broadcast %1408 : vector<1x8xf32> to vector<16x8xf32>
    %1418 = arith.addf %1416, %1417 : vector<16x8xf32>
    %1419 = vector.shape_cast %1409 : vector<1x8xf32> to vector<1x8xf32>
    %1420 = vector.broadcast %1419 : vector<1x8xf32> to vector<2x8xf32>
    %cst_569 = arith.constant 0.000000e+00 : f32
    %1421 = vector.broadcast %cst_569 : f32 to vector<2x8xf32>
    %cst_570 = arith.constant dense<0.000000e+00> : vector<2x8xf32>
    %1422 = tpu.matmul %1421, %1403, %cst_570 {dimension_numbers = #tpu.dot_dimension_numbers<[1], [0], [0], [1], [0, 0, 1, 1], [], []>} : vector<2x8xf32>, vector<8x8xf32>, vector<2x8xf32> -> vector<2x8xf32>
    %cst_571 = arith.constant dense<0.000000e+00> : vector<2x8xf32>
    %1423 = tpu.matmul %1421, %1404, %cst_571 {dimension_numbers = #tpu.dot_dimension_numbers<[1], [0], [0], [1], [0, 0, 1, 1], [], []>} : vector<2x8xf32>, vector<8x8xf32>, vector<2x8xf32> -> vector<2x8xf32>
    %cst_572 = arith.constant dense<0.000000e+00> : vector<2x8xf32>
    %1424 = tpu.matmul %1421, %1405, %cst_572 {dimension_numbers = #tpu.dot_dimension_numbers<[1], [0], [0], [1], [0, 0, 1, 1], [], []>} : vector<2x8xf32>, vector<8x8xf32>, vector<2x8xf32> -> vector<2x8xf32>
    %1425 = vector.extract_strided_slice %1412 {offsets = [0, 0], sizes = [2, 8], strides = [1, 1]} : vector<16x8xf32> to vector<2x8xf32>
    %1426 = arith.addf %1425, %1422 : vector<2x8xf32>
    %cst_573 = arith.constant 5.000000e-01 : f32
    %1427 = vector.broadcast %cst_573 : f32 to vector<2x8xf32>
    %1428 = arith.mulf %1427, %1426 : vector<2x8xf32>
    %1429 = math.tanh %1428 : vector<2x8xf32>
    %cst_574 = arith.constant 5.000000e-01 : f32
    %1430 = vector.broadcast %cst_574 : f32 to vector<2x8xf32>
    %1431 = arith.mulf %1430, %1429 : vector<2x8xf32>
    %cst_575 = arith.constant 5.000000e-01 : f32
    %1432 = vector.broadcast %cst_575 : f32 to vector<2x8xf32>
    %1433 = arith.addf %1431, %1432 : vector<2x8xf32>
    %1434 = vector.extract_strided_slice %1415 {offsets = [0, 0], sizes = [2, 8], strides = [1, 1]} : vector<16x8xf32> to vector<2x8xf32>
    %1435 = arith.addf %1434, %1423 : vector<2x8xf32>
    %cst_576 = arith.constant 5.000000e-01 : f32
    %1436 = vector.broadcast %cst_576 : f32 to vector<2x8xf32>
    %1437 = arith.mulf %1436, %1435 : vector<2x8xf32>
    %1438 = math.tanh %1437 : vector<2x8xf32>
    %cst_577 = arith.constant 5.000000e-01 : f32
    %1439 = vector.broadcast %cst_577 : f32 to vector<2x8xf32>
    %1440 = arith.mulf %1439, %1438 : vector<2x8xf32>
    %cst_578 = arith.constant 5.000000e-01 : f32
    %1441 = vector.broadcast %cst_578 : f32 to vector<2x8xf32>
    %1442 = arith.addf %1440, %1441 : vector<2x8xf32>
    %1443 = vector.extract_strided_slice %1418 {offsets = [0, 0], sizes = [2, 8], strides = [1, 1]} : vector<16x8xf32> to vector<2x8xf32>
    %1444 = arith.addf %1424, %1420 : vector<2x8xf32>
    %1445 = arith.mulf %1433, %1444 : vector<2x8xf32>
    %1446 = arith.addf %1443, %1445 : vector<2x8xf32>
    %1447 = math.tanh %1446 : vector<2x8xf32>
    %cst_579 = arith.constant 1.000000e+00 : f32
    %1448 = vector.broadcast %cst_579 : f32 to vector<2x8xf32>
    %1449 = arith.subf %1448, %1442 : vector<2x8xf32>
    %1450 = arith.mulf %1449, %1447 : vector<2x8xf32>
    %1451 = arith.mulf %1442, %1421 : vector<2x8xf32>
    %1452 = arith.addf %1450, %1451 : vector<2x8xf32>
    %c0_580 = arith.constant 0 : index
    %c0_581 = arith.constant 0 : index
    %1453 = vector.load %arg3[%c0_580, %c0_581] : memref<16x32xf32, #tpu.memory_space<vmem>>, vector<2x8xf32>
    tpu.vector_store %arg3[%c0_580, %c0_581], %1452 {strides = array<i32>} : memref<16x32xf32, #tpu.memory_space<vmem>>, vector<2x8xf32>,
    %cst_582 = arith.constant dense<0.000000e+00> : vector<2x8xf32>
    %1454 = tpu.matmul %1452, %1403, %cst_582 {dimension_numbers = #tpu.dot_dimension_numbers<[1], [0], [0], [1], [0, 0, 1, 1], [], []>} : vector<2x8xf32>, vector<8x8xf32>, vector<2x8xf32> -> vector<2x8xf32>
    %cst_583 = arith.constant dense<0.000000e+00> : vector<2x8xf32>
    %1455 = tpu.matmul %1452, %1404, %cst_583 {dimension_numbers = #tpu.dot_dimension_numbers<[1], [0], [0], [1], [0, 0, 1, 1], [], []>} : vector<2x8xf32>, vector<8x8xf32>, vector<2x8xf32> -> vector<2x8xf32>
    %cst_584 = arith.constant dense<0.000000e+00> : vector<2x8xf32>
    %1456 = tpu.matmul %1452, %1405, %cst_584 {dimension_numbers = #tpu.dot_dimension_numbers<[1], [0], [0], [1], [0, 0, 1, 1], [], []>} : vector<2x8xf32>, vector<8x8xf32>, vector<2x8xf32> -> vector<2x8xf32>
    %1457 = vector.extract_strided_slice %1412 {offsets = [2, 0], sizes = [2, 8], strides = [1, 1]} : vector<16x8xf32> to vector<2x8xf32>
    %1458 = arith.addf %1457, %1454 : vector<2x8xf32>
    %cst_585 = arith.constant 5.000000e-01 : f32
    %1459 = vector.broadcast %cst_585 : f32 to vector<2x8xf32>
    %1460 = arith.mulf %1459, %1458 : vector<2x8xf32>
    %1461 = math.tanh %1460 : vector<2x8xf32>
    %cst_586 = arith.constant 5.000000e-01 : f32
    %1462 = vector.broadcast %cst_586 : f32 to vector<2x8xf32>
    %1463 = arith.mulf %1462, %1461 : vector<2x8xf32>
    %cst_587 = arith.constant 5.000000e-01 : f32
    %1464 = vector.broadcast %cst_587 : f32 to vector<2x8xf32>
    %1465 = arith.addf %1463, %1464 : vector<2x8xf32>
    %1466 = vector.extract_strided_slice %1415 {offsets = [2, 0], sizes = [2, 8], strides = [1, 1]} : vector<16x8xf32> to vector<2x8xf32>
    %1467 = arith.addf %1466, %1455 : vector<2x8xf32>
    %cst_588 = arith.constant 5.000000e-01 : f32
    %1468 = vector.broadcast %cst_588 : f32 to vector<2x8xf32>
    %1469 = arith.mulf %1468, %1467 : vector<2x8xf32>
    %1470 = math.tanh %1469 : vector<2x8xf32>
    %cst_589 = arith.constant 5.000000e-01 : f32
    %1471 = vector.broadcast %cst_589 : f32 to vector<2x8xf32>
    %1472 = arith.mulf %1471, %1470 : vector<2x8xf32>
    %cst_590 = arith.constant 5.000000e-01 : f32
    %1473 = vector.broadcast %cst_590 : f32 to vector<2x8xf32>
    %1474 = arith.addf %1472, %1473 : vector<2x8xf32>
    %1475 = vector.extract_strided_slice %1418 {offsets = [2, 0], sizes = [2, 8], strides = [1, 1]} : vector<16x8xf32> to vector<2x8xf32>
    %1476 = arith.addf %1456, %1420 : vector<2x8xf32>
    %1477 = arith.mulf %1465, %1476 : vector<2x8xf32>
    %1478 = arith.addf %1475, %1477 : vector<2x8xf32>
    %1479 = math.tanh %1478 : vector<2x8xf32>
    %cst_591 = arith.constant 1.000000e+00 : f32
    %1480 = vector.broadcast %cst_591 : f32 to vector<2x8xf32>
    %1481 = arith.subf %1480, %1474 : vector<2x8xf32>
    %1482 = arith.mulf %1481, %1479 : vector<2x8xf32>
    %1483 = arith.mulf %1474, %1452 : vector<2x8xf32>
    %1484 = arith.addf %1482, %1483 : vector<2x8xf32>
    %c2_592 = arith.constant 2 : index
    %c0_593 = arith.constant 0 : index
    %1485 = vector.load %arg3[%c2_592, %c0_593] : memref<16x32xf32, #tpu.memory_space<vmem>>, vector<2x8xf32>
    tpu.vector_store %arg3[%c2_592, %c0_593], %1484 {strides = array<i32>} : memref<16x32xf32, #tpu.memory_space<vmem>>, vector<2x8xf32>,
    %cst_594 = arith.constant dense<0.000000e+00> : vector<2x8xf32>
    %1486 = tpu.matmul %1484, %1403, %cst_594 {dimension_numbers = #tpu.dot_dimension_numbers<[1], [0], [0], [1], [0, 0, 1, 1], [], []>} : vector<2x8xf32>, vector<8x8xf32>, vector<2x8xf32> -> vector<2x8xf32>
    %cst_595 = arith.constant dense<0.000000e+00> : vector<2x8xf32>
    %1487 = tpu.matmul %1484, %1404, %cst_595 {dimension_numbers = #tpu.dot_dimension_numbers<[1], [0], [0], [1], [0, 0, 1, 1], [], []>} : vector<2x8xf32>, vector<8x8xf32>, vector<2x8xf32> -> vector<2x8xf32>
    %cst_596 = arith.constant dense<0.000000e+00> : vector<2x8xf32>
    %1488 = tpu.matmul %1484, %1405, %cst_596 {dimension_numbers = #tpu.dot_dimension_numbers<[1], [0], [0], [1], [0, 0, 1, 1], [], []>} : vector<2x8xf32>, vector<8x8xf32>, vector<2x8xf32> -> vector<2x8xf32>
    %1489 = vector.extract_strided_slice %1412 {offsets = [4, 0], sizes = [2, 8], strides = [1, 1]} : vector<16x8xf32> to vector<2x8xf32>
    %1490 = arith.addf %1489, %1486 : vector<2x8xf32>
    %cst_597 = arith.constant 5.000000e-01 : f32
    %1491 = vector.broadcast %cst_597 : f32 to vector<2x8xf32>
    %1492 = arith.mulf %1491, %1490 : vector<2x8xf32>
    %1493 = math.tanh %1492 : vector<2x8xf32>
    %cst_598 = arith.constant 5.000000e-01 : f32
    %1494 = vector.broadcast %cst_598 : f32 to vector<2x8xf32>
    %1495 = arith.mulf %1494, %1493 : vector<2x8xf32>
    %cst_599 = arith.constant 5.000000e-01 : f32
    %1496 = vector.broadcast %cst_599 : f32 to vector<2x8xf32>
    %1497 = arith.addf %1495, %1496 : vector<2x8xf32>
    %1498 = vector.extract_strided_slice %1415 {offsets = [4, 0], sizes = [2, 8], strides = [1, 1]} : vector<16x8xf32> to vector<2x8xf32>
    %1499 = arith.addf %1498, %1487 : vector<2x8xf32>
    %cst_600 = arith.constant 5.000000e-01 : f32
    %1500 = vector.broadcast %cst_600 : f32 to vector<2x8xf32>
    %1501 = arith.mulf %1500, %1499 : vector<2x8xf32>
    %1502 = math.tanh %1501 : vector<2x8xf32>
    %cst_601 = arith.constant 5.000000e-01 : f32
    %1503 = vector.broadcast %cst_601 : f32 to vector<2x8xf32>
    %1504 = arith.mulf %1503, %1502 : vector<2x8xf32>
    %cst_602 = arith.constant 5.000000e-01 : f32
    %1505 = vector.broadcast %cst_602 : f32 to vector<2x8xf32>
    %1506 = arith.addf %1504, %1505 : vector<2x8xf32>
    %1507 = vector.extract_strided_slice %1418 {offsets = [4, 0], sizes = [2, 8], strides = [1, 1]} : vector<16x8xf32> to vector<2x8xf32>
    %1508 = arith.addf %1488, %1420 : vector<2x8xf32>
    %1509 = arith.mulf %1497, %1508 : vector<2x8xf32>
    %1510 = arith.addf %1507, %1509 : vector<2x8xf32>
    %1511 = math.tanh %1510 : vector<2x8xf32>
    %cst_603 = arith.constant 1.000000e+00 : f32
    %1512 = vector.broadcast %cst_603 : f32 to vector<2x8xf32>
    %1513 = arith.subf %1512, %1506 : vector<2x8xf32>
    %1514 = arith.mulf %1513, %1511 : vector<2x8xf32>
    %1515 = arith.mulf %1506, %1484 : vector<2x8xf32>
    %1516 = arith.addf %1514, %1515 : vector<2x8xf32>
    %c4_604 = arith.constant 4 : index
    %c0_605 = arith.constant 0 : index
    %1517 = vector.load %arg3[%c4_604, %c0_605] : memref<16x32xf32, #tpu.memory_space<vmem>>, vector<2x8xf32>
    tpu.vector_store %arg3[%c4_604, %c0_605], %1516 {strides = array<i32>} : memref<16x32xf32, #tpu.memory_space<vmem>>, vector<2x8xf32>,
    %cst_606 = arith.constant dense<0.000000e+00> : vector<2x8xf32>
    %1518 = tpu.matmul %1516, %1403, %cst_606 {dimension_numbers = #tpu.dot_dimension_numbers<[1], [0], [0], [1], [0, 0, 1, 1], [], []>} : vector<2x8xf32>, vector<8x8xf32>, vector<2x8xf32> -> vector<2x8xf32>
    %cst_607 = arith.constant dense<0.000000e+00> : vector<2x8xf32>
    %1519 = tpu.matmul %1516, %1404, %cst_607 {dimension_numbers = #tpu.dot_dimension_numbers<[1], [0], [0], [1], [0, 0, 1, 1], [], []>} : vector<2x8xf32>, vector<8x8xf32>, vector<2x8xf32> -> vector<2x8xf32>
    %cst_608 = arith.constant dense<0.000000e+00> : vector<2x8xf32>
    %1520 = tpu.matmul %1516, %1405, %cst_608 {dimension_numbers = #tpu.dot_dimension_numbers<[1], [0], [0], [1], [0, 0, 1, 1], [], []>} : vector<2x8xf32>, vector<8x8xf32>, vector<2x8xf32> -> vector<2x8xf32>
    %1521 = vector.extract_strided_slice %1412 {offsets = [6, 0], sizes = [2, 8], strides = [1, 1]} : vector<16x8xf32> to vector<2x8xf32>
    %1522 = arith.addf %1521, %1518 : vector<2x8xf32>
    %cst_609 = arith.constant 5.000000e-01 : f32
    %1523 = vector.broadcast %cst_609 : f32 to vector<2x8xf32>
    %1524 = arith.mulf %1523, %1522 : vector<2x8xf32>
    %1525 = math.tanh %1524 : vector<2x8xf32>
    %cst_610 = arith.constant 5.000000e-01 : f32
    %1526 = vector.broadcast %cst_610 : f32 to vector<2x8xf32>
    %1527 = arith.mulf %1526, %1525 : vector<2x8xf32>
    %cst_611 = arith.constant 5.000000e-01 : f32
    %1528 = vector.broadcast %cst_611 : f32 to vector<2x8xf32>
    %1529 = arith.addf %1527, %1528 : vector<2x8xf32>
    %1530 = vector.extract_strided_slice %1415 {offsets = [6, 0], sizes = [2, 8], strides = [1, 1]} : vector<16x8xf32> to vector<2x8xf32>
    %1531 = arith.addf %1530, %1519 : vector<2x8xf32>
    %cst_612 = arith.constant 5.000000e-01 : f32
    %1532 = vector.broadcast %cst_612 : f32 to vector<2x8xf32>
    %1533 = arith.mulf %1532, %1531 : vector<2x8xf32>
    %1534 = math.tanh %1533 : vector<2x8xf32>
    %cst_613 = arith.constant 5.000000e-01 : f32
    %1535 = vector.broadcast %cst_613 : f32 to vector<2x8xf32>
    %1536 = arith.mulf %1535, %1534 : vector<2x8xf32>
    %cst_614 = arith.constant 5.000000e-01 : f32
    %1537 = vector.broadcast %cst_614 : f32 to vector<2x8xf32>
    %1538 = arith.addf %1536, %1537 : vector<2x8xf32>
    %1539 = vector.extract_strided_slice %1418 {offsets = [6, 0], sizes = [2, 8], strides = [1, 1]} : vector<16x8xf32> to vector<2x8xf32>
    %1540 = arith.addf %1520, %1420 : vector<2x8xf32>
    %1541 = arith.mulf %1529, %1540 : vector<2x8xf32>
    %1542 = arith.addf %1539, %1541 : vector<2x8xf32>
    %1543 = math.tanh %1542 : vector<2x8xf32>
    %cst_615 = arith.constant 1.000000e+00 : f32
    %1544 = vector.broadcast %cst_615 : f32 to vector<2x8xf32>
    %1545 = arith.subf %1544, %1538 : vector<2x8xf32>
    %1546 = arith.mulf %1545, %1543 : vector<2x8xf32>
    %1547 = arith.mulf %1538, %1516 : vector<2x8xf32>
    %1548 = arith.addf %1546, %1547 : vector<2x8xf32>
    %c6_616 = arith.constant 6 : index
    %c0_617 = arith.constant 0 : index
    %1549 = vector.load %arg3[%c6_616, %c0_617] : memref<16x32xf32, #tpu.memory_space<vmem>>, vector<2x8xf32>
    tpu.vector_store %arg3[%c6_616, %c0_617], %1548 {strides = array<i32>} : memref<16x32xf32, #tpu.memory_space<vmem>>, vector<2x8xf32>,
    %cst_618 = arith.constant dense<0.000000e+00> : vector<2x8xf32>
    %1550 = tpu.matmul %1548, %1403, %cst_618 {dimension_numbers = #tpu.dot_dimension_numbers<[1], [0], [0], [1], [0, 0, 1, 1], [], []>} : vector<2x8xf32>, vector<8x8xf32>, vector<2x8xf32> -> vector<2x8xf32>
    %cst_619 = arith.constant dense<0.000000e+00> : vector<2x8xf32>
    %1551 = tpu.matmul %1548, %1404, %cst_619 {dimension_numbers = #tpu.dot_dimension_numbers<[1], [0], [0], [1], [0, 0, 1, 1], [], []>} : vector<2x8xf32>, vector<8x8xf32>, vector<2x8xf32> -> vector<2x8xf32>
    %cst_620 = arith.constant dense<0.000000e+00> : vector<2x8xf32>
    %1552 = tpu.matmul %1548, %1405, %cst_620 {dimension_numbers = #tpu.dot_dimension_numbers<[1], [0], [0], [1], [0, 0, 1, 1], [], []>} : vector<2x8xf32>, vector<8x8xf32>, vector<2x8xf32> -> vector<2x8xf32>
    %1553 = vector.extract_strided_slice %1412 {offsets = [8, 0], sizes = [2, 8], strides = [1, 1]} : vector<16x8xf32> to vector<2x8xf32>
    %1554 = arith.addf %1553, %1550 : vector<2x8xf32>
    %cst_621 = arith.constant 5.000000e-01 : f32
    %1555 = vector.broadcast %cst_621 : f32 to vector<2x8xf32>
    %1556 = arith.mulf %1555, %1554 : vector<2x8xf32>
    %1557 = math.tanh %1556 : vector<2x8xf32>
    %cst_622 = arith.constant 5.000000e-01 : f32
    %1558 = vector.broadcast %cst_622 : f32 to vector<2x8xf32>
    %1559 = arith.mulf %1558, %1557 : vector<2x8xf32>
    %cst_623 = arith.constant 5.000000e-01 : f32
    %1560 = vector.broadcast %cst_623 : f32 to vector<2x8xf32>
    %1561 = arith.addf %1559, %1560 : vector<2x8xf32>
    %1562 = vector.extract_strided_slice %1415 {offsets = [8, 0], sizes = [2, 8], strides = [1, 1]} : vector<16x8xf32> to vector<2x8xf32>
    %1563 = arith.addf %1562, %1551 : vector<2x8xf32>
    %cst_624 = arith.constant 5.000000e-01 : f32
    %1564 = vector.broadcast %cst_624 : f32 to vector<2x8xf32>
    %1565 = arith.mulf %1564, %1563 : vector<2x8xf32>
    %1566 = math.tanh %1565 : vector<2x8xf32>
    %cst_625 = arith.constant 5.000000e-01 : f32
    %1567 = vector.broadcast %cst_625 : f32 to vector<2x8xf32>
    %1568 = arith.mulf %1567, %1566 : vector<2x8xf32>
    %cst_626 = arith.constant 5.000000e-01 : f32
    %1569 = vector.broadcast %cst_626 : f32 to vector<2x8xf32>
    %1570 = arith.addf %1568, %1569 : vector<2x8xf32>
    %1571 = vector.extract_strided_slice %1418 {offsets = [8, 0], sizes = [2, 8], strides = [1, 1]} : vector<16x8xf32> to vector<2x8xf32>
    %1572 = arith.addf %1552, %1420 : vector<2x8xf32>
    %1573 = arith.mulf %1561, %1572 : vector<2x8xf32>
    %1574 = arith.addf %1571, %1573 : vector<2x8xf32>
    %1575 = math.tanh %1574 : vector<2x8xf32>
    %cst_627 = arith.constant 1.000000e+00 : f32
    %1576 = vector.broadcast %cst_627 : f32 to vector<2x8xf32>
    %1577 = arith.subf %1576, %1570 : vector<2x8xf32>
    %1578 = arith.mulf %1577, %1575 : vector<2x8xf32>
    %1579 = arith.mulf %1570, %1548 : vector<2x8xf32>
    %1580 = arith.addf %1578, %1579 : vector<2x8xf32>
    %c8_628 = arith.constant 8 : index
    %c0_629 = arith.constant 0 : index
    %1581 = vector.load %arg3[%c8_628, %c0_629] : memref<16x32xf32, #tpu.memory_space<vmem>>, vector<2x8xf32>
    tpu.vector_store %arg3[%c8_628, %c0_629], %1580 {strides = array<i32>} : memref<16x32xf32, #tpu.memory_space<vmem>>, vector<2x8xf32>,
    %cst_630 = arith.constant dense<0.000000e+00> : vector<2x8xf32>
    %1582 = tpu.matmul %1580, %1403, %cst_630 {dimension_numbers = #tpu.dot_dimension_numbers<[1], [0], [0], [1], [0, 0, 1, 1], [], []>} : vector<2x8xf32>, vector<8x8xf32>, vector<2x8xf32> -> vector<2x8xf32>
    %cst_631 = arith.constant dense<0.000000e+00> : vector<2x8xf32>
    %1583 = tpu.matmul %1580, %1404, %cst_631 {dimension_numbers = #tpu.dot_dimension_numbers<[1], [0], [0], [1], [0, 0, 1, 1], [], []>} : vector<2x8xf32>, vector<8x8xf32>, vector<2x8xf32> -> vector<2x8xf32>
    %cst_632 = arith.constant dense<0.000000e+00> : vector<2x8xf32>
    %1584 = tpu.matmul %1580, %1405, %cst_632 {dimension_numbers = #tpu.dot_dimension_numbers<[1], [0], [0], [1], [0, 0, 1, 1], [], []>} : vector<2x8xf32>, vector<8x8xf32>, vector<2x8xf32> -> vector<2x8xf32>
    %1585 = vector.extract_strided_slice %1412 {offsets = [10, 0], sizes = [2, 8], strides = [1, 1]} : vector<16x8xf32> to vector<2x8xf32>
    %1586 = arith.addf %1585, %1582 : vector<2x8xf32>
    %cst_633 = arith.constant 5.000000e-01 : f32
    %1587 = vector.broadcast %cst_633 : f32 to vector<2x8xf32>
    %1588 = arith.mulf %1587, %1586 : vector<2x8xf32>
    %1589 = math.tanh %1588 : vector<2x8xf32>
    %cst_634 = arith.constant 5.000000e-01 : f32
    %1590 = vector.broadcast %cst_634 : f32 to vector<2x8xf32>
    %1591 = arith.mulf %1590, %1589 : vector<2x8xf32>
    %cst_635 = arith.constant 5.000000e-01 : f32
    %1592 = vector.broadcast %cst_635 : f32 to vector<2x8xf32>
    %1593 = arith.addf %1591, %1592 : vector<2x8xf32>
    %1594 = vector.extract_strided_slice %1415 {offsets = [10, 0], sizes = [2, 8], strides = [1, 1]} : vector<16x8xf32> to vector<2x8xf32>
    %1595 = arith.addf %1594, %1583 : vector<2x8xf32>
    %cst_636 = arith.constant 5.000000e-01 : f32
    %1596 = vector.broadcast %cst_636 : f32 to vector<2x8xf32>
    %1597 = arith.mulf %1596, %1595 : vector<2x8xf32>
    %1598 = math.tanh %1597 : vector<2x8xf32>
    %cst_637 = arith.constant 5.000000e-01 : f32
    %1599 = vector.broadcast %cst_637 : f32 to vector<2x8xf32>
    %1600 = arith.mulf %1599, %1598 : vector<2x8xf32>
    %cst_638 = arith.constant 5.000000e-01 : f32
    %1601 = vector.broadcast %cst_638 : f32 to vector<2x8xf32>
    %1602 = arith.addf %1600, %1601 : vector<2x8xf32>
    %1603 = vector.extract_strided_slice %1418 {offsets = [10, 0], sizes = [2, 8], strides = [1, 1]} : vector<16x8xf32> to vector<2x8xf32>
    %1604 = arith.addf %1584, %1420 : vector<2x8xf32>
    %1605 = arith.mulf %1593, %1604 : vector<2x8xf32>
    %1606 = arith.addf %1603, %1605 : vector<2x8xf32>
    %1607 = math.tanh %1606 : vector<2x8xf32>
    %cst_639 = arith.constant 1.000000e+00 : f32
    %1608 = vector.broadcast %cst_639 : f32 to vector<2x8xf32>
    %1609 = arith.subf %1608, %1602 : vector<2x8xf32>
    %1610 = arith.mulf %1609, %1607 : vector<2x8xf32>
    %1611 = arith.mulf %1602, %1580 : vector<2x8xf32>
    %1612 = arith.addf %1610, %1611 : vector<2x8xf32>
    %c10_640 = arith.constant 10 : index
    %c0_641 = arith.constant 0 : index
    %1613 = vector.load %arg3[%c10_640, %c0_641] : memref<16x32xf32, #tpu.memory_space<vmem>>, vector<2x8xf32>
    tpu.vector_store %arg3[%c10_640, %c0_641], %1612 {strides = array<i32>} : memref<16x32xf32, #tpu.memory_space<vmem>>, vector<2x8xf32>,
    %cst_642 = arith.constant dense<0.000000e+00> : vector<2x8xf32>
    %1614 = tpu.matmul %1612, %1403, %cst_642 {dimension_numbers = #tpu.dot_dimension_numbers<[1], [0], [0], [1], [0, 0, 1, 1], [], []>} : vector<2x8xf32>, vector<8x8xf32>, vector<2x8xf32> -> vector<2x8xf32>
    %cst_643 = arith.constant dense<0.000000e+00> : vector<2x8xf32>
    %1615 = tpu.matmul %1612, %1404, %cst_643 {dimension_numbers = #tpu.dot_dimension_numbers<[1], [0], [0], [1], [0, 0, 1, 1], [], []>} : vector<2x8xf32>, vector<8x8xf32>, vector<2x8xf32> -> vector<2x8xf32>
    %cst_644 = arith.constant dense<0.000000e+00> : vector<2x8xf32>
    %1616 = tpu.matmul %1612, %1405, %cst_644 {dimension_numbers = #tpu.dot_dimension_numbers<[1], [0], [0], [1], [0, 0, 1, 1], [], []>} : vector<2x8xf32>, vector<8x8xf32>, vector<2x8xf32> -> vector<2x8xf32>
    %1617 = vector.extract_strided_slice %1412 {offsets = [12, 0], sizes = [2, 8], strides = [1, 1]} : vector<16x8xf32> to vector<2x8xf32>
    %1618 = arith.addf %1617, %1614 : vector<2x8xf32>
    %cst_645 = arith.constant 5.000000e-01 : f32
    %1619 = vector.broadcast %cst_645 : f32 to vector<2x8xf32>
    %1620 = arith.mulf %1619, %1618 : vector<2x8xf32>
    %1621 = math.tanh %1620 : vector<2x8xf32>
    %cst_646 = arith.constant 5.000000e-01 : f32
    %1622 = vector.broadcast %cst_646 : f32 to vector<2x8xf32>
    %1623 = arith.mulf %1622, %1621 : vector<2x8xf32>
    %cst_647 = arith.constant 5.000000e-01 : f32
    %1624 = vector.broadcast %cst_647 : f32 to vector<2x8xf32>
    %1625 = arith.addf %1623, %1624 : vector<2x8xf32>
    %1626 = vector.extract_strided_slice %1415 {offsets = [12, 0], sizes = [2, 8], strides = [1, 1]} : vector<16x8xf32> to vector<2x8xf32>
    %1627 = arith.addf %1626, %1615 : vector<2x8xf32>
    %cst_648 = arith.constant 5.000000e-01 : f32
    %1628 = vector.broadcast %cst_648 : f32 to vector<2x8xf32>
    %1629 = arith.mulf %1628, %1627 : vector<2x8xf32>
    %1630 = math.tanh %1629 : vector<2x8xf32>
    %cst_649 = arith.constant 5.000000e-01 : f32
    %1631 = vector.broadcast %cst_649 : f32 to vector<2x8xf32>
    %1632 = arith.mulf %1631, %1630 : vector<2x8xf32>
    %cst_650 = arith.constant 5.000000e-01 : f32
    %1633 = vector.broadcast %cst_650 : f32 to vector<2x8xf32>
    %1634 = arith.addf %1632, %1633 : vector<2x8xf32>
    %1635 = vector.extract_strided_slice %1418 {offsets = [12, 0], sizes = [2, 8], strides = [1, 1]} : vector<16x8xf32> to vector<2x8xf32>
    %1636 = arith.addf %1616, %1420 : vector<2x8xf32>
    %1637 = arith.mulf %1625, %1636 : vector<2x8xf32>
    %1638 = arith.addf %1635, %1637 : vector<2x8xf32>
    %1639 = math.tanh %1638 : vector<2x8xf32>
    %cst_651 = arith.constant 1.000000e+00 : f32
    %1640 = vector.broadcast %cst_651 : f32 to vector<2x8xf32>
    %1641 = arith.subf %1640, %1634 : vector<2x8xf32>
    %1642 = arith.mulf %1641, %1639 : vector<2x8xf32>
    %1643 = arith.mulf %1634, %1612 : vector<2x8xf32>
    %1644 = arith.addf %1642, %1643 : vector<2x8xf32>
    %c12_652 = arith.constant 12 : index
    %c0_653 = arith.constant 0 : index
    %1645 = vector.load %arg3[%c12_652, %c0_653] : memref<16x32xf32, #tpu.memory_space<vmem>>, vector<2x8xf32>
    tpu.vector_store %arg3[%c12_652, %c0_653], %1644 {strides = array<i32>} : memref<16x32xf32, #tpu.memory_space<vmem>>, vector<2x8xf32>,
    %cst_654 = arith.constant dense<0.000000e+00> : vector<2x8xf32>
    %1646 = tpu.matmul %1644, %1403, %cst_654 {dimension_numbers = #tpu.dot_dimension_numbers<[1], [0], [0], [1], [0, 0, 1, 1], [], []>} : vector<2x8xf32>, vector<8x8xf32>, vector<2x8xf32> -> vector<2x8xf32>
    %cst_655 = arith.constant dense<0.000000e+00> : vector<2x8xf32>
    %1647 = tpu.matmul %1644, %1404, %cst_655 {dimension_numbers = #tpu.dot_dimension_numbers<[1], [0], [0], [1], [0, 0, 1, 1], [], []>} : vector<2x8xf32>, vector<8x8xf32>, vector<2x8xf32> -> vector<2x8xf32>
    %cst_656 = arith.constant dense<0.000000e+00> : vector<2x8xf32>
    %1648 = tpu.matmul %1644, %1405, %cst_656 {dimension_numbers = #tpu.dot_dimension_numbers<[1], [0], [0], [1], [0, 0, 1, 1], [], []>} : vector<2x8xf32>, vector<8x8xf32>, vector<2x8xf32> -> vector<2x8xf32>
    %1649 = vector.extract_strided_slice %1412 {offsets = [14, 0], sizes = [2, 8], strides = [1, 1]} : vector<16x8xf32> to vector<2x8xf32>
    %1650 = arith.addf %1649, %1646 : vector<2x8xf32>
    %cst_657 = arith.constant 5.000000e-01 : f32
    %1651 = vector.broadcast %cst_657 : f32 to vector<2x8xf32>
    %1652 = arith.mulf %1651, %1650 : vector<2x8xf32>
    %1653 = math.tanh %1652 : vector<2x8xf32>
    %cst_658 = arith.constant 5.000000e-01 : f32
    %1654 = vector.broadcast %cst_658 : f32 to vector<2x8xf32>
    %1655 = arith.mulf %1654, %1653 : vector<2x8xf32>
    %cst_659 = arith.constant 5.000000e-01 : f32
    %1656 = vector.broadcast %cst_659 : f32 to vector<2x8xf32>
    %1657 = arith.addf %1655, %1656 : vector<2x8xf32>
    %1658 = vector.extract_strided_slice %1415 {offsets = [14, 0], sizes = [2, 8], strides = [1, 1]} : vector<16x8xf32> to vector<2x8xf32>
    %1659 = arith.addf %1658, %1647 : vector<2x8xf32>
    %cst_660 = arith.constant 5.000000e-01 : f32
    %1660 = vector.broadcast %cst_660 : f32 to vector<2x8xf32>
    %1661 = arith.mulf %1660, %1659 : vector<2x8xf32>
    %1662 = math.tanh %1661 : vector<2x8xf32>
    %cst_661 = arith.constant 5.000000e-01 : f32
    %1663 = vector.broadcast %cst_661 : f32 to vector<2x8xf32>
    %1664 = arith.mulf %1663, %1662 : vector<2x8xf32>
    %cst_662 = arith.constant 5.000000e-01 : f32
    %1665 = vector.broadcast %cst_662 : f32 to vector<2x8xf32>
    %1666 = arith.addf %1664, %1665 : vector<2x8xf32>
    %1667 = vector.extract_strided_slice %1418 {offsets = [14, 0], sizes = [2, 8], strides = [1, 1]} : vector<16x8xf32> to vector<2x8xf32>
    %1668 = arith.addf %1648, %1420 : vector<2x8xf32>
    %1669 = arith.mulf %1657, %1668 : vector<2x8xf32>
    %1670 = arith.addf %1667, %1669 : vector<2x8xf32>
    %1671 = math.tanh %1670 : vector<2x8xf32>
    %cst_663 = arith.constant 1.000000e+00 : f32
    %1672 = vector.broadcast %cst_663 : f32 to vector<2x8xf32>
    %1673 = arith.subf %1672, %1666 : vector<2x8xf32>
    %1674 = arith.mulf %1673, %1671 : vector<2x8xf32>
    %1675 = arith.mulf %1666, %1644 : vector<2x8xf32>
    %1676 = arith.addf %1674, %1675 : vector<2x8xf32>
    %c14_664 = arith.constant 14 : index
    %c0_665 = arith.constant 0 : index
    %1677 = vector.load %arg3[%c14_664, %c0_665] : memref<16x32xf32, #tpu.memory_space<vmem>>, vector<2x8xf32>
    tpu.vector_store %arg3[%c14_664, %c0_665], %1676 {strides = array<i32>} : memref<16x32xf32, #tpu.memory_space<vmem>>, vector<2x8xf32>,
    %c0_666 = arith.constant 0 : index
    %c0_667 = arith.constant 0 : index
    %1678 = vector.load %arg3[%c0_666, %c0_667] : memref<16x32xf32, #tpu.memory_space<vmem>>, vector<16x8xf32>
    %cst_668 = arith.constant 5.000000e-01 : f32
    %1679 = vector.broadcast %cst_668 : f32 to vector<16x8xf32>
    %1680 = arith.mulf %1679, %1678 : vector<16x8xf32>
    %1681 = math.tanh %1680 : vector<16x8xf32>
    %cst_669 = arith.constant 5.000000e-01 : f32
    %1682 = vector.broadcast %cst_669 : f32 to vector<16x8xf32>
    %1683 = arith.mulf %1682, %1681 : vector<16x8xf32>
    %cst_670 = arith.constant 5.000000e-01 : f32
    %1684 = vector.broadcast %cst_670 : f32 to vector<16x8xf32>
    %1685 = arith.addf %1683, %1684 : vector<16x8xf32>
    %c0_671 = arith.constant 0 : index
    %c0_672 = arith.constant 0 : index
    %1686 = vector.load %arg2[%c0_671, %c0_672] : memref<16x8xf32, #tpu.memory_space<vmem>>, vector<16x8xf32>
    tpu.vector_store %arg2[%c0_671, %c0_672], %1685 {strides = array<i32>} : memref<16x8xf32, #tpu.memory_space<vmem>>, vector<16x8xf32>,
    return
  }
}

</mosaic_0001>

<llo_original>
// kernel: tpu_custom_call.1
$region0: #{tpu_custom_call.1}
  #allocation0 [shape = 'u32[]', space=smem, size = 0x4, offset = 0x4, fixed_abs, tag = 'smem constant byte address 0x4 - core index']
  #allocation1 [shape = 'u32[72,128]{1,0:T(1,128)}', space=vmem, size = 0x9000, scoped, tag = 'internal scratch']
  #allocation2 [shape = 'f32[16,32]{1,0:T(8,128)}', space=vmem, size = 0x2000, scoped, tag = 'scratch operand']
  %s0 = inlined_call_operand.hbm [shape: f32[16,16], index: 0, kind: input, shape index: {}]
  %s1 = inlined_call_operand.hbm [shape: f32[744,128], index: 1, kind: input, shape index: {}]
  %s2 = inlined_call_operand.vmem [shape: f32[16,8], index: 2, kind: output, shape index: {}]
  %s3 = sld [smem:[#allocation0]]
  $region26: #{tpu_custom_call.1} parent=0
    _
  %s5 = ssub.s32 1, %s3
  %s6 = scalar_select 0, %s5, %s3
  $region1: #{tpu_custom_call.1} parent=0
    #allocation3 [shape = 'u8[8192]{0}', space=vmem, size = 0x2000, scoped, tag = 'input window, operand 0, single buffered']
    #allocation4 [shape = 's32[1]{0}', space=sflag, size = 0x4, scoped, tag = 'scoped memory for tpu_custom_call.1']
    #allocation5 [shape = 'u8[380928]{0}', space=vmem, size = 0x5d000, scoped, tag = 'input window, operand 1, single buffered']
    #allocation6 [shape = 's32[1]{0}', space=sflag, size = 0x4, scoped, tag = 'scoped memory for tpu_custom_call.1']
    %7 = vsyncpa [#allocation4], 0
    %8 = vsyncpa [#allocation6], 0
    // Predicated region
    $region2: #{tpu_custom_call.1} parent=1 // pred_check
      _
    $region3: #{tpu_custom_call.1} parent=1 // pred_check_branch
      %10 = sbr.rel (0) target = $region5
    $region4: #{tpu_custom_call.1} parent=1 // pred_region
      %12 = vsyncadd [#allocation4], 0
      %s13 = sshll.u32 %s0, 4
      %s14 = int_to_ptr.hbm [resolvable:$true] %s13
      %s15 = sshll.u32 [#allocation3], 4
      %s16 = int_to_ptr.vmem [resolvable:$true] %s15
      %21 = dma.hbm_to_vmem [thread:$0]  %s14, 256, %s16, [#allocation4], 128, 128, 8
    $region5: #{tpu_custom_call.1} parent=1 // pred_fallthru
      _
    // Predicated region
    $region6: #{tpu_custom_call.1} parent=1 // pred_check
      _
    $region7: #{tpu_custom_call.1} parent=1 // pred_check_branch
      %23 = sbr.rel (0) target = $region9
    $region8: #{tpu_custom_call.1} parent=1 // pred_region
      %25 = vsyncadd [#allocation6], 0
      %s26 = sshll.u32 %s1, 4
      %s27 = int_to_ptr.hbm [resolvable:$true] %s26
      %s28 = sshll.u32 [#allocation5], 4
      %s29 = int_to_ptr.vmem [resolvable:$true] %s28
      %34 = dma.hbm_to_vmem [thread:$0]  %s27, 11904, %s29, [#allocation6], 128, 128, 8
    $region9: #{tpu_custom_call.1} parent=1 // pred_fallthru
      _
    // Predicated region
    $region10: #{tpu_custom_call.1} parent=1 // pred_check
      _
    $region11: #{tpu_custom_call.1} parent=1 // pred_check_branch
      %36 = sbr.rel (0) target = $region13
    $region12: #{tpu_custom_call.1} parent=1 // pred_region
      %38 = dma.done [#allocation4], 256
    $region13: #{tpu_custom_call.1} parent=1 // pred_fallthru
      _
    // Predicated region
    $region14: #{tpu_custom_call.1} parent=1 // pred_check
      _
    $region15: #{tpu_custom_call.1} parent=1 // pred_check_branch
      %40 = sbr.rel (0) target = $region17
    $region16: #{tpu_custom_call.1} parent=1 // pred_region
      %42 = dma.done [#allocation6], 11904
    $region17: #{tpu_custom_call.1} parent=1 // pred_fallthru
      _
    %v43 = vld [vmem:[#allocation3] sm:$0xff]
    %v44 = vld [vmem:[#allocation3 + $0x8] sm:$0xff]
    %v45 = vld [vmem:[#allocation5] sm:$0xff]
    %v46 = vld [vmem:[#allocation5 + $0x8] sm:$0xff]
    %v47 = vld [vmem:[#allocation5 + $0x10] sm:$0xff]
    %v48 = vld [vmem:[#allocation5 + $0x18] sm:$0xff]
    %v49 = vld [vmem:[#allocation5 + $0x20] sm:$0xff]
    %v50 = vld [vmem:[#allocation5 + $0x28] sm:$0xff]
    %v51 = vld [vmem:[#allocation5 + $0x30] sm:$0xff]
    %v52 = vld [vmem:[#allocation5 + $0x38] sm:$0xff]
    %v53 = vld [vmem:[#allocation5 + $0x40] sm:$0xff]
    %v54 = vld [vmem:[#allocation5 + $0x48] sm:$0xff]
    %v55 = vld [vmem:[#allocation5 + $0x50] sm:$0xff]
    %v56 = vld [vmem:[#allocation5 + $0x58] sm:$0xff]
    %v57 = vld [vmem:[#allocation5 + $0x60] sm:$0xff]
    %v58 = vld [vmem:[#allocation5 + $0x68] sm:$0xff]
    %v59 = vld [vmem:[#allocation5 + $0x70] sm:$0xff]
    %v60 = vld [vmem:[#allocation5 + $0x78] sm:$0xff]
    %v61 = vld [vmem:[#allocation5 + $0x80] sm:$0xff]
    %v62 = vld [vmem:[#allocation5 + $0x88] sm:$0xff]
    %v63 = vld [vmem:[#allocation5 + $0x90] sm:$0x1]
    %v64 = vld [vmem:[#allocation5 + $0x91] sm:$0x1]
    %v65 = vld [vmem:[#allocation5 + $0x92] sm:$0x1]
    %v66 = vld [vmem:[#allocation5 + $0x93] sm:$0x1]
    %v67 = vperm.slane %v63, 0
    %vm68 = vcmask 130048
    %v70 = vsel %vm68, %v43, 0
    %v73 = vsel %vm68, %v44, 0
    %75 = vmatpush.msra.mxu0 0.0
    %76 = vmatpush.msra.mxu0 0.0
    %77 = vmatpush.msra.mxu0 0.0
    %78 = vmatpush.msra.mxu0 0.0
    %79 = vmatpush.msra.mxu0 0.0
    %80 = vmatpush.msra.mxu0 0.0
    %81 = vmatpush.msra.mxu0 0.0
    %82 = vmatpush.msra.mxu0 0.0
    %83 = vmatpush.msra.mxu0 0.0
    %84 = vmatpush.msra.mxu0 0.0
    %85 = vmatpush.msra.mxu0 0.0
    %86 = vmatpush.msra.mxu0 0.0
    %87 = vmatpush.msra.mxu0 0.0
    %88 = vmatpush.msra.mxu0 0.0
    %89 = vmatpush.msra.mxu0 %v46
    %90 = vmatpush.msra.mxu0 %v45
    %91 = vmatmul.f32.gmra.mxu0 %v70
    %v92 = vpop.f32.mrf.mxu0
    %v93 = vadd.f32 %v67, %v92
    %94 = vmatmul.f32.gmra.mxu0 %v73
    %v95 = vpop.f32.mrf.mxu0
    %v96 = vadd.f32 %v67, %v95
    %97 = vdwg.mxu0
    %v98 = vperm.slane %v64, 0
    %99 = vmatpush.msra.mxu0 0.0
    %100 = vmatpush.msra.mxu0 0.0
    %101 = vmatpush.msra.mxu0 0.0
    %102 = vmatpush.msra.mxu0 0.0
    %103 = vmatpush.msra.mxu0 0.0
    %104 = vmatpush.msra.mxu0 0.0
    %105 = vmatpush.msra.mxu0 0.0
    %106 = vmatpush.msra.mxu0 0.0
    %107 = vmatpush.msra.mxu0 0.0
    %108 = vmatpush.msra.mxu0 0.0
    %109 = vmatpush.msra.mxu0 0.0
    %110 = vmatpush.msra.mxu0 0.0
    %111 = vmatpush.msra.mxu0 0.0
    %112 = vmatpush.msra.mxu0 0.0
    %113 = vmatpush.msra.mxu0 %v48
    %114 = vmatpush.msra.mxu0 %v47
    %115 = vmatmul.f32.gmra.mxu0 %v70
    %v116 = vpop.f32.mrf.mxu0
    %v117 = vadd.f32 %v98, %v116
    %118 = vmatmul.f32.gmra.mxu0 %v73
    %v119 = vpop.f32.mrf.mxu0
    %v120 = vadd.f32 %v98, %v119
    %121 = vdwg.mxu0
    %v122 = vperm.slane %v65, 0
    %123 = vmatpush.msra.mxu0 0.0
    %124 = vmatpush.msra.mxu0 0.0
    %125 = vmatpush.msra.mxu0 0.0
    %126 = vmatpush.msra.mxu0 0.0
    %127 = vmatpush.msra.mxu0 0.0
    %128 = vmatpush.msra.mxu0 0.0
    %129 = vmatpush.msra.mxu0 0.0
    %130 = vmatpush.msra.mxu0 0.0
    %131 = vmatpush.msra.mxu0 0.0
    %132 = vmatpush.msra.mxu0 0.0
    %133 = vmatpush.msra.mxu0 0.0
    %134 = vmatpush.msra.mxu0 0.0
    %135 = vmatpush.msra.mxu0 0.0
    %136 = vmatpush.msra.mxu0 0.0
    %137 = vmatpush.msra.mxu0 %v50
    %138 = vmatpush.msra.mxu0 %v49
    %139 = vmatmul.f32.gmra.mxu0 %v70
    %v140 = vpop.f32.mrf.mxu0
    %v141 = vadd.f32 %v122, %v140
    %142 = vmatmul.f32.gmra.mxu0 %v73
    %v143 = vpop.f32.mrf.mxu0
    %v144 = vadd.f32 %v122, %v143
    %145 = vdwg.mxu0
    %v146 = vperm.slane %v66, 0
    %vm147 = vcmask 261120
    %v149 = vsel %vm147, 0.0, 0
    %151 = vmatpush.msra.mxu0 0.0
    %152 = vmatpush.msra.mxu0 0.0
    %153 = vmatpush.msra.mxu0 0.0
    %154 = vmatpush.msra.mxu0 0.0
    %155 = vmatpush.msra.mxu0 0.0
    %156 = vmatpush.msra.mxu0 0.0
    %157 = vmatpush.msra.mxu0 0.0
    %158 = vmatpush.msra.mxu0 0.0
    %159 = vmatpush.msra.mxu0 0.0
    %160 = vmatpush.msra.mxu0 0.0
    %161 = vmatpush.msra.mxu0 0.0
    %162 = vmatpush.msra.mxu0 0.0
    %163 = vmatpush.msra.mxu0 %v54
    %164 = vmatpush.msra.mxu0 %v53
    %165 = vmatpush.msra.mxu0 %v52
    %166 = vmatpush.msra.mxu0 %v51
    %167 = vmatmul.f32.gmra.mxu0 %v149
    %v168 = vpop.f32.mrf.mxu0
    %v169 = vadd.f32 0.0, %v168
    %170 = vdwg.mxu0
    %171 = vmatpush.msra.mxu0 0.0
    %172 = vmatpush.msra.mxu0 0.0
    %173 = vmatpush.msra.mxu0 0.0
    %174 = vmatpush.msra.mxu0 0.0
    %175 = vmatpush.msra.mxu0 0.0
    %176 = vmatpush.msra.mxu0 0.0
    %177 = vmatpush.msra.mxu0 0.0
    %178 = vmatpush.msra.mxu0 0.0
    %179 = vmatpush.msra.mxu0 0.0
    %180 = vmatpush.msra.mxu0 0.0
    %181 = vmatpush.msra.mxu0 0.0
    %182 = vmatpush.msra.mxu0 0.0
    %183 = vmatpush.msra.mxu0 %v58
    %184 = vmatpush.msra.mxu0 %v57
    %185 = vmatpush.msra.mxu0 %v56
    %186 = vmatpush.msra.mxu0 %v55
    %187 = vmatmul.f32.gmra.mxu0 %v149
    %v188 = vpop.f32.mrf.mxu0
    %v189 = vadd.f32 0.0, %v188
    %190 = vdwg.mxu0
    %v191 = vadd.f32 %v93, %v169
    %v192 = vmul.f32 %v191, 0.5
    %v193 = vtanh.pop %v192
    %v194 = vmul.f32 %v193, 0.5
    %v195 = vadd.f32 %v194, 0.5
    %v196 = vadd.f32 %v117, %v189
    %v197 = vmul.f32 %v196, 0.5
    %v198 = vtanh.pop %v197
    %v199 = vmul.f32 %v198, 0.5
    %v200 = vadd.f32 %v199, 0.5
    %201 = vmatpush.msra.mxu0 0.0
    %202 = vmatpush.msra.mxu0 0.0
    %203 = vmatpush.msra.mxu0 0.0
    %204 = vmatpush.msra.mxu0 0.0
    %205 = vmatpush.msra.mxu0 0.0
    %206 = vmatpush.msra.mxu0 0.0
    %207 = vmatpush.msra.mxu0 0.0
    %208 = vmatpush.msra.mxu0 0.0
    %209 = vmatpush.msra.mxu0 0.0
    %210 = vmatpush.msra.mxu0 0.0
    %211 = vmatpush.msra.mxu0 0.0
    %212 = vmatpush.msra.mxu0 0.0
    %213 = vmatpush.msra.mxu0 %v62
    %214 = vmatpush.msra.mxu0 %v61
    %215 = vmatpush.msra.mxu0 %v60
    %216 = vmatpush.msra.mxu0 %v59
    %217 = vmatmul.f32.gmra.mxu0 %v149
    %v218 = vpop.f32.mrf.mxu0
    %v219 = vadd.f32 %v146, %v218
    %220 = vdwg.mxu0
    %v221 = vmul.f32 %v195, %v219
    %v222 = vadd.f32 %v141, %v221
    %v223 = vtanh.pop %v222
    %v224 = vsub.f32 1.0, %v200
    %v225 = vmul.f32 %v224, %v223
    %v226 = vmul.f32 %v200, 0.0
    %v227 = vadd.f32 %v225, %v226
    %vm228 = vcmask 254976
    %229 = vst.msk [vmem:[#allocation2] sm:$0x3] %vm228, %v227
    %v231 = vsel %vm147, %v227, 0
    %233 = vmatpush.msra.mxu0 0.0
    %234 = vmatpush.msra.mxu0 0.0
    %235 = vmatpush.msra.mxu0 0.0
    %236 = vmatpush.msra.mxu0 0.0
    %237 = vmatpush.msra.mxu0 0.0
    %238 = vmatpush.msra.mxu0 0.0
    %239 = vmatpush.msra.mxu0 0.0
    %240 = vmatpush.msra.mxu0 0.0
    %241 = vmatpush.msra.mxu0 0.0
    %242 = vmatpush.msra.mxu0 0.0
    %243 = vmatpush.msra.mxu0 0.0
    %244 = vmatpush.msra.mxu0 0.0
    %245 = vmatpush.msra.mxu0 %v54
    %246 = vmatpush.msra.mxu0 %v53
    %247 = vmatpush.msra.mxu0 %v52
    %248 = vmatpush.msra.mxu0 %v51
    %249 = vmatmul.f32.gmra.mxu0 %v231
    %v250 = vpop.f32.mrf.mxu0
    %v251 = vadd.f32 0.0, %v250
    %252 = vdwg.mxu0
    %253 = vmatpush.msra.mxu0 0.0
    %254 = vmatpush.msra.mxu0 0.0
    %255 = vmatpush.msra.mxu0 0.0
    %256 = vmatpush.msra.mxu0 0.0
    %257 = vmatpush.msra.mxu0 0.0
    %258 = vmatpush.msra.mxu0 0.0
    %259 = vmatpush.msra.mxu0 0.0
    %260 = vmatpush.msra.mxu0 0.0
    %261 = vmatpush.msra.mxu0 0.0
    %262 = vmatpush.msra.mxu0 0.0
    %263 = vmatpush.msra.mxu0 0.0
    %264 = vmatpush.msra.mxu0 0.0
    %265 = vmatpush.msra.mxu0 %v58
    %266 = vmatpush.msra.mxu0 %v57
    %267 = vmatpush.msra.mxu0 %v56
    %268 = vmatpush.msra.mxu0 %v55
    %269 = vmatmul.f32.gmra.mxu0 %v231
    %v270 = vpop.f32.mrf.mxu0
    %v271 = vadd.f32 0.0, %v270
    %272 = vdwg.mxu0
    %v274 = vrot.slane %v251, 6
    %v276 = vadd.f32 %v93, %v274
    %v277 = vmul.f32 %v276, 0.5
    %v278 = vtanh.pop %v277
    %v279 = vmul.f32 %v278, 0.5
    %v280 = vadd.f32 %v279, 0.5
    %v282 = vrot.slane %v271, 6
    %v284 = vadd.f32 %v117, %v282
    %v285 = vmul.f32 %v284, 0.5
    %v286 = vtanh.pop %v285
    %v287 = vmul.f32 %v286, 0.5
    %v288 = vadd.f32 %v287, 0.5
    %289 = vmatpush.msra.mxu0 0.0
    %290 = vmatpush.msra.mxu0 0.0
    %291 = vmatpush.msra.mxu0 0.0
    %292 = vmatpush.msra.mxu0 0.0
    %293 = vmatpush.msra.mxu0 0.0
    %294 = vmatpush.msra.mxu0 0.0
    %295 = vmatpush.msra.mxu0 0.0
    %296 = vmatpush.msra.mxu0 0.0
    %297 = vmatpush.msra.mxu0 0.0
    %298 = vmatpush.msra.mxu0 0.0
    %299 = vmatpush.msra.mxu0 0.0
    %300 = vmatpush.msra.mxu0 0.0
    %301 = vmatpush.msra.mxu0 %v62
    %302 = vmatpush.msra.mxu0 %v61
    %303 = vmatpush.msra.mxu0 %v60
    %304 = vmatpush.msra.mxu0 %v59
    %305 = vmatmul.f32.gmra.mxu0 %v231
    %v306 = vpop.f32.mrf.mxu0
    %v307 = vadd.f32 %v146, %v306
    %308 = vdwg.mxu0
    %v310 = vrot.slane %v307, 6
    %v312 = vmul.f32 %v280, %v310
    %v313 = vadd.f32 %v141, %v312
    %v314 = vtanh.pop %v313
    %v315 = vsub.f32 1.0, %v288
    %v316 = vmul.f32 %v315, %v314
    %v317 = vrot.slane %v227, 6
    %v319 = vmul.f32 %v288, %v317
    %v320 = vadd.f32 %v316, %v319
    %vm321 = vcmask 257026
    %322 = vst.msk [vmem:[#allocation2] sm:$0xc] %vm321, %v320
    %v324 = vrot.slane %v320, 2
    %v325 = vsel %vm147, %v324, 0
    %327 = vmatpush.msra.mxu0 0.0
    %328 = vmatpush.msra.mxu0 0.0
    %329 = vmatpush.msra.mxu0 0.0
    %330 = vmatpush.msra.mxu0 0.0
    %331 = vmatpush.msra.mxu0 0.0
    %332 = vmatpush.msra.mxu0 0.0
    %333 = vmatpush.msra.mxu0 0.0
    %334 = vmatpush.msra.mxu0 0.0
    %335 = vmatpush.msra.mxu0 0.0
    %336 = vmatpush.msra.mxu0 0.0
    %337 = vmatpush.msra.mxu0 0.0
    %338 = vmatpush.msra.mxu0 0.0
    %339 = vmatpush.msra.mxu0 %v54
    %340 = vmatpush.msra.mxu0 %v53
    %341 = vmatpush.msra.mxu0 %v52
    %342 = vmatpush.msra.mxu0 %v51
    %343 = vmatmul.f32.gmra.mxu0 %v325
    %v344 = vpop.f32.mrf.mxu0
    %v345 = vadd.f32 0.0, %v344
    %346 = vdwg.mxu0
    %347 = vmatpush.msra.mxu0 0.0
    %348 = vmatpush.msra.mxu0 0.0
    %349 = vmatpush.msra.mxu0 0.0
    %350 = vmatpush.msra.mxu0 0.0
    %351 = vmatpush.msra.mxu0 0.0
    %352 = vmatpush.msra.mxu0 0.0
    %353 = vmatpush.msra.mxu0 0.0
    %354 = vmatpush.msra.mxu0 0.0
    %355 = vmatpush.msra.mxu0 0.0
    %356 = vmatpush.msra.mxu0 0.0
    %357 = vmatpush.msra.mxu0 0.0
    %358 = vmatpush.msra.mxu0 0.0
    %359 = vmatpush.msra.mxu0 %v58
    %360 = vmatpush.msra.mxu0 %v57
    %361 = vmatpush.msra.mxu0 %v56
    %362 = vmatpush.msra.mxu0 %v55
    %363 = vmatmul.f32.gmra.mxu0 %v325
    %v364 = vpop.f32.mrf.mxu0
    %v365 = vadd.f32 0.0, %v364
    %366 = vdwg.mxu0
    %v368 = vrot.slane %v345, 4
    %v370 = vadd.f32 %v93, %v368
    %v371 = vmul.f32 %v370, 0.5
    %v372 = vtanh.pop %v371
    %v373 = vmul.f32 %v372, 0.5
    %v374 = vadd.f32 %v373, 0.5
    %v376 = vrot.slane %v365, 4
    %v378 = vadd.f32 %v117, %v376
    %v379 = vmul.f32 %v378, 0.5
    %v380 = vtanh.pop %v379
    %v381 = vmul.f32 %v380, 0.5
    %v382 = vadd.f32 %v381, 0.5
    %383 = vmatpush.msra.mxu0 0.0
    %384 = vmatpush.msra.mxu0 0.0
    %385 = vmatpush.msra.mxu0 0.0
    %386 = vmatpush.msra.mxu0 0.0
    %387 = vmatpush.msra.mxu0 0.0
    %388 = vmatpush.msra.mxu0 0.0
    %389 = vmatpush.msra.mxu0 0.0
    %390 = vmatpush.msra.mxu0 0.0
    %391 = vmatpush.msra.mxu0 0.0
    %392 = vmatpush.msra.mxu0 0.0
    %393 = vmatpush.msra.mxu0 0.0
    %394 = vmatpush.msra.mxu0 0.0
    %395 = vmatpush.msra.mxu0 %v62
    %396 = vmatpush.msra.mxu0 %v61
    %397 = vmatpush.msra.mxu0 %v60
    %398 = vmatpush.msra.mxu0 %v59
    %399 = vmatmul.f32.gmra.mxu0 %v325
    %v400 = vpop.f32.mrf.mxu0
    %v401 = vadd.f32 %v146, %v400
    %402 = vdwg.mxu0
    %v404 = vrot.slane %v401, 4
    %v406 = vmul.f32 %v374, %v404
    %v407 = vadd.f32 %v141, %v406
    %v408 = vtanh.pop %v407
    %v409 = vsub.f32 1.0, %v382
    %v410 = vmul.f32 %v409, %v408
    %v411 = vrot.slane %v320, 6
    %v413 = vmul.f32 %v382, %v411
    %v414 = vadd.f32 %v410, %v413
    %vm415 = vcmask 259076
    %416 = vst.msk [vmem:[#allocation2] sm:$0x30] %vm415, %v414
    %v418 = vrot.slane %v414, 4
    %v419 = vsel %vm147, %v418, 0
    %421 = vmatpush.msra.mxu0 0.0
    %422 = vmatpush.msra.mxu0 0.0
    %423 = vmatpush.msra.mxu0 0.0
    %424 = vmatpush.msra.mxu0 0.0
    %425 = vmatpush.msra.mxu0 0.0
    %426 = vmatpush.msra.mxu0 0.0
    %427 = vmatpush.msra.mxu0 0.0
    %428 = vmatpush.msra.mxu0 0.0
    %429 = vmatpush.msra.mxu0 0.0
    %430 = vmatpush.msra.mxu0 0.0
    %431 = vmatpush.msra.mxu0 0.0
    %432 = vmatpush.msra.mxu0 0.0
    %433 = vmatpush.msra.mxu0 %v54
    %434 = vmatpush.msra.mxu0 %v53
    %435 = vmatpush.msra.mxu0 %v52
    %436 = vmatpush.msra.mxu0 %v51
    %437 = vmatmul.f32.gmra.mxu0 %v419
    %v438 = vpop.f32.mrf.mxu0
    %v439 = vadd.f32 0.0, %v438
    %440 = vdwg.mxu0
    %441 = vmatpush.msra.mxu0 0.0
    %442 = vmatpush.msra.mxu0 0.0
    %443 = vmatpush.msra.mxu0 0.0
    %444 = vmatpush.msra.mxu0 0.0
    %445 = vmatpush.msra.mxu0 0.0
    %446 = vmatpush.msra.mxu0 0.0
    %447 = vmatpush.msra.mxu0 0.0
    %448 = vmatpush.msra.mxu0 0.0
    %449 = vmatpush.msra.mxu0 0.0
    %450 = vmatpush.msra.mxu0 0.0
    %451 = vmatpush.msra.mxu0 0.0
    %452 = vmatpush.msra.mxu0 0.0
    %453 = vmatpush.msra.mxu0 %v58
    %454 = vmatpush.msra.mxu0 %v57
    %455 = vmatpush.msra.mxu0 %v56
    %456 = vmatpush.msra.mxu0 %v55
    %457 = vmatmul.f32.gmra.mxu0 %v419
    %v458 = vpop.f32.mrf.mxu0
    %v459 = vadd.f32 0.0, %v458
    %460 = vdwg.mxu0
    %v462 = vrot.slane %v439, 2
    %v464 = vadd.f32 %v93, %v462
    %v465 = vmul.f32 %v464, 0.5
    %v466 = vtanh.pop %v465
    %v467 = vmul.f32 %v466, 0.5
    %v468 = vadd.f32 %v467, 0.5
    %v470 = vrot.slane %v459, 2
    %v472 = vadd.f32 %v117, %v470
    %v473 = vmul.f32 %v472, 0.5
    %v474 = vtanh.pop %v473
    %v475 = vmul.f32 %v474, 0.5
    %v476 = vadd.f32 %v475, 0.5
    %477 = vmatpush.msra.mxu0 0.0
    %478 = vmatpush.msra.mxu0 0.0
    %479 = vmatpush.msra.mxu0 0.0
    %480 = vmatpush.msra.mxu0 0.0
    %481 = vmatpush.msra.mxu0 0.0
    %482 = vmatpush.msra.mxu0 0.0
    %483 = vmatpush.msra.mxu0 0.0
    %484 = vmatpush.msra.mxu0 0.0
    %485 = vmatpush.msra.mxu0 0.0
    %486 = vmatpush.msra.mxu0 0.0
    %487 = vmatpush.msra.mxu0 0.0
    %488 = vmatpush.msra.mxu0 0.0
    %489 = vmatpush.msra.mxu0 %v62
    %490 = vmatpush.msra.mxu0 %v61
    %491 = vmatpush.msra.mxu0 %v60
    %492 = vmatpush.msra.mxu0 %v59
    %493 = vmatmul.f32.gmra.mxu0 %v419
    %v494 = vpop.f32.mrf.mxu0
    %v495 = vadd.f32 %v146, %v494
    %496 = vdwg.mxu0
    %v498 = vrot.slane %v495, 2
    %v500 = vmul.f32 %v468, %v498
    %v501 = vadd.f32 %v141, %v500
    %v502 = vtanh.pop %v501
    %v503 = vsub.f32 1.0, %v476
    %v504 = vmul.f32 %v503, %v502
    %v505 = vrot.slane %v414, 6
    %v507 = vmul.f32 %v476, %v505
    %v508 = vadd.f32 %v504, %v507
    %vm509 = vcmask 261126
    %510 = vst.msk [vmem:[#allocation2] sm:$0xc0] %vm509, %v508
    %v512 = vrot.slane %v508, 6
    %v513 = vsel %vm147, %v512, 0
    %515 = vmatpush.msra.mxu0 0.0
    %516 = vmatpush.msra.mxu0 0.0
    %517 = vmatpush.msra.mxu0 0.0
    %518 = vmatpush.msra.mxu0 0.0
    %519 = vmatpush.msra.mxu0 0.0
    %520 = vmatpush.msra.mxu0 0.0
    %521 = vmatpush.msra.mxu0 0.0
    %522 = vmatpush.msra.mxu0 0.0
    %523 = vmatpush.msra.mxu0 0.0
    %524 = vmatpush.msra.mxu0 0.0
    %525 = vmatpush.msra.mxu0 0.0
    %526 = vmatpush.msra.mxu0 0.0
    %527 = vmatpush.msra.mxu0 %v54
    %528 = vmatpush.msra.mxu0 %v53
    %529 = vmatpush.msra.mxu0 %v52
    %530 = vmatpush.msra.mxu0 %v51
    %531 = vmatmul.f32.gmra.mxu0 %v513
    %v532 = vpop.f32.mrf.mxu0
    %v533 = vadd.f32 0.0, %v532
    %534 = vdwg.mxu0
    %535 = vmatpush.msra.mxu0 0.0
    %536 = vmatpush.msra.mxu0 0.0
    %537 = vmatpush.msra.mxu0 0.0
    %538 = vmatpush.msra.mxu0 0.0
    %539 = vmatpush.msra.mxu0 0.0
    %540 = vmatpush.msra.mxu0 0.0
    %541 = vmatpush.msra.mxu0 0.0
    %542 = vmatpush.msra.mxu0 0.0
    %543 = vmatpush.msra.mxu0 0.0
    %544 = vmatpush.msra.mxu0 0.0
    %545 = vmatpush.msra.mxu0 0.0
    %546 = vmatpush.msra.mxu0 0.0
    %547 = vmatpush.msra.mxu0 %v58
    %548 = vmatpush.msra.mxu0 %v57
    %549 = vmatpush.msra.mxu0 %v56
    %550 = vmatpush.msra.mxu0 %v55
    %551 = vmatmul.f32.gmra.mxu0 %v513
    %v552 = vpop.f32.mrf.mxu0
    %v553 = vadd.f32 0.0, %v552
    %554 = vdwg.mxu0
    %v555 = vadd.f32 %v96, %v533
    %v556 = vmul.f32 %v555, 0.5
    %v557 = vtanh.pop %v556
    %v558 = vmul.f32 %v557, 0.5
    %v559 = vadd.f32 %v558, 0.5
    %v560 = vadd.f32 %v120, %v553
    %v561 = vmul.f32 %v560, 0.5
    %v562 = vtanh.pop %v561
    %v563 = vmul.f32 %v562, 0.5
    %v564 = vadd.f32 %v563, 0.5
    %565 = vmatpush.msra.mxu0 0.0
    %566 = vmatpush.msra.mxu0 0.0
    %567 = vmatpush.msra.mxu0 0.0
    %568 = vmatpush.msra.mxu0 0.0
    %569 = vmatpush.msra.mxu0 0.0
    %570 = vmatpush.msra.mxu0 0.0
    %571 = vmatpush.msra.mxu0 0.0
    %572 = vmatpush.msra.mxu0 0.0
    %573 = vmatpush.msra.mxu0 0.0
    %574 = vmatpush.msra.mxu0 0.0
    %575 = vmatpush.msra.mxu0 0.0
    %576 = vmatpush.msra.mxu0 0.0
    %577 = vmatpush.msra.mxu0 %v62
    %578 = vmatpush.msra.mxu0 %v61
    %579 = vmatpush.msra.mxu0 %v60
    %580 = vmatpush.msra.mxu0 %v59
    %581 = vmatmul.f32.gmra.mxu0 %v513
    %v582 = vpop.f32.mrf.mxu0
    %v583 = vadd.f32 %v146, %v582
    %584 = vdwg.mxu0
    %v585 = vmul.f32 %v559, %v583
    %v586 = vadd.f32 %v144, %v585
    %v587 = vtanh.pop %v586
    %v588 = vsub.f32 1.0, %v564
    %v589 = vmul.f32 %v588, %v587
    %v591 = vmul.f32 %v564, %v512
    %v592 = vadd.f32 %v589, %v591
    %593 = vst.msk [vmem:[#allocation2 + $0x8] sm:$0x3] %vm228, %v592
    %v595 = vsel %vm147, %v592, 0
    %597 = vmatpush.msra.mxu0 0.0
    %598 = vmatpush.msra.mxu0 0.0
    %599 = vmatpush.msra.mxu0 0.0
    %600 = vmatpush.msra.mxu0 0.0
    %601 = vmatpush.msra.mxu0 0.0
    %602 = vmatpush.msra.mxu0 0.0
    %603 = vmatpush.msra.mxu0 0.0
    %604 = vmatpush.msra.mxu0 0.0
    %605 = vmatpush.msra.mxu0 0.0
    %606 = vmatpush.msra.mxu0 0.0
    %607 = vmatpush.msra.mxu0 0.0
    %608 = vmatpush.msra.mxu0 0.0
    %609 = vmatpush.msra.mxu0 %v54
    %610 = vmatpush.msra.mxu0 %v53
    %611 = vmatpush.msra.mxu0 %v52
    %612 = vmatpush.msra.mxu0 %v51
    %613 = vmatmul.f32.gmra.mxu0 %v595
    %v614 = vpop.f32.mrf.mxu0
    %v615 = vadd.f32 0.0, %v614
    %616 = vdwg.mxu0
    %617 = vmatpush.msra.mxu0 0.0
    %618 = vmatpush.msra.mxu0 0.0
    %619 = vmatpush.msra.mxu0 0.0
    %620 = vmatpush.msra.mxu0 0.0
    %621 = vmatpush.msra.mxu0 0.0
    %622 = vmatpush.msra.mxu0 0.0
    %623 = vmatpush.msra.mxu0 0.0
    %624 = vmatpush.msra.mxu0 0.0
    %625 = vmatpush.msra.mxu0 0.0
    %626 = vmatpush.msra.mxu0 0.0
    %627 = vmatpush.msra.mxu0 0.0
    %628 = vmatpush.msra.mxu0 0.0
    %629 = vmatpush.msra.mxu0 %v58
    %630 = vmatpush.msra.mxu0 %v57
    %631 = vmatpush.msra.mxu0 %v56
    %632 = vmatpush.msra.mxu0 %v55
    %633 = vmatmul.f32.gmra.mxu0 %v595
    %v634 = vpop.f32.mrf.mxu0
    %v635 = vadd.f32 0.0, %v634
    %636 = vdwg.mxu0
    %v638 = vrot.slane %v615, 6
    %v640 = vadd.f32 %v96, %v638
    %v641 = vmul.f32 %v640, 0.5
    %v642 = vtanh.pop %v641
    %v643 = vmul.f32 %v642, 0.5
    %v644 = vadd.f32 %v643, 0.5
    %v646 = vrot.slane %v635, 6
    %v648 = vadd.f32 %v120, %v646
    %v649 = vmul.f32 %v648, 0.5
    %v650 = vtanh.pop %v649
    %v651 = vmul.f32 %v650, 0.5
    %v652 = vadd.f32 %v651, 0.5
    %653 = vmatpush.msra.mxu0 0.0
    %654 = vmatpush.msra.mxu0 0.0
    %655 = vmatpush.msra.mxu0 0.0
    %656 = vmatpush.msra.mxu0 0.0
    %657 = vmatpush.msra.mxu0 0.0
    %658 = vmatpush.msra.mxu0 0.0
    %659 = vmatpush.msra.mxu0 0.0
    %660 = vmatpush.msra.mxu0 0.0
    %661 = vmatpush.msra.mxu0 0.0
    %662 = vmatpush.msra.mxu0 0.0
    %663 = vmatpush.msra.mxu0 0.0
    %664 = vmatpush.msra.mxu0 0.0
    %665 = vmatpush.msra.mxu0 %v62
    %666 = vmatpush.msra.mxu0 %v61
    %667 = vmatpush.msra.mxu0 %v60
    %668 = vmatpush.msra.mxu0 %v59
    %669 = vmatmul.f32.gmra.mxu0 %v595
    %v670 = vpop.f32.mrf.mxu0
    %v671 = vadd.f32 %v146, %v670
    %672 = vdwg.mxu0
    %v674 = vrot.slane %v671, 6
    %v676 = vmul.f32 %v644, %v674
    %v677 = vadd.f32 %v144, %v676
    %v678 = vtanh.pop %v677
    %v679 = vsub.f32 1.0, %v652
    %v680 = vmul.f32 %v679, %v678
    %v681 = vrot.slane %v592, 6
    %v683 = vmul.f32 %v652, %v681
    %v684 = vadd.f32 %v680, %v683
    %685 = vst.msk [vmem:[#allocation2 + $0x8] sm:$0xc] %vm321, %v684
    %v687 = vrot.slane %v684, 2
    %v688 = vsel %vm147, %v687, 0
    %690 = vmatpush.msra.mxu0 0.0
    %691 = vmatpush.msra.mxu0 0.0
    %692 = vmatpush.msra.mxu0 0.0
    %693 = vmatpush.msra.mxu0 0.0
    %694 = vmatpush.msra.mxu0 0.0
    %695 = vmatpush.msra.mxu0 0.0
    %696 = vmatpush.msra.mxu0 0.0
    %697 = vmatpush.msra.mxu0 0.0
    %698 = vmatpush.msra.mxu0 0.0
    %699 = vmatpush.msra.mxu0 0.0
    %700 = vmatpush.msra.mxu0 0.0
    %701 = vmatpush.msra.mxu0 0.0
    %702 = vmatpush.msra.mxu0 %v54
    %703 = vmatpush.msra.mxu0 %v53
    %704 = vmatpush.msra.mxu0 %v52
    %705 = vmatpush.msra.mxu0 %v51
    %706 = vmatmul.f32.gmra.mxu0 %v688
    %v707 = vpop.f32.mrf.mxu0
    %v708 = vadd.f32 0.0, %v707
    %709 = vdwg.mxu0
    %710 = vmatpush.msra.mxu0 0.0
    %711 = vmatpush.msra.mxu0 0.0
    %712 = vmatpush.msra.mxu0 0.0
    %713 = vmatpush.msra.mxu0 0.0
    %714 = vmatpush.msra.mxu0 0.0
    %715 = vmatpush.msra.mxu0 0.0
    %716 = vmatpush.msra.mxu0 0.0
    %717 = vmatpush.msra.mxu0 0.0
    %718 = vmatpush.msra.mxu0 0.0
    %719 = vmatpush.msra.mxu0 0.0
    %720 = vmatpush.msra.mxu0 0.0
    %721 = vmatpush.msra.mxu0 0.0
    %722 = vmatpush.msra.mxu0 %v58
    %723 = vmatpush.msra.mxu0 %v57
    %724 = vmatpush.msra.mxu0 %v56
    %725 = vmatpush.msra.mxu0 %v55
    %726 = vmatmul.f32.gmra.mxu0 %v688
    %v727 = vpop.f32.mrf.mxu0
    %v728 = vadd.f32 0.0, %v727
    %729 = vdwg.mxu0
    %v731 = vrot.slane %v708, 4
    %v733 = vadd.f32 %v96, %v731
    %v734 = vmul.f32 %v733, 0.5
    %v735 = vtanh.pop %v734
    %v736 = vmul.f32 %v735, 0.5
    %v737 = vadd.f32 %v736, 0.5
    %v739 = vrot.slane %v728, 4
    %v741 = vadd.f32 %v120, %v739
    %v742 = vmul.f32 %v741, 0.5
    %v743 = vtanh.pop %v742
    %v744 = vmul.f32 %v743, 0.5
    %v745 = vadd.f32 %v744, 0.5
    %746 = vmatpush.msra.mxu0 0.0
    %747 = vmatpush.msra.mxu0 0.0
    %748 = vmatpush.msra.mxu0 0.0
    %749 = vmatpush.msra.mxu0 0.0
    %750 = vmatpush.msra.mxu0 0.0
    %751 = vmatpush.msra.mxu0 0.0
    %752 = vmatpush.msra.mxu0 0.0
    %753 = vmatpush.msra.mxu0 0.0
    %754 = vmatpush.msra.mxu0 0.0
    %755 = vmatpush.msra.mxu0 0.0
    %756 = vmatpush.msra.mxu0 0.0
    %757 = vmatpush.msra.mxu0 0.0
    %758 = vmatpush.msra.mxu0 %v62
    %759 = vmatpush.msra.mxu0 %v61
    %760 = vmatpush.msra.mxu0 %v60
    %761 = vmatpush.msra.mxu0 %v59
    %762 = vmatmul.f32.gmra.mxu0 %v688
    %v763 = vpop.f32.mrf.mxu0
    %v764 = vadd.f32 %v146, %v763
    %765 = vdwg.mxu0
    %v767 = vrot.slane %v764, 4
    %v769 = vmul.f32 %v737, %v767
    %v770 = vadd.f32 %v144, %v769
    %v771 = vtanh.pop %v770
    %v772 = vsub.f32 1.0, %v745
    %v773 = vmul.f32 %v772, %v771
    %v774 = vrot.slane %v684, 6
    %v776 = vmul.f32 %v745, %v774
    %v777 = vadd.f32 %v773, %v776
    %778 = vst.msk [vmem:[#allocation2 + $0x8] sm:$0x30] %vm415, %v777
    %v780 = vrot.slane %v777, 4
    %v781 = vsel %vm147, %v780, 0
    %783 = vmatpush.msra.mxu0 0.0
    %784 = vmatpush.msra.mxu0 0.0
    %785 = vmatpush.msra.mxu0 0.0
    %786 = vmatpush.msra.mxu0 0.0
    %787 = vmatpush.msra.mxu0 0.0
    %788 = vmatpush.msra.mxu0 0.0
    %789 = vmatpush.msra.mxu0 0.0
    %790 = vmatpush.msra.mxu0 0.0
    %791 = vmatpush.msra.mxu0 0.0
    %792 = vmatpush.msra.mxu0 0.0
    %793 = vmatpush.msra.mxu0 0.0
    %794 = vmatpush.msra.mxu0 0.0
    %795 = vmatpush.msra.mxu0 %v54
    %796 = vmatpush.msra.mxu0 %v53
    %797 = vmatpush.msra.mxu0 %v52
    %798 = vmatpush.msra.mxu0 %v51
    %799 = vmatmul.f32.gmra.mxu0 %v781
    %v800 = vpop.f32.mrf.mxu0
    %v801 = vadd.f32 0.0, %v800
    %802 = vdwg.mxu0
    %803 = vmatpush.msra.mxu0 0.0
    %804 = vmatpush.msra.mxu0 0.0
    %805 = vmatpush.msra.mxu0 0.0
    %806 = vmatpush.msra.mxu0 0.0
    %807 = vmatpush.msra.mxu0 0.0
    %808 = vmatpush.msra.mxu0 0.0
    %809 = vmatpush.msra.mxu0 0.0
    %810 = vmatpush.msra.mxu0 0.0
    %811 = vmatpush.msra.mxu0 0.0
    %812 = vmatpush.msra.mxu0 0.0
    %813 = vmatpush.msra.mxu0 0.0
    %814 = vmatpush.msra.mxu0 0.0
    %815 = vmatpush.msra.mxu0 %v58
    %816 = vmatpush.msra.mxu0 %v57
    %817 = vmatpush.msra.mxu0 %v56
    %818 = vmatpush.msra.mxu0 %v55
    %819 = vmatmul.f32.gmra.mxu0 %v781
    %v820 = vpop.f32.mrf.mxu0
    %v821 = vadd.f32 0.0, %v820
    %822 = vdwg.mxu0
    %v824 = vrot.slane %v801, 2
    %v826 = vadd.f32 %v96, %v824
    %v827 = vmul.f32 %v826, 0.5
    %v828 = vtanh.pop %v827
    %v829 = vmul.f32 %v828, 0.5
    %v830 = vadd.f32 %v829, 0.5
    %v832 = vrot.slane %v821, 2
    %v834 = vadd.f32 %v120, %v832
    %v835 = vmul.f32 %v834, 0.5
    %v836 = vtanh.pop %v835
    %v837 = vmul.f32 %v836, 0.5
    %v838 = vadd.f32 %v837, 0.5
    %839 = vmatpush.msra.mxu0 0.0
    %840 = vmatpush.msra.mxu0 0.0
    %841 = vmatpush.msra.mxu0 0.0
    %842 = vmatpush.msra.mxu0 0.0
    %843 = vmatpush.msra.mxu0 0.0
    %844 = vmatpush.msra.mxu0 0.0
    %845 = vmatpush.msra.mxu0 0.0
    %846 = vmatpush.msra.mxu0 0.0
    %847 = vmatpush.msra.mxu0 0.0
    %848 = vmatpush.msra.mxu0 0.0
    %849 = vmatpush.msra.mxu0 0.0
    %850 = vmatpush.msra.mxu0 0.0
    %851 = vmatpush.msra.mxu0 %v62
    %852 = vmatpush.msra.mxu0 %v61
    %853 = vmatpush.msra.mxu0 %v60
    %854 = vmatpush.msra.mxu0 %v59
    %855 = vmatmul.f32.gmra.mxu0 %v781
    %v856 = vpop.f32.mrf.mxu0
    %v857 = vadd.f32 %v146, %v856
    %858 = vdwg.mxu0
    %v860 = vrot.slane %v857, 2
    %v862 = vmul.f32 %v830, %v860
    %v863 = vadd.f32 %v144, %v862
    %v864 = vtanh.pop %v863
    %v865 = vsub.f32 1.0, %v838
    %v866 = vmul.f32 %v865, %v864
    %v867 = vrot.slane %v777, 6
    %v869 = vmul.f32 %v838, %v867
    %v870 = vadd.f32 %v866, %v869
    %871 = vst.msk [vmem:[#allocation2 + $0x8] sm:$0xc0] %vm509, %v870
    %v872 = vld [vmem:[#allocation2] sm:$0xff]
    %v873 = vld [vmem:[#allocation2 + $0x8] sm:$0xff]
    %v874 = vld [vmem:[#allocation5 + $0x98] sm:$0xff]
    %v875 = vld [vmem:[#allocation5 + $0xa0] sm:$0xff]
    %v876 = vld [vmem:[#allocation5 + $0xa8] sm:$0xff]
    %v877 = vld [vmem:[#allocation5 + $0xb0] sm:$0xff]
    %v878 = vld [vmem:[#allocation5 + $0xb8] sm:$0xff]
    %v879 = vld [vmem:[#allocation5 + $0xc0] sm:$0xff]
    %v880 = vld [vmem:[#allocation5 + $0xc8] sm:$0xff]
    %v881 = vld [vmem:[#allocation5 + $0xd0] sm:$0xff]
    %v882 = vld [vmem:[#allocation5 + $0xd8] sm:$0xff]
    %v883 = vld [vmem:[#allocation5 + $0xe0] sm:$0xff]
    %v884 = vld [vmem:[#allocation5 + $0xe8] sm:$0xff]
    %v885 = vld [vmem:[#allocation5 + $0xf0] sm:$0xff]
    %v886 = vld [vmem:[#allocation5 + $0xf8] sm:$0xff]
    %v887 = vld [vmem:[#allocation5 + $0x100] sm:$0xff]
    %v888 = vld [vmem:[#allocation5 + $0x108] sm:$0xff]
    %v889 = vld [vmem:[#allocation5 + $0x110] sm:$0xff]
    %v890 = vld [vmem:[#allocation5 + $0x118] sm:$0xff]
    %v891 = vld [vmem:[#allocation5 + $0x120] sm:$0xff]
    %v892 = vld [vmem:[#allocation5 + $0x128] sm:$0xff]
    %v893 = vld [vmem:[#allocation5 + $0x130] sm:$0xff]
    %v894 = vld [vmem:[#allocation5 + $0x138] sm:$0xff]
    %v895 = vld [vmem:[#allocation5 + $0x140] sm:$0xff]
    %v896 = vld [vmem:[#allocation5 + $0x148] sm:$0xff]
    %v897 = vld [vmem:[#allocation5 + $0x150] sm:$0xff]
    %v898 = vld [vmem:[#allocation5 + $0x158] sm:$0x1]
    %v899 = vld [vmem:[#allocation5 + $0x159] sm:$0x1]
    %v900 = vld [vmem:[#allocation5 + $0x15a] sm:$0x1]
    %v901 = vld [vmem:[#allocation5 + $0x15b] sm:$0x1]
    %v902 = vperm.slane %v898, 0
    %v904 = vsel %vm147, %v872, 0
    %v907 = vsel %vm147, %v873, 0
    %909 = vmatpush.msra.mxu0 0.0
    %910 = vmatpush.msra.mxu0 0.0
    %911 = vmatpush.msra.mxu0 0.0
    %912 = vmatpush.msra.mxu0 0.0
    %913 = vmatpush.msra.mxu0 0.0
    %914 = vmatpush.msra.mxu0 0.0
    %915 = vmatpush.msra.mxu0 0.0
    %916 = vmatpush.msra.mxu0 0.0
    %917 = vmatpush.msra.mxu0 0.0
    %918 = vmatpush.msra.mxu0 0.0
    %919 = vmatpush.msra.mxu0 0.0
    %920 = vmatpush.msra.mxu0 0.0
    %921 = vmatpush.msra.mxu0 %v877
    %922 = vmatpush.msra.mxu0 %v876
    %923 = vmatpush.msra.mxu0 %v875
    %924 = vmatpush.msra.mxu0 %v874
    %925 = vmatmul.f32.gmra.mxu0 %v904
    %v926 = vpop.f32.mrf.mxu0
    %v927 = vadd.f32 %v902, %v926
    %928 = vmatmul.f32.gmra.mxu0 %v907
    %v929 = vpop.f32.mrf.mxu0
    %v930 = vadd.f32 %v902, %v929
    %931 = vdwg.mxu0
    %v932 = vperm.slane %v899, 0
    %933 = vmatpush.msra.mxu0 0.0
    %934 = vmatpush.msra.mxu0 0.0
    %935 = vmatpush.msra.mxu0 0.0
    %936 = vmatpush.msra.mxu0 0.0
    %937 = vmatpush.msra.mxu0 0.0
    %938 = vmatpush.msra.mxu0 0.0
    %939 = vmatpush.msra.mxu0 0.0
    %940 = vmatpush.msra.mxu0 0.0
    %941 = vmatpush.msra.mxu0 0.0
    %942 = vmatpush.msra.mxu0 0.0
    %943 = vmatpush.msra.mxu0 0.0
    %944 = vmatpush.msra.mxu0 0.0
    %945 = vmatpush.msra.mxu0 %v881
    %946 = vmatpush.msra.mxu0 %v880
    %947 = vmatpush.msra.mxu0 %v879
    %948 = vmatpush.msra.mxu0 %v878
    %949 = vmatmul.f32.gmra.mxu0 %v904
    %v950 = vpop.f32.mrf.mxu0
    %v951 = vadd.f32 %v932, %v950
    %952 = vmatmul.f32.gmra.mxu0 %v907
    %v953 = vpop.f32.mrf.mxu0
    %v954 = vadd.f32 %v932, %v953
    %955 = vdwg.mxu0
    %v956 = vperm.slane %v900, 0
    %957 = vmatpush.msra.mxu0 0.0
    %958 = vmatpush.msra.mxu0 0.0
    %959 = vmatpush.msra.mxu0 0.0
    %960 = vmatpush.msra.mxu0 0.0
    %961 = vmatpush.msra.mxu0 0.0
    %962 = vmatpush.msra.mxu0 0.0
    %963 = vmatpush.msra.mxu0 0.0
    %964 = vmatpush.msra.mxu0 0.0
    %965 = vmatpush.msra.mxu0 0.0
    %966 = vmatpush.msra.mxu0 0.0
    %967 = vmatpush.msra.mxu0 0.0
    %968 = vmatpush.msra.mxu0 0.0
    %969 = vmatpush.msra.mxu0 %v885
    %970 = vmatpush.msra.mxu0 %v884
    %971 = vmatpush.msra.mxu0 %v883
    %972 = vmatpush.msra.mxu0 %v882
    %973 = vmatmul.f32.gmra.mxu0 %v904
    %v974 = vpop.f32.mrf.mxu0
    %v975 = vadd.f32 %v956, %v974
    %976 = vmatmul.f32.gmra.mxu0 %v907
    %v977 = vpop.f32.mrf.mxu0
    %v978 = vadd.f32 %v956, %v977
    %979 = vdwg.mxu0
    %v980 = vperm.slane %v901, 0
    %981 = vmatpush.msra.mxu0 0.0
    %982 = vmatpush.msra.mxu0 0.0
    %983 = vmatpush.msra.mxu0 0.0
    %984 = vmatpush.msra.mxu0 0.0
    %985 = vmatpush.msra.mxu0 0.0
    %986 = vmatpush.msra.mxu0 0.0
    %987 = vmatpush.msra.mxu0 0.0
    %988 = vmatpush.msra.mxu0 0.0
    %989 = vmatpush.msra.mxu0 0.0
    %990 = vmatpush.msra.mxu0 0.0
    %991 = vmatpush.msra.mxu0 0.0
    %992 = vmatpush.msra.mxu0 0.0
    %993 = vmatpush.msra.mxu0 %v889
    %994 = vmatpush.msra.mxu0 %v888
    %995 = vmatpush.msra.mxu0 %v887
    %996 = vmatpush.msra.mxu0 %v886
    %997 = vmatmul.f32.gmra.mxu0 %v149
    %v998 = vpop.f32.mrf.mxu0
    %v999 = vadd.f32 0.0, %v998
    %1000 = vdwg.mxu0
    %1001 = vmatpush.msra.mxu0 0.0
    %1002 = vmatpush.msra.mxu0 0.0
    %1003 = vmatpush.msra.mxu0 0.0
    %1004 = vmatpush.msra.mxu0 0.0
    %1005 = vmatpush.msra.mxu0 0.0
    %1006 = vmatpush.msra.mxu0 0.0
    %1007 = vmatpush.msra.mxu0 0.0
    %1008 = vmatpush.msra.mxu0 0.0
    %1009 = vmatpush.msra.mxu0 0.0
    %1010 = vmatpush.msra.mxu0 0.0
    %1011 = vmatpush.msra.mxu0 0.0
    %1012 = vmatpush.msra.mxu0 0.0
    %1013 = vmatpush.msra.mxu0 %v893
    %1014 = vmatpush.msra.mxu0 %v892
    %1015 = vmatpush.msra.mxu0 %v891
    %1016 = vmatpush.msra.mxu0 %v890
    %1017 = vmatmul.f32.gmra.mxu0 %v149
    %v1018 = vpop.f32.mrf.mxu0
    %v1019 = vadd.f32 0.0, %v1018
    %1020 = vdwg.mxu0
    %v1021 = vadd.f32 %v927, %v999
    %v1022 = vmul.f32 %v1021, 0.5
    %v1023 = vtanh.pop %v1022
    %v1024 = vmul.f32 %v1023, 0.5
    %v1025 = vadd.f32 %v1024, 0.5
    %v1026 = vadd.f32 %v951, %v1019
    %v1027 = vmul.f32 %v1026, 0.5
    %v1028 = vtanh.pop %v1027
    %v1029 = vmul.f32 %v1028, 0.5
    %v1030 = vadd.f32 %v1029, 0.5
    %1031 = vmatpush.msra.mxu0 0.0
    %1032 = vmatpush.msra.mxu0 0.0
    %1033 = vmatpush.msra.mxu0 0.0
    %1034 = vmatpush.msra.mxu0 0.0
    %1035 = vmatpush.msra.mxu0 0.0
    %1036 = vmatpush.msra.mxu0 0.0
    %1037 = vmatpush.msra.mxu0 0.0
    %1038 = vmatpush.msra.mxu0 0.0
    %1039 = vmatpush.msra.mxu0 0.0
    %1040 = vmatpush.msra.mxu0 0.0
    %1041 = vmatpush.msra.mxu0 0.0
    %1042 = vmatpush.msra.mxu0 0.0
    %1043 = vmatpush.msra.mxu0 %v897
    %1044 = vmatpush.msra.mxu0 %v896
    %1045 = vmatpush.msra.mxu0 %v895
    %1046 = vmatpush.msra.mxu0 %v894
    %1047 = vmatmul.f32.gmra.mxu0 %v149
    %v1048 = vpop.f32.mrf.mxu0
    %v1049 = vadd.f32 %v980, %v1048
    %1050 = vdwg.mxu0
    %v1051 = vmul.f32 %v1025, %v1049
    %v1052 = vadd.f32 %v975, %v1051
    %v1053 = vtanh.pop %v1052
    %v1054 = vsub.f32 1.0, %v1030
    %v1055 = vmul.f32 %v1054, %v1053
    %v1056 = vmul.f32 %v1030, 0.0
    %v1057 = vadd.f32 %v1055, %v1056
    %1058 = vst.msk [vmem:[#allocation2] sm:$0x3] %vm228, %v1057
    %v1060 = vsel %vm147, %v1057, 0
    %1062 = vmatpush.msra.mxu0 0.0
    %1063 = vmatpush.msra.mxu0 0.0
    %1064 = vmatpush.msra.mxu0 0.0
    %1065 = vmatpush.msra.mxu0 0.0
    %1066 = vmatpush.msra.mxu0 0.0
    %1067 = vmatpush.msra.mxu0 0.0
    %1068 = vmatpush.msra.mxu0 0.0
    %1069 = vmatpush.msra.mxu0 0.0
    %1070 = vmatpush.msra.mxu0 0.0
    %1071 = vmatpush.msra.mxu0 0.0
    %1072 = vmatpush.msra.mxu0 0.0
    %1073 = vmatpush.msra.mxu0 0.0
    %1074 = vmatpush.msra.mxu0 %v889
    %1075 = vmatpush.msra.mxu0 %v888
    %1076 = vmatpush.msra.mxu0 %v887
    %1077 = vmatpush.msra.mxu0 %v886
    %1078 = vmatmul.f32.gmra.mxu0 %v1060
    %v1079 = vpop.f32.mrf.mxu0
    %v1080 = vadd.f32 0.0, %v1079
    %1081 = vdwg.mxu0
    %1082 = vmatpush.msra.mxu0 0.0
    %1083 = vmatpush.msra.mxu0 0.0
    %1084 = vmatpush.msra.mxu0 0.0
    %1085 = vmatpush.msra.mxu0 0.0
    %1086 = vmatpush.msra.mxu0 0.0
    %1087 = vmatpush.msra.mxu0 0.0
    %1088 = vmatpush.msra.mxu0 0.0
    %1089 = vmatpush.msra.mxu0 0.0
    %1090 = vmatpush.msra.mxu0 0.0
    %1091 = vmatpush.msra.mxu0 0.0
    %1092 = vmatpush.msra.mxu0 0.0
    %1093 = vmatpush.msra.mxu0 0.0
    %1094 = vmatpush.msra.mxu0 %v893
    %1095 = vmatpush.msra.mxu0 %v892
    %1096 = vmatpush.msra.mxu0 %v891
    %1097 = vmatpush.msra.mxu0 %v890
    %1098 = vmatmul.f32.gmra.mxu0 %v1060
    %v1099 = vpop.f32.mrf.mxu0
    %v1100 = vadd.f32 0.0, %v1099
    %1101 = vdwg.mxu0
    %v1103 = vrot.slane %v1080, 6
    %v1105 = vadd.f32 %v927, %v1103
    %v1106 = vmul.f32 %v1105, 0.5
    %v1107 = vtanh.pop %v1106
    %v1108 = vmul.f32 %v1107, 0.5
    %v1109 = vadd.f32 %v1108, 0.5
    %v1111 = vrot.slane %v1100, 6
    %v1113 = vadd.f32 %v951, %v1111
    %v1114 = vmul.f32 %v1113, 0.5
    %v1115 = vtanh.pop %v1114
    %v1116 = vmul.f32 %v1115, 0.5
    %v1117 = vadd.f32 %v1116, 0.5
    %1118 = vmatpush.msra.mxu0 0.0
    %1119 = vmatpush.msra.mxu0 0.0
    %1120 = vmatpush.msra.mxu0 0.0
    %1121 = vmatpush.msra.mxu0 0.0
    %1122 = vmatpush.msra.mxu0 0.0
    %1123 = vmatpush.msra.mxu0 0.0
    %1124 = vmatpush.msra.mxu0 0.0
    %1125 = vmatpush.msra.mxu0 0.0
    %1126 = vmatpush.msra.mxu0 0.0
    %1127 = vmatpush.msra.mxu0 0.0
    %1128 = vmatpush.msra.mxu0 0.0
    %1129 = vmatpush.msra.mxu0 0.0
    %1130 = vmatpush.msra.mxu0 %v897
    %1131 = vmatpush.msra.mxu0 %v896
    %1132 = vmatpush.msra.mxu0 %v895
    %1133 = vmatpush.msra.mxu0 %v894
    %1134 = vmatmul.f32.gmra.mxu0 %v1060
    %v1135 = vpop.f32.mrf.mxu0
    %v1136 = vadd.f32 %v980, %v1135
    %1137 = vdwg.mxu0
    %v1139 = vrot.slane %v1136, 6
    %v1141 = vmul.f32 %v1109, %v1139
    %v1142 = vadd.f32 %v975, %v1141
    %v1143 = vtanh.pop %v1142
    %v1144 = vsub.f32 1.0, %v1117
    %v1145 = vmul.f32 %v1144, %v1143
    %v1146 = vrot.slane %v1057, 6
    %v1148 = vmul.f32 %v1117, %v1146
    %v1149 = vadd.f32 %v1145, %v1148
    %1150 = vst.msk [vmem:[#allocation2] sm:$0xc] %vm321, %v1149
    %v1152 = vrot.slane %v1149, 2
    %v1153 = vsel %vm147, %v1152, 0
    %1155 = vmatpush.msra.mxu0 0.0
    %1156 = vmatpush.msra.mxu0 0.0
    %1157 = vmatpush.msra.mxu0 0.0
    %1158 = vmatpush.msra.mxu0 0.0
    %1159 = vmatpush.msra.mxu0 0.0
    %1160 = vmatpush.msra.mxu0 0.0
    %1161 = vmatpush.msra.mxu0 0.0
    %1162 = vmatpush.msra.mxu0 0.0
    %1163 = vmatpush.msra.mxu0 0.0
    %1164 = vmatpush.msra.mxu0 0.0
    %1165 = vmatpush.msra.mxu0 0.0
    %1166 = vmatpush.msra.mxu0 0.0
    %1167 = vmatpush.msra.mxu0 %v889
    %1168 = vmatpush.msra.mxu0 %v888
    %1169 = vmatpush.msra.mxu0 %v887
    %1170 = vmatpush.msra.mxu0 %v886
    %1171 = vmatmul.f32.gmra.mxu0 %v1153
    %v1172 = vpop.f32.mrf.mxu0
    %v1173 = vadd.f32 0.0, %v1172
    %1174 = vdwg.mxu0
    %1175 = vmatpush.msra.mxu0 0.0
    %1176 = vmatpush.msra.mxu0 0.0
    %1177 = vmatpush.msra.mxu0 0.0
    %1178 = vmatpush.msra.mxu0 0.0
    %1179 = vmatpush.msra.mxu0 0.0
    %1180 = vmatpush.msra.mxu0 0.0
    %1181 = vmatpush.msra.mxu0 0.0
    %1182 = vmatpush.msra.mxu0 0.0
    %1183 = vmatpush.msra.mxu0 0.0
    %1184 = vmatpush.msra.mxu0 0.0
    %1185 = vmatpush.msra.mxu0 0.0
    %1186 = vmatpush.msra.mxu0 0.0
    %1187 = vmatpush.msra.mxu0 %v893
    %1188 = vmatpush.msra.mxu0 %v892
    %1189 = vmatpush.msra.mxu0 %v891
    %1190 = vmatpush.msra.mxu0 %v890
    %1191 = vmatmul.f32.gmra.mxu0 %v1153
    %v1192 = vpop.f32.mrf.mxu0
    %v1193 = vadd.f32 0.0, %v1192
    %1194 = vdwg.mxu0
    %v1196 = vrot.slane %v1173, 4
    %v1198 = vadd.f32 %v927, %v1196
    %v1199 = vmul.f32 %v1198, 0.5
    %v1200 = vtanh.pop %v1199
    %v1201 = vmul.f32 %v1200, 0.5
    %v1202 = vadd.f32 %v1201, 0.5
    %v1204 = vrot.slane %v1193, 4
    %v1206 = vadd.f32 %v951, %v1204
    %v1207 = vmul.f32 %v1206, 0.5
    %v1208 = vtanh.pop %v1207
    %v1209 = vmul.f32 %v1208, 0.5
    %v1210 = vadd.f32 %v1209, 0.5
    %1211 = vmatpush.msra.mxu0 0.0
    %1212 = vmatpush.msra.mxu0 0.0
    %1213 = vmatpush.msra.mxu0 0.0
    %1214 = vmatpush.msra.mxu0 0.0
    %1215 = vmatpush.msra.mxu0 0.0
    %1216 = vmatpush.msra.mxu0 0.0
    %1217 = vmatpush.msra.mxu0 0.0
    %1218 = vmatpush.msra.mxu0 0.0
    %1219 = vmatpush.msra.mxu0 0.0
    %1220 = vmatpush.msra.mxu0 0.0
    %1221 = vmatpush.msra.mxu0 0.0
    %1222 = vmatpush.msra.mxu0 0.0
    %1223 = vmatpush.msra.mxu0 %v897
    %1224 = vmatpush.msra.mxu0 %v896
    %1225 = vmatpush.msra.mxu0 %v895
    %1226 = vmatpush.msra.mxu0 %v894
    %1227 = vmatmul.f32.gmra.mxu0 %v1153
    %v1228 = vpop.f32.mrf.mxu0
    %v1229 = vadd.f32 %v980, %v1228
    %1230 = vdwg.mxu0
    %v1232 = vrot.slane %v1229, 4
    %v1234 = vmul.f32 %v1202, %v1232
    %v1235 = vadd.f32 %v975, %v1234
    %v1236 = vtanh.pop %v1235
    %v1237 = vsub.f32 1.0, %v1210
    %v1238 = vmul.f32 %v1237, %v1236
    %v1239 = vrot.slane %v1149, 6
    %v1241 = vmul.f32 %v1210, %v1239
    %v1242 = vadd.f32 %v1238, %v1241
    %1243 = vst.msk [vmem:[#allocation2] sm:$0x30] %vm415, %v1242
    %v1245 = vrot.slane %v1242, 4
    %v1246 = vsel %vm147, %v1245, 0
    %1248 = vmatpush.msra.mxu0 0.0
    %1249 = vmatpush.msra.mxu0 0.0
    %1250 = vmatpush.msra.mxu0 0.0
    %1251 = vmatpush.msra.mxu0 0.0
    %1252 = vmatpush.msra.mxu0 0.0
    %1253 = vmatpush.msra.mxu0 0.0
    %1254 = vmatpush.msra.mxu0 0.0
    %1255 = vmatpush.msra.mxu0 0.0
    %1256 = vmatpush.msra.mxu0 0.0
    %1257 = vmatpush.msra.mxu0 0.0
    %1258 = vmatpush.msra.mxu0 0.0
    %1259 = vmatpush.msra.mxu0 0.0
    %1260 = vmatpush.msra.mxu0 %v889
    %1261 = vmatpush.msra.mxu0 %v888
    %1262 = vmatpush.msra.mxu0 %v887
    %1263 = vmatpush.msra.mxu0 %v886
    %1264 = vmatmul.f32.gmra.mxu0 %v1246
    %v1265 = vpop.f32.mrf.mxu0
    %v1266 = vadd.f32 0.0, %v1265
    %1267 = vdwg.mxu0
    %1268 = vmatpush.msra.mxu0 0.0
    %1269 = vmatpush.msra.mxu0 0.0
    %1270 = vmatpush.msra.mxu0 0.0
    %1271 = vmatpush.msra.mxu0 0.0
    %1272 = vmatpush.msra.mxu0 0.0
    %1273 = vmatpush.msra.mxu0 0.0
    %1274 = vmatpush.msra.mxu0 0.0
    %1275 = vmatpush.msra.mxu0 0.0
    %1276 = vmatpush.msra.mxu0 0.0
    %1277 = vmatpush.msra.mxu0 0.0
    %1278 = vmatpush.msra.mxu0 0.0
    %1279 = vmatpush.msra.mxu0 0.0
    %1280 = vmatpush.msra.mxu0 %v893
    %1281 = vmatpush.msra.mxu0 %v892
    %1282 = vmatpush.msra.mxu0 %v891
    %1283 = vmatpush.msra.mxu0 %v890
    %1284 = vmatmul.f32.gmra.mxu0 %v1246
    %v1285 = vpop.f32.mrf.mxu0
    %v1286 = vadd.f32 0.0, %v1285
    %1287 = vdwg.mxu0
    %v1289 = vrot.slane %v1266, 2
    %v1291 = vadd.f32 %v927, %v1289
    %v1292 = vmul.f32 %v1291, 0.5
    %v1293 = vtanh.pop %v1292
    %v1294 = vmul.f32 %v1293, 0.5
    %v1295 = vadd.f32 %v1294, 0.5
    %v1297 = vrot.slane %v1286, 2
    %v1299 = vadd.f32 %v951, %v1297
    %v1300 = vmul.f32 %v1299, 0.5
    %v1301 = vtanh.pop %v1300
    %v1302 = vmul.f32 %v1301, 0.5
    %v1303 = vadd.f32 %v1302, 0.5
    %1304 = vmatpush.msra.mxu0 0.0
    %1305 = vmatpush.msra.mxu0 0.0
    %1306 = vmatpush.msra.mxu0 0.0
    %1307 = vmatpush.msra.mxu0 0.0
    %1308 = vmatpush.msra.mxu0 0.0
    %1309 = vmatpush.msra.mxu0 0.0
    %1310 = vmatpush.msra.mxu0 0.0
    %1311 = vmatpush.msra.mxu0 0.0
    %1312 = vmatpush.msra.mxu0 0.0
    %1313 = vmatpush.msra.mxu0 0.0
    %1314 = vmatpush.msra.mxu0 0.0
    %1315 = vmatpush.msra.mxu0 0.0
    %1316 = vmatpush.msra.mxu0 %v897
    %1317 = vmatpush.msra.mxu0 %v896
    %1318 = vmatpush.msra.mxu0 %v895
    %1319 = vmatpush.msra.mxu0 %v894
    %1320 = vmatmul.f32.gmra.mxu0 %v1246
    %v1321 = vpop.f32.mrf.mxu0
    %v1322 = vadd.f32 %v980, %v1321
    %1323 = vdwg.mxu0
    %v1325 = vrot.slane %v1322, 2
    %v1327 = vmul.f32 %v1295, %v1325
    %v1328 = vadd.f32 %v975, %v1327
    %v1329 = vtanh.pop %v1328
    %v1330 = vsub.f32 1.0, %v1303
    %v1331 = vmul.f32 %v1330, %v1329
    %v1332 = vrot.slane %v1242, 6
    %v1334 = vmul.f32 %v1303, %v1332
    %v1335 = vadd.f32 %v1331, %v1334
    %1336 = vst.msk [vmem:[#allocation2] sm:$0xc0] %vm509, %v1335
    %v1338 = vrot.slane %v1335, 6
    %v1339 = vsel %vm147, %v1338, 0
    %1341 = vmatpush.msra.mxu0 0.0
    %1342 = vmatpush.msra.mxu0 0.0
    %1343 = vmatpush.msra.mxu0 0.0
    %1344 = vmatpush.msra.mxu0 0.0
    %1345 = vmatpush.msra.mxu0 0.0
    %1346 = vmatpush.msra.mxu0 0.0
    %1347 = vmatpush.msra.mxu0 0.0
    %1348 = vmatpush.msra.mxu0 0.0
    %1349 = vmatpush.msra.mxu0 0.0
    %1350 = vmatpush.msra.mxu0 0.0
    %1351 = vmatpush.msra.mxu0 0.0
    %1352 = vmatpush.msra.mxu0 0.0
    %1353 = vmatpush.msra.mxu0 %v889
    %1354 = vmatpush.msra.mxu0 %v888
    %1355 = vmatpush.msra.mxu0 %v887
    %1356 = vmatpush.msra.mxu0 %v886
    %1357 = vmatmul.f32.gmra.mxu0 %v1339
    %v1358 = vpop.f32.mrf.mxu0
    %v1359 = vadd.f32 0.0, %v1358
    %1360 = vdwg.mxu0
    %1361 = vmatpush.msra.mxu0 0.0
    %1362 = vmatpush.msra.mxu0 0.0
    %1363 = vmatpush.msra.mxu0 0.0
    %1364 = vmatpush.msra.mxu0 0.0
    %1365 = vmatpush.msra.mxu0 0.0
    %1366 = vmatpush.msra.mxu0 0.0
    %1367 = vmatpush.msra.mxu0 0.0
    %1368 = vmatpush.msra.mxu0 0.0
    %1369 = vmatpush.msra.mxu0 0.0
    %1370 = vmatpush.msra.mxu0 0.0
    %1371 = vmatpush.msra.mxu0 0.0
    %1372 = vmatpush.msra.mxu0 0.0
    %1373 = vmatpush.msra.mxu0 %v893
    %1374 = vmatpush.msra.mxu0 %v892
    %1375 = vmatpush.msra.mxu0 %v891
    %1376 = vmatpush.msra.mxu0 %v890
    %1377 = vmatmul.f32.gmra.mxu0 %v1339
    %v1378 = vpop.f32.mrf.mxu0
    %v1379 = vadd.f32 0.0, %v1378
    %1380 = vdwg.mxu0
    %v1381 = vadd.f32 %v930, %v1359
    %v1382 = vmul.f32 %v1381, 0.5
    %v1383 = vtanh.pop %v1382
    %v1384 = vmul.f32 %v1383, 0.5
    %v1385 = vadd.f32 %v1384, 0.5
    %v1386 = vadd.f32 %v954, %v1379
    %v1387 = vmul.f32 %v1386, 0.5
    %v1388 = vtanh.pop %v1387
    %v1389 = vmul.f32 %v1388, 0.5
    %v1390 = vadd.f32 %v1389, 0.5
    %1391 = vmatpush.msra.mxu0 0.0
    %1392 = vmatpush.msra.mxu0 0.0
    %1393 = vmatpush.msra.mxu0 0.0
    %1394 = vmatpush.msra.mxu0 0.0
    %1395 = vmatpush.msra.mxu0 0.0
    %1396 = vmatpush.msra.mxu0 0.0
    %1397 = vmatpush.msra.mxu0 0.0
    %1398 = vmatpush.msra.mxu0 0.0
    %1399 = vmatpush.msra.mxu0 0.0
    %1400 = vmatpush.msra.mxu0 0.0
    %1401 = vmatpush.msra.mxu0 0.0
    %1402 = vmatpush.msra.mxu0 0.0
    %1403 = vmatpush.msra.mxu0 %v897
    %1404 = vmatpush.msra.mxu0 %v896
    %1405 = vmatpush.msra.mxu0 %v895
    %1406 = vmatpush.msra.mxu0 %v894
    %1407 = vmatmul.f32.gmra.mxu0 %v1339
    %v1408 = vpop.f32.mrf.mxu0
    %v1409 = vadd.f32 %v980, %v1408
    %1410 = vdwg.mxu0
    %v1411 = vmul.f32 %v1385, %v1409
    %v1412 = vadd.f32 %v978, %v1411
    %v1413 = vtanh.pop %v1412
    %v1414 = vsub.f32 1.0, %v1390
    %v1415 = vmul.f32 %v1414, %v1413
    %v1417 = vmul.f32 %v1390, %v1338
    %v1418 = vadd.f32 %v1415, %v1417
    %1419 = vst.msk [vmem:[#allocation2 + $0x8] sm:$0x3] %vm228, %v1418
    %v1421 = vsel %vm147, %v1418, 0
    %1423 = vmatpush.msra.mxu0 0.0
    %1424 = vmatpush.msra.mxu0 0.0
    %1425 = vmatpush.msra.mxu0 0.0
    %1426 = vmatpush.msra.mxu0 0.0
    %1427 = vmatpush.msra.mxu0 0.0
    %1428 = vmatpush.msra.mxu0 0.0
    %1429 = vmatpush.msra.mxu0 0.0
    %1430 = vmatpush.msra.mxu0 0.0
    %1431 = vmatpush.msra.mxu0 0.0
    %1432 = vmatpush.msra.mxu0 0.0
    %1433 = vmatpush.msra.mxu0 0.0
    %1434 = vmatpush.msra.mxu0 0.0
    %1435 = vmatpush.msra.mxu0 %v889
    %1436 = vmatpush.msra.mxu0 %v888
    %1437 = vmatpush.msra.mxu0 %v887
    %1438 = vmatpush.msra.mxu0 %v886
    %1439 = vmatmul.f32.gmra.mxu0 %v1421
    %v1440 = vpop.f32.mrf.mxu0
    %v1441 = vadd.f32 0.0, %v1440
    %1442 = vdwg.mxu0
    %1443 = vmatpush.msra.mxu0 0.0
    %1444 = vmatpush.msra.mxu0 0.0
    %1445 = vmatpush.msra.mxu0 0.0
    %1446 = vmatpush.msra.mxu0 0.0
    %1447 = vmatpush.msra.mxu0 0.0
    %1448 = vmatpush.msra.mxu0 0.0
    %1449 = vmatpush.msra.mxu0 0.0
    %1450 = vmatpush.msra.mxu0 0.0
    %1451 = vmatpush.msra.mxu0 0.0
    %1452 = vmatpush.msra.mxu0 0.0
    %1453 = vmatpush.msra.mxu0 0.0
    %1454 = vmatpush.msra.mxu0 0.0
    %1455 = vmatpush.msra.mxu0 %v893
    %1456 = vmatpush.msra.mxu0 %v892
    %1457 = vmatpush.msra.mxu0 %v891
    %1458 = vmatpush.msra.mxu0 %v890
    %1459 = vmatmul.f32.gmra.mxu0 %v1421
    %v1460 = vpop.f32.mrf.mxu0
    %v1461 = vadd.f32 0.0, %v1460
    %1462 = vdwg.mxu0
    %v1464 = vrot.slane %v1441, 6
    %v1466 = vadd.f32 %v930, %v1464
    %v1467 = vmul.f32 %v1466, 0.5
    %v1468 = vtanh.pop %v1467
    %v1469 = vmul.f32 %v1468, 0.5
    %v1470 = vadd.f32 %v1469, 0.5
    %v1472 = vrot.slane %v1461, 6
    %v1474 = vadd.f32 %v954, %v1472
    %v1475 = vmul.f32 %v1474, 0.5
    %v1476 = vtanh.pop %v1475
    %v1477 = vmul.f32 %v1476, 0.5
    %v1478 = vadd.f32 %v1477, 0.5
    %1479 = vmatpush.msra.mxu0 0.0
    %1480 = vmatpush.msra.mxu0 0.0
    %1481 = vmatpush.msra.mxu0 0.0
    %1482 = vmatpush.msra.mxu0 0.0
    %1483 = vmatpush.msra.mxu0 0.0
    %1484 = vmatpush.msra.mxu0 0.0
    %1485 = vmatpush.msra.mxu0 0.0
    %1486 = vmatpush.msra.mxu0 0.0
    %1487 = vmatpush.msra.mxu0 0.0
    %1488 = vmatpush.msra.mxu0 0.0
    %1489 = vmatpush.msra.mxu0 0.0
    %1490 = vmatpush.msra.mxu0 0.0
    %1491 = vmatpush.msra.mxu0 %v897
    %1492 = vmatpush.msra.mxu0 %v896
    %1493 = vmatpush.msra.mxu0 %v895
    %1494 = vmatpush.msra.mxu0 %v894
    %1495 = vmatmul.f32.gmra.mxu0 %v1421
    %v1496 = vpop.f32.mrf.mxu0
    %v1497 = vadd.f32 %v980, %v1496
    %1498 = vdwg.mxu0
    %v1500 = vrot.slane %v1497, 6
    %v1502 = vmul.f32 %v1470, %v1500
    %v1503 = vadd.f32 %v978, %v1502
    %v1504 = vtanh.pop %v1503
    %v1505 = vsub.f32 1.0, %v1478
    %v1506 = vmul.f32 %v1505, %v1504
    %v1507 = vrot.slane %v1418, 6
    %v1509 = vmul.f32 %v1478, %v1507
    %v1510 = vadd.f32 %v1506, %v1509
    %1511 = vst.msk [vmem:[#allocation2 + $0x8] sm:$0xc] %vm321, %v1510
    %v1513 = vrot.slane %v1510, 2
    %v1514 = vsel %vm147, %v1513, 0
    %1516 = vmatpush.msra.mxu0 0.0
    %1517 = vmatpush.msra.mxu0 0.0
    %1518 = vmatpush.msra.mxu0 0.0
    %1519 = vmatpush.msra.mxu0 0.0
    %1520 = vmatpush.msra.mxu0 0.0
    %1521 = vmatpush.msra.mxu0 0.0
    %1522 = vmatpush.msra.mxu0 0.0
    %1523 = vmatpush.msra.mxu0 0.0
    %1524 = vmatpush.msra.mxu0 0.0
    %1525 = vmatpush.msra.mxu0 0.0
    %1526 = vmatpush.msra.mxu0 0.0
    %1527 = vmatpush.msra.mxu0 0.0
    %1528 = vmatpush.msra.mxu0 %v889
    %1529 = vmatpush.msra.mxu0 %v888
    %1530 = vmatpush.msra.mxu0 %v887
    %1531 = vmatpush.msra.mxu0 %v886
    %1532 = vmatmul.f32.gmra.mxu0 %v1514
    %v1533 = vpop.f32.mrf.mxu0
    %v1534 = vadd.f32 0.0, %v1533
    %1535 = vdwg.mxu0
    %1536 = vmatpush.msra.mxu0 0.0
    %1537 = vmatpush.msra.mxu0 0.0
    %1538 = vmatpush.msra.mxu0 0.0
    %1539 = vmatpush.msra.mxu0 0.0
    %1540 = vmatpush.msra.mxu0 0.0
    %1541 = vmatpush.msra.mxu0 0.0
    %1542 = vmatpush.msra.mxu0 0.0
    %1543 = vmatpush.msra.mxu0 0.0
    %1544 = vmatpush.msra.mxu0 0.0
    %1545 = vmatpush.msra.mxu0 0.0
    %1546 = vmatpush.msra.mxu0 0.0
    %1547 = vmatpush.msra.mxu0 0.0
    %1548 = vmatpush.msra.mxu0 %v893
    %1549 = vmatpush.msra.mxu0 %v892
    %1550 = vmatpush.msra.mxu0 %v891
    %1551 = vmatpush.msra.mxu0 %v890
    %1552 = vmatmul.f32.gmra.mxu0 %v1514
    %v1553 = vpop.f32.mrf.mxu0
    %v1554 = vadd.f32 0.0, %v1553
    %1555 = vdwg.mxu0
    %v1557 = vrot.slane %v1534, 4
    %v1559 = vadd.f32 %v930, %v1557
    %v1560 = vmul.f32 %v1559, 0.5
    %v1561 = vtanh.pop %v1560
    %v1562 = vmul.f32 %v1561, 0.5
    %v1563 = vadd.f32 %v1562, 0.5
    %v1565 = vrot.slane %v1554, 4
    %v1567 = vadd.f32 %v954, %v1565
    %v1568 = vmul.f32 %v1567, 0.5
    %v1569 = vtanh.pop %v1568
    %v1570 = vmul.f32 %v1569, 0.5
    %v1571 = vadd.f32 %v1570, 0.5
    %1572 = vmatpush.msra.mxu0 0.0
    %1573 = vmatpush.msra.mxu0 0.0
    %1574 = vmatpush.msra.mxu0 0.0
    %1575 = vmatpush.msra.mxu0 0.0
    %1576 = vmatpush.msra.mxu0 0.0
    %1577 = vmatpush.msra.mxu0 0.0
    %1578 = vmatpush.msra.mxu0 0.0
    %1579 = vmatpush.msra.mxu0 0.0
    %1580 = vmatpush.msra.mxu0 0.0
    %1581 = vmatpush.msra.mxu0 0.0
    %1582 = vmatpush.msra.mxu0 0.0
    %1583 = vmatpush.msra.mxu0 0.0
    %1584 = vmatpush.msra.mxu0 %v897
    %1585 = vmatpush.msra.mxu0 %v896
    %1586 = vmatpush.msra.mxu0 %v895
    %1587 = vmatpush.msra.mxu0 %v894
    %1588 = vmatmul.f32.gmra.mxu0 %v1514
    %v1589 = vpop.f32.mrf.mxu0
    %v1590 = vadd.f32 %v980, %v1589
    %1591 = vdwg.mxu0
    %v1593 = vrot.slane %v1590, 4
    %v1595 = vmul.f32 %v1563, %v1593
    %v1596 = vadd.f32 %v978, %v1595
    %v1597 = vtanh.pop %v1596
    %v1598 = vsub.f32 1.0, %v1571
    %v1599 = vmul.f32 %v1598, %v1597
    %v1600 = vrot.slane %v1510, 6
    %v1602 = vmul.f32 %v1571, %v1600
    %v1603 = vadd.f32 %v1599, %v1602
    %1604 = vst.msk [vmem:[#allocation2 + $0x8] sm:$0x30] %vm415, %v1603
    %v1606 = vrot.slane %v1603, 4
    %v1607 = vsel %vm147, %v1606, 0
    %1609 = vmatpush.msra.mxu0 0.0
    %1610 = vmatpush.msra.mxu0 0.0
    %1611 = vmatpush.msra.mxu0 0.0
    %1612 = vmatpush.msra.mxu0 0.0
    %1613 = vmatpush.msra.mxu0 0.0
    %1614 = vmatpush.msra.mxu0 0.0
    %1615 = vmatpush.msra.mxu0 0.0
    %1616 = vmatpush.msra.mxu0 0.0
    %1617 = vmatpush.msra.mxu0 0.0
    %1618 = vmatpush.msra.mxu0 0.0
    %1619 = vmatpush.msra.mxu0 0.0
    %1620 = vmatpush.msra.mxu0 0.0
    %1621 = vmatpush.msra.mxu0 %v889
    %1622 = vmatpush.msra.mxu0 %v888
    %1623 = vmatpush.msra.mxu0 %v887
    %1624 = vmatpush.msra.mxu0 %v886
    %1625 = vmatmul.f32.gmra.mxu0 %v1607
    %v1626 = vpop.f32.mrf.mxu0
    %v1627 = vadd.f32 0.0, %v1626
    %1628 = vdwg.mxu0
    %1629 = vmatpush.msra.mxu0 0.0
    %1630 = vmatpush.msra.mxu0 0.0
    %1631 = vmatpush.msra.mxu0 0.0
    %1632 = vmatpush.msra.mxu0 0.0
    %1633 = vmatpush.msra.mxu0 0.0
    %1634 = vmatpush.msra.mxu0 0.0
    %1635 = vmatpush.msra.mxu0 0.0
    %1636 = vmatpush.msra.mxu0 0.0
    %1637 = vmatpush.msra.mxu0 0.0
    %1638 = vmatpush.msra.mxu0 0.0
    %1639 = vmatpush.msra.mxu0 0.0
    %1640 = vmatpush.msra.mxu0 0.0
    %1641 = vmatpush.msra.mxu0 %v893
    %1642 = vmatpush.msra.mxu0 %v892
    %1643 = vmatpush.msra.mxu0 %v891
    %1644 = vmatpush.msra.mxu0 %v890
    %1645 = vmatmul.f32.gmra.mxu0 %v1607
    %v1646 = vpop.f32.mrf.mxu0
    %v1647 = vadd.f32 0.0, %v1646
    %1648 = vdwg.mxu0
    %v1650 = vrot.slane %v1627, 2
    %v1652 = vadd.f32 %v930, %v1650
    %v1653 = vmul.f32 %v1652, 0.5
    %v1654 = vtanh.pop %v1653
    %v1655 = vmul.f32 %v1654, 0.5
    %v1656 = vadd.f32 %v1655, 0.5
    %v1658 = vrot.slane %v1647, 2
    %v1660 = vadd.f32 %v954, %v1658
    %v1661 = vmul.f32 %v1660, 0.5
    %v1662 = vtanh.pop %v1661
    %v1663 = vmul.f32 %v1662, 0.5
    %v1664 = vadd.f32 %v1663, 0.5
    %1665 = vmatpush.msra.mxu0 0.0
    %1666 = vmatpush.msra.mxu0 0.0
    %1667 = vmatpush.msra.mxu0 0.0
    %1668 = vmatpush.msra.mxu0 0.0
    %1669 = vmatpush.msra.mxu0 0.0
    %1670 = vmatpush.msra.mxu0 0.0
    %1671 = vmatpush.msra.mxu0 0.0
    %1672 = vmatpush.msra.mxu0 0.0
    %1673 = vmatpush.msra.mxu0 0.0
    %1674 = vmatpush.msra.mxu0 0.0
    %1675 = vmatpush.msra.mxu0 0.0
    %1676 = vmatpush.msra.mxu0 0.0
    %1677 = vmatpush.msra.mxu0 %v897
    %1678 = vmatpush.msra.mxu0 %v896
    %1679 = vmatpush.msra.mxu0 %v895
    %1680 = vmatpush.msra.mxu0 %v894
    %1681 = vmatmul.f32.gmra.mxu0 %v1607
    %v1682 = vpop.f32.mrf.mxu0
    %v1683 = vadd.f32 %v980, %v1682
    %1684 = vdwg.mxu0
    %v1686 = vrot.slane %v1683, 2
    %v1688 = vmul.f32 %v1656, %v1686
    %v1689 = vadd.f32 %v978, %v1688
    %v1690 = vtanh.pop %v1689
    %v1691 = vsub.f32 1.0, %v1664
    %v1692 = vmul.f32 %v1691, %v1690
    %v1693 = vrot.slane %v1603, 6
    %v1695 = vmul.f32 %v1664, %v1693
    %v1696 = vadd.f32 %v1692, %v1695
    %1697 = vst.msk [vmem:[#allocation2 + $0x8] sm:$0xc0] %vm509, %v1696
    %v1698 = vld [vmem:[#allocation2] sm:$0xff]
    %v1699 = vld [vmem:[#allocation2 + $0x8] sm:$0xff]
    %v1700 = vmax.f32 %v1698, 0.0
    %v1701 = vmax.f32 %v1699, 0.0
    %v1702 = vld [vmem:[#allocation5 + $0x160] sm:$0xff]
    %v1703 = vld [vmem:[#allocation5 + $0x168] sm:$0xff]
    %v1704 = vld [vmem:[#allocation5 + $0x170] sm:$0xff]
    %v1705 = vld [vmem:[#allocation5 + $0x178] sm:$0xff]
    %v1706 = vld [vmem:[#allocation5 + $0x180] sm:$0xff]
    %v1707 = vld [vmem:[#allocation5 + $0x188] sm:$0xff]
    %v1708 = vld [vmem:[#allocation5 + $0x190] sm:$0xff]
    %v1709 = vld [vmem:[#allocation5 + $0x198] sm:$0xff]
    %v1710 = vld [vmem:[#allocation5 + $0x1a0] sm:$0xff]
    %v1711 = vld [vmem:[#allocation5 + $0x1a8] sm:$0xff]
    %v1712 = vld [vmem:[#allocation5 + $0x1b0] sm:$0xff]
    %v1713 = vld [vmem:[#allocation5 + $0x1b8] sm:$0xff]
    %v1714 = vld [vmem:[#allocation5 + $0x1c0] sm:$0xff]
    %v1715 = vld [vmem:[#allocation5 + $0x1c8] sm:$0xff]
    %v1716 = vld [vmem:[#allocation5 + $0x1d0] sm:$0xff]
    %v1717 = vld [vmem:[#allocation5 + $0x1d8] sm:$0xff]
    %v1718 = vld [vmem:[#allocation5 + $0x1e0] sm:$0xff]
    %v1719 = vld [vmem:[#allocation5 + $0x1e8] sm:$0xff]
    %v1720 = vld [vmem:[#allocation5 + $0x1f0] sm:$0x1]
    %v1721 = vld [vmem:[#allocation5 + $0x1f1] sm:$0x1]
    %v1722 = vld [vmem:[#allocation5 + $0x1f2] sm:$0x1]
    %v1723 = vld [vmem:[#allocation5 + $0x1f3] sm:$0x1]
    %v1724 = vperm.slane %v1720, 0
    %v1726 = vsel %vm147, %v1700, 0
    %v1729 = vsel %vm147, %v1701, 0
    %1731 = vmatpush.msra.mxu0 0.0
    %1732 = vmatpush.msra.mxu0 0.0
    %1733 = vmatpush.msra.mxu0 0.0
    %1734 = vmatpush.msra.mxu0 0.0
    %1735 = vmatpush.msra.mxu0 0.0
    %1736 = vmatpush.msra.mxu0 0.0
    %1737 = vmatpush.msra.mxu0 0.0
    %1738 = vmatpush.msra.mxu0 0.0
    %1739 = vmatpush.msra.mxu0 0.0
    %1740 = vmatpush.msra.mxu0 0.0
    %1741 = vmatpush.msra.mxu0 0.0
    %1742 = vmatpush.msra.mxu0 0.0
    %1743 = vmatpush.msra.mxu0 %v1705
    %1744 = vmatpush.msra.mxu0 %v1704
    %1745 = vmatpush.msra.mxu0 %v1703
    %1746 = vmatpush.msra.mxu0 %v1702
    %1747 = vmatmul.f32.gmra.mxu0 %v1726
    %v1748 = vpop.f32.mrf.mxu0
    %v1749 = vadd.f32 %v1724, %v1748
    %1750 = vmatmul.f32.gmra.mxu0 %v1729
    %v1751 = vpop.f32.mrf.mxu0
    %v1752 = vadd.f32 %v1724, %v1751
    %1753 = vdwg.mxu0
    %v1754 = vperm.slane %v1721, 0
    %1755 = vmatpush.msra.mxu0 0.0
    %1756 = vmatpush.msra.mxu0 0.0
    %1757 = vmatpush.msra.mxu0 0.0
    %1758 = vmatpush.msra.mxu0 0.0
    %1759 = vmatpush.msra.mxu0 0.0
    %1760 = vmatpush.msra.mxu0 0.0
    %1761 = vmatpush.msra.mxu0 0.0
    %1762 = vmatpush.msra.mxu0 0.0
    %1763 = vmatpush.msra.mxu0 0.0
    %1764 = vmatpush.msra.mxu0 0.0
    %1765 = vmatpush.msra.mxu0 0.0
    %1766 = vmatpush.msra.mxu0 0.0
    %1767 = vmatpush.msra.mxu0 %v1709
    %1768 = vmatpush.msra.mxu0 %v1708
    %1769 = vmatpush.msra.mxu0 %v1707
    %1770 = vmatpush.msra.mxu0 %v1706
    %1771 = vmatmul.f32.gmra.mxu0 %v1726
    %v1772 = vpop.f32.mrf.mxu0
    %v1773 = vadd.f32 %v1754, %v1772
    %1774 = vmatmul.f32.gmra.mxu0 %v1729
    %v1775 = vpop.f32.mrf.mxu0
    %v1776 = vadd.f32 %v1754, %v1775
    %1777 = vdwg.mxu0
    %v1778 = vperm.slane %v1722, 0
    %1779 = vmatpush.msra.mxu0 0.0
    %1780 = vmatpush.msra.mxu0 0.0
    %1781 = vmatpush.msra.mxu0 0.0
    %1782 = vmatpush.msra.mxu0 0.0
    %1783 = vmatpush.msra.mxu0 0.0
    %1784 = vmatpush.msra.mxu0 0.0
    %1785 = vmatpush.msra.mxu0 0.0
    %1786 = vmatpush.msra.mxu0 0.0
    %1787 = vmatpush.msra.mxu0 0.0
    %1788 = vmatpush.msra.mxu0 0.0
    %1789 = vmatpush.msra.mxu0 0.0
    %1790 = vmatpush.msra.mxu0 0.0
    %1791 = vmatpush.msra.mxu0 %v1713
    %1792 = vmatpush.msra.mxu0 %v1712
    %1793 = vmatpush.msra.mxu0 %v1711
    %1794 = vmatpush.msra.mxu0 %v1710
    %1795 = vmatmul.f32.gmra.mxu0 %v1726
    %v1796 = vpop.f32.mrf.mxu0
    %v1797 = vadd.f32 %v1778, %v1796
    %1798 = vmatmul.f32.gmra.mxu0 %v1729
    %v1799 = vpop.f32.mrf.mxu0
    %v1800 = vadd.f32 %v1778, %v1799
    %1801 = vdwg.mxu0
    %v1802 = vperm.slane %v1723, 0
    %v1803 = vsel %vm68, 0.0, 0
    %1805 = vmatpush.msra.mxu0 0.0
    %1806 = vmatpush.msra.mxu0 0.0
    %1807 = vmatpush.msra.mxu0 0.0
    %1808 = vmatpush.msra.mxu0 0.0
    %1809 = vmatpush.msra.mxu0 0.0
    %1810 = vmatpush.msra.mxu0 0.0
    %1811 = vmatpush.msra.mxu0 0.0
    %1812 = vmatpush.msra.mxu0 0.0
    %1813 = vmatpush.msra.mxu0 0.0
    %1814 = vmatpush.msra.mxu0 0.0
    %1815 = vmatpush.msra.mxu0 0.0
    %1816 = vmatpush.msra.mxu0 0.0
    %1817 = vmatpush.msra.mxu0 0.0
    %1818 = vmatpush.msra.mxu0 0.0
    %1819 = vmatpush.msra.mxu0 %v1715
    %1820 = vmatpush.msra.mxu0 %v1714
    %1821 = vmatmul.f32.gmra.mxu0 %v1803
    %v1822 = vpop.f32.mrf.mxu0
    %v1823 = vadd.f32 0.0, %v1822
    %1824 = vdwg.mxu0
    %1825 = vmatpush.msra.mxu0 0.0
    %1826 = vmatpush.msra.mxu0 0.0
    %1827 = vmatpush.msra.mxu0 0.0
    %1828 = vmatpush.msra.mxu0 0.0
    %1829 = vmatpush.msra.mxu0 0.0
    %1830 = vmatpush.msra.mxu0 0.0
    %1831 = vmatpush.msra.mxu0 0.0
    %1832 = vmatpush.msra.mxu0 0.0
    %1833 = vmatpush.msra.mxu0 0.0
    %1834 = vmatpush.msra.mxu0 0.0
    %1835 = vmatpush.msra.mxu0 0.0
    %1836 = vmatpush.msra.mxu0 0.0
    %1837 = vmatpush.msra.mxu0 0.0
    %1838 = vmatpush.msra.mxu0 0.0
    %1839 = vmatpush.msra.mxu0 %v1717
    %1840 = vmatpush.msra.mxu0 %v1716
    %1841 = vmatmul.f32.gmra.mxu0 %v1803
    %v1842 = vpop.f32.mrf.mxu0
    %v1843 = vadd.f32 0.0, %v1842
    %1844 = vdwg.mxu0
    %v1845 = vadd.f32 %v1749, %v1823
    %v1846 = vmul.f32 %v1845, 0.5
    %v1847 = vtanh.pop %v1846
    %v1848 = vmul.f32 %v1847, 0.5
    %v1849 = vadd.f32 %v1848, 0.5
    %v1850 = vadd.f32 %v1773, %v1843
    %v1851 = vmul.f32 %v1850, 0.5
    %v1852 = vtanh.pop %v1851
    %v1853 = vmul.f32 %v1852, 0.5
    %v1854 = vadd.f32 %v1853, 0.5
    %1855 = vmatpush.msra.mxu0 0.0
    %1856 = vmatpush.msra.mxu0 0.0
    %1857 = vmatpush.msra.mxu0 0.0
    %1858 = vmatpush.msra.mxu0 0.0
    %1859 = vmatpush.msra.mxu0 0.0
    %1860 = vmatpush.msra.mxu0 0.0
    %1861 = vmatpush.msra.mxu0 0.0
    %1862 = vmatpush.msra.mxu0 0.0
    %1863 = vmatpush.msra.mxu0 0.0
    %1864 = vmatpush.msra.mxu0 0.0
    %1865 = vmatpush.msra.mxu0 0.0
    %1866 = vmatpush.msra.mxu0 0.0
    %1867 = vmatpush.msra.mxu0 0.0
    %1868 = vmatpush.msra.mxu0 0.0
    %1869 = vmatpush.msra.mxu0 %v1719
    %1870 = vmatpush.msra.mxu0 %v1718
    %1871 = vmatmul.f32.gmra.mxu0 %v1803
    %v1872 = vpop.f32.mrf.mxu0
    %v1873 = vadd.f32 %v1802, %v1872
    %1874 = vdwg.mxu0
    %v1875 = vmul.f32 %v1849, %v1873
    %v1876 = vadd.f32 %v1797, %v1875
    %v1877 = vtanh.pop %v1876
    %v1878 = vsub.f32 1.0, %v1854
    %v1879 = vmul.f32 %v1878, %v1877
    %v1880 = vmul.f32 %v1854, 0.0
    %v1881 = vadd.f32 %v1879, %v1880
    %vm1882 = vcmask 123904
    %1883 = vst.msk [vmem:[#allocation2] sm:$0x3] %vm1882, %v1881
    %v1885 = vsel %vm68, %v1881, 0
    %1887 = vmatpush.msra.mxu0 0.0
    %1888 = vmatpush.msra.mxu0 0.0
    %1889 = vmatpush.msra.mxu0 0.0
    %1890 = vmatpush.msra.mxu0 0.0
    %1891 = vmatpush.msra.mxu0 0.0
    %1892 = vmatpush.msra.mxu0 0.0
    %1893 = vmatpush.msra.mxu0 0.0
    %1894 = vmatpush.msra.mxu0 0.0
    %1895 = vmatpush.msra.mxu0 0.0
    %1896 = vmatpush.msra.mxu0 0.0
    %1897 = vmatpush.msra.mxu0 0.0
    %1898 = vmatpush.msra.mxu0 0.0
    %1899 = vmatpush.msra.mxu0 0.0
    %1900 = vmatpush.msra.mxu0 0.0
    %1901 = vmatpush.msra.mxu0 %v1715
    %1902 = vmatpush.msra.mxu0 %v1714
    %1903 = vmatmul.f32.gmra.mxu0 %v1885
    %v1904 = vpop.f32.mrf.mxu0
    %v1905 = vadd.f32 0.0, %v1904
    %1906 = vdwg.mxu0
    %1907 = vmatpush.msra.mxu0 0.0
    %1908 = vmatpush.msra.mxu0 0.0
    %1909 = vmatpush.msra.mxu0 0.0
    %1910 = vmatpush.msra.mxu0 0.0
    %1911 = vmatpush.msra.mxu0 0.0
    %1912 = vmatpush.msra.mxu0 0.0
    %1913 = vmatpush.msra.mxu0 0.0
    %1914 = vmatpush.msra.mxu0 0.0
    %1915 = vmatpush.msra.mxu0 0.0
    %1916 = vmatpush.msra.mxu0 0.0
    %1917 = vmatpush.msra.mxu0 0.0
    %1918 = vmatpush.msra.mxu0 0.0
    %1919 = vmatpush.msra.mxu0 0.0
    %1920 = vmatpush.msra.mxu0 0.0
    %1921 = vmatpush.msra.mxu0 %v1717
    %1922 = vmatpush.msra.mxu0 %v1716
    %1923 = vmatmul.f32.gmra.mxu0 %v1885
    %v1924 = vpop.f32.mrf.mxu0
    %v1925 = vadd.f32 0.0, %v1924
    %1926 = vdwg.mxu0
    %v1928 = vrot.slane %v1905, 6
    %v1930 = vadd.f32 %v1749, %v1928
    %v1931 = vmul.f32 %v1930, 0.5
    %v1932 = vtanh.pop %v1931
    %v1933 = vmul.f32 %v1932, 0.5
    %v1934 = vadd.f32 %v1933, 0.5
    %v1936 = vrot.slane %v1925, 6
    %v1938 = vadd.f32 %v1773, %v1936
    %v1939 = vmul.f32 %v1938, 0.5
    %v1940 = vtanh.pop %v1939
    %v1941 = vmul.f32 %v1940, 0.5
    %v1942 = vadd.f32 %v1941, 0.5
    %1943 = vmatpush.msra.mxu0 0.0
    %1944 = vmatpush.msra.mxu0 0.0
    %1945 = vmatpush.msra.mxu0 0.0
    %1946 = vmatpush.msra.mxu0 0.0
    %1947 = vmatpush.msra.mxu0 0.0
    %1948 = vmatpush.msra.mxu0 0.0
    %1949 = vmatpush.msra.mxu0 0.0
    %1950 = vmatpush.msra.mxu0 0.0
    %1951 = vmatpush.msra.mxu0 0.0
    %1952 = vmatpush.msra.mxu0 0.0
    %1953 = vmatpush.msra.mxu0 0.0
    %1954 = vmatpush.msra.mxu0 0.0
    %1955 = vmatpush.msra.mxu0 0.0
    %1956 = vmatpush.msra.mxu0 0.0
    %1957 = vmatpush.msra.mxu0 %v1719
    %1958 = vmatpush.msra.mxu0 %v1718
    %1959 = vmatmul.f32.gmra.mxu0 %v1885
    %v1960 = vpop.f32.mrf.mxu0
    %v1961 = vadd.f32 %v1802, %v1960
    %1962 = vdwg.mxu0
    %v1964 = vrot.slane %v1961, 6
    %v1966 = vmul.f32 %v1934, %v1964
    %v1967 = vadd.f32 %v1797, %v1966
    %v1968 = vtanh.pop %v1967
    %v1969 = vsub.f32 1.0, %v1942
    %v1970 = vmul.f32 %v1969, %v1968
    %v1971 = vrot.slane %v1881, 6
    %v1973 = vmul.f32 %v1942, %v1971
    %v1974 = vadd.f32 %v1970, %v1973
    %vm1975 = vcmask 125954
    %1976 = vst.msk [vmem:[#allocation2] sm:$0xc] %vm1975, %v1974
    %v1978 = vrot.slane %v1974, 2
    %v1979 = vsel %vm68, %v1978, 0
    %1981 = vmatpush.msra.mxu0 0.0
    %1982 = vmatpush.msra.mxu0 0.0
    %1983 = vmatpush.msra.mxu0 0.0
    %1984 = vmatpush.msra.mxu0 0.0
    %1985 = vmatpush.msra.mxu0 0.0
    %1986 = vmatpush.msra.mxu0 0.0
    %1987 = vmatpush.msra.mxu0 0.0
    %1988 = vmatpush.msra.mxu0 0.0
    %1989 = vmatpush.msra.mxu0 0.0
    %1990 = vmatpush.msra.mxu0 0.0
    %1991 = vmatpush.msra.mxu0 0.0
    %1992 = vmatpush.msra.mxu0 0.0
    %1993 = vmatpush.msra.mxu0 0.0
    %1994 = vmatpush.msra.mxu0 0.0
    %1995 = vmatpush.msra.mxu0 %v1715
    %1996 = vmatpush.msra.mxu0 %v1714
    %1997 = vmatmul.f32.gmra.mxu0 %v1979
    %v1998 = vpop.f32.mrf.mxu0
    %v1999 = vadd.f32 0.0, %v1998
    %2000 = vdwg.mxu0
    %2001 = vmatpush.msra.mxu0 0.0
    %2002 = vmatpush.msra.mxu0 0.0
    %2003 = vmatpush.msra.mxu0 0.0
    %2004 = vmatpush.msra.mxu0 0.0
    %2005 = vmatpush.msra.mxu0 0.0
    %2006 = vmatpush.msra.mxu0 0.0
    %2007 = vmatpush.msra.mxu0 0.0
    %2008 = vmatpush.msra.mxu0 0.0
    %2009 = vmatpush.msra.mxu0 0.0
    %2010 = vmatpush.msra.mxu0 0.0
    %2011 = vmatpush.msra.mxu0 0.0
    %2012 = vmatpush.msra.mxu0 0.0
    %2013 = vmatpush.msra.mxu0 0.0
    %2014 = vmatpush.msra.mxu0 0.0
    %2015 = vmatpush.msra.mxu0 %v1717
    %2016 = vmatpush.msra.mxu0 %v1716
    %2017 = vmatmul.f32.gmra.mxu0 %v1979
    %v2018 = vpop.f32.mrf.mxu0
    %v2019 = vadd.f32 0.0, %v2018
    %2020 = vdwg.mxu0
    %v2022 = vrot.slane %v1999, 4
    %v2024 = vadd.f32 %v1749, %v2022
    %v2025 = vmul.f32 %v2024, 0.5
    %v2026 = vtanh.pop %v2025
    %v2027 = vmul.f32 %v2026, 0.5
    %v2028 = vadd.f32 %v2027, 0.5
    %v2030 = vrot.slane %v2019, 4
    %v2032 = vadd.f32 %v1773, %v2030
    %v2033 = vmul.f32 %v2032, 0.5
    %v2034 = vtanh.pop %v2033
    %v2035 = vmul.f32 %v2034, 0.5
    %v2036 = vadd.f32 %v2035, 0.5
    %2037 = vmatpush.msra.mxu0 0.0
    %2038 = vmatpush.msra.mxu0 0.0
    %2039 = vmatpush.msra.mxu0 0.0
    %2040 = vmatpush.msra.mxu0 0.0
    %2041 = vmatpush.msra.mxu0 0.0
    %2042 = vmatpush.msra.mxu0 0.0
    %2043 = vmatpush.msra.mxu0 0.0
    %2044 = vmatpush.msra.mxu0 0.0
    %2045 = vmatpush.msra.mxu0 0.0
    %2046 = vmatpush.msra.mxu0 0.0
    %2047 = vmatpush.msra.mxu0 0.0
    %2048 = vmatpush.msra.mxu0 0.0
    %2049 = vmatpush.msra.mxu0 0.0
    %2050 = vmatpush.msra.mxu0 0.0
    %2051 = vmatpush.msra.mxu0 %v1719
    %2052 = vmatpush.msra.mxu0 %v1718
    %2053 = vmatmul.f32.gmra.mxu0 %v1979
    %v2054 = vpop.f32.mrf.mxu0
    %v2055 = vadd.f32 %v1802, %v2054
    %2056 = vdwg.mxu0
    %v2058 = vrot.slane %v2055, 4
    %v2060 = vmul.f32 %v2028, %v2058
    %v2061 = vadd.f32 %v1797, %v2060
    %v2062 = vtanh.pop %v2061
    %v2063 = vsub.f32 1.0, %v2036
    %v2064 = vmul.f32 %v2063, %v2062
    %v2065 = vrot.slane %v1974, 6
    %v2067 = vmul.f32 %v2036, %v2065
    %v2068 = vadd.f32 %v2064, %v2067
    %vm2069 = vcmask 128004
    %2070 = vst.msk [vmem:[#allocation2] sm:$0x30] %vm2069, %v2068
    %v2072 = vrot.slane %v2068, 4
    %v2073 = vsel %vm68, %v2072, 0
    %2075 = vmatpush.msra.mxu0 0.0
    %2076 = vmatpush.msra.mxu0 0.0
    %2077 = vmatpush.msra.mxu0 0.0
    %2078 = vmatpush.msra.mxu0 0.0
    %2079 = vmatpush.msra.mxu0 0.0
    %2080 = vmatpush.msra.mxu0 0.0
    %2081 = vmatpush.msra.mxu0 0.0
    %2082 = vmatpush.msra.mxu0 0.0
    %2083 = vmatpush.msra.mxu0 0.0
    %2084 = vmatpush.msra.mxu0 0.0
    %2085 = vmatpush.msra.mxu0 0.0
    %2086 = vmatpush.msra.mxu0 0.0
    %2087 = vmatpush.msra.mxu0 0.0
    %2088 = vmatpush.msra.mxu0 0.0
    %2089 = vmatpush.msra.mxu0 %v1715
    %2090 = vmatpush.msra.mxu0 %v1714
    %2091 = vmatmul.f32.gmra.mxu0 %v2073
    %v2092 = vpop.f32.mrf.mxu0
    %v2093 = vadd.f32 0.0, %v2092
    %2094 = vdwg.mxu0
    %2095 = vmatpush.msra.mxu0 0.0
    %2096 = vmatpush.msra.mxu0 0.0
    %2097 = vmatpush.msra.mxu0 0.0
    %2098 = vmatpush.msra.mxu0 0.0
    %2099 = vmatpush.msra.mxu0 0.0
    %2100 = vmatpush.msra.mxu0 0.0
    %2101 = vmatpush.msra.mxu0 0.0
    %2102 = vmatpush.msra.mxu0 0.0
    %2103 = vmatpush.msra.mxu0 0.0
    %2104 = vmatpush.msra.mxu0 0.0
    %2105 = vmatpush.msra.mxu0 0.0
    %2106 = vmatpush.msra.mxu0 0.0
    %2107 = vmatpush.msra.mxu0 0.0
    %2108 = vmatpush.msra.mxu0 0.0
    %2109 = vmatpush.msra.mxu0 %v1717
    %2110 = vmatpush.msra.mxu0 %v1716
    %2111 = vmatmul.f32.gmra.mxu0 %v2073
    %v2112 = vpop.f32.mrf.mxu0
    %v2113 = vadd.f32 0.0, %v2112
    %2114 = vdwg.mxu0
    %v2116 = vrot.slane %v2093, 2
    %v2118 = vadd.f32 %v1749, %v2116
    %v2119 = vmul.f32 %v2118, 0.5
    %v2120 = vtanh.pop %v2119
    %v2121 = vmul.f32 %v2120, 0.5
    %v2122 = vadd.f32 %v2121, 0.5
    %v2124 = vrot.slane %v2113, 2
    %v2126 = vadd.f32 %v1773, %v2124
    %v2127 = vmul.f32 %v2126, 0.5
    %v2128 = vtanh.pop %v2127
    %v2129 = vmul.f32 %v2128, 0.5
    %v2130 = vadd.f32 %v2129, 0.5
    %2131 = vmatpush.msra.mxu0 0.0
    %2132 = vmatpush.msra.mxu0 0.0
    %2133 = vmatpush.msra.mxu0 0.0
    %2134 = vmatpush.msra.mxu0 0.0
    %2135 = vmatpush.msra.mxu0 0.0
    %2136 = vmatpush.msra.mxu0 0.0
    %2137 = vmatpush.msra.mxu0 0.0
    %2138 = vmatpush.msra.mxu0 0.0
    %2139 = vmatpush.msra.mxu0 0.0
    %2140 = vmatpush.msra.mxu0 0.0
    %2141 = vmatpush.msra.mxu0 0.0
    %2142 = vmatpush.msra.mxu0 0.0
    %2143 = vmatpush.msra.mxu0 0.0
    %2144 = vmatpush.msra.mxu0 0.0
    %2145 = vmatpush.msra.mxu0 %v1719
    %2146 = vmatpush.msra.mxu0 %v1718
    %2147 = vmatmul.f32.gmra.mxu0 %v2073
    %v2148 = vpop.f32.mrf.mxu0
    %v2149 = vadd.f32 %v1802, %v2148
    %2150 = vdwg.mxu0
    %v2152 = vrot.slane %v2149, 2
    %v2154 = vmul.f32 %v2122, %v2152
    %v2155 = vadd.f32 %v1797, %v2154
    %v2156 = vtanh.pop %v2155
    %v2157 = vsub.f32 1.0, %v2130
    %v2158 = vmul.f32 %v2157, %v2156
    %v2159 = vrot.slane %v2068, 6
    %v2161 = vmul.f32 %v2130, %v2159
    %v2162 = vadd.f32 %v2158, %v2161
    %vm2163 = vcmask 130054
    %2164 = vst.msk [vmem:[#allocation2] sm:$0xc0] %vm2163, %v2162
    %v2166 = vrot.slane %v2162, 6
    %v2167 = vsel %vm68, %v2166, 0
    %2169 = vmatpush.msra.mxu0 0.0
    %2170 = vmatpush.msra.mxu0 0.0
    %2171 = vmatpush.msra.mxu0 0.0
    %2172 = vmatpush.msra.mxu0 0.0
    %2173 = vmatpush.msra.mxu0 0.0
    %2174 = vmatpush.msra.mxu0 0.0
    %2175 = vmatpush.msra.mxu0 0.0
    %2176 = vmatpush.msra.mxu0 0.0
    %2177 = vmatpush.msra.mxu0 0.0
    %2178 = vmatpush.msra.mxu0 0.0
    %2179 = vmatpush.msra.mxu0 0.0
    %2180 = vmatpush.msra.mxu0 0.0
    %2181 = vmatpush.msra.mxu0 0.0
    %2182 = vmatpush.msra.mxu0 0.0
    %2183 = vmatpush.msra.mxu0 %v1715
    %2184 = vmatpush.msra.mxu0 %v1714
    %2185 = vmatmul.f32.gmra.mxu0 %v2167
    %v2186 = vpop.f32.mrf.mxu0
    %v2187 = vadd.f32 0.0, %v2186
    %2188 = vdwg.mxu0
    %2189 = vmatpush.msra.mxu0 0.0
    %2190 = vmatpush.msra.mxu0 0.0
    %2191 = vmatpush.msra.mxu0 0.0
    %2192 = vmatpush.msra.mxu0 0.0
    %2193 = vmatpush.msra.mxu0 0.0
    %2194 = vmatpush.msra.mxu0 0.0
    %2195 = vmatpush.msra.mxu0 0.0
    %2196 = vmatpush.msra.mxu0 0.0
    %2197 = vmatpush.msra.mxu0 0.0
    %2198 = vmatpush.msra.mxu0 0.0
    %2199 = vmatpush.msra.mxu0 0.0
    %2200 = vmatpush.msra.mxu0 0.0
    %2201 = vmatpush.msra.mxu0 0.0
    %2202 = vmatpush.msra.mxu0 0.0
    %2203 = vmatpush.msra.mxu0 %v1717
    %2204 = vmatpush.msra.mxu0 %v1716
    %2205 = vmatmul.f32.gmra.mxu0 %v2167
    %v2206 = vpop.f32.mrf.mxu0
    %v2207 = vadd.f32 0.0, %v2206
    %2208 = vdwg.mxu0
    %v2209 = vadd.f32 %v1752, %v2187
    %v2210 = vmul.f32 %v2209, 0.5
    %v2211 = vtanh.pop %v2210
    %v2212 = vmul.f32 %v2211, 0.5
    %v2213 = vadd.f32 %v2212, 0.5
    %v2214 = vadd.f32 %v1776, %v2207
    %v2215 = vmul.f32 %v2214, 0.5
    %v2216 = vtanh.pop %v2215
    %v2217 = vmul.f32 %v2216, 0.5
    %v2218 = vadd.f32 %v2217, 0.5
    %2219 = vmatpush.msra.mxu0 0.0
    %2220 = vmatpush.msra.mxu0 0.0
    %2221 = vmatpush.msra.mxu0 0.0
    %2222 = vmatpush.msra.mxu0 0.0
    %2223 = vmatpush.msra.mxu0 0.0
    %2224 = vmatpush.msra.mxu0 0.0
    %2225 = vmatpush.msra.mxu0 0.0
    %2226 = vmatpush.msra.mxu0 0.0
    %2227 = vmatpush.msra.mxu0 0.0
    %2228 = vmatpush.msra.mxu0 0.0
    %2229 = vmatpush.msra.mxu0 0.0
    %2230 = vmatpush.msra.mxu0 0.0
    %2231 = vmatpush.msra.mxu0 0.0
    %2232 = vmatpush.msra.mxu0 0.0
    %2233 = vmatpush.msra.mxu0 %v1719
    %2234 = vmatpush.msra.mxu0 %v1718
    %2235 = vmatmul.f32.gmra.mxu0 %v2167
    %v2236 = vpop.f32.mrf.mxu0
    %v2237 = vadd.f32 %v1802, %v2236
    %2238 = vdwg.mxu0
    %v2239 = vmul.f32 %v2213, %v2237
    %v2240 = vadd.f32 %v1800, %v2239
    %v2241 = vtanh.pop %v2240
    %v2242 = vsub.f32 1.0, %v2218
    %v2243 = vmul.f32 %v2242, %v2241
    %v2245 = vmul.f32 %v2218, %v2166
    %v2246 = vadd.f32 %v2243, %v2245
    %2247 = vst.msk [vmem:[#allocation2 + $0x8] sm:$0x3] %vm1882, %v2246
    %v2249 = vsel %vm68, %v2246, 0
    %2251 = vmatpush.msra.mxu0 0.0
    %2252 = vmatpush.msra.mxu0 0.0
    %2253 = vmatpush.msra.mxu0 0.0
    %2254 = vmatpush.msra.mxu0 0.0
    %2255 = vmatpush.msra.mxu0 0.0
    %2256 = vmatpush.msra.mxu0 0.0
    %2257 = vmatpush.msra.mxu0 0.0
    %2258 = vmatpush.msra.mxu0 0.0
    %2259 = vmatpush.msra.mxu0 0.0
    %2260 = vmatpush.msra.mxu0 0.0
    %2261 = vmatpush.msra.mxu0 0.0
    %2262 = vmatpush.msra.mxu0 0.0
    %2263 = vmatpush.msra.mxu0 0.0
    %2264 = vmatpush.msra.mxu0 0.0
    %2265 = vmatpush.msra.mxu0 %v1715
    %2266 = vmatpush.msra.mxu0 %v1714
    %2267 = vmatmul.f32.gmra.mxu0 %v2249
    %v2268 = vpop.f32.mrf.mxu0
    %v2269 = vadd.f32 0.0, %v2268
    %2270 = vdwg.mxu0
    %2271 = vmatpush.msra.mxu0 0.0
    %2272 = vmatpush.msra.mxu0 0.0
    %2273 = vmatpush.msra.mxu0 0.0
    %2274 = vmatpush.msra.mxu0 0.0
    %2275 = vmatpush.msra.mxu0 0.0
    %2276 = vmatpush.msra.mxu0 0.0
    %2277 = vmatpush.msra.mxu0 0.0
    %2278 = vmatpush.msra.mxu0 0.0
    %2279 = vmatpush.msra.mxu0 0.0
    %2280 = vmatpush.msra.mxu0 0.0
    %2281 = vmatpush.msra.mxu0 0.0
    %2282 = vmatpush.msra.mxu0 0.0
    %2283 = vmatpush.msra.mxu0 0.0
    %2284 = vmatpush.msra.mxu0 0.0
    %2285 = vmatpush.msra.mxu0 %v1717
    %2286 = vmatpush.msra.mxu0 %v1716
    %2287 = vmatmul.f32.gmra.mxu0 %v2249
    %v2288 = vpop.f32.mrf.mxu0
    %v2289 = vadd.f32 0.0, %v2288
    %2290 = vdwg.mxu0
    %v2292 = vrot.slane %v2269, 6
    %v2294 = vadd.f32 %v1752, %v2292
    %v2295 = vmul.f32 %v2294, 0.5
    %v2296 = vtanh.pop %v2295
    %v2297 = vmul.f32 %v2296, 0.5
    %v2298 = vadd.f32 %v2297, 0.5
    %v2300 = vrot.slane %v2289, 6
    %v2302 = vadd.f32 %v1776, %v2300
    %v2303 = vmul.f32 %v2302, 0.5
    %v2304 = vtanh.pop %v2303
    %v2305 = vmul.f32 %v2304, 0.5
    %v2306 = vadd.f32 %v2305, 0.5
    %2307 = vmatpush.msra.mxu0 0.0
    %2308 = vmatpush.msra.mxu0 0.0
    %2309 = vmatpush.msra.mxu0 0.0
    %2310 = vmatpush.msra.mxu0 0.0
    %2311 = vmatpush.msra.mxu0 0.0
    %2312 = vmatpush.msra.mxu0 0.0
    %2313 = vmatpush.msra.mxu0 0.0
    %2314 = vmatpush.msra.mxu0 0.0
    %2315 = vmatpush.msra.mxu0 0.0
    %2316 = vmatpush.msra.mxu0 0.0
    %2317 = vmatpush.msra.mxu0 0.0
    %2318 = vmatpush.msra.mxu0 0.0
    %2319 = vmatpush.msra.mxu0 0.0
    %2320 = vmatpush.msra.mxu0 0.0
    %2321 = vmatpush.msra.mxu0 %v1719
    %2322 = vmatpush.msra.mxu0 %v1718
    %2323 = vmatmul.f32.gmra.mxu0 %v2249
    %v2324 = vpop.f32.mrf.mxu0
    %v2325 = vadd.f32 %v1802, %v2324
    %2326 = vdwg.mxu0
    %v2328 = vrot.slane %v2325, 6
    %v2330 = vmul.f32 %v2298, %v2328
    %v2331 = vadd.f32 %v1800, %v2330
    %v2332 = vtanh.pop %v2331
    %v2333 = vsub.f32 1.0, %v2306
    %v2334 = vmul.f32 %v2333, %v2332
    %v2335 = vrot.slane %v2246, 6
    %v2337 = vmul.f32 %v2306, %v2335
    %v2338 = vadd.f32 %v2334, %v2337
    %2339 = vst.msk [vmem:[#allocation2 + $0x8] sm:$0xc] %vm1975, %v2338
    %v2341 = vrot.slane %v2338, 2
    %v2342 = vsel %vm68, %v2341, 0
    %2344 = vmatpush.msra.mxu0 0.0
    %2345 = vmatpush.msra.mxu0 0.0
    %2346 = vmatpush.msra.mxu0 0.0
    %2347 = vmatpush.msra.mxu0 0.0
    %2348 = vmatpush.msra.mxu0 0.0
    %2349 = vmatpush.msra.mxu0 0.0
    %2350 = vmatpush.msra.mxu0 0.0
    %2351 = vmatpush.msra.mxu0 0.0
    %2352 = vmatpush.msra.mxu0 0.0
    %2353 = vmatpush.msra.mxu0 0.0
    %2354 = vmatpush.msra.mxu0 0.0
    %2355 = vmatpush.msra.mxu0 0.0
    %2356 = vmatpush.msra.mxu0 0.0
    %2357 = vmatpush.msra.mxu0 0.0
    %2358 = vmatpush.msra.mxu0 %v1715
    %2359 = vmatpush.msra.mxu0 %v1714
    %2360 = vmatmul.f32.gmra.mxu0 %v2342
    %v2361 = vpop.f32.mrf.mxu0
    %v2362 = vadd.f32 0.0, %v2361
    %2363 = vdwg.mxu0
    %2364 = vmatpush.msra.mxu0 0.0
    %2365 = vmatpush.msra.mxu0 0.0
    %2366 = vmatpush.msra.mxu0 0.0
    %2367 = vmatpush.msra.mxu0 0.0
    %2368 = vmatpush.msra.mxu0 0.0
    %2369 = vmatpush.msra.mxu0 0.0
    %2370 = vmatpush.msra.mxu0 0.0
    %2371 = vmatpush.msra.mxu0 0.0
    %2372 = vmatpush.msra.mxu0 0.0
    %2373 = vmatpush.msra.mxu0 0.0
    %2374 = vmatpush.msra.mxu0 0.0
    %2375 = vmatpush.msra.mxu0 0.0
    %2376 = vmatpush.msra.mxu0 0.0
    %2377 = vmatpush.msra.mxu0 0.0
    %2378 = vmatpush.msra.mxu0 %v1717
    %2379 = vmatpush.msra.mxu0 %v1716
    %2380 = vmatmul.f32.gmra.mxu0 %v2342
    %v2381 = vpop.f32.mrf.mxu0
    %v2382 = vadd.f32 0.0, %v2381
    %2383 = vdwg.mxu0
    %v2385 = vrot.slane %v2362, 4
    %v2387 = vadd.f32 %v1752, %v2385
    %v2388 = vmul.f32 %v2387, 0.5
    %v2389 = vtanh.pop %v2388
    %v2390 = vmul.f32 %v2389, 0.5
    %v2391 = vadd.f32 %v2390, 0.5
    %v2393 = vrot.slane %v2382, 4
    %v2395 = vadd.f32 %v1776, %v2393
    %v2396 = vmul.f32 %v2395, 0.5
    %v2397 = vtanh.pop %v2396
    %v2398 = vmul.f32 %v2397, 0.5
    %v2399 = vadd.f32 %v2398, 0.5
    %2400 = vmatpush.msra.mxu0 0.0
    %2401 = vmatpush.msra.mxu0 0.0
    %2402 = vmatpush.msra.mxu0 0.0
    %2403 = vmatpush.msra.mxu0 0.0
    %2404 = vmatpush.msra.mxu0 0.0
    %2405 = vmatpush.msra.mxu0 0.0
    %2406 = vmatpush.msra.mxu0 0.0
    %2407 = vmatpush.msra.mxu0 0.0
    %2408 = vmatpush.msra.mxu0 0.0
    %2409 = vmatpush.msra.mxu0 0.0
    %2410 = vmatpush.msra.mxu0 0.0
    %2411 = vmatpush.msra.mxu0 0.0
    %2412 = vmatpush.msra.mxu0 0.0
    %2413 = vmatpush.msra.mxu0 0.0
    %2414 = vmatpush.msra.mxu0 %v1719
    %2415 = vmatpush.msra.mxu0 %v1718
    %2416 = vmatmul.f32.gmra.mxu0 %v2342
    %v2417 = vpop.f32.mrf.mxu0
    %v2418 = vadd.f32 %v1802, %v2417
    %2419 = vdwg.mxu0
    %v2421 = vrot.slane %v2418, 4
    %v2423 = vmul.f32 %v2391, %v2421
    %v2424 = vadd.f32 %v1800, %v2423
    %v2425 = vtanh.pop %v2424
    %v2426 = vsub.f32 1.0, %v2399
    %v2427 = vmul.f32 %v2426, %v2425
    %v2428 = vrot.slane %v2338, 6
    %v2430 = vmul.f32 %v2399, %v2428
    %v2431 = vadd.f32 %v2427, %v2430
    %2432 = vst.msk [vmem:[#allocation2 + $0x8] sm:$0x30] %vm2069, %v2431
    %v2434 = vrot.slane %v2431, 4
    %v2435 = vsel %vm68, %v2434, 0
    %2437 = vmatpush.msra.mxu0 0.0
    %2438 = vmatpush.msra.mxu0 0.0
    %2439 = vmatpush.msra.mxu0 0.0
    %2440 = vmatpush.msra.mxu0 0.0
    %2441 = vmatpush.msra.mxu0 0.0
    %2442 = vmatpush.msra.mxu0 0.0
    %2443 = vmatpush.msra.mxu0 0.0
    %2444 = vmatpush.msra.mxu0 0.0
    %2445 = vmatpush.msra.mxu0 0.0
    %2446 = vmatpush.msra.mxu0 0.0
    %2447 = vmatpush.msra.mxu0 0.0
    %2448 = vmatpush.msra.mxu0 0.0
    %2449 = vmatpush.msra.mxu0 0.0
    %2450 = vmatpush.msra.mxu0 0.0
    %2451 = vmatpush.msra.mxu0 %v1715
    %2452 = vmatpush.msra.mxu0 %v1714
    %2453 = vmatmul.f32.gmra.mxu0 %v2435
    %v2454 = vpop.f32.mrf.mxu0
    %v2455 = vadd.f32 0.0, %v2454
    %2456 = vdwg.mxu0
    %2457 = vmatpush.msra.mxu0 0.0
    %2458 = vmatpush.msra.mxu0 0.0
    %2459 = vmatpush.msra.mxu0 0.0
    %2460 = vmatpush.msra.mxu0 0.0
    %2461 = vmatpush.msra.mxu0 0.0
    %2462 = vmatpush.msra.mxu0 0.0
    %2463 = vmatpush.msra.mxu0 0.0
    %2464 = vmatpush.msra.mxu0 0.0
    %2465 = vmatpush.msra.mxu0 0.0
    %2466 = vmatpush.msra.mxu0 0.0
    %2467 = vmatpush.msra.mxu0 0.0
    %2468 = vmatpush.msra.mxu0 0.0
    %2469 = vmatpush.msra.mxu0 0.0
    %2470 = vmatpush.msra.mxu0 0.0
    %2471 = vmatpush.msra.mxu0 %v1717
    %2472 = vmatpush.msra.mxu0 %v1716
    %2473 = vmatmul.f32.gmra.mxu0 %v2435
    %v2474 = vpop.f32.mrf.mxu0
    %v2475 = vadd.f32 0.0, %v2474
    %2476 = vdwg.mxu0
    %v2478 = vrot.slane %v2455, 2
    %v2480 = vadd.f32 %v1752, %v2478
    %v2481 = vmul.f32 %v2480, 0.5
    %v2482 = vtanh.pop %v2481
    %v2483 = vmul.f32 %v2482, 0.5
    %v2484 = vadd.f32 %v2483, 0.5
    %v2486 = vrot.slane %v2475, 2
    %v2488 = vadd.f32 %v1776, %v2486
    %v2489 = vmul.f32 %v2488, 0.5
    %v2490 = vtanh.pop %v2489
    %v2491 = vmul.f32 %v2490, 0.5
    %v2492 = vadd.f32 %v2491, 0.5
    %2493 = vmatpush.msra.mxu0 0.0
    %2494 = vmatpush.msra.mxu0 0.0
    %2495 = vmatpush.msra.mxu0 0.0
    %2496 = vmatpush.msra.mxu0 0.0
    %2497 = vmatpush.msra.mxu0 0.0
    %2498 = vmatpush.msra.mxu0 0.0
    %2499 = vmatpush.msra.mxu0 0.0
    %2500 = vmatpush.msra.mxu0 0.0
    %2501 = vmatpush.msra.mxu0 0.0
    %2502 = vmatpush.msra.mxu0 0.0
    %2503 = vmatpush.msra.mxu0 0.0
    %2504 = vmatpush.msra.mxu0 0.0
    %2505 = vmatpush.msra.mxu0 0.0
    %2506 = vmatpush.msra.mxu0 0.0
    %2507 = vmatpush.msra.mxu0 %v1719
    %2508 = vmatpush.msra.mxu0 %v1718
    %2509 = vmatmul.f32.gmra.mxu0 %v2435
    %v2510 = vpop.f32.mrf.mxu0
    %v2511 = vadd.f32 %v1802, %v2510
    %2512 = vdwg.mxu0
    %v2514 = vrot.slane %v2511, 2
    %v2516 = vmul.f32 %v2484, %v2514
    %v2517 = vadd.f32 %v1800, %v2516
    %v2518 = vtanh.pop %v2517
    %v2519 = vsub.f32 1.0, %v2492
    %v2520 = vmul.f32 %v2519, %v2518
    %v2521 = vrot.slane %v2431, 6
    %v2523 = vmul.f32 %v2492, %v2521
    %v2524 = vadd.f32 %v2520, %v2523
    %2525 = vst.msk [vmem:[#allocation2 + $0x8] sm:$0xc0] %vm2163, %v2524
    %v2526 = vld [vmem:[#allocation2] sm:$0xff]
    %v2527 = vld [vmem:[#allocation2 + $0x8] sm:$0xff]
    %v2528 = vld [vmem:[#allocation5 + $0x1f8] sm:$0xff]
    %v2529 = vld [vmem:[#allocation5 + $0x200] sm:$0xff]
    %v2530 = vld [vmem:[#allocation5 + $0x208] sm:$0xff]
    %v2531 = vld [vmem:[#allocation5 + $0x210] sm:$0xff]
    %v2532 = vld [vmem:[#allocation5 + $0x218] sm:$0xff]
    %v2533 = vld [vmem:[#allocation5 + $0x220] sm:$0xff]
    %v2534 = vld [vmem:[#allocation5 + $0x228] sm:$0xff]
    %v2535 = vld [vmem:[#allocation5 + $0x230] sm:$0xff]
    %v2536 = vld [vmem:[#allocation5 + $0x238] sm:$0xff]
    %v2537 = vld [vmem:[#allocation5 + $0x240] sm:$0xff]
    %v2538 = vld [vmem:[#allocation5 + $0x248] sm:$0xff]
    %v2539 = vld [vmem:[#allocation5 + $0x250] sm:$0xff]
    %v2540 = vld [vmem:[#allocation5 + $0x258] sm:$0x1]
    %v2541 = vld [vmem:[#allocation5 + $0x259] sm:$0x1]
    %v2542 = vld [vmem:[#allocation5 + $0x25a] sm:$0x1]
    %v2543 = vld [vmem:[#allocation5 + $0x25b] sm:$0x1]
    %v2544 = vperm.slane %v2540, 0
    %v2546 = vsel %vm68, %v2526, 0
    %v2549 = vsel %vm68, %v2527, 0
    %2551 = vmatpush.msra.mxu0 0.0
    %2552 = vmatpush.msra.mxu0 0.0
    %2553 = vmatpush.msra.mxu0 0.0
    %2554 = vmatpush.msra.mxu0 0.0
    %2555 = vmatpush.msra.mxu0 0.0
    %2556 = vmatpush.msra.mxu0 0.0
    %2557 = vmatpush.msra.mxu0 0.0
    %2558 = vmatpush.msra.mxu0 0.0
    %2559 = vmatpush.msra.mxu0 0.0
    %2560 = vmatpush.msra.mxu0 0.0
    %2561 = vmatpush.msra.mxu0 0.0
    %2562 = vmatpush.msra.mxu0 0.0
    %2563 = vmatpush.msra.mxu0 0.0
    %2564 = vmatpush.msra.mxu0 0.0
    %2565 = vmatpush.msra.mxu0 %v2529
    %2566 = vmatpush.msra.mxu0 %v2528
    %2567 = vmatmul.f32.gmra.mxu0 %v2546
    %v2568 = vpop.f32.mrf.mxu0
    %v2569 = vadd.f32 %v2544, %v2568
    %2570 = vmatmul.f32.gmra.mxu0 %v2549
    %v2571 = vpop.f32.mrf.mxu0
    %v2572 = vadd.f32 %v2544, %v2571
    %2573 = vdwg.mxu0
    %v2574 = vperm.slane %v2541, 0
    %2575 = vmatpush.msra.mxu0 0.0
    %2576 = vmatpush.msra.mxu0 0.0
    %2577 = vmatpush.msra.mxu0 0.0
    %2578 = vmatpush.msra.mxu0 0.0
    %2579 = vmatpush.msra.mxu0 0.0
    %2580 = vmatpush.msra.mxu0 0.0
    %2581 = vmatpush.msra.mxu0 0.0
    %2582 = vmatpush.msra.mxu0 0.0
    %2583 = vmatpush.msra.mxu0 0.0
    %2584 = vmatpush.msra.mxu0 0.0
    %2585 = vmatpush.msra.mxu0 0.0
    %2586 = vmatpush.msra.mxu0 0.0
    %2587 = vmatpush.msra.mxu0 0.0
    %2588 = vmatpush.msra.mxu0 0.0
    %2589 = vmatpush.msra.mxu0 %v2531
    %2590 = vmatpush.msra.mxu0 %v2530
    %2591 = vmatmul.f32.gmra.mxu0 %v2546
    %v2592 = vpop.f32.mrf.mxu0
    %v2593 = vadd.f32 %v2574, %v2592
    %2594 = vmatmul.f32.gmra.mxu0 %v2549
    %v2595 = vpop.f32.mrf.mxu0
    %v2596 = vadd.f32 %v2574, %v2595
    %2597 = vdwg.mxu0
    %v2598 = vperm.slane %v2542, 0
    %2599 = vmatpush.msra.mxu0 0.0
    %2600 = vmatpush.msra.mxu0 0.0
    %2601 = vmatpush.msra.mxu0 0.0
    %2602 = vmatpush.msra.mxu0 0.0
    %2603 = vmatpush.msra.mxu0 0.0
    %2604 = vmatpush.msra.mxu0 0.0
    %2605 = vmatpush.msra.mxu0 0.0
    %2606 = vmatpush.msra.mxu0 0.0
    %2607 = vmatpush.msra.mxu0 0.0
    %2608 = vmatpush.msra.mxu0 0.0
    %2609 = vmatpush.msra.mxu0 0.0
    %2610 = vmatpush.msra.mxu0 0.0
    %2611 = vmatpush.msra.mxu0 0.0
    %2612 = vmatpush.msra.mxu0 0.0
    %2613 = vmatpush.msra.mxu0 %v2533
    %2614 = vmatpush.msra.mxu0 %v2532
    %2615 = vmatmul.f32.gmra.mxu0 %v2546
    %v2616 = vpop.f32.mrf.mxu0
    %v2617 = vadd.f32 %v2598, %v2616
    %2618 = vmatmul.f32.gmra.mxu0 %v2549
    %v2619 = vpop.f32.mrf.mxu0
    %v2620 = vadd.f32 %v2598, %v2619
    %2621 = vdwg.mxu0
    %v2622 = vperm.slane %v2543, 0
    %2623 = vmatpush.msra.mxu0 0.0
    %2624 = vmatpush.msra.mxu0 0.0
    %2625 = vmatpush.msra.mxu0 0.0
    %2626 = vmatpush.msra.mxu0 0.0
    %2627 = vmatpush.msra.mxu0 0.0
    %2628 = vmatpush.msra.mxu0 0.0
    %2629 = vmatpush.msra.mxu0 0.0
    %2630 = vmatpush.msra.mxu0 0.0
    %2631 = vmatpush.msra.mxu0 0.0
    %2632 = vmatpush.msra.mxu0 0.0
    %2633 = vmatpush.msra.mxu0 0.0
    %2634 = vmatpush.msra.mxu0 0.0
    %2635 = vmatpush.msra.mxu0 0.0
    %2636 = vmatpush.msra.mxu0 0.0
    %2637 = vmatpush.msra.mxu0 %v2535
    %2638 = vmatpush.msra.mxu0 %v2534
    %2639 = vmatmul.f32.gmra.mxu0 %v1803
    %v2640 = vpop.f32.mrf.mxu0
    %v2641 = vadd.f32 0.0, %v2640
    %2642 = vdwg.mxu0
    %2643 = vmatpush.msra.mxu0 0.0
    %2644 = vmatpush.msra.mxu0 0.0
    %2645 = vmatpush.msra.mxu0 0.0
    %2646 = vmatpush.msra.mxu0 0.0
    %2647 = vmatpush.msra.mxu0 0.0
    %2648 = vmatpush.msra.mxu0 0.0
    %2649 = vmatpush.msra.mxu0 0.0
    %2650 = vmatpush.msra.mxu0 0.0
    %2651 = vmatpush.msra.mxu0 0.0
    %2652 = vmatpush.msra.mxu0 0.0
    %2653 = vmatpush.msra.mxu0 0.0
    %2654 = vmatpush.msra.mxu0 0.0
    %2655 = vmatpush.msra.mxu0 0.0
    %2656 = vmatpush.msra.mxu0 0.0
    %2657 = vmatpush.msra.mxu0 %v2537
    %2658 = vmatpush.msra.mxu0 %v2536
    %2659 = vmatmul.f32.gmra.mxu0 %v1803
    %v2660 = vpop.f32.mrf.mxu0
    %v2661 = vadd.f32 0.0, %v2660
    %2662 = vdwg.mxu0
    %v2663 = vadd.f32 %v2569, %v2641
    %v2664 = vmul.f32 %v2663, 0.5
    %v2665 = vtanh.pop %v2664
    %v2666 = vmul.f32 %v2665, 0.5
    %v2667 = vadd.f32 %v2666, 0.5
    %v2668 = vadd.f32 %v2593, %v2661
    %v2669 = vmul.f32 %v2668, 0.5
    %v2670 = vtanh.pop %v2669
    %v2671 = vmul.f32 %v2670, 0.5
    %v2672 = vadd.f32 %v2671, 0.5
    %2673 = vmatpush.msra.mxu0 0.0
    %2674 = vmatpush.msra.mxu0 0.0
    %2675 = vmatpush.msra.mxu0 0.0
    %2676 = vmatpush.msra.mxu0 0.0
    %2677 = vmatpush.msra.mxu0 0.0
    %2678 = vmatpush.msra.mxu0 0.0
    %2679 = vmatpush.msra.mxu0 0.0
    %2680 = vmatpush.msra.mxu0 0.0
    %2681 = vmatpush.msra.mxu0 0.0
    %2682 = vmatpush.msra.mxu0 0.0
    %2683 = vmatpush.msra.mxu0 0.0
    %2684 = vmatpush.msra.mxu0 0.0
    %2685 = vmatpush.msra.mxu0 0.0
    %2686 = vmatpush.msra.mxu0 0.0
    %2687 = vmatpush.msra.mxu0 %v2539
    %2688 = vmatpush.msra.mxu0 %v2538
    %2689 = vmatmul.f32.gmra.mxu0 %v1803
    %v2690 = vpop.f32.mrf.mxu0
    %v2691 = vadd.f32 %v2622, %v2690
    %2692 = vdwg.mxu0
    %v2693 = vmul.f32 %v2667, %v2691
    %v2694 = vadd.f32 %v2617, %v2693
    %v2695 = vtanh.pop %v2694
    %v2696 = vsub.f32 1.0, %v2672
    %v2697 = vmul.f32 %v2696, %v2695
    %v2698 = vmul.f32 %v2672, 0.0
    %v2699 = vadd.f32 %v2697, %v2698
    %2700 = vst.msk [vmem:[#allocation2] sm:$0x3] %vm1882, %v2699
    %v2702 = vsel %vm68, %v2699, 0
    %2704 = vmatpush.msra.mxu0 0.0
    %2705 = vmatpush.msra.mxu0 0.0
    %2706 = vmatpush.msra.mxu0 0.0
    %2707 = vmatpush.msra.mxu0 0.0
    %2708 = vmatpush.msra.mxu0 0.0
    %2709 = vmatpush.msra.mxu0 0.0
    %2710 = vmatpush.msra.mxu0 0.0
    %2711 = vmatpush.msra.mxu0 0.0
    %2712 = vmatpush.msra.mxu0 0.0
    %2713 = vmatpush.msra.mxu0 0.0
    %2714 = vmatpush.msra.mxu0 0.0
    %2715 = vmatpush.msra.mxu0 0.0
    %2716 = vmatpush.msra.mxu0 0.0
    %2717 = vmatpush.msra.mxu0 0.0
    %2718 = vmatpush.msra.mxu0 %v2535
    %2719 = vmatpush.msra.mxu0 %v2534
    %2720 = vmatmul.f32.gmra.mxu0 %v2702
    %v2721 = vpop.f32.mrf.mxu0
    %v2722 = vadd.f32 0.0, %v2721
    %2723 = vdwg.mxu0
    %2724 = vmatpush.msra.mxu0 0.0
    %2725 = vmatpush.msra.mxu0 0.0
    %2726 = vmatpush.msra.mxu0 0.0
    %2727 = vmatpush.msra.mxu0 0.0
    %2728 = vmatpush.msra.mxu0 0.0
    %2729 = vmatpush.msra.mxu0 0.0
    %2730 = vmatpush.msra.mxu0 0.0
    %2731 = vmatpush.msra.mxu0 0.0
    %2732 = vmatpush.msra.mxu0 0.0
    %2733 = vmatpush.msra.mxu0 0.0
    %2734 = vmatpush.msra.mxu0 0.0
    %2735 = vmatpush.msra.mxu0 0.0
    %2736 = vmatpush.msra.mxu0 0.0
    %2737 = vmatpush.msra.mxu0 0.0
    %2738 = vmatpush.msra.mxu0 %v2537
    %2739 = vmatpush.msra.mxu0 %v2536
    %2740 = vmatmul.f32.gmra.mxu0 %v2702
    %v2741 = vpop.f32.mrf.mxu0
    %v2742 = vadd.f32 0.0, %v2741
    %2743 = vdwg.mxu0
    %v2745 = vrot.slane %v2722, 6
    %v2747 = vadd.f32 %v2569, %v2745
    %v2748 = vmul.f32 %v2747, 0.5
    %v2749 = vtanh.pop %v2748
    %v2750 = vmul.f32 %v2749, 0.5
    %v2751 = vadd.f32 %v2750, 0.5
    %v2753 = vrot.slane %v2742, 6
    %v2755 = vadd.f32 %v2593, %v2753
    %v2756 = vmul.f32 %v2755, 0.5
    %v2757 = vtanh.pop %v2756
    %v2758 = vmul.f32 %v2757, 0.5
    %v2759 = vadd.f32 %v2758, 0.5
    %2760 = vmatpush.msra.mxu0 0.0
    %2761 = vmatpush.msra.mxu0 0.0
    %2762 = vmatpush.msra.mxu0 0.0
    %2763 = vmatpush.msra.mxu0 0.0
    %2764 = vmatpush.msra.mxu0 0.0
    %2765 = vmatpush.msra.mxu0 0.0
    %2766 = vmatpush.msra.mxu0 0.0
    %2767 = vmatpush.msra.mxu0 0.0
    %2768 = vmatpush.msra.mxu0 0.0
    %2769 = vmatpush.msra.mxu0 0.0
    %2770 = vmatpush.msra.mxu0 0.0
    %2771 = vmatpush.msra.mxu0 0.0
    %2772 = vmatpush.msra.mxu0 0.0
    %2773 = vmatpush.msra.mxu0 0.0
    %2774 = vmatpush.msra.mxu0 %v2539
    %2775 = vmatpush.msra.mxu0 %v2538
    %2776 = vmatmul.f32.gmra.mxu0 %v2702
    %v2777 = vpop.f32.mrf.mxu0
    %v2778 = vadd.f32 %v2622, %v2777
    %2779 = vdwg.mxu0
    %v2781 = vrot.slane %v2778, 6
    %v2783 = vmul.f32 %v2751, %v2781
    %v2784 = vadd.f32 %v2617, %v2783
    %v2785 = vtanh.pop %v2784
    %v2786 = vsub.f32 1.0, %v2759
    %v2787 = vmul.f32 %v2786, %v2785
    %v2788 = vrot.slane %v2699, 6
    %v2790 = vmul.f32 %v2759, %v2788
    %v2791 = vadd.f32 %v2787, %v2790
    %2792 = vst.msk [vmem:[#allocation2] sm:$0xc] %vm1975, %v2791
    %v2794 = vrot.slane %v2791, 2
    %v2795 = vsel %vm68, %v2794, 0
    %2797 = vmatpush.msra.mxu0 0.0
    %2798 = vmatpush.msra.mxu0 0.0
    %2799 = vmatpush.msra.mxu0 0.0
    %2800 = vmatpush.msra.mxu0 0.0
    %2801 = vmatpush.msra.mxu0 0.0
    %2802 = vmatpush.msra.mxu0 0.0
    %2803 = vmatpush.msra.mxu0 0.0
    %2804 = vmatpush.msra.mxu0 0.0
    %2805 = vmatpush.msra.mxu0 0.0
    %2806 = vmatpush.msra.mxu0 0.0
    %2807 = vmatpush.msra.mxu0 0.0
    %2808 = vmatpush.msra.mxu0 0.0
    %2809 = vmatpush.msra.mxu0 0.0
    %2810 = vmatpush.msra.mxu0 0.0
    %2811 = vmatpush.msra.mxu0 %v2535
    %2812 = vmatpush.msra.mxu0 %v2534
    %2813 = vmatmul.f32.gmra.mxu0 %v2795
    %v2814 = vpop.f32.mrf.mxu0
    %v2815 = vadd.f32 0.0, %v2814
    %2816 = vdwg.mxu0
    %2817 = vmatpush.msra.mxu0 0.0
    %2818 = vmatpush.msra.mxu0 0.0
    %2819 = vmatpush.msra.mxu0 0.0
    %2820 = vmatpush.msra.mxu0 0.0
    %2821 = vmatpush.msra.mxu0 0.0
    %2822 = vmatpush.msra.mxu0 0.0
    %2823 = vmatpush.msra.mxu0 0.0
    %2824 = vmatpush.msra.mxu0 0.0
    %2825 = vmatpush.msra.mxu0 0.0
    %2826 = vmatpush.msra.mxu0 0.0
    %2827 = vmatpush.msra.mxu0 0.0
    %2828 = vmatpush.msra.mxu0 0.0
    %2829 = vmatpush.msra.mxu0 0.0
    %2830 = vmatpush.msra.mxu0 0.0
    %2831 = vmatpush.msra.mxu0 %v2537
    %2832 = vmatpush.msra.mxu0 %v2536
    %2833 = vmatmul.f32.gmra.mxu0 %v2795
    %v2834 = vpop.f32.mrf.mxu0
    %v2835 = vadd.f32 0.0, %v2834
    %2836 = vdwg.mxu0
    %v2838 = vrot.slane %v2815, 4
    %v2840 = vadd.f32 %v2569, %v2838
    %v2841 = vmul.f32 %v2840, 0.5
    %v2842 = vtanh.pop %v2841
    %v2843 = vmul.f32 %v2842, 0.5
    %v2844 = vadd.f32 %v2843, 0.5
    %v2846 = vrot.slane %v2835, 4
    %v2848 = vadd.f32 %v2593, %v2846
    %v2849 = vmul.f32 %v2848, 0.5
    %v2850 = vtanh.pop %v2849
    %v2851 = vmul.f32 %v2850, 0.5
    %v2852 = vadd.f32 %v2851, 0.5
    %2853 = vmatpush.msra.mxu0 0.0
    %2854 = vmatpush.msra.mxu0 0.0
    %2855 = vmatpush.msra.mxu0 0.0
    %2856 = vmatpush.msra.mxu0 0.0
    %2857 = vmatpush.msra.mxu0 0.0
    %2858 = vmatpush.msra.mxu0 0.0
    %2859 = vmatpush.msra.mxu0 0.0
    %2860 = vmatpush.msra.mxu0 0.0
    %2861 = vmatpush.msra.mxu0 0.0
    %2862 = vmatpush.msra.mxu0 0.0
    %2863 = vmatpush.msra.mxu0 0.0
    %2864 = vmatpush.msra.mxu0 0.0
    %2865 = vmatpush.msra.mxu0 0.0
    %2866 = vmatpush.msra.mxu0 0.0
    %2867 = vmatpush.msra.mxu0 %v2539
    %2868 = vmatpush.msra.mxu0 %v2538
    %2869 = vmatmul.f32.gmra.mxu0 %v2795
    %v2870 = vpop.f32.mrf.mxu0
    %v2871 = vadd.f32 %v2622, %v2870
    %2872 = vdwg.mxu0
    %v2874 = vrot.slane %v2871, 4
    %v2876 = vmul.f32 %v2844, %v2874
    %v2877 = vadd.f32 %v2617, %v2876
    %v2878 = vtanh.pop %v2877
    %v2879 = vsub.f32 1.0, %v2852
    %v2880 = vmul.f32 %v2879, %v2878
    %v2881 = vrot.slane %v2791, 6
    %v2883 = vmul.f32 %v2852, %v2881
    %v2884 = vadd.f32 %v2880, %v2883
    %2885 = vst.msk [vmem:[#allocation2] sm:$0x30] %vm2069, %v2884
    %v2887 = vrot.slane %v2884, 4
    %v2888 = vsel %vm68, %v2887, 0
    %2890 = vmatpush.msra.mxu0 0.0
    %2891 = vmatpush.msra.mxu0 0.0
    %2892 = vmatpush.msra.mxu0 0.0
    %2893 = vmatpush.msra.mxu0 0.0
    %2894 = vmatpush.msra.mxu0 0.0
    %2895 = vmatpush.msra.mxu0 0.0
    %2896 = vmatpush.msra.mxu0 0.0
    %2897 = vmatpush.msra.mxu0 0.0
    %2898 = vmatpush.msra.mxu0 0.0
    %2899 = vmatpush.msra.mxu0 0.0
    %2900 = vmatpush.msra.mxu0 0.0
    %2901 = vmatpush.msra.mxu0 0.0
    %2902 = vmatpush.msra.mxu0 0.0
    %2903 = vmatpush.msra.mxu0 0.0
    %2904 = vmatpush.msra.mxu0 %v2535
    %2905 = vmatpush.msra.mxu0 %v2534
    %2906 = vmatmul.f32.gmra.mxu0 %v2888
    %v2907 = vpop.f32.mrf.mxu0
    %v2908 = vadd.f32 0.0, %v2907
    %2909 = vdwg.mxu0
    %2910 = vmatpush.msra.mxu0 0.0
    %2911 = vmatpush.msra.mxu0 0.0
    %2912 = vmatpush.msra.mxu0 0.0
    %2913 = vmatpush.msra.mxu0 0.0
    %2914 = vmatpush.msra.mxu0 0.0
    %2915 = vmatpush.msra.mxu0 0.0
    %2916 = vmatpush.msra.mxu0 0.0
    %2917 = vmatpush.msra.mxu0 0.0
    %2918 = vmatpush.msra.mxu0 0.0
    %2919 = vmatpush.msra.mxu0 0.0
    %2920 = vmatpush.msra.mxu0 0.0
    %2921 = vmatpush.msra.mxu0 0.0
    %2922 = vmatpush.msra.mxu0 0.0
    %2923 = vmatpush.msra.mxu0 0.0
    %2924 = vmatpush.msra.mxu0 %v2537
    %2925 = vmatpush.msra.mxu0 %v2536
    %2926 = vmatmul.f32.gmra.mxu0 %v2888
    %v2927 = vpop.f32.mrf.mxu0
    %v2928 = vadd.f32 0.0, %v2927
    %2929 = vdwg.mxu0
    %v2931 = vrot.slane %v2908, 2
    %v2933 = vadd.f32 %v2569, %v2931
    %v2934 = vmul.f32 %v2933, 0.5
    %v2935 = vtanh.pop %v2934
    %v2936 = vmul.f32 %v2935, 0.5
    %v2937 = vadd.f32 %v2936, 0.5
    %v2939 = vrot.slane %v2928, 2
    %v2941 = vadd.f32 %v2593, %v2939
    %v2942 = vmul.f32 %v2941, 0.5
    %v2943 = vtanh.pop %v2942
    %v2944 = vmul.f32 %v2943, 0.5
    %v2945 = vadd.f32 %v2944, 0.5
    %2946 = vmatpush.msra.mxu0 0.0
    %2947 = vmatpush.msra.mxu0 0.0
    %2948 = vmatpush.msra.mxu0 0.0
    %2949 = vmatpush.msra.mxu0 0.0
    %2950 = vmatpush.msra.mxu0 0.0
    %2951 = vmatpush.msra.mxu0 0.0
    %2952 = vmatpush.msra.mxu0 0.0
    %2953 = vmatpush.msra.mxu0 0.0
    %2954 = vmatpush.msra.mxu0 0.0
    %2955 = vmatpush.msra.mxu0 0.0
    %2956 = vmatpush.msra.mxu0 0.0
    %2957 = vmatpush.msra.mxu0 0.0
    %2958 = vmatpush.msra.mxu0 0.0
    %2959 = vmatpush.msra.mxu0 0.0
    %2960 = vmatpush.msra.mxu0 %v2539
    %2961 = vmatpush.msra.mxu0 %v2538
    %2962 = vmatmul.f32.gmra.mxu0 %v2888
    %v2963 = vpop.f32.mrf.mxu0
    %v2964 = vadd.f32 %v2622, %v2963
    %2965 = vdwg.mxu0
    %v2967 = vrot.slane %v2964, 2
    %v2969 = vmul.f32 %v2937, %v2967
    %v2970 = vadd.f32 %v2617, %v2969
    %v2971 = vtanh.pop %v2970
    %v2972 = vsub.f32 1.0, %v2945
    %v2973 = vmul.f32 %v2972, %v2971
    %v2974 = vrot.slane %v2884, 6
    %v2976 = vmul.f32 %v2945, %v2974
    %v2977 = vadd.f32 %v2973, %v2976
    %2978 = vst.msk [vmem:[#allocation2] sm:$0xc0] %vm2163, %v2977
    %v2980 = vrot.slane %v2977, 6
    %v2981 = vsel %vm68, %v2980, 0
    %2983 = vmatpush.msra.mxu0 0.0
    %2984 = vmatpush.msra.mxu0 0.0
    %2985 = vmatpush.msra.mxu0 0.0
    %2986 = vmatpush.msra.mxu0 0.0
    %2987 = vmatpush.msra.mxu0 0.0
    %2988 = vmatpush.msra.mxu0 0.0
    %2989 = vmatpush.msra.mxu0 0.0
    %2990 = vmatpush.msra.mxu0 0.0
    %2991 = vmatpush.msra.mxu0 0.0
    %2992 = vmatpush.msra.mxu0 0.0
    %2993 = vmatpush.msra.mxu0 0.0
    %2994 = vmatpush.msra.mxu0 0.0
    %2995 = vmatpush.msra.mxu0 0.0
    %2996 = vmatpush.msra.mxu0 0.0
    %2997 = vmatpush.msra.mxu0 %v2535
    %2998 = vmatpush.msra.mxu0 %v2534
    %2999 = vmatmul.f32.gmra.mxu0 %v2981
    %v3000 = vpop.f32.mrf.mxu0
    %v3001 = vadd.f32 0.0, %v3000
    %3002 = vdwg.mxu0
    %3003 = vmatpush.msra.mxu0 0.0
    %3004 = vmatpush.msra.mxu0 0.0
    %3005 = vmatpush.msra.mxu0 0.0
    %3006 = vmatpush.msra.mxu0 0.0
    %3007 = vmatpush.msra.mxu0 0.0
    %3008 = vmatpush.msra.mxu0 0.0
    %3009 = vmatpush.msra.mxu0 0.0
    %3010 = vmatpush.msra.mxu0 0.0
    %3011 = vmatpush.msra.mxu0 0.0
    %3012 = vmatpush.msra.mxu0 0.0
    %3013 = vmatpush.msra.mxu0 0.0
    %3014 = vmatpush.msra.mxu0 0.0
    %3015 = vmatpush.msra.mxu0 0.0
    %3016 = vmatpush.msra.mxu0 0.0
    %3017 = vmatpush.msra.mxu0 %v2537
    %3018 = vmatpush.msra.mxu0 %v2536
    %3019 = vmatmul.f32.gmra.mxu0 %v2981
    %v3020 = vpop.f32.mrf.mxu0
    %v3021 = vadd.f32 0.0, %v3020
    %3022 = vdwg.mxu0
    %v3023 = vadd.f32 %v2572, %v3001
    %v3024 = vmul.f32 %v3023, 0.5
    %v3025 = vtanh.pop %v3024
    %v3026 = vmul.f32 %v3025, 0.5
    %v3027 = vadd.f32 %v3026, 0.5
    %v3028 = vadd.f32 %v2596, %v3021
    %v3029 = vmul.f32 %v3028, 0.5
    %v3030 = vtanh.pop %v3029
    %v3031 = vmul.f32 %v3030, 0.5
    %v3032 = vadd.f32 %v3031, 0.5
    %3033 = vmatpush.msra.mxu0 0.0
    %3034 = vmatpush.msra.mxu0 0.0
    %3035 = vmatpush.msra.mxu0 0.0
    %3036 = vmatpush.msra.mxu0 0.0
    %3037 = vmatpush.msra.mxu0 0.0
    %3038 = vmatpush.msra.mxu0 0.0
    %3039 = vmatpush.msra.mxu0 0.0
    %3040 = vmatpush.msra.mxu0 0.0
    %3041 = vmatpush.msra.mxu0 0.0
    %3042 = vmatpush.msra.mxu0 0.0
    %3043 = vmatpush.msra.mxu0 0.0
    %3044 = vmatpush.msra.mxu0 0.0
    %3045 = vmatpush.msra.mxu0 0.0
    %3046 = vmatpush.msra.mxu0 0.0
    %3047 = vmatpush.msra.mxu0 %v2539
    %3048 = vmatpush.msra.mxu0 %v2538
    %3049 = vmatmul.f32.gmra.mxu0 %v2981
    %v3050 = vpop.f32.mrf.mxu0
    %v3051 = vadd.f32 %v2622, %v3050
    %3052 = vdwg.mxu0
    %v3053 = vmul.f32 %v3027, %v3051
    %v3054 = vadd.f32 %v2620, %v3053
    %v3055 = vtanh.pop %v3054
    %v3056 = vsub.f32 1.0, %v3032
    %v3057 = vmul.f32 %v3056, %v3055
    %v3059 = vmul.f32 %v3032, %v2980
    %v3060 = vadd.f32 %v3057, %v3059
    %3061 = vst.msk [vmem:[#allocation2 + $0x8] sm:$0x3] %vm1882, %v3060
    %v3063 = vsel %vm68, %v3060, 0
    %3065 = vmatpush.msra.mxu0 0.0
    %3066 = vmatpush.msra.mxu0 0.0
    %3067 = vmatpush.msra.mxu0 0.0
    %3068 = vmatpush.msra.mxu0 0.0
    %3069 = vmatpush.msra.mxu0 0.0
    %3070 = vmatpush.msra.mxu0 0.0
    %3071 = vmatpush.msra.mxu0 0.0
    %3072 = vmatpush.msra.mxu0 0.0
    %3073 = vmatpush.msra.mxu0 0.0
    %3074 = vmatpush.msra.mxu0 0.0
    %3075 = vmatpush.msra.mxu0 0.0
    %3076 = vmatpush.msra.mxu0 0.0
    %3077 = vmatpush.msra.mxu0 0.0
    %3078 = vmatpush.msra.mxu0 0.0
    %3079 = vmatpush.msra.mxu0 %v2535
    %3080 = vmatpush.msra.mxu0 %v2534
    %3081 = vmatmul.f32.gmra.mxu0 %v3063
    %v3082 = vpop.f32.mrf.mxu0
    %v3083 = vadd.f32 0.0, %v3082
    %3084 = vdwg.mxu0
    %3085 = vmatpush.msra.mxu0 0.0
    %3086 = vmatpush.msra.mxu0 0.0
    %3087 = vmatpush.msra.mxu0 0.0
    %3088 = vmatpush.msra.mxu0 0.0
    %3089 = vmatpush.msra.mxu0 0.0
    %3090 = vmatpush.msra.mxu0 0.0
    %3091 = vmatpush.msra.mxu0 0.0
    %3092 = vmatpush.msra.mxu0 0.0
    %3093 = vmatpush.msra.mxu0 0.0
    %3094 = vmatpush.msra.mxu0 0.0
    %3095 = vmatpush.msra.mxu0 0.0
    %3096 = vmatpush.msra.mxu0 0.0
    %3097 = vmatpush.msra.mxu0 0.0
    %3098 = vmatpush.msra.mxu0 0.0
    %3099 = vmatpush.msra.mxu0 %v2537
    %3100 = vmatpush.msra.mxu0 %v2536
    %3101 = vmatmul.f32.gmra.mxu0 %v3063
    %v3102 = vpop.f32.mrf.mxu0
    %v3103 = vadd.f32 0.0, %v3102
    %3104 = vdwg.mxu0
    %v3106 = vrot.slane %v3083, 6
    %v3108 = vadd.f32 %v2572, %v3106
    %v3109 = vmul.f32 %v3108, 0.5
    %v3110 = vtanh.pop %v3109
    %v3111 = vmul.f32 %v3110, 0.5
    %v3112 = vadd.f32 %v3111, 0.5
    %v3114 = vrot.slane %v3103, 6
    %v3116 = vadd.f32 %v2596, %v3114
    %v3117 = vmul.f32 %v3116, 0.5
    %v3118 = vtanh.pop %v3117
    %v3119 = vmul.f32 %v3118, 0.5
    %v3120 = vadd.f32 %v3119, 0.5
    %3121 = vmatpush.msra.mxu0 0.0
    %3122 = vmatpush.msra.mxu0 0.0
    %3123 = vmatpush.msra.mxu0 0.0
    %3124 = vmatpush.msra.mxu0 0.0
    %3125 = vmatpush.msra.mxu0 0.0
    %3126 = vmatpush.msra.mxu0 0.0
    %3127 = vmatpush.msra.mxu0 0.0
    %3128 = vmatpush.msra.mxu0 0.0
    %3129 = vmatpush.msra.mxu0 0.0
    %3130 = vmatpush.msra.mxu0 0.0
    %3131 = vmatpush.msra.mxu0 0.0
    %3132 = vmatpush.msra.mxu0 0.0
    %3133 = vmatpush.msra.mxu0 0.0
    %3134 = vmatpush.msra.mxu0 0.0
    %3135 = vmatpush.msra.mxu0 %v2539
    %3136 = vmatpush.msra.mxu0 %v2538
    %3137 = vmatmul.f32.gmra.mxu0 %v3063
    %v3138 = vpop.f32.mrf.mxu0
    %v3139 = vadd.f32 %v2622, %v3138
    %3140 = vdwg.mxu0
    %v3142 = vrot.slane %v3139, 6
    %v3144 = vmul.f32 %v3112, %v3142
    %v3145 = vadd.f32 %v2620, %v3144
    %v3146 = vtanh.pop %v3145
    %v3147 = vsub.f32 1.0, %v3120
    %v3148 = vmul.f32 %v3147, %v3146
    %v3149 = vrot.slane %v3060, 6
    %v3151 = vmul.f32 %v3120, %v3149
    %v3152 = vadd.f32 %v3148, %v3151
    %3153 = vst.msk [vmem:[#allocation2 + $0x8] sm:$0xc] %vm1975, %v3152
    %v3155 = vrot.slane %v3152, 2
    %v3156 = vsel %vm68, %v3155, 0
    %3158 = vmatpush.msra.mxu0 0.0
    %3159 = vmatpush.msra.mxu0 0.0
    %3160 = vmatpush.msra.mxu0 0.0
    %3161 = vmatpush.msra.mxu0 0.0
    %3162 = vmatpush.msra.mxu0 0.0
    %3163 = vmatpush.msra.mxu0 0.0
    %3164 = vmatpush.msra.mxu0 0.0
    %3165 = vmatpush.msra.mxu0 0.0
    %3166 = vmatpush.msra.mxu0 0.0
    %3167 = vmatpush.msra.mxu0 0.0
    %3168 = vmatpush.msra.mxu0 0.0
    %3169 = vmatpush.msra.mxu0 0.0
    %3170 = vmatpush.msra.mxu0 0.0
    %3171 = vmatpush.msra.mxu0 0.0
    %3172 = vmatpush.msra.mxu0 %v2535
    %3173 = vmatpush.msra.mxu0 %v2534
    %3174 = vmatmul.f32.gmra.mxu0 %v3156
    %v3175 = vpop.f32.mrf.mxu0
    %v3176 = vadd.f32 0.0, %v3175
    %3177 = vdwg.mxu0
    %3178 = vmatpush.msra.mxu0 0.0
    %3179 = vmatpush.msra.mxu0 0.0
    %3180 = vmatpush.msra.mxu0 0.0
    %3181 = vmatpush.msra.mxu0 0.0
    %3182 = vmatpush.msra.mxu0 0.0
    %3183 = vmatpush.msra.mxu0 0.0
    %3184 = vmatpush.msra.mxu0 0.0
    %3185 = vmatpush.msra.mxu0 0.0
    %3186 = vmatpush.msra.mxu0 0.0
    %3187 = vmatpush.msra.mxu0 0.0
    %3188 = vmatpush.msra.mxu0 0.0
    %3189 = vmatpush.msra.mxu0 0.0
    %3190 = vmatpush.msra.mxu0 0.0
    %3191 = vmatpush.msra.mxu0 0.0
    %3192 = vmatpush.msra.mxu0 %v2537
    %3193 = vmatpush.msra.mxu0 %v2536
    %3194 = vmatmul.f32.gmra.mxu0 %v3156
    %v3195 = vpop.f32.mrf.mxu0
    %v3196 = vadd.f32 0.0, %v3195
    %3197 = vdwg.mxu0
    %v3199 = vrot.slane %v3176, 4
    %v3201 = vadd.f32 %v2572, %v3199
    %v3202 = vmul.f32 %v3201, 0.5
    %v3203 = vtanh.pop %v3202
    %v3204 = vmul.f32 %v3203, 0.5
    %v3205 = vadd.f32 %v3204, 0.5
    %v3207 = vrot.slane %v3196, 4
    %v3209 = vadd.f32 %v2596, %v3207
    %v3210 = vmul.f32 %v3209, 0.5
    %v3211 = vtanh.pop %v3210
    %v3212 = vmul.f32 %v3211, 0.5
    %v3213 = vadd.f32 %v3212, 0.5
    %3214 = vmatpush.msra.mxu0 0.0
    %3215 = vmatpush.msra.mxu0 0.0
    %3216 = vmatpush.msra.mxu0 0.0
    %3217 = vmatpush.msra.mxu0 0.0
    %3218 = vmatpush.msra.mxu0 0.0
    %3219 = vmatpush.msra.mxu0 0.0
    %3220 = vmatpush.msra.mxu0 0.0
    %3221 = vmatpush.msra.mxu0 0.0
    %3222 = vmatpush.msra.mxu0 0.0
    %3223 = vmatpush.msra.mxu0 0.0
    %3224 = vmatpush.msra.mxu0 0.0
    %3225 = vmatpush.msra.mxu0 0.0
    %3226 = vmatpush.msra.mxu0 0.0
    %3227 = vmatpush.msra.mxu0 0.0
    %3228 = vmatpush.msra.mxu0 %v2539
    %3229 = vmatpush.msra.mxu0 %v2538
    %3230 = vmatmul.f32.gmra.mxu0 %v3156
    %v3231 = vpop.f32.mrf.mxu0
    %v3232 = vadd.f32 %v2622, %v3231
    %3233 = vdwg.mxu0
    %v3235 = vrot.slane %v3232, 4
    %v3237 = vmul.f32 %v3205, %v3235
    %v3238 = vadd.f32 %v2620, %v3237
    %v3239 = vtanh.pop %v3238
    %v3240 = vsub.f32 1.0, %v3213
    %v3241 = vmul.f32 %v3240, %v3239
    %v3242 = vrot.slane %v3152, 6
    %v3244 = vmul.f32 %v3213, %v3242
    %v3245 = vadd.f32 %v3241, %v3244
    %3246 = vst.msk [vmem:[#allocation2 + $0x8] sm:$0x30] %vm2069, %v3245
    %v3248 = vrot.slane %v3245, 4
    %v3249 = vsel %vm68, %v3248, 0
    %3251 = vmatpush.msra.mxu0 0.0
    %3252 = vmatpush.msra.mxu0 0.0
    %3253 = vmatpush.msra.mxu0 0.0
    %3254 = vmatpush.msra.mxu0 0.0
    %3255 = vmatpush.msra.mxu0 0.0
    %3256 = vmatpush.msra.mxu0 0.0
    %3257 = vmatpush.msra.mxu0 0.0
    %3258 = vmatpush.msra.mxu0 0.0
    %3259 = vmatpush.msra.mxu0 0.0
    %3260 = vmatpush.msra.mxu0 0.0
    %3261 = vmatpush.msra.mxu0 0.0
    %3262 = vmatpush.msra.mxu0 0.0
    %3263 = vmatpush.msra.mxu0 0.0
    %3264 = vmatpush.msra.mxu0 0.0
    %3265 = vmatpush.msra.mxu0 %v2535
    %3266 = vmatpush.msra.mxu0 %v2534
    %3267 = vmatmul.f32.gmra.mxu0 %v3249
    %v3268 = vpop.f32.mrf.mxu0
    %v3269 = vadd.f32 0.0, %v3268
    %3270 = vdwg.mxu0
    %3271 = vmatpush.msra.mxu0 0.0
    %3272 = vmatpush.msra.mxu0 0.0
    %3273 = vmatpush.msra.mxu0 0.0
    %3274 = vmatpush.msra.mxu0 0.0
    %3275 = vmatpush.msra.mxu0 0.0
    %3276 = vmatpush.msra.mxu0 0.0
    %3277 = vmatpush.msra.mxu0 0.0
    %3278 = vmatpush.msra.mxu0 0.0
    %3279 = vmatpush.msra.mxu0 0.0
    %3280 = vmatpush.msra.mxu0 0.0
    %3281 = vmatpush.msra.mxu0 0.0
    %3282 = vmatpush.msra.mxu0 0.0
    %3283 = vmatpush.msra.mxu0 0.0
    %3284 = vmatpush.msra.mxu0 0.0
    %3285 = vmatpush.msra.mxu0 %v2537
    %3286 = vmatpush.msra.mxu0 %v2536
    %3287 = vmatmul.f32.gmra.mxu0 %v3249
    %v3288 = vpop.f32.mrf.mxu0
    %v3289 = vadd.f32 0.0, %v3288
    %3290 = vdwg.mxu0
    %v3292 = vrot.slane %v3269, 2
    %v3294 = vadd.f32 %v2572, %v3292
    %v3295 = vmul.f32 %v3294, 0.5
    %v3296 = vtanh.pop %v3295
    %v3297 = vmul.f32 %v3296, 0.5
    %v3298 = vadd.f32 %v3297, 0.5
    %v3300 = vrot.slane %v3289, 2
    %v3302 = vadd.f32 %v2596, %v3300
    %v3303 = vmul.f32 %v3302, 0.5
    %v3304 = vtanh.pop %v3303
    %v3305 = vmul.f32 %v3304, 0.5
    %v3306 = vadd.f32 %v3305, 0.5
    %3307 = vmatpush.msra.mxu0 0.0
    %3308 = vmatpush.msra.mxu0 0.0
    %3309 = vmatpush.msra.mxu0 0.0
    %3310 = vmatpush.msra.mxu0 0.0
    %3311 = vmatpush.msra.mxu0 0.0
    %3312 = vmatpush.msra.mxu0 0.0
    %3313 = vmatpush.msra.mxu0 0.0
    %3314 = vmatpush.msra.mxu0 0.0
    %3315 = vmatpush.msra.mxu0 0.0
    %3316 = vmatpush.msra.mxu0 0.0
    %3317 = vmatpush.msra.mxu0 0.0
    %3318 = vmatpush.msra.mxu0 0.0
    %3319 = vmatpush.msra.mxu0 0.0
    %3320 = vmatpush.msra.mxu0 0.0
    %3321 = vmatpush.msra.mxu0 %v2539
    %3322 = vmatpush.msra.mxu0 %v2538
    %3323 = vmatmul.f32.gmra.mxu0 %v3249
    %v3324 = vpop.f32.mrf.mxu0
    %v3325 = vadd.f32 %v2622, %v3324
    %3326 = vdwg.mxu0
    %v3328 = vrot.slane %v3325, 2
    %v3330 = vmul.f32 %v3298, %v3328
    %v3331 = vadd.f32 %v2620, %v3330
    %v3332 = vtanh.pop %v3331
    %v3333 = vsub.f32 1.0, %v3306
    %v3334 = vmul.f32 %v3333, %v3332
    %v3335 = vrot.slane %v3245, 6
    %v3337 = vmul.f32 %v3306, %v3335
    %v3338 = vadd.f32 %v3334, %v3337
    %3339 = vst.msk [vmem:[#allocation2 + $0x8] sm:$0xc0] %vm2163, %v3338
    %v3340 = vld [vmem:[#allocation2] sm:$0xff]
    %v3341 = vld [vmem:[#allocation2 + $0x8] sm:$0xff]
    %v3342 = vmax.f32 %v3340, 0.0
    %v3343 = vmax.f32 %v3341, 0.0
    %v3344 = vld [vmem:[#allocation5 + $0x260] sm:$0xff]
    %v3345 = vld [vmem:[#allocation5 + $0x268] sm:$0xff]
    %v3346 = vld [vmem:[#allocation5 + $0x270] sm:$0xff]
    %v3347 = vld [vmem:[#allocation5 + $0x278] sm:$0xff]
    %v3348 = vld [vmem:[#allocation5 + $0x280] sm:$0xff]
    %v3349 = vld [vmem:[#allocation5 + $0x288] sm:$0xff]
    %v3350 = vld [vmem:[#allocation5 + $0x290] sm:$0xff]
    %v3351 = vld [vmem:[#allocation5 + $0x298] sm:$0xff]
    %v3352 = vld [vmem:[#allocation5 + $0x2a0] sm:$0xff]
    %v3353 = vld [vmem:[#allocation5 + $0x2a8] sm:$0x1]
    %v3354 = vld [vmem:[#allocation5 + $0x2a9] sm:$0x1]
    %v3355 = vld [vmem:[#allocation5 + $0x2aa] sm:$0x1]
    %v3356 = vld [vmem:[#allocation5 + $0x2ab] sm:$0x1]
    %v3357 = vperm.slane %v3353, 0
    %v3359 = vsel %vm68, %v3342, 0
    %v3362 = vsel %vm68, %v3343, 0
    %3364 = vmatpush.msra.mxu0 0.0
    %3365 = vmatpush.msra.mxu0 0.0
    %3366 = vmatpush.msra.mxu0 0.0
    %3367 = vmatpush.msra.mxu0 0.0
    %3368 = vmatpush.msra.mxu0 0.0
    %3369 = vmatpush.msra.mxu0 0.0
    %3370 = vmatpush.msra.mxu0 0.0
    %3371 = vmatpush.msra.mxu0 0.0
    %3372 = vmatpush.msra.mxu0 0.0
    %3373 = vmatpush.msra.mxu0 0.0
    %3374 = vmatpush.msra.mxu0 0.0
    %3375 = vmatpush.msra.mxu0 0.0
    %3376 = vmatpush.msra.mxu0 0.0
    %3377 = vmatpush.msra.mxu0 0.0
    %3378 = vmatpush.msra.mxu0 %v3345
    %3379 = vmatpush.msra.mxu0 %v3344
    %3380 = vmatmul.f32.gmra.mxu0 %v3359
    %v3381 = vpop.f32.mrf.mxu0
    %v3382 = vadd.f32 %v3357, %v3381
    %3383 = vmatmul.f32.gmra.mxu0 %v3362
    %v3384 = vpop.f32.mrf.mxu0
    %v3385 = vadd.f32 %v3357, %v3384
    %3386 = vdwg.mxu0
    %v3387 = vperm.slane %v3354, 0
    %3388 = vmatpush.msra.mxu0 0.0
    %3389 = vmatpush.msra.mxu0 0.0
    %3390 = vmatpush.msra.mxu0 0.0
    %3391 = vmatpush.msra.mxu0 0.0
    %3392 = vmatpush.msra.mxu0 0.0
    %3393 = vmatpush.msra.mxu0 0.0
    %3394 = vmatpush.msra.mxu0 0.0
    %3395 = vmatpush.msra.mxu0 0.0
    %3396 = vmatpush.msra.mxu0 0.0
    %3397 = vmatpush.msra.mxu0 0.0
    %3398 = vmatpush.msra.mxu0 0.0
    %3399 = vmatpush.msra.mxu0 0.0
    %3400 = vmatpush.msra.mxu0 0.0
    %3401 = vmatpush.msra.mxu0 0.0
    %3402 = vmatpush.msra.mxu0 %v3347
    %3403 = vmatpush.msra.mxu0 %v3346
    %3404 = vmatmul.f32.gmra.mxu0 %v3359
    %v3405 = vpop.f32.mrf.mxu0
    %v3406 = vadd.f32 %v3387, %v3405
    %3407 = vmatmul.f32.gmra.mxu0 %v3362
    %v3408 = vpop.f32.mrf.mxu0
    %v3409 = vadd.f32 %v3387, %v3408
    %3410 = vdwg.mxu0
    %v3411 = vperm.slane %v3355, 0
    %3412 = vmatpush.msra.mxu0 0.0
    %3413 = vmatpush.msra.mxu0 0.0
    %3414 = vmatpush.msra.mxu0 0.0
    %3415 = vmatpush.msra.mxu0 0.0
    %3416 = vmatpush.msra.mxu0 0.0
    %3417 = vmatpush.msra.mxu0 0.0
    %3418 = vmatpush.msra.mxu0 0.0
    %3419 = vmatpush.msra.mxu0 0.0
    %3420 = vmatpush.msra.mxu0 0.0
    %3421 = vmatpush.msra.mxu0 0.0
    %3422 = vmatpush.msra.mxu0 0.0
    %3423 = vmatpush.msra.mxu0 0.0
    %3424 = vmatpush.msra.mxu0 0.0
    %3425 = vmatpush.msra.mxu0 0.0
    %3426 = vmatpush.msra.mxu0 %v3349
    %3427 = vmatpush.msra.mxu0 %v3348
    %3428 = vmatmul.f32.gmra.mxu0 %v3359
    %v3429 = vpop.f32.mrf.mxu0
    %v3430 = vadd.f32 %v3411, %v3429
    %3431 = vmatmul.f32.gmra.mxu0 %v3362
    %v3432 = vpop.f32.mrf.mxu0
    %v3433 = vadd.f32 %v3411, %v3432
    %3434 = vdwg.mxu0
    %v3435 = vperm.slane %v3356, 0
    %vm3436 = vcmask 64512
    %v3437 = vsel %vm3436, 0.0, 0
    %3439 = vmatpush.msra.mxu0 0.0
    %3440 = vmatpush.msra.mxu0 0.0
    %3441 = vmatpush.msra.mxu0 0.0
    %3442 = vmatpush.msra.mxu0 0.0
    %3443 = vmatpush.msra.mxu0 0.0
    %3444 = vmatpush.msra.mxu0 0.0
    %3445 = vmatpush.msra.mxu0 0.0
    %3446 = vmatpush.msra.mxu0 0.0
    %3447 = vmatpush.msra.mxu0 0.0
    %3448 = vmatpush.msra.mxu0 0.0
    %3449 = vmatpush.msra.mxu0 0.0
    %3450 = vmatpush.msra.mxu0 0.0
    %3451 = vmatpush.msra.mxu0 0.0
    %3452 = vmatpush.msra.mxu0 0.0
    %3453 = vmatpush.msra.mxu0 0.0
    %3454 = vmatpush.msra.mxu0 %v3350
    %3455 = vmatmul.f32.gmra.mxu0 %v3437
    %v3456 = vpop.f32.mrf.mxu0
    %v3457 = vadd.f32 0.0, %v3456
    %3458 = vdwg.mxu0
    %3459 = vmatpush.msra.mxu0 0.0
    %3460 = vmatpush.msra.mxu0 0.0
    %3461 = vmatpush.msra.mxu0 0.0
    %3462 = vmatpush.msra.mxu0 0.0
    %3463 = vmatpush.msra.mxu0 0.0
    %3464 = vmatpush.msra.mxu0 0.0
    %3465 = vmatpush.msra.mxu0 0.0
    %3466 = vmatpush.msra.mxu0 0.0
    %3467 = vmatpush.msra.mxu0 0.0
    %3468 = vmatpush.msra.mxu0 0.0
    %3469 = vmatpush.msra.mxu0 0.0
    %3470 = vmatpush.msra.mxu0 0.0
    %3471 = vmatpush.msra.mxu0 0.0
    %3472 = vmatpush.msra.mxu0 0.0
    %3473 = vmatpush.msra.mxu0 0.0
    %3474 = vmatpush.msra.mxu0 %v3351
    %3475 = vmatmul.f32.gmra.mxu0 %v3437
    %v3476 = vpop.f32.mrf.mxu0
    %v3477 = vadd.f32 0.0, %v3476
    %3478 = vdwg.mxu0
    %v3479 = vadd.f32 %v3382, %v3457
    %v3480 = vmul.f32 %v3479, 0.5
    %v3481 = vtanh.pop %v3480
    %v3482 = vmul.f32 %v3481, 0.5
    %v3483 = vadd.f32 %v3482, 0.5
    %v3484 = vadd.f32 %v3406, %v3477
    %v3485 = vmul.f32 %v3484, 0.5
    %v3486 = vtanh.pop %v3485
    %v3487 = vmul.f32 %v3486, 0.5
    %v3488 = vadd.f32 %v3487, 0.5
    %3489 = vmatpush.msra.mxu0 0.0
    %3490 = vmatpush.msra.mxu0 0.0
    %3491 = vmatpush.msra.mxu0 0.0
    %3492 = vmatpush.msra.mxu0 0.0
    %3493 = vmatpush.msra.mxu0 0.0
    %3494 = vmatpush.msra.mxu0 0.0
    %3495 = vmatpush.msra.mxu0 0.0
    %3496 = vmatpush.msra.mxu0 0.0
    %3497 = vmatpush.msra.mxu0 0.0
    %3498 = vmatpush.msra.mxu0 0.0
    %3499 = vmatpush.msra.mxu0 0.0
    %3500 = vmatpush.msra.mxu0 0.0
    %3501 = vmatpush.msra.mxu0 0.0
    %3502 = vmatpush.msra.mxu0 0.0
    %3503 = vmatpush.msra.mxu0 0.0
    %3504 = vmatpush.msra.mxu0 %v3352
    %3505 = vmatmul.f32.gmra.mxu0 %v3437
    %v3506 = vpop.f32.mrf.mxu0
    %v3507 = vadd.f32 %v3435, %v3506
    %3508 = vdwg.mxu0
    %v3509 = vmul.f32 %v3483, %v3507
    %v3510 = vadd.f32 %v3430, %v3509
    %v3511 = vtanh.pop %v3510
    %v3512 = vsub.f32 1.0, %v3488
    %v3513 = vmul.f32 %v3512, %v3511
    %v3514 = vmul.f32 %v3488, 0.0
    %v3515 = vadd.f32 %v3513, %v3514
    %vm3516 = vcmask 58368
    %3517 = vst.msk [vmem:[#allocation2] sm:$0x3] %vm3516, %v3515
    %v3519 = vsel %vm3436, %v3515, 0
    %3521 = vmatpush.msra.mxu0 0.0
    %3522 = vmatpush.msra.mxu0 0.0
    %3523 = vmatpush.msra.mxu0 0.0
    %3524 = vmatpush.msra.mxu0 0.0
    %3525 = vmatpush.msra.mxu0 0.0
    %3526 = vmatpush.msra.mxu0 0.0
    %3527 = vmatpush.msra.mxu0 0.0
    %3528 = vmatpush.msra.mxu0 0.0
    %3529 = vmatpush.msra.mxu0 0.0
    %3530 = vmatpush.msra.mxu0 0.0
    %3531 = vmatpush.msra.mxu0 0.0
    %3532 = vmatpush.msra.mxu0 0.0
    %3533 = vmatpush.msra.mxu0 0.0
    %3534 = vmatpush.msra.mxu0 0.0
    %3535 = vmatpush.msra.mxu0 0.0
    %3536 = vmatpush.msra.mxu0 %v3350
    %3537 = vmatmul.f32.gmra.mxu0 %v3519
    %v3538 = vpop.f32.mrf.mxu0
    %v3539 = vadd.f32 0.0, %v3538
    %3540 = vdwg.mxu0
    %3541 = vmatpush.msra.mxu0 0.0
    %3542 = vmatpush.msra.mxu0 0.0
    %3543 = vmatpush.msra.mxu0 0.0
    %3544 = vmatpush.msra.mxu0 0.0
    %3545 = vmatpush.msra.mxu0 0.0
    %3546 = vmatpush.msra.mxu0 0.0
    %3547 = vmatpush.msra.mxu0 0.0
    %3548 = vmatpush.msra.mxu0 0.0
    %3549 = vmatpush.msra.mxu0 0.0
    %3550 = vmatpush.msra.mxu0 0.0
    %3551 = vmatpush.msra.mxu0 0.0
    %3552 = vmatpush.msra.mxu0 0.0
    %3553 = vmatpush.msra.mxu0 0.0
    %3554 = vmatpush.msra.mxu0 0.0
    %3555 = vmatpush.msra.mxu0 0.0
    %3556 = vmatpush.msra.mxu0 %v3351
    %3557 = vmatmul.f32.gmra.mxu0 %v3519
    %v3558 = vpop.f32.mrf.mxu0
    %v3559 = vadd.f32 0.0, %v3558
    %3560 = vdwg.mxu0
    %v3562 = vrot.slane %v3539, 6
    %v3564 = vadd.f32 %v3382, %v3562
    %v3565 = vmul.f32 %v3564, 0.5
    %v3566 = vtanh.pop %v3565
    %v3567 = vmul.f32 %v3566, 0.5
    %v3568 = vadd.f32 %v3567, 0.5
    %v3570 = vrot.slane %v3559, 6
    %v3572 = vadd.f32 %v3406, %v3570
    %v3573 = vmul.f32 %v3572, 0.5
    %v3574 = vtanh.pop %v3573
    %v3575 = vmul.f32 %v3574, 0.5
    %v3576 = vadd.f32 %v3575, 0.5
    %3577 = vmatpush.msra.mxu0 0.0
    %3578 = vmatpush.msra.mxu0 0.0
    %3579 = vmatpush.msra.mxu0 0.0
    %3580 = vmatpush.msra.mxu0 0.0
    %3581 = vmatpush.msra.mxu0 0.0
    %3582 = vmatpush.msra.mxu0 0.0
    %3583 = vmatpush.msra.mxu0 0.0
    %3584 = vmatpush.msra.mxu0 0.0
    %3585 = vmatpush.msra.mxu0 0.0
    %3586 = vmatpush.msra.mxu0 0.0
    %3587 = vmatpush.msra.mxu0 0.0
    %3588 = vmatpush.msra.mxu0 0.0
    %3589 = vmatpush.msra.mxu0 0.0
    %3590 = vmatpush.msra.mxu0 0.0
    %3591 = vmatpush.msra.mxu0 0.0
    %3592 = vmatpush.msra.mxu0 %v3352
    %3593 = vmatmul.f32.gmra.mxu0 %v3519
    %v3594 = vpop.f32.mrf.mxu0
    %v3595 = vadd.f32 %v3435, %v3594
    %3596 = vdwg.mxu0
    %v3598 = vrot.slane %v3595, 6
    %v3600 = vmul.f32 %v3568, %v3598
    %v3601 = vadd.f32 %v3430, %v3600
    %v3602 = vtanh.pop %v3601
    %v3603 = vsub.f32 1.0, %v3576
    %v3604 = vmul.f32 %v3603, %v3602
    %v3605 = vrot.slane %v3515, 6
    %v3607 = vmul.f32 %v3576, %v3605
    %v3608 = vadd.f32 %v3604, %v3607
    %vm3609 = vcmask 60418
    %3610 = vst.msk [vmem:[#allocation2] sm:$0xc] %vm3609, %v3608
    %v3612 = vrot.slane %v3608, 2
    %v3613 = vsel %vm3436, %v3612, 0
    %3615 = vmatpush.msra.mxu0 0.0
    %3616 = vmatpush.msra.mxu0 0.0
    %3617 = vmatpush.msra.mxu0 0.0
    %3618 = vmatpush.msra.mxu0 0.0
    %3619 = vmatpush.msra.mxu0 0.0
    %3620 = vmatpush.msra.mxu0 0.0
    %3621 = vmatpush.msra.mxu0 0.0
    %3622 = vmatpush.msra.mxu0 0.0
    %3623 = vmatpush.msra.mxu0 0.0
    %3624 = vmatpush.msra.mxu0 0.0
    %3625 = vmatpush.msra.mxu0 0.0
    %3626 = vmatpush.msra.mxu0 0.0
    %3627 = vmatpush.msra.mxu0 0.0
    %3628 = vmatpush.msra.mxu0 0.0
    %3629 = vmatpush.msra.mxu0 0.0
    %3630 = vmatpush.msra.mxu0 %v3350
    %3631 = vmatmul.f32.gmra.mxu0 %v3613
    %v3632 = vpop.f32.mrf.mxu0
    %v3633 = vadd.f32 0.0, %v3632
    %3634 = vdwg.mxu0
    %3635 = vmatpush.msra.mxu0 0.0
    %3636 = vmatpush.msra.mxu0 0.0
    %3637 = vmatpush.msra.mxu0 0.0
    %3638 = vmatpush.msra.mxu0 0.0
    %3639 = vmatpush.msra.mxu0 0.0
    %3640 = vmatpush.msra.mxu0 0.0
    %3641 = vmatpush.msra.mxu0 0.0
    %3642 = vmatpush.msra.mxu0 0.0
    %3643 = vmatpush.msra.mxu0 0.0
    %3644 = vmatpush.msra.mxu0 0.0
    %3645 = vmatpush.msra.mxu0 0.0
    %3646 = vmatpush.msra.mxu0 0.0
    %3647 = vmatpush.msra.mxu0 0.0
    %3648 = vmatpush.msra.mxu0 0.0
    %3649 = vmatpush.msra.mxu0 0.0
    %3650 = vmatpush.msra.mxu0 %v3351
    %3651 = vmatmul.f32.gmra.mxu0 %v3613
    %v3652 = vpop.f32.mrf.mxu0
    %v3653 = vadd.f32 0.0, %v3652
    %3654 = vdwg.mxu0
    %v3656 = vrot.slane %v3633, 4
    %v3658 = vadd.f32 %v3382, %v3656
    %v3659 = vmul.f32 %v3658, 0.5
    %v3660 = vtanh.pop %v3659
    %v3661 = vmul.f32 %v3660, 0.5
    %v3662 = vadd.f32 %v3661, 0.5
    %v3664 = vrot.slane %v3653, 4
    %v3666 = vadd.f32 %v3406, %v3664
    %v3667 = vmul.f32 %v3666, 0.5
    %v3668 = vtanh.pop %v3667
    %v3669 = vmul.f32 %v3668, 0.5
    %v3670 = vadd.f32 %v3669, 0.5
    %3671 = vmatpush.msra.mxu0 0.0
    %3672 = vmatpush.msra.mxu0 0.0
    %3673 = vmatpush.msra.mxu0 0.0
    %3674 = vmatpush.msra.mxu0 0.0
    %3675 = vmatpush.msra.mxu0 0.0
    %3676 = vmatpush.msra.mxu0 0.0
    %3677 = vmatpush.msra.mxu0 0.0
    %3678 = vmatpush.msra.mxu0 0.0
    %3679 = vmatpush.msra.mxu0 0.0
    %3680 = vmatpush.msra.mxu0 0.0
    %3681 = vmatpush.msra.mxu0 0.0
    %3682 = vmatpush.msra.mxu0 0.0
    %3683 = vmatpush.msra.mxu0 0.0
    %3684 = vmatpush.msra.mxu0 0.0
    %3685 = vmatpush.msra.mxu0 0.0
    %3686 = vmatpush.msra.mxu0 %v3352
    %3687 = vmatmul.f32.gmra.mxu0 %v3613
    %v3688 = vpop.f32.mrf.mxu0
    %v3689 = vadd.f32 %v3435, %v3688
    %3690 = vdwg.mxu0
    %v3692 = vrot.slane %v3689, 4
    %v3694 = vmul.f32 %v3662, %v3692
    %v3695 = vadd.f32 %v3430, %v3694
    %v3696 = vtanh.pop %v3695
    %v3697 = vsub.f32 1.0, %v3670
    %v3698 = vmul.f32 %v3697, %v3696
    %v3699 = vrot.slane %v3608, 6
    %v3701 = vmul.f32 %v3670, %v3699
    %v3702 = vadd.f32 %v3698, %v3701
    %vm3703 = vcmask 62468
    %3704 = vst.msk [vmem:[#allocation2] sm:$0x30] %vm3703, %v3702
    %v3706 = vrot.slane %v3702, 4
    %v3707 = vsel %vm3436, %v3706, 0
    %3709 = vmatpush.msra.mxu0 0.0
    %3710 = vmatpush.msra.mxu0 0.0
    %3711 = vmatpush.msra.mxu0 0.0
    %3712 = vmatpush.msra.mxu0 0.0
    %3713 = vmatpush.msra.mxu0 0.0
    %3714 = vmatpush.msra.mxu0 0.0
    %3715 = vmatpush.msra.mxu0 0.0
    %3716 = vmatpush.msra.mxu0 0.0
    %3717 = vmatpush.msra.mxu0 0.0
    %3718 = vmatpush.msra.mxu0 0.0
    %3719 = vmatpush.msra.mxu0 0.0
    %3720 = vmatpush.msra.mxu0 0.0
    %3721 = vmatpush.msra.mxu0 0.0
    %3722 = vmatpush.msra.mxu0 0.0
    %3723 = vmatpush.msra.mxu0 0.0
    %3724 = vmatpush.msra.mxu0 %v3350
    %3725 = vmatmul.f32.gmra.mxu0 %v3707
    %v3726 = vpop.f32.mrf.mxu0
    %v3727 = vadd.f32 0.0, %v3726
    %3728 = vdwg.mxu0
    %3729 = vmatpush.msra.mxu0 0.0
    %3730 = vmatpush.msra.mxu0 0.0
    %3731 = vmatpush.msra.mxu0 0.0
    %3732 = vmatpush.msra.mxu0 0.0
    %3733 = vmatpush.msra.mxu0 0.0
    %3734 = vmatpush.msra.mxu0 0.0
    %3735 = vmatpush.msra.mxu0 0.0
    %3736 = vmatpush.msra.mxu0 0.0
    %3737 = vmatpush.msra.mxu0 0.0
    %3738 = vmatpush.msra.mxu0 0.0
    %3739 = vmatpush.msra.mxu0 0.0
    %3740 = vmatpush.msra.mxu0 0.0
    %3741 = vmatpush.msra.mxu0 0.0
    %3742 = vmatpush.msra.mxu0 0.0
    %3743 = vmatpush.msra.mxu0 0.0
    %3744 = vmatpush.msra.mxu0 %v3351
    %3745 = vmatmul.f32.gmra.mxu0 %v3707
    %v3746 = vpop.f32.mrf.mxu0
    %v3747 = vadd.f32 0.0, %v3746
    %3748 = vdwg.mxu0
    %v3750 = vrot.slane %v3727, 2
    %v3752 = vadd.f32 %v3382, %v3750
    %v3753 = vmul.f32 %v3752, 0.5
    %v3754 = vtanh.pop %v3753
    %v3755 = vmul.f32 %v3754, 0.5
    %v3756 = vadd.f32 %v3755, 0.5
    %v3758 = vrot.slane %v3747, 2
    %v3760 = vadd.f32 %v3406, %v3758
    %v3761 = vmul.f32 %v3760, 0.5
    %v3762 = vtanh.pop %v3761
    %v3763 = vmul.f32 %v3762, 0.5
    %v3764 = vadd.f32 %v3763, 0.5
    %3765 = vmatpush.msra.mxu0 0.0
    %3766 = vmatpush.msra.mxu0 0.0
    %3767 = vmatpush.msra.mxu0 0.0
    %3768 = vmatpush.msra.mxu0 0.0
    %3769 = vmatpush.msra.mxu0 0.0
    %3770 = vmatpush.msra.mxu0 0.0
    %3771 = vmatpush.msra.mxu0 0.0
    %3772 = vmatpush.msra.mxu0 0.0
    %3773 = vmatpush.msra.mxu0 0.0
    %3774 = vmatpush.msra.mxu0 0.0
    %3775 = vmatpush.msra.mxu0 0.0
    %3776 = vmatpush.msra.mxu0 0.0
    %3777 = vmatpush.msra.mxu0 0.0
    %3778 = vmatpush.msra.mxu0 0.0
    %3779 = vmatpush.msra.mxu0 0.0
    %3780 = vmatpush.msra.mxu0 %v3352
    %3781 = vmatmul.f32.gmra.mxu0 %v3707
    %v3782 = vpop.f32.mrf.mxu0
    %v3783 = vadd.f32 %v3435, %v3782
    %3784 = vdwg.mxu0
    %v3786 = vrot.slane %v3783, 2
    %v3788 = vmul.f32 %v3756, %v3786
    %v3789 = vadd.f32 %v3430, %v3788
    %v3790 = vtanh.pop %v3789
    %v3791 = vsub.f32 1.0, %v3764
    %v3792 = vmul.f32 %v3791, %v3790
    %v3793 = vrot.slane %v3702, 6
    %v3795 = vmul.f32 %v3764, %v3793
    %v3796 = vadd.f32 %v3792, %v3795
    %vm3797 = vcmask 64518
    %3798 = vst.msk [vmem:[#allocation2] sm:$0xc0] %vm3797, %v3796
    %v3800 = vrot.slane %v3796, 6
    %v3801 = vsel %vm3436, %v3800, 0
    %3803 = vmatpush.msra.mxu0 0.0
    %3804 = vmatpush.msra.mxu0 0.0
    %3805 = vmatpush.msra.mxu0 0.0
    %3806 = vmatpush.msra.mxu0 0.0
    %3807 = vmatpush.msra.mxu0 0.0
    %3808 = vmatpush.msra.mxu0 0.0
    %3809 = vmatpush.msra.mxu0 0.0
    %3810 = vmatpush.msra.mxu0 0.0
    %3811 = vmatpush.msra.mxu0 0.0
    %3812 = vmatpush.msra.mxu0 0.0
    %3813 = vmatpush.msra.mxu0 0.0
    %3814 = vmatpush.msra.mxu0 0.0
    %3815 = vmatpush.msra.mxu0 0.0
    %3816 = vmatpush.msra.mxu0 0.0
    %3817 = vmatpush.msra.mxu0 0.0
    %3818 = vmatpush.msra.mxu0 %v3350
    %3819 = vmatmul.f32.gmra.mxu0 %v3801
    %v3820 = vpop.f32.mrf.mxu0
    %v3821 = vadd.f32 0.0, %v3820
    %3822 = vdwg.mxu0
    %3823 = vmatpush.msra.mxu0 0.0
    %3824 = vmatpush.msra.mxu0 0.0
    %3825 = vmatpush.msra.mxu0 0.0
    %3826 = vmatpush.msra.mxu0 0.0
    %3827 = vmatpush.msra.mxu0 0.0
    %3828 = vmatpush.msra.mxu0 0.0
    %3829 = vmatpush.msra.mxu0 0.0
    %3830 = vmatpush.msra.mxu0 0.0
    %3831 = vmatpush.msra.mxu0 0.0
    %3832 = vmatpush.msra.mxu0 0.0
    %3833 = vmatpush.msra.mxu0 0.0
    %3834 = vmatpush.msra.mxu0 0.0
    %3835 = vmatpush.msra.mxu0 0.0
    %3836 = vmatpush.msra.mxu0 0.0
    %3837 = vmatpush.msra.mxu0 0.0
    %3838 = vmatpush.msra.mxu0 %v3351
    %3839 = vmatmul.f32.gmra.mxu0 %v3801
    %v3840 = vpop.f32.mrf.mxu0
    %v3841 = vadd.f32 0.0, %v3840
    %3842 = vdwg.mxu0
    %v3843 = vadd.f32 %v3385, %v3821
    %v3844 = vmul.f32 %v3843, 0.5
    %v3845 = vtanh.pop %v3844
    %v3846 = vmul.f32 %v3845, 0.5
    %v3847 = vadd.f32 %v3846, 0.5
    %v3848 = vadd.f32 %v3409, %v3841
    %v3849 = vmul.f32 %v3848, 0.5
    %v3850 = vtanh.pop %v3849
    %v3851 = vmul.f32 %v3850, 0.5
    %v3852 = vadd.f32 %v3851, 0.5
    %3853 = vmatpush.msra.mxu0 0.0
    %3854 = vmatpush.msra.mxu0 0.0
    %3855 = vmatpush.msra.mxu0 0.0
    %3856 = vmatpush.msra.mxu0 0.0
    %3857 = vmatpush.msra.mxu0 0.0
    %3858 = vmatpush.msra.mxu0 0.0
    %3859 = vmatpush.msra.mxu0 0.0
    %3860 = vmatpush.msra.mxu0 0.0
    %3861 = vmatpush.msra.mxu0 0.0
    %3862 = vmatpush.msra.mxu0 0.0
    %3863 = vmatpush.msra.mxu0 0.0
    %3864 = vmatpush.msra.mxu0 0.0
    %3865 = vmatpush.msra.mxu0 0.0
    %3866 = vmatpush.msra.mxu0 0.0
    %3867 = vmatpush.msra.mxu0 0.0
    %3868 = vmatpush.msra.mxu0 %v3352
    %3869 = vmatmul.f32.gmra.mxu0 %v3801
    %v3870 = vpop.f32.mrf.mxu0
    %v3871 = vadd.f32 %v3435, %v3870
    %3872 = vdwg.mxu0
    %v3873 = vmul.f32 %v3847, %v3871
    %v3874 = vadd.f32 %v3433, %v3873
    %v3875 = vtanh.pop %v3874
    %v3876 = vsub.f32 1.0, %v3852
    %v3877 = vmul.f32 %v3876, %v3875
    %v3879 = vmul.f32 %v3852, %v3800
    %v3880 = vadd.f32 %v3877, %v3879
    %3881 = vst.msk [vmem:[#allocation2 + $0x8] sm:$0x3] %vm3516, %v3880
    %v3883 = vsel %vm3436, %v3880, 0
    %3885 = vmatpush.msra.mxu0 0.0
    %3886 = vmatpush.msra.mxu0 0.0
    %3887 = vmatpush.msra.mxu0 0.0
    %3888 = vmatpush.msra.mxu0 0.0
    %3889 = vmatpush.msra.mxu0 0.0
    %3890 = vmatpush.msra.mxu0 0.0
    %3891 = vmatpush.msra.mxu0 0.0
    %3892 = vmatpush.msra.mxu0 0.0
    %3893 = vmatpush.msra.mxu0 0.0
    %3894 = vmatpush.msra.mxu0 0.0
    %3895 = vmatpush.msra.mxu0 0.0
    %3896 = vmatpush.msra.mxu0 0.0
    %3897 = vmatpush.msra.mxu0 0.0
    %3898 = vmatpush.msra.mxu0 0.0
    %3899 = vmatpush.msra.mxu0 0.0
    %3900 = vmatpush.msra.mxu0 %v3350
    %3901 = vmatmul.f32.gmra.mxu0 %v3883
    %v3902 = vpop.f32.mrf.mxu0
    %v3903 = vadd.f32 0.0, %v3902
    %3904 = vdwg.mxu0
    %3905 = vmatpush.msra.mxu0 0.0
    %3906 = vmatpush.msra.mxu0 0.0
    %3907 = vmatpush.msra.mxu0 0.0
    %3908 = vmatpush.msra.mxu0 0.0
    %3909 = vmatpush.msra.mxu0 0.0
    %3910 = vmatpush.msra.mxu0 0.0
    %3911 = vmatpush.msra.mxu0 0.0
    %3912 = vmatpush.msra.mxu0 0.0
    %3913 = vmatpush.msra.mxu0 0.0
    %3914 = vmatpush.msra.mxu0 0.0
    %3915 = vmatpush.msra.mxu0 0.0
    %3916 = vmatpush.msra.mxu0 0.0
    %3917 = vmatpush.msra.mxu0 0.0
    %3918 = vmatpush.msra.mxu0 0.0
    %3919 = vmatpush.msra.mxu0 0.0
    %3920 = vmatpush.msra.mxu0 %v3351
    %3921 = vmatmul.f32.gmra.mxu0 %v3883
    %v3922 = vpop.f32.mrf.mxu0
    %v3923 = vadd.f32 0.0, %v3922
    %3924 = vdwg.mxu0
    %v3926 = vrot.slane %v3903, 6
    %v3928 = vadd.f32 %v3385, %v3926
    %v3929 = vmul.f32 %v3928, 0.5
    %v3930 = vtanh.pop %v3929
    %v3931 = vmul.f32 %v3930, 0.5
    %v3932 = vadd.f32 %v3931, 0.5
    %v3934 = vrot.slane %v3923, 6
    %v3936 = vadd.f32 %v3409, %v3934
    %v3937 = vmul.f32 %v3936, 0.5
    %v3938 = vtanh.pop %v3937
    %v3939 = vmul.f32 %v3938, 0.5
    %v3940 = vadd.f32 %v3939, 0.5
    %3941 = vmatpush.msra.mxu0 0.0
    %3942 = vmatpush.msra.mxu0 0.0
    %3943 = vmatpush.msra.mxu0 0.0
    %3944 = vmatpush.msra.mxu0 0.0
    %3945 = vmatpush.msra.mxu0 0.0
    %3946 = vmatpush.msra.mxu0 0.0
    %3947 = vmatpush.msra.mxu0 0.0
    %3948 = vmatpush.msra.mxu0 0.0
    %3949 = vmatpush.msra.mxu0 0.0
    %3950 = vmatpush.msra.mxu0 0.0
    %3951 = vmatpush.msra.mxu0 0.0
    %3952 = vmatpush.msra.mxu0 0.0
    %3953 = vmatpush.msra.mxu0 0.0
    %3954 = vmatpush.msra.mxu0 0.0
    %3955 = vmatpush.msra.mxu0 0.0
    %3956 = vmatpush.msra.mxu0 %v3352
    %3957 = vmatmul.f32.gmra.mxu0 %v3883
    %v3958 = vpop.f32.mrf.mxu0
    %v3959 = vadd.f32 %v3435, %v3958
    %3960 = vdwg.mxu0
    %v3962 = vrot.slane %v3959, 6
    %v3964 = vmul.f32 %v3932, %v3962
    %v3965 = vadd.f32 %v3433, %v3964
    %v3966 = vtanh.pop %v3965
    %v3967 = vsub.f32 1.0, %v3940
    %v3968 = vmul.f32 %v3967, %v3966
    %v3969 = vrot.slane %v3880, 6
    %v3971 = vmul.f32 %v3940, %v3969
    %v3972 = vadd.f32 %v3968, %v3971
    %3973 = vst.msk [vmem:[#allocation2 + $0x8] sm:$0xc] %vm3609, %v3972
    %v3975 = vrot.slane %v3972, 2
    %v3976 = vsel %vm3436, %v3975, 0
    %3978 = vmatpush.msra.mxu0 0.0
    %3979 = vmatpush.msra.mxu0 0.0
    %3980 = vmatpush.msra.mxu0 0.0
    %3981 = vmatpush.msra.mxu0 0.0
    %3982 = vmatpush.msra.mxu0 0.0
    %3983 = vmatpush.msra.mxu0 0.0
    %3984 = vmatpush.msra.mxu0 0.0
    %3985 = vmatpush.msra.mxu0 0.0
    %3986 = vmatpush.msra.mxu0 0.0
    %3987 = vmatpush.msra.mxu0 0.0
    %3988 = vmatpush.msra.mxu0 0.0
    %3989 = vmatpush.msra.mxu0 0.0
    %3990 = vmatpush.msra.mxu0 0.0
    %3991 = vmatpush.msra.mxu0 0.0
    %3992 = vmatpush.msra.mxu0 0.0
    %3993 = vmatpush.msra.mxu0 %v3350
    %3994 = vmatmul.f32.gmra.mxu0 %v3976
    %v3995 = vpop.f32.mrf.mxu0
    %v3996 = vadd.f32 0.0, %v3995
    %3997 = vdwg.mxu0
    %3998 = vmatpush.msra.mxu0 0.0
    %3999 = vmatpush.msra.mxu0 0.0
    %4000 = vmatpush.msra.mxu0 0.0
    %4001 = vmatpush.msra.mxu0 0.0
    %4002 = vmatpush.msra.mxu0 0.0
    %4003 = vmatpush.msra.mxu0 0.0
    %4004 = vmatpush.msra.mxu0 0.0
    %4005 = vmatpush.msra.mxu0 0.0
    %4006 = vmatpush.msra.mxu0 0.0
    %4007 = vmatpush.msra.mxu0 0.0
    %4008 = vmatpush.msra.mxu0 0.0
    %4009 = vmatpush.msra.mxu0 0.0
    %4010 = vmatpush.msra.mxu0 0.0
    %4011 = vmatpush.msra.mxu0 0.0
    %4012 = vmatpush.msra.mxu0 0.0
    %4013 = vmatpush.msra.mxu0 %v3351
    %4014 = vmatmul.f32.gmra.mxu0 %v3976
    %v4015 = vpop.f32.mrf.mxu0
    %v4016 = vadd.f32 0.0, %v4015
    %4017 = vdwg.mxu0
    %v4019 = vrot.slane %v3996, 4
    %v4021 = vadd.f32 %v3385, %v4019
    %v4022 = vmul.f32 %v4021, 0.5
    %v4023 = vtanh.pop %v4022
    %v4024 = vmul.f32 %v4023, 0.5
    %v4025 = vadd.f32 %v4024, 0.5
    %v4027 = vrot.slane %v4016, 4
    %v4029 = vadd.f32 %v3409, %v4027
    %v4030 = vmul.f32 %v4029, 0.5
    %v4031 = vtanh.pop %v4030
    %v4032 = vmul.f32 %v4031, 0.5
    %v4033 = vadd.f32 %v4032, 0.5
    %4034 = vmatpush.msra.mxu0 0.0
    %4035 = vmatpush.msra.mxu0 0.0
    %4036 = vmatpush.msra.mxu0 0.0
    %4037 = vmatpush.msra.mxu0 0.0
    %4038 = vmatpush.msra.mxu0 0.0
    %4039 = vmatpush.msra.mxu0 0.0
    %4040 = vmatpush.msra.mxu0 0.0
    %4041 = vmatpush.msra.mxu0 0.0
    %4042 = vmatpush.msra.mxu0 0.0
    %4043 = vmatpush.msra.mxu0 0.0
    %4044 = vmatpush.msra.mxu0 0.0
    %4045 = vmatpush.msra.mxu0 0.0
    %4046 = vmatpush.msra.mxu0 0.0
    %4047 = vmatpush.msra.mxu0 0.0
    %4048 = vmatpush.msra.mxu0 0.0
    %4049 = vmatpush.msra.mxu0 %v3352
    %4050 = vmatmul.f32.gmra.mxu0 %v3976
    %v4051 = vpop.f32.mrf.mxu0
    %v4052 = vadd.f32 %v3435, %v4051
    %4053 = vdwg.mxu0
    %v4055 = vrot.slane %v4052, 4
    %v4057 = vmul.f32 %v4025, %v4055
    %v4058 = vadd.f32 %v3433, %v4057
    %v4059 = vtanh.pop %v4058
    %v4060 = vsub.f32 1.0, %v4033
    %v4061 = vmul.f32 %v4060, %v4059
    %v4062 = vrot.slane %v3972, 6
    %v4064 = vmul.f32 %v4033, %v4062
    %v4065 = vadd.f32 %v4061, %v4064
    %4066 = vst.msk [vmem:[#allocation2 + $0x8] sm:$0x30] %vm3703, %v4065
    %v4068 = vrot.slane %v4065, 4
    %v4069 = vsel %vm3436, %v4068, 0
    %4071 = vmatpush.msra.mxu0 0.0
    %4072 = vmatpush.msra.mxu0 0.0
    %4073 = vmatpush.msra.mxu0 0.0
    %4074 = vmatpush.msra.mxu0 0.0
    %4075 = vmatpush.msra.mxu0 0.0
    %4076 = vmatpush.msra.mxu0 0.0
    %4077 = vmatpush.msra.mxu0 0.0
    %4078 = vmatpush.msra.mxu0 0.0
    %4079 = vmatpush.msra.mxu0 0.0
    %4080 = vmatpush.msra.mxu0 0.0
    %4081 = vmatpush.msra.mxu0 0.0
    %4082 = vmatpush.msra.mxu0 0.0
    %4083 = vmatpush.msra.mxu0 0.0
    %4084 = vmatpush.msra.mxu0 0.0
    %4085 = vmatpush.msra.mxu0 0.0
    %4086 = vmatpush.msra.mxu0 %v3350
    %4087 = vmatmul.f32.gmra.mxu0 %v4069
    %v4088 = vpop.f32.mrf.mxu0
    %v4089 = vadd.f32 0.0, %v4088
    %4090 = vdwg.mxu0
    %4091 = vmatpush.msra.mxu0 0.0
    %4092 = vmatpush.msra.mxu0 0.0
    %4093 = vmatpush.msra.mxu0 0.0
    %4094 = vmatpush.msra.mxu0 0.0
    %4095 = vmatpush.msra.mxu0 0.0
    %4096 = vmatpush.msra.mxu0 0.0
    %4097 = vmatpush.msra.mxu0 0.0
    %4098 = vmatpush.msra.mxu0 0.0
    %4099 = vmatpush.msra.mxu0 0.0
    %4100 = vmatpush.msra.mxu0 0.0
    %4101 = vmatpush.msra.mxu0 0.0
    %4102 = vmatpush.msra.mxu0 0.0
    %4103 = vmatpush.msra.mxu0 0.0
    %4104 = vmatpush.msra.mxu0 0.0
    %4105 = vmatpush.msra.mxu0 0.0
    %4106 = vmatpush.msra.mxu0 %v3351
    %4107 = vmatmul.f32.gmra.mxu0 %v4069
    %v4108 = vpop.f32.mrf.mxu0
    %v4109 = vadd.f32 0.0, %v4108
    %4110 = vdwg.mxu0
    %v4112 = vrot.slane %v4089, 2
    %v4114 = vadd.f32 %v3385, %v4112
    %v4115 = vmul.f32 %v4114, 0.5
    %v4116 = vtanh.pop %v4115
    %v4117 = vmul.f32 %v4116, 0.5
    %v4118 = vadd.f32 %v4117, 0.5
    %v4120 = vrot.slane %v4109, 2
    %v4122 = vadd.f32 %v3409, %v4120
    %v4123 = vmul.f32 %v4122, 0.5
    %v4124 = vtanh.pop %v4123
    %v4125 = vmul.f32 %v4124, 0.5
    %v4126 = vadd.f32 %v4125, 0.5
    %4127 = vmatpush.msra.mxu0 0.0
    %4128 = vmatpush.msra.mxu0 0.0
    %4129 = vmatpush.msra.mxu0 0.0
    %4130 = vmatpush.msra.mxu0 0.0
    %4131 = vmatpush.msra.mxu0 0.0
    %4132 = vmatpush.msra.mxu0 0.0
    %4133 = vmatpush.msra.mxu0 0.0
    %4134 = vmatpush.msra.mxu0 0.0
    %4135 = vmatpush.msra.mxu0 0.0
    %4136 = vmatpush.msra.mxu0 0.0
    %4137 = vmatpush.msra.mxu0 0.0
    %4138 = vmatpush.msra.mxu0 0.0
    %4139 = vmatpush.msra.mxu0 0.0
    %4140 = vmatpush.msra.mxu0 0.0
    %4141 = vmatpush.msra.mxu0 0.0
    %4142 = vmatpush.msra.mxu0 %v3352
    %4143 = vmatmul.f32.gmra.mxu0 %v4069
    %v4144 = vpop.f32.mrf.mxu0
    %v4145 = vadd.f32 %v3435, %v4144
    %4146 = vdwg.mxu0
    %v4148 = vrot.slane %v4145, 2
    %v4150 = vmul.f32 %v4118, %v4148
    %v4151 = vadd.f32 %v3433, %v4150
    %v4152 = vtanh.pop %v4151
    %v4153 = vsub.f32 1.0, %v4126
    %v4154 = vmul.f32 %v4153, %v4152
    %v4155 = vrot.slane %v4065, 6
    %v4157 = vmul.f32 %v4126, %v4155
    %v4158 = vadd.f32 %v4154, %v4157
    %4159 = vst.msk [vmem:[#allocation2 + $0x8] sm:$0xc0] %vm3797, %v4158
    %v4160 = vld [vmem:[#allocation2] sm:$0xff]
    %v4161 = vld [vmem:[#allocation2 + $0x8] sm:$0xff]
    %v4162 = vld [vmem:[#allocation5 + $0x2b0] sm:$0xff]
    %v4163 = vld [vmem:[#allocation5 + $0x2b8] sm:$0xff]
    %v4164 = vld [vmem:[#allocation5 + $0x2c0] sm:$0xff]
    %v4165 = vld [vmem:[#allocation5 + $0x2c8] sm:$0xff]
    %v4166 = vld [vmem:[#allocation5 + $0x2d0] sm:$0xff]
    %v4167 = vld [vmem:[#allocation5 + $0x2d8] sm:$0xff]
    %v4168 = vld [vmem:[#allocation5 + $0x2e0] sm:$0x1]
    %v4169 = vld [vmem:[#allocation5 + $0x2e1] sm:$0x1]
    %v4170 = vld [vmem:[#allocation5 + $0x2e2] sm:$0x1]
    %v4171 = vld [vmem:[#allocation5 + $0x2e3] sm:$0x1]
    %v4172 = vperm.slane %v4168, 0
    %v4174 = vsel %vm3436, %v4160, 0
    %v4177 = vsel %vm3436, %v4161, 0
    %4179 = vmatpush.msra.mxu0 0.0
    %4180 = vmatpush.msra.mxu0 0.0
    %4181 = vmatpush.msra.mxu0 0.0
    %4182 = vmatpush.msra.mxu0 0.0
    %4183 = vmatpush.msra.mxu0 0.0
    %4184 = vmatpush.msra.mxu0 0.0
    %4185 = vmatpush.msra.mxu0 0.0
    %4186 = vmatpush.msra.mxu0 0.0
    %4187 = vmatpush.msra.mxu0 0.0
    %4188 = vmatpush.msra.mxu0 0.0
    %4189 = vmatpush.msra.mxu0 0.0
    %4190 = vmatpush.msra.mxu0 0.0
    %4191 = vmatpush.msra.mxu0 0.0
    %4192 = vmatpush.msra.mxu0 0.0
    %4193 = vmatpush.msra.mxu0 0.0
    %4194 = vmatpush.msra.mxu0 %v4162
    %4195 = vmatmul.f32.gmra.mxu0 %v4174
    %v4196 = vpop.f32.mrf.mxu0
    %v4197 = vadd.f32 %v4172, %v4196
    %4198 = vmatmul.f32.gmra.mxu0 %v4177
    %v4199 = vpop.f32.mrf.mxu0
    %v4200 = vadd.f32 %v4172, %v4199
    %4201 = vdwg.mxu0
    %v4202 = vperm.slane %v4169, 0
    %4203 = vmatpush.msra.mxu0 0.0
    %4204 = vmatpush.msra.mxu0 0.0
    %4205 = vmatpush.msra.mxu0 0.0
    %4206 = vmatpush.msra.mxu0 0.0
    %4207 = vmatpush.msra.mxu0 0.0
    %4208 = vmatpush.msra.mxu0 0.0
    %4209 = vmatpush.msra.mxu0 0.0
    %4210 = vmatpush.msra.mxu0 0.0
    %4211 = vmatpush.msra.mxu0 0.0
    %4212 = vmatpush.msra.mxu0 0.0
    %4213 = vmatpush.msra.mxu0 0.0
    %4214 = vmatpush.msra.mxu0 0.0
    %4215 = vmatpush.msra.mxu0 0.0
    %4216 = vmatpush.msra.mxu0 0.0
    %4217 = vmatpush.msra.mxu0 0.0
    %4218 = vmatpush.msra.mxu0 %v4163
    %4219 = vmatmul.f32.gmra.mxu0 %v4174
    %v4220 = vpop.f32.mrf.mxu0
    %v4221 = vadd.f32 %v4202, %v4220
    %4222 = vmatmul.f32.gmra.mxu0 %v4177
    %v4223 = vpop.f32.mrf.mxu0
    %v4224 = vadd.f32 %v4202, %v4223
    %4225 = vdwg.mxu0
    %v4226 = vperm.slane %v4170, 0
    %4227 = vmatpush.msra.mxu0 0.0
    %4228 = vmatpush.msra.mxu0 0.0
    %4229 = vmatpush.msra.mxu0 0.0
    %4230 = vmatpush.msra.mxu0 0.0
    %4231 = vmatpush.msra.mxu0 0.0
    %4232 = vmatpush.msra.mxu0 0.0
    %4233 = vmatpush.msra.mxu0 0.0
    %4234 = vmatpush.msra.mxu0 0.0
    %4235 = vmatpush.msra.mxu0 0.0
    %4236 = vmatpush.msra.mxu0 0.0
    %4237 = vmatpush.msra.mxu0 0.0
    %4238 = vmatpush.msra.mxu0 0.0
    %4239 = vmatpush.msra.mxu0 0.0
    %4240 = vmatpush.msra.mxu0 0.0
    %4241 = vmatpush.msra.mxu0 0.0
    %4242 = vmatpush.msra.mxu0 %v4164
    %4243 = vmatmul.f32.gmra.mxu0 %v4174
    %v4244 = vpop.f32.mrf.mxu0
    %v4245 = vadd.f32 %v4226, %v4244
    %4246 = vmatmul.f32.gmra.mxu0 %v4177
    %v4247 = vpop.f32.mrf.mxu0
    %v4248 = vadd.f32 %v4226, %v4247
    %4249 = vdwg.mxu0
    %v4250 = vperm.slane %v4171, 0
    %4251 = vmatpush.msra.mxu0 0.0
    %4252 = vmatpush.msra.mxu0 0.0
    %4253 = vmatpush.msra.mxu0 0.0
    %4254 = vmatpush.msra.mxu0 0.0
    %4255 = vmatpush.msra.mxu0 0.0
    %4256 = vmatpush.msra.mxu0 0.0
    %4257 = vmatpush.msra.mxu0 0.0
    %4258 = vmatpush.msra.mxu0 0.0
    %4259 = vmatpush.msra.mxu0 0.0
    %4260 = vmatpush.msra.mxu0 0.0
    %4261 = vmatpush.msra.mxu0 0.0
    %4262 = vmatpush.msra.mxu0 0.0
    %4263 = vmatpush.msra.mxu0 0.0
    %4264 = vmatpush.msra.mxu0 0.0
    %4265 = vmatpush.msra.mxu0 0.0
    %4266 = vmatpush.msra.mxu0 %v4165
    %4267 = vmatmul.f32.gmra.mxu0 %v3437
    %v4268 = vpop.f32.mrf.mxu0
    %v4269 = vadd.f32 0.0, %v4268
    %4270 = vdwg.mxu0
    %4271 = vmatpush.msra.mxu0 0.0
    %4272 = vmatpush.msra.mxu0 0.0
    %4273 = vmatpush.msra.mxu0 0.0
    %4274 = vmatpush.msra.mxu0 0.0
    %4275 = vmatpush.msra.mxu0 0.0
    %4276 = vmatpush.msra.mxu0 0.0
    %4277 = vmatpush.msra.mxu0 0.0
    %4278 = vmatpush.msra.mxu0 0.0
    %4279 = vmatpush.msra.mxu0 0.0
    %4280 = vmatpush.msra.mxu0 0.0
    %4281 = vmatpush.msra.mxu0 0.0
    %4282 = vmatpush.msra.mxu0 0.0
    %4283 = vmatpush.msra.mxu0 0.0
    %4284 = vmatpush.msra.mxu0 0.0
    %4285 = vmatpush.msra.mxu0 0.0
    %4286 = vmatpush.msra.mxu0 %v4166
    %4287 = vmatmul.f32.gmra.mxu0 %v3437
    %v4288 = vpop.f32.mrf.mxu0
    %v4289 = vadd.f32 0.0, %v4288
    %4290 = vdwg.mxu0
    %v4291 = vadd.f32 %v4197, %v4269
    %v4292 = vmul.f32 %v4291, 0.5
    %v4293 = vtanh.pop %v4292
    %v4294 = vmul.f32 %v4293, 0.5
    %v4295 = vadd.f32 %v4294, 0.5
    %v4296 = vadd.f32 %v4221, %v4289
    %v4297 = vmul.f32 %v4296, 0.5
    %v4298 = vtanh.pop %v4297
    %v4299 = vmul.f32 %v4298, 0.5
    %v4300 = vadd.f32 %v4299, 0.5
    %4301 = vmatpush.msra.mxu0 0.0
    %4302 = vmatpush.msra.mxu0 0.0
    %4303 = vmatpush.msra.mxu0 0.0
    %4304 = vmatpush.msra.mxu0 0.0
    %4305 = vmatpush.msra.mxu0 0.0
    %4306 = vmatpush.msra.mxu0 0.0
    %4307 = vmatpush.msra.mxu0 0.0
    %4308 = vmatpush.msra.mxu0 0.0
    %4309 = vmatpush.msra.mxu0 0.0
    %4310 = vmatpush.msra.mxu0 0.0
    %4311 = vmatpush.msra.mxu0 0.0
    %4312 = vmatpush.msra.mxu0 0.0
    %4313 = vmatpush.msra.mxu0 0.0
    %4314 = vmatpush.msra.mxu0 0.0
    %4315 = vmatpush.msra.mxu0 0.0
    %4316 = vmatpush.msra.mxu0 %v4167
    %4317 = vmatmul.f32.gmra.mxu0 %v3437
    %v4318 = vpop.f32.mrf.mxu0
    %v4319 = vadd.f32 %v4250, %v4318
    %4320 = vdwg.mxu0
    %v4321 = vmul.f32 %v4295, %v4319
    %v4322 = vadd.f32 %v4245, %v4321
    %v4323 = vtanh.pop %v4322
    %v4324 = vsub.f32 1.0, %v4300
    %v4325 = vmul.f32 %v4324, %v4323
    %v4326 = vmul.f32 %v4300, 0.0
    %v4327 = vadd.f32 %v4325, %v4326
    %4328 = vst.msk [vmem:[#allocation2] sm:$0x3] %vm3516, %v4327
    %v4330 = vsel %vm3436, %v4327, 0
    %4332 = vmatpush.msra.mxu0 0.0
    %4333 = vmatpush.msra.mxu0 0.0
    %4334 = vmatpush.msra.mxu0 0.0
    %4335 = vmatpush.msra.mxu0 0.0
    %4336 = vmatpush.msra.mxu0 0.0
    %4337 = vmatpush.msra.mxu0 0.0
    %4338 = vmatpush.msra.mxu0 0.0
    %4339 = vmatpush.msra.mxu0 0.0
    %4340 = vmatpush.msra.mxu0 0.0
    %4341 = vmatpush.msra.mxu0 0.0
    %4342 = vmatpush.msra.mxu0 0.0
    %4343 = vmatpush.msra.mxu0 0.0
    %4344 = vmatpush.msra.mxu0 0.0
    %4345 = vmatpush.msra.mxu0 0.0
    %4346 = vmatpush.msra.mxu0 0.0
    %4347 = vmatpush.msra.mxu0 %v4165
    %4348 = vmatmul.f32.gmra.mxu0 %v4330
    %v4349 = vpop.f32.mrf.mxu0
    %v4350 = vadd.f32 0.0, %v4349
    %4351 = vdwg.mxu0
    %4352 = vmatpush.msra.mxu0 0.0
    %4353 = vmatpush.msra.mxu0 0.0
    %4354 = vmatpush.msra.mxu0 0.0
    %4355 = vmatpush.msra.mxu0 0.0
    %4356 = vmatpush.msra.mxu0 0.0
    %4357 = vmatpush.msra.mxu0 0.0
    %4358 = vmatpush.msra.mxu0 0.0
    %4359 = vmatpush.msra.mxu0 0.0
    %4360 = vmatpush.msra.mxu0 0.0
    %4361 = vmatpush.msra.mxu0 0.0
    %4362 = vmatpush.msra.mxu0 0.0
    %4363 = vmatpush.msra.mxu0 0.0
    %4364 = vmatpush.msra.mxu0 0.0
    %4365 = vmatpush.msra.mxu0 0.0
    %4366 = vmatpush.msra.mxu0 0.0
    %4367 = vmatpush.msra.mxu0 %v4166
    %4368 = vmatmul.f32.gmra.mxu0 %v4330
    %v4369 = vpop.f32.mrf.mxu0
    %v4370 = vadd.f32 0.0, %v4369
    %4371 = vdwg.mxu0
    %v4373 = vrot.slane %v4350, 6
    %v4375 = vadd.f32 %v4197, %v4373
    %v4376 = vmul.f32 %v4375, 0.5
    %v4377 = vtanh.pop %v4376
    %v4378 = vmul.f32 %v4377, 0.5
    %v4379 = vadd.f32 %v4378, 0.5
    %v4381 = vrot.slane %v4370, 6
    %v4383 = vadd.f32 %v4221, %v4381
    %v4384 = vmul.f32 %v4383, 0.5
    %v4385 = vtanh.pop %v4384
    %v4386 = vmul.f32 %v4385, 0.5
    %v4387 = vadd.f32 %v4386, 0.5
    %4388 = vmatpush.msra.mxu0 0.0
    %4389 = vmatpush.msra.mxu0 0.0
    %4390 = vmatpush.msra.mxu0 0.0
    %4391 = vmatpush.msra.mxu0 0.0
    %4392 = vmatpush.msra.mxu0 0.0
    %4393 = vmatpush.msra.mxu0 0.0
    %4394 = vmatpush.msra.mxu0 0.0
    %4395 = vmatpush.msra.mxu0 0.0
    %4396 = vmatpush.msra.mxu0 0.0
    %4397 = vmatpush.msra.mxu0 0.0
    %4398 = vmatpush.msra.mxu0 0.0
    %4399 = vmatpush.msra.mxu0 0.0
    %4400 = vmatpush.msra.mxu0 0.0
    %4401 = vmatpush.msra.mxu0 0.0
    %4402 = vmatpush.msra.mxu0 0.0
    %4403 = vmatpush.msra.mxu0 %v4167
    %4404 = vmatmul.f32.gmra.mxu0 %v4330
    %v4405 = vpop.f32.mrf.mxu0
    %v4406 = vadd.f32 %v4250, %v4405
    %4407 = vdwg.mxu0
    %v4409 = vrot.slane %v4406, 6
    %v4411 = vmul.f32 %v4379, %v4409
    %v4412 = vadd.f32 %v4245, %v4411
    %v4413 = vtanh.pop %v4412
    %v4414 = vsub.f32 1.0, %v4387
    %v4415 = vmul.f32 %v4414, %v4413
    %v4416 = vrot.slane %v4327, 6
    %v4418 = vmul.f32 %v4387, %v4416
    %v4419 = vadd.f32 %v4415, %v4418
    %4420 = vst.msk [vmem:[#allocation2] sm:$0xc] %vm3609, %v4419
    %v4422 = vrot.slane %v4419, 2
    %v4423 = vsel %vm3436, %v4422, 0
    %4425 = vmatpush.msra.mxu0 0.0
    %4426 = vmatpush.msra.mxu0 0.0
    %4427 = vmatpush.msra.mxu0 0.0
    %4428 = vmatpush.msra.mxu0 0.0
    %4429 = vmatpush.msra.mxu0 0.0
    %4430 = vmatpush.msra.mxu0 0.0
    %4431 = vmatpush.msra.mxu0 0.0
    %4432 = vmatpush.msra.mxu0 0.0
    %4433 = vmatpush.msra.mxu0 0.0
    %4434 = vmatpush.msra.mxu0 0.0
    %4435 = vmatpush.msra.mxu0 0.0
    %4436 = vmatpush.msra.mxu0 0.0
    %4437 = vmatpush.msra.mxu0 0.0
    %4438 = vmatpush.msra.mxu0 0.0
    %4439 = vmatpush.msra.mxu0 0.0
    %4440 = vmatpush.msra.mxu0 %v4165
    %4441 = vmatmul.f32.gmra.mxu0 %v4423
    %v4442 = vpop.f32.mrf.mxu0
    %v4443 = vadd.f32 0.0, %v4442
    %4444 = vdwg.mxu0
    %4445 = vmatpush.msra.mxu0 0.0
    %4446 = vmatpush.msra.mxu0 0.0
    %4447 = vmatpush.msra.mxu0 0.0
    %4448 = vmatpush.msra.mxu0 0.0
    %4449 = vmatpush.msra.mxu0 0.0
    %4450 = vmatpush.msra.mxu0 0.0
    %4451 = vmatpush.msra.mxu0 0.0
    %4452 = vmatpush.msra.mxu0 0.0
    %4453 = vmatpush.msra.mxu0 0.0
    %4454 = vmatpush.msra.mxu0 0.0
    %4455 = vmatpush.msra.mxu0 0.0
    %4456 = vmatpush.msra.mxu0 0.0
    %4457 = vmatpush.msra.mxu0 0.0
    %4458 = vmatpush.msra.mxu0 0.0
    %4459 = vmatpush.msra.mxu0 0.0
    %4460 = vmatpush.msra.mxu0 %v4166
    %4461 = vmatmul.f32.gmra.mxu0 %v4423
    %v4462 = vpop.f32.mrf.mxu0
    %v4463 = vadd.f32 0.0, %v4462
    %4464 = vdwg.mxu0
    %v4466 = vrot.slane %v4443, 4
    %v4468 = vadd.f32 %v4197, %v4466
    %v4469 = vmul.f32 %v4468, 0.5
    %v4470 = vtanh.pop %v4469
    %v4471 = vmul.f32 %v4470, 0.5
    %v4472 = vadd.f32 %v4471, 0.5
    %v4474 = vrot.slane %v4463, 4
    %v4476 = vadd.f32 %v4221, %v4474
    %v4477 = vmul.f32 %v4476, 0.5
    %v4478 = vtanh.pop %v4477
    %v4479 = vmul.f32 %v4478, 0.5
    %v4480 = vadd.f32 %v4479, 0.5
    %4481 = vmatpush.msra.mxu0 0.0
    %4482 = vmatpush.msra.mxu0 0.0
    %4483 = vmatpush.msra.mxu0 0.0
    %4484 = vmatpush.msra.mxu0 0.0
    %4485 = vmatpush.msra.mxu0 0.0
    %4486 = vmatpush.msra.mxu0 0.0
    %4487 = vmatpush.msra.mxu0 0.0
    %4488 = vmatpush.msra.mxu0 0.0
    %4489 = vmatpush.msra.mxu0 0.0
    %4490 = vmatpush.msra.mxu0 0.0
    %4491 = vmatpush.msra.mxu0 0.0
    %4492 = vmatpush.msra.mxu0 0.0
    %4493 = vmatpush.msra.mxu0 0.0
    %4494 = vmatpush.msra.mxu0 0.0
    %4495 = vmatpush.msra.mxu0 0.0
    %4496 = vmatpush.msra.mxu0 %v4167
    %4497 = vmatmul.f32.gmra.mxu0 %v4423
    %v4498 = vpop.f32.mrf.mxu0
    %v4499 = vadd.f32 %v4250, %v4498
    %4500 = vdwg.mxu0
    %v4502 = vrot.slane %v4499, 4
    %v4504 = vmul.f32 %v4472, %v4502
    %v4505 = vadd.f32 %v4245, %v4504
    %v4506 = vtanh.pop %v4505
    %v4507 = vsub.f32 1.0, %v4480
    %v4508 = vmul.f32 %v4507, %v4506
    %v4509 = vrot.slane %v4419, 6
    %v4511 = vmul.f32 %v4480, %v4509
    %v4512 = vadd.f32 %v4508, %v4511
    %4513 = vst.msk [vmem:[#allocation2] sm:$0x30] %vm3703, %v4512
    %v4515 = vrot.slane %v4512, 4
    %v4516 = vsel %vm3436, %v4515, 0
    %4518 = vmatpush.msra.mxu0 0.0
    %4519 = vmatpush.msra.mxu0 0.0
    %4520 = vmatpush.msra.mxu0 0.0
    %4521 = vmatpush.msra.mxu0 0.0
    %4522 = vmatpush.msra.mxu0 0.0
    %4523 = vmatpush.msra.mxu0 0.0
    %4524 = vmatpush.msra.mxu0 0.0
    %4525 = vmatpush.msra.mxu0 0.0
    %4526 = vmatpush.msra.mxu0 0.0
    %4527 = vmatpush.msra.mxu0 0.0
    %4528 = vmatpush.msra.mxu0 0.0
    %4529 = vmatpush.msra.mxu0 0.0
    %4530 = vmatpush.msra.mxu0 0.0
    %4531 = vmatpush.msra.mxu0 0.0
    %4532 = vmatpush.msra.mxu0 0.0
    %4533 = vmatpush.msra.mxu0 %v4165
    %4534 = vmatmul.f32.gmra.mxu0 %v4516
    %v4535 = vpop.f32.mrf.mxu0
    %v4536 = vadd.f32 0.0, %v4535
    %4537 = vdwg.mxu0
    %4538 = vmatpush.msra.mxu0 0.0
    %4539 = vmatpush.msra.mxu0 0.0
    %4540 = vmatpush.msra.mxu0 0.0
    %4541 = vmatpush.msra.mxu0 0.0
    %4542 = vmatpush.msra.mxu0 0.0
    %4543 = vmatpush.msra.mxu0 0.0
    %4544 = vmatpush.msra.mxu0 0.0
    %4545 = vmatpush.msra.mxu0 0.0
    %4546 = vmatpush.msra.mxu0 0.0
    %4547 = vmatpush.msra.mxu0 0.0
    %4548 = vmatpush.msra.mxu0 0.0
    %4549 = vmatpush.msra.mxu0 0.0
    %4550 = vmatpush.msra.mxu0 0.0
    %4551 = vmatpush.msra.mxu0 0.0
    %4552 = vmatpush.msra.mxu0 0.0
    %4553 = vmatpush.msra.mxu0 %v4166
    %4554 = vmatmul.f32.gmra.mxu0 %v4516
    %v4555 = vpop.f32.mrf.mxu0
    %v4556 = vadd.f32 0.0, %v4555
    %4557 = vdwg.mxu0
    %v4559 = vrot.slane %v4536, 2
    %v4561 = vadd.f32 %v4197, %v4559
    %v4562 = vmul.f32 %v4561, 0.5
    %v4563 = vtanh.pop %v4562
    %v4564 = vmul.f32 %v4563, 0.5
    %v4565 = vadd.f32 %v4564, 0.5
    %v4567 = vrot.slane %v4556, 2
    %v4569 = vadd.f32 %v4221, %v4567
    %v4570 = vmul.f32 %v4569, 0.5
    %v4571 = vtanh.pop %v4570
    %v4572 = vmul.f32 %v4571, 0.5
    %v4573 = vadd.f32 %v4572, 0.5
    %4574 = vmatpush.msra.mxu0 0.0
    %4575 = vmatpush.msra.mxu0 0.0
    %4576 = vmatpush.msra.mxu0 0.0
    %4577 = vmatpush.msra.mxu0 0.0
    %4578 = vmatpush.msra.mxu0 0.0
    %4579 = vmatpush.msra.mxu0 0.0
    %4580 = vmatpush.msra.mxu0 0.0
    %4581 = vmatpush.msra.mxu0 0.0
    %4582 = vmatpush.msra.mxu0 0.0
    %4583 = vmatpush.msra.mxu0 0.0
    %4584 = vmatpush.msra.mxu0 0.0
    %4585 = vmatpush.msra.mxu0 0.0
    %4586 = vmatpush.msra.mxu0 0.0
    %4587 = vmatpush.msra.mxu0 0.0
    %4588 = vmatpush.msra.mxu0 0.0
    %4589 = vmatpush.msra.mxu0 %v4167
    %4590 = vmatmul.f32.gmra.mxu0 %v4516
    %v4591 = vpop.f32.mrf.mxu0
    %v4592 = vadd.f32 %v4250, %v4591
    %4593 = vdwg.mxu0
    %v4595 = vrot.slane %v4592, 2
    %v4597 = vmul.f32 %v4565, %v4595
    %v4598 = vadd.f32 %v4245, %v4597
    %v4599 = vtanh.pop %v4598
    %v4600 = vsub.f32 1.0, %v4573
    %v4601 = vmul.f32 %v4600, %v4599
    %v4602 = vrot.slane %v4512, 6
    %v4604 = vmul.f32 %v4573, %v4602
    %v4605 = vadd.f32 %v4601, %v4604
    %4606 = vst.msk [vmem:[#allocation2] sm:$0xc0] %vm3797, %v4605
    %v4608 = vrot.slane %v4605, 6
    %v4609 = vsel %vm3436, %v4608, 0
    %4611 = vmatpush.msra.mxu0 0.0
    %4612 = vmatpush.msra.mxu0 0.0
    %4613 = vmatpush.msra.mxu0 0.0
    %4614 = vmatpush.msra.mxu0 0.0
    %4615 = vmatpush.msra.mxu0 0.0
    %4616 = vmatpush.msra.mxu0 0.0
    %4617 = vmatpush.msra.mxu0 0.0
    %4618 = vmatpush.msra.mxu0 0.0
    %4619 = vmatpush.msra.mxu0 0.0
    %4620 = vmatpush.msra.mxu0 0.0
    %4621 = vmatpush.msra.mxu0 0.0
    %4622 = vmatpush.msra.mxu0 0.0
    %4623 = vmatpush.msra.mxu0 0.0
    %4624 = vmatpush.msra.mxu0 0.0
    %4625 = vmatpush.msra.mxu0 0.0
    %4626 = vmatpush.msra.mxu0 %v4165
    %4627 = vmatmul.f32.gmra.mxu0 %v4609
    %v4628 = vpop.f32.mrf.mxu0
    %v4629 = vadd.f32 0.0, %v4628
    %4630 = vdwg.mxu0
    %4631 = vmatpush.msra.mxu0 0.0
    %4632 = vmatpush.msra.mxu0 0.0
    %4633 = vmatpush.msra.mxu0 0.0
    %4634 = vmatpush.msra.mxu0 0.0
    %4635 = vmatpush.msra.mxu0 0.0
    %4636 = vmatpush.msra.mxu0 0.0
    %4637 = vmatpush.msra.mxu0 0.0
    %4638 = vmatpush.msra.mxu0 0.0
    %4639 = vmatpush.msra.mxu0 0.0
    %4640 = vmatpush.msra.mxu0 0.0
    %4641 = vmatpush.msra.mxu0 0.0
    %4642 = vmatpush.msra.mxu0 0.0
    %4643 = vmatpush.msra.mxu0 0.0
    %4644 = vmatpush.msra.mxu0 0.0
    %4645 = vmatpush.msra.mxu0 0.0
    %4646 = vmatpush.msra.mxu0 %v4166
    %4647 = vmatmul.f32.gmra.mxu0 %v4609
    %v4648 = vpop.f32.mrf.mxu0
    %v4649 = vadd.f32 0.0, %v4648
    %4650 = vdwg.mxu0
    %v4651 = vadd.f32 %v4200, %v4629
    %v4652 = vmul.f32 %v4651, 0.5
    %v4653 = vtanh.pop %v4652
    %v4654 = vmul.f32 %v4653, 0.5
    %v4655 = vadd.f32 %v4654, 0.5
    %v4656 = vadd.f32 %v4224, %v4649
    %v4657 = vmul.f32 %v4656, 0.5
    %v4658 = vtanh.pop %v4657
    %v4659 = vmul.f32 %v4658, 0.5
    %v4660 = vadd.f32 %v4659, 0.5
    %4661 = vmatpush.msra.mxu0 0.0
    %4662 = vmatpush.msra.mxu0 0.0
    %4663 = vmatpush.msra.mxu0 0.0
    %4664 = vmatpush.msra.mxu0 0.0
    %4665 = vmatpush.msra.mxu0 0.0
    %4666 = vmatpush.msra.mxu0 0.0
    %4667 = vmatpush.msra.mxu0 0.0
    %4668 = vmatpush.msra.mxu0 0.0
    %4669 = vmatpush.msra.mxu0 0.0
    %4670 = vmatpush.msra.mxu0 0.0
    %4671 = vmatpush.msra.mxu0 0.0
    %4672 = vmatpush.msra.mxu0 0.0
    %4673 = vmatpush.msra.mxu0 0.0
    %4674 = vmatpush.msra.mxu0 0.0
    %4675 = vmatpush.msra.mxu0 0.0
    %4676 = vmatpush.msra.mxu0 %v4167
    %4677 = vmatmul.f32.gmra.mxu0 %v4609
    %v4678 = vpop.f32.mrf.mxu0
    %v4679 = vadd.f32 %v4250, %v4678
    %4680 = vdwg.mxu0
    %v4681 = vmul.f32 %v4655, %v4679
    %v4682 = vadd.f32 %v4248, %v4681
    %v4683 = vtanh.pop %v4682
    %v4684 = vsub.f32 1.0, %v4660
    %v4685 = vmul.f32 %v4684, %v4683
    %v4687 = vmul.f32 %v4660, %v4608
    %v4688 = vadd.f32 %v4685, %v4687
    %4689 = vst.msk [vmem:[#allocation2 + $0x8] sm:$0x3] %vm3516, %v4688
    %v4691 = vsel %vm3436, %v4688, 0
    %4693 = vmatpush.msra.mxu0 0.0
    %4694 = vmatpush.msra.mxu0 0.0
    %4695 = vmatpush.msra.mxu0 0.0
    %4696 = vmatpush.msra.mxu0 0.0
    %4697 = vmatpush.msra.mxu0 0.0
    %4698 = vmatpush.msra.mxu0 0.0
    %4699 = vmatpush.msra.mxu0 0.0
    %4700 = vmatpush.msra.mxu0 0.0
    %4701 = vmatpush.msra.mxu0 0.0
    %4702 = vmatpush.msra.mxu0 0.0
    %4703 = vmatpush.msra.mxu0 0.0
    %4704 = vmatpush.msra.mxu0 0.0
    %4705 = vmatpush.msra.mxu0 0.0
    %4706 = vmatpush.msra.mxu0 0.0
    %4707 = vmatpush.msra.mxu0 0.0
    %4708 = vmatpush.msra.mxu0 %v4165
    %4709 = vmatmul.f32.gmra.mxu0 %v4691
    %v4710 = vpop.f32.mrf.mxu0
    %v4711 = vadd.f32 0.0, %v4710
    %4712 = vdwg.mxu0
    %4713 = vmatpush.msra.mxu0 0.0
    %4714 = vmatpush.msra.mxu0 0.0
    %4715 = vmatpush.msra.mxu0 0.0
    %4716 = vmatpush.msra.mxu0 0.0
    %4717 = vmatpush.msra.mxu0 0.0
    %4718 = vmatpush.msra.mxu0 0.0
    %4719 = vmatpush.msra.mxu0 0.0
    %4720 = vmatpush.msra.mxu0 0.0
    %4721 = vmatpush.msra.mxu0 0.0
    %4722 = vmatpush.msra.mxu0 0.0
    %4723 = vmatpush.msra.mxu0 0.0
    %4724 = vmatpush.msra.mxu0 0.0
    %4725 = vmatpush.msra.mxu0 0.0
    %4726 = vmatpush.msra.mxu0 0.0
    %4727 = vmatpush.msra.mxu0 0.0
    %4728 = vmatpush.msra.mxu0 %v4166
    %4729 = vmatmul.f32.gmra.mxu0 %v4691
    %v4730 = vpop.f32.mrf.mxu0
    %v4731 = vadd.f32 0.0, %v4730
    %4732 = vdwg.mxu0
    %v4734 = vrot.slane %v4711, 6
    %v4736 = vadd.f32 %v4200, %v4734
    %v4737 = vmul.f32 %v4736, 0.5
    %v4738 = vtanh.pop %v4737
    %v4739 = vmul.f32 %v4738, 0.5
    %v4740 = vadd.f32 %v4739, 0.5
    %v4742 = vrot.slane %v4731, 6
    %v4744 = vadd.f32 %v4224, %v4742
    %v4745 = vmul.f32 %v4744, 0.5
    %v4746 = vtanh.pop %v4745
    %v4747 = vmul.f32 %v4746, 0.5
    %v4748 = vadd.f32 %v4747, 0.5
    %4749 = vmatpush.msra.mxu0 0.0
    %4750 = vmatpush.msra.mxu0 0.0
    %4751 = vmatpush.msra.mxu0 0.0
    %4752 = vmatpush.msra.mxu0 0.0
    %4753 = vmatpush.msra.mxu0 0.0
    %4754 = vmatpush.msra.mxu0 0.0
    %4755 = vmatpush.msra.mxu0 0.0
    %4756 = vmatpush.msra.mxu0 0.0
    %4757 = vmatpush.msra.mxu0 0.0
    %4758 = vmatpush.msra.mxu0 0.0
    %4759 = vmatpush.msra.mxu0 0.0
    %4760 = vmatpush.msra.mxu0 0.0
    %4761 = vmatpush.msra.mxu0 0.0
    %4762 = vmatpush.msra.mxu0 0.0
    %4763 = vmatpush.msra.mxu0 0.0
    %4764 = vmatpush.msra.mxu0 %v4167
    %4765 = vmatmul.f32.gmra.mxu0 %v4691
    %v4766 = vpop.f32.mrf.mxu0
    %v4767 = vadd.f32 %v4250, %v4766
    %4768 = vdwg.mxu0
    %v4770 = vrot.slane %v4767, 6
    %v4772 = vmul.f32 %v4740, %v4770
    %v4773 = vadd.f32 %v4248, %v4772
    %v4774 = vtanh.pop %v4773
    %v4775 = vsub.f32 1.0, %v4748
    %v4776 = vmul.f32 %v4775, %v4774
    %v4777 = vrot.slane %v4688, 6
    %v4779 = vmul.f32 %v4748, %v4777
    %v4780 = vadd.f32 %v4776, %v4779
    %4781 = vst.msk [vmem:[#allocation2 + $0x8] sm:$0xc] %vm3609, %v4780
    %v4783 = vrot.slane %v4780, 2
    %v4784 = vsel %vm3436, %v4783, 0
    %4786 = vmatpush.msra.mxu0 0.0
    %4787 = vmatpush.msra.mxu0 0.0
    %4788 = vmatpush.msra.mxu0 0.0
    %4789 = vmatpush.msra.mxu0 0.0
    %4790 = vmatpush.msra.mxu0 0.0
    %4791 = vmatpush.msra.mxu0 0.0
    %4792 = vmatpush.msra.mxu0 0.0
    %4793 = vmatpush.msra.mxu0 0.0
    %4794 = vmatpush.msra.mxu0 0.0
    %4795 = vmatpush.msra.mxu0 0.0
    %4796 = vmatpush.msra.mxu0 0.0
    %4797 = vmatpush.msra.mxu0 0.0
    %4798 = vmatpush.msra.mxu0 0.0
    %4799 = vmatpush.msra.mxu0 0.0
    %4800 = vmatpush.msra.mxu0 0.0
    %4801 = vmatpush.msra.mxu0 %v4165
    %4802 = vmatmul.f32.gmra.mxu0 %v4784
    %v4803 = vpop.f32.mrf.mxu0
    %v4804 = vadd.f32 0.0, %v4803
    %4805 = vdwg.mxu0
    %4806 = vmatpush.msra.mxu0 0.0
    %4807 = vmatpush.msra.mxu0 0.0
    %4808 = vmatpush.msra.mxu0 0.0
    %4809 = vmatpush.msra.mxu0 0.0
    %4810 = vmatpush.msra.mxu0 0.0
    %4811 = vmatpush.msra.mxu0 0.0
    %4812 = vmatpush.msra.mxu0 0.0
    %4813 = vmatpush.msra.mxu0 0.0
    %4814 = vmatpush.msra.mxu0 0.0
    %4815 = vmatpush.msra.mxu0 0.0
    %4816 = vmatpush.msra.mxu0 0.0
    %4817 = vmatpush.msra.mxu0 0.0
    %4818 = vmatpush.msra.mxu0 0.0
    %4819 = vmatpush.msra.mxu0 0.0
    %4820 = vmatpush.msra.mxu0 0.0
    %4821 = vmatpush.msra.mxu0 %v4166
    %4822 = vmatmul.f32.gmra.mxu0 %v4784
    %v4823 = vpop.f32.mrf.mxu0
    %v4824 = vadd.f32 0.0, %v4823
    %4825 = vdwg.mxu0
    %v4827 = vrot.slane %v4804, 4
    %v4829 = vadd.f32 %v4200, %v4827
    %v4830 = vmul.f32 %v4829, 0.5
    %v4831 = vtanh.pop %v4830
    %v4832 = vmul.f32 %v4831, 0.5
    %v4833 = vadd.f32 %v4832, 0.5
    %v4835 = vrot.slane %v4824, 4
    %v4837 = vadd.f32 %v4224, %v4835
    %v4838 = vmul.f32 %v4837, 0.5
    %v4839 = vtanh.pop %v4838
    %v4840 = vmul.f32 %v4839, 0.5
    %v4841 = vadd.f32 %v4840, 0.5
    %4842 = vmatpush.msra.mxu0 0.0
    %4843 = vmatpush.msra.mxu0 0.0
    %4844 = vmatpush.msra.mxu0 0.0
    %4845 = vmatpush.msra.mxu0 0.0
    %4846 = vmatpush.msra.mxu0 0.0
    %4847 = vmatpush.msra.mxu0 0.0
    %4848 = vmatpush.msra.mxu0 0.0
    %4849 = vmatpush.msra.mxu0 0.0
    %4850 = vmatpush.msra.mxu0 0.0
    %4851 = vmatpush.msra.mxu0 0.0
    %4852 = vmatpush.msra.mxu0 0.0
    %4853 = vmatpush.msra.mxu0 0.0
    %4854 = vmatpush.msra.mxu0 0.0
    %4855 = vmatpush.msra.mxu0 0.0
    %4856 = vmatpush.msra.mxu0 0.0
    %4857 = vmatpush.msra.mxu0 %v4167
    %4858 = vmatmul.f32.gmra.mxu0 %v4784
    %v4859 = vpop.f32.mrf.mxu0
    %v4860 = vadd.f32 %v4250, %v4859
    %4861 = vdwg.mxu0
    %v4863 = vrot.slane %v4860, 4
    %v4865 = vmul.f32 %v4833, %v4863
    %v4866 = vadd.f32 %v4248, %v4865
    %v4867 = vtanh.pop %v4866
    %v4868 = vsub.f32 1.0, %v4841
    %v4869 = vmul.f32 %v4868, %v4867
    %v4870 = vrot.slane %v4780, 6
    %v4872 = vmul.f32 %v4841, %v4870
    %v4873 = vadd.f32 %v4869, %v4872
    %4874 = vst.msk [vmem:[#allocation2 + $0x8] sm:$0x30] %vm3703, %v4873
    %v4876 = vrot.slane %v4873, 4
    %v4877 = vsel %vm3436, %v4876, 0
    %4879 = vmatpush.msra.mxu0 0.0
    %4880 = vmatpush.msra.mxu0 0.0
    %4881 = vmatpush.msra.mxu0 0.0
    %4882 = vmatpush.msra.mxu0 0.0
    %4883 = vmatpush.msra.mxu0 0.0
    %4884 = vmatpush.msra.mxu0 0.0
    %4885 = vmatpush.msra.mxu0 0.0
    %4886 = vmatpush.msra.mxu0 0.0
    %4887 = vmatpush.msra.mxu0 0.0
    %4888 = vmatpush.msra.mxu0 0.0
    %4889 = vmatpush.msra.mxu0 0.0
    %4890 = vmatpush.msra.mxu0 0.0
    %4891 = vmatpush.msra.mxu0 0.0
    %4892 = vmatpush.msra.mxu0 0.0
    %4893 = vmatpush.msra.mxu0 0.0
    %4894 = vmatpush.msra.mxu0 %v4165
    %4895 = vmatmul.f32.gmra.mxu0 %v4877
    %v4896 = vpop.f32.mrf.mxu0
    %v4897 = vadd.f32 0.0, %v4896
    %4898 = vdwg.mxu0
    %4899 = vmatpush.msra.mxu0 0.0
    %4900 = vmatpush.msra.mxu0 0.0
    %4901 = vmatpush.msra.mxu0 0.0
    %4902 = vmatpush.msra.mxu0 0.0
    %4903 = vmatpush.msra.mxu0 0.0
    %4904 = vmatpush.msra.mxu0 0.0
    %4905 = vmatpush.msra.mxu0 0.0
    %4906 = vmatpush.msra.mxu0 0.0
    %4907 = vmatpush.msra.mxu0 0.0
    %4908 = vmatpush.msra.mxu0 0.0
    %4909 = vmatpush.msra.mxu0 0.0
    %4910 = vmatpush.msra.mxu0 0.0
    %4911 = vmatpush.msra.mxu0 0.0
    %4912 = vmatpush.msra.mxu0 0.0
    %4913 = vmatpush.msra.mxu0 0.0
    %4914 = vmatpush.msra.mxu0 %v4166
    %4915 = vmatmul.f32.gmra.mxu0 %v4877
    %v4916 = vpop.f32.mrf.mxu0
    %v4917 = vadd.f32 0.0, %v4916
    %4918 = vdwg.mxu0
    %v4920 = vrot.slane %v4897, 2
    %v4922 = vadd.f32 %v4200, %v4920
    %v4923 = vmul.f32 %v4922, 0.5
    %v4924 = vtanh.pop %v4923
    %v4925 = vmul.f32 %v4924, 0.5
    %v4926 = vadd.f32 %v4925, 0.5
    %v4928 = vrot.slane %v4917, 2
    %v4930 = vadd.f32 %v4224, %v4928
    %v4931 = vmul.f32 %v4930, 0.5
    %v4932 = vtanh.pop %v4931
    %v4933 = vmul.f32 %v4932, 0.5
    %v4934 = vadd.f32 %v4933, 0.5
    %4935 = vmatpush.msra.mxu0 0.0
    %4936 = vmatpush.msra.mxu0 0.0
    %4937 = vmatpush.msra.mxu0 0.0
    %4938 = vmatpush.msra.mxu0 0.0
    %4939 = vmatpush.msra.mxu0 0.0
    %4940 = vmatpush.msra.mxu0 0.0
    %4941 = vmatpush.msra.mxu0 0.0
    %4942 = vmatpush.msra.mxu0 0.0
    %4943 = vmatpush.msra.mxu0 0.0
    %4944 = vmatpush.msra.mxu0 0.0
    %4945 = vmatpush.msra.mxu0 0.0
    %4946 = vmatpush.msra.mxu0 0.0
    %4947 = vmatpush.msra.mxu0 0.0
    %4948 = vmatpush.msra.mxu0 0.0
    %4949 = vmatpush.msra.mxu0 0.0
    %4950 = vmatpush.msra.mxu0 %v4167
    %4951 = vmatmul.f32.gmra.mxu0 %v4877
    %v4952 = vpop.f32.mrf.mxu0
    %v4953 = vadd.f32 %v4250, %v4952
    %4954 = vdwg.mxu0
    %v4956 = vrot.slane %v4953, 2
    %v4958 = vmul.f32 %v4926, %v4956
    %v4959 = vadd.f32 %v4248, %v4958
    %v4960 = vtanh.pop %v4959
    %v4961 = vsub.f32 1.0, %v4934
    %v4962 = vmul.f32 %v4961, %v4960
    %v4963 = vrot.slane %v4873, 6
    %v4965 = vmul.f32 %v4934, %v4963
    %v4966 = vadd.f32 %v4962, %v4965
    %4967 = vst.msk [vmem:[#allocation2 + $0x8] sm:$0xc0] %vm3797, %v4966
    %v4968 = vld [vmem:[#allocation2] sm:$0xff]
    %v4969 = vld [vmem:[#allocation2 + $0x8] sm:$0xff]
    %v4970 = vmul.f32 %v4968, 0.5
    %v4971 = vmul.f32 %v4969, 0.5
    %v4972 = vtanh.pop %v4970
    %v4973 = vtanh.pop %v4971
    %v4974 = vmul.f32 %v4972, 0.5
    %v4975 = vmul.f32 %v4973, 0.5
    %v4976 = vadd.f32 %v4974, 0.5
    %v4977 = vadd.f32 %v4975, 0.5
    %4978 = vst.msk [vmem:[%s2] sm:$0xff] %vm3436, %v4976
    %4979 = vst.msk [vmem:[%s2 + $0x8] sm:$0xff] %vm3436, %v4977
    // Predicated region
    $region18: #{tpu_custom_call.1} parent=1 // pred_check
      _
    $region19: #{tpu_custom_call.1} parent=1 // pred_check_branch
      %4981 = sbr.rel (0) target = $region21
    $region20: #{tpu_custom_call.1} parent=1 // pred_region
      _
    $region21: #{tpu_custom_call.1} parent=1 // pred_fallthru
      _
    // Predicated region
    $region22: #{tpu_custom_call.1} parent=1 // pred_check
      _
    $region23: #{tpu_custom_call.1} parent=1 // pred_check_branch
      %4983 = sbr.rel (0) target = $region25
    $region24: #{tpu_custom_call.1} parent=1 // pred_region
      _
    $region25: #{tpu_custom_call.1} parent=1 // pred_fallthru
      _
    %4984 = vsyncpa [#allocation4], 1
    %4985 = vsyncpa [#allocation6], 1

</llo_original>
